<compile_context>
chip_gen: v5e
topology: v5e:2x2
jax: 0.10.0
libtpu: 0.0.40
codegen_flags: <defaults>
</compile_context>

<pallas_src>
import functools

import jax
import jax.numpy as jnp
from jax.experimental import pallas as pl
from jax.experimental.pallas import tpu as pltpu

# ----------------------------- hyper-params ---------------------------------
VOCAB_SIZE = 64
EMBED_SIZE = 32
HIDDEN_SIZE = 32
NUM_LAYERS = 2
NUM_LABELS = 4
PAD_INDEX = 0
BATCH = 2
SEQ_LEN = 8  # raw text length; model consumes text[:, :-1] -> T = 7

_VMEM_SPEC = pl.BlockSpec(memory_space=pltpu.MemorySpace.VMEM)


# ----------------------------- GRU gate math ----------------------------------
def _gru_gate(gi, gh, h):
    """PyTorch GRU cell given precomputed gi = x@Wih+bih, gh = h@Whh+bhh."""
    H = HIDDEN_SIZE
    r = jax.nn.sigmoid(gi[:, :H] + gh[:, :H])
    z = jax.nn.sigmoid(gi[:, H:2 * H] + gh[:, H:2 * H])
    n = jnp.tanh(gi[:, 2 * H:] + r * gh[:, 2 * H:])
    return (1.0 - z) * n + z * h


# ----------------------------- the fused kernel --------------------------------
def textvae_kernel(ids_ref, emb_ref, enc_w_ref, dec_w_ref, bias_ref, head_w_ref,
                   sample_ref,
                   logits_ref, mean_ref, std_ref, cls_ref,
                   enc_scr, dec_scr):
    """Whole TextVAE forward in one invocation (grid=()).

    ids_ref:    (T*B, 1) int32   time-major token ids (row = t*B + b)
    emb_ref:    (2, V, E)        [encoder_emb ; decoder_emb]
    enc_w_ref:  (L, 4H, 6H)      rows [:2H] = [Wih_f | Wih_b] (layer0: rows :E),
                                 rows [2H:] = block-diag(Whh_f, Whh_b)
    dec_w_ref:  (L, 2H, 6H)      layer0: rows[:E]=Wih0, rows[E:E+H]=Whh0 (cols :3H);
                                 layer1: block-diag(Wih1, Whh1)
    bias_ref:   (8, 6H)          rows 0-3 enc [bih|bhh] per layer, 4-5 dec,
                                 row 6 = [ms_b | out_b | 0], row 7 = [cls_b | 0]
    head_w_ref: (5H, 2H)         rows[:2H]=ms_w, rows[2H:3H]=out_w,
                                 rows[3H:]=folded classifier weights (cols :NL)
    sample_ref: (B, H)           N(0,1) sample for the reparameterisation
    outputs: logits (T*B, V) time-major, mean (B,H), std (B,H), cls (B,NL)
    scratch: enc_scr (T*B, 2H), dec_scr (T*B, H)
    """
    H = HIDDEN_SIZE
    H2, H3 = 2 * H, 3 * H
    E = EMBED_SIZE
    V = VOCAB_SIZE
    f32 = jnp.float32

    B = sample_ref.shape[0]
    TB = ids_ref.shape[0]
    T = TB // B

    ids = ids_ref[...]                                                # (TB, 1)
    # one-hot embedding lookup on the MXU (shared by encoder and decoder)
    onehot = (ids == jax.lax.broadcasted_iota(jnp.int32, (TB, V), 1)).astype(f32)
    mask = (ids != PAD_INDEX).astype(f32)                             # (TB, 1)
    bias = bias_ref[...]                                              # (8, 6H)

    # =================== encoder: bidirectional 2-layer GRU ===================
    layer_in = jnp.dot(onehot, emb_ref[0], preferred_element_type=f32)  # (TB, E)
    in_rows = E
    h_cat = jnp.zeros((B, H2), f32)
    for l in range(NUM_LAYERS):
        w = enc_w_ref[l]                                              # (4H, 6H)
        bih = bias[2 * l:2 * l + 1, :]                                # (1, 6H)
        bhh = bias[2 * l + 1:2 * l + 2, :]
        # hoisted input projection, both directions fused into one matmul
        gi = jnp.dot(layer_in, w[:in_rows, :], preferred_element_type=f32) + bih
        whh_bd = w[H2:, :]                                            # (2H, 6H)
        h_cat = jnp.zeros((B, H2), f32)                               # [h_fwd | h_bwd]
        for t in range(T):
            tb = T - 1 - t                                            # backward index
            # one block-diagonal hidden matmul for both directions
            gh = jnp.dot(h_cat, whh_bd, preferred_element_type=f32) + bhh
            h_f = _gru_gate(gi[t * B:(t + 1) * B, :H3], gh[:, :H3], h_cat[:, :H])
            h_b = _gru_gate(gi[tb * B:(tb + 1) * B, H3:], gh[:, H3:], h_cat[:, H:])
            # packed-sequence semantics: padded steps keep the previous hidden
            m_t = mask[t * B:(t + 1) * B, :]
            m_b = mask[tb * B:(tb + 1) * B, :]
            h_f = m_t * h_f + (1.0 - m_t) * h_cat[:, :H]
            h_b = m_b * h_b + (1.0 - m_b) * h_cat[:, H:]
            h_cat = jnp.concatenate([h_f, h_b], axis=-1)
            if l + 1 < NUM_LAYERS:
                enc_scr[t * B:(t + 1) * B, :H] = h_f
                enc_scr[tb * B:(tb + 1) * B, H:] = h_b
        if l + 1 < NUM_LAYERS:
            # pad_packed_sequence zero-fill at padded positions
            layer_in = enc_scr[...] * mask                            # (TB, 2H)
            in_rows = H2

    # h_cat == concat([fwd final, bwd final]) of the last layer == final_states
    head_w = head_w_ref[...]                                          # (5H, 2H)
    head = (jnp.dot(h_cat, head_w[:H2, :], preferred_element_type=f32)
            + bias[6:7, :H2])                                         # (B, 2H)
    mean = head[:, :H]
    std = jax.nn.softplus(head[:, H:])
    encoding = mean + std * sample_ref[...]
    mean_ref[...] = mean
    std_ref[...] = std

    # =================== decoder: 2-layer GRU, layer wavefront =================
    x_dec = jnp.dot(onehot, emb_ref[1], preferred_element_type=f32)   # (TB, E)
    w0 = dec_w_ref[0]                                                 # (2H, 6H)
    w1 = dec_w_ref[1]                                                 # (2H, 6H) block-diag
    b0 = bias[4:5, :]                                                 # [bih0 | bhh0]
    b1 = bias[5:6, :]                                                 # [bih1 | bhh1]
    # hoisted layer-0 input projection over the whole sequence
    gi0 = (jnp.dot(x_dec, w0[:E, :H3], preferred_element_type=f32) + b0[:, :H3])
    whh0 = w0[E:E + H, :H3]
    bhh0 = b0[:, H3:]

    h0 = encoding                      # every decoder layer starts from encoding
    h1 = encoding
    h_sum = jnp.zeros((B, H), f32)
    for t in range(T):
        gh0 = jnp.dot(h0, whh0, preferred_element_type=f32) + bhh0
        h0 = _gru_gate(gi0[t * B:(t + 1) * B, :], gh0, h0)
        # layer 1: fused input+hidden projections in one block-diag matmul
        g1 = (jnp.dot(jnp.concatenate([h0, h1], axis=-1), w1,
                      preferred_element_type=f32) + b1)               # [gi1 | gh1]
        h1 = _gru_gate(g1[:, :H3], g1[:, H3:], h1)
        dec_scr[t * B:(t + 1) * B, :] = h1
        h_sum = h_sum + h1

    # vocab projection over the whole sequence at once, dense store
    out_w = head_w[H2:H2 + H, :]                                      # (H, V)
    out_b = bias[6:7, H2:H2 + V]                                      # (1, V)
    logits = jnp.dot(dec_scr[...], out_w, preferred_element_type=f32) + out_b
    logits_ref[...] = logits                                          # (TB, V)

    # classifier: decoder_projection + concat + Linear folded into one matmul
    # (mean_t(logits) = mean_t(h1) @ out_w + out_b, and everything downstream
    #  is linear -> folded into head_w[3H:] / bias row 7 in the wrapper).
    h_mean = h_sum * (1.0 / T)
    cls_in = jnp.concatenate([encoding, h_mean], axis=-1)             # (B, 2H)
    cls_full = (jnp.dot(cls_in, head_w[H2 + H:, :], preferred_element_type=f32)
                + bias[7:8, :H2])                                     # (B, 2H) padded
    cls_ref[...] = cls_full[:, :NUM_LABELS]


# ----------------------------- parameter init --------------------------------
def _normal(key, shape, scale=0.1):
    return jax.random.normal(key, shape, jnp.float32) * scale


def init_params(key):
    """Logical parameters mirroring the PyTorch module structure."""
    keys = jax.random.split(key, 18)
    H = HIDDEN_SIZE
    p = {}
    p["enc_emb"] = _normal(keys[0], (VOCAB_SIZE, EMBED_SIZE))
    p["dec_emb"] = _normal(keys[1], (VOCAB_SIZE, EMBED_SIZE))

    # encoder GRU: (layer, direction), fused gate columns [r|z|n].
    # layer 0 uses only the first EMBED_SIZE rows of enc_wih (rest is padding).
    p["enc_wih"] = _normal(keys[2], (NUM_LAYERS, 2, 2 * H, 3 * H))
    p["enc_whh"] = _normal(keys[3], (NUM_LAYERS, 2, H, 3 * H))
    p["enc_bih"] = _normal(keys[4], (NUM_LAYERS, 2, 1, 3 * H))
    p["enc_bhh"] = _normal(keys[5], (NUM_LAYERS, 2, 1, 3 * H))

    # decoder GRU (layer-0 in = E == layer-1 in = H).
    p["dec_wih"] = _normal(keys[6], (NUM_LAYERS, EMBED_SIZE, 3 * H))
    p["dec_whh"] = _normal(keys[7], (NUM_LAYERS, H, 3 * H))
    p["dec_bih"] = _normal(keys[8], (NUM_LAYERS, 1, 3 * H))
    p["dec_bhh"] = _normal(keys[9], (NUM_LAYERS, 1, 3 * H))

    # fused [mean | std] projection
    p["ms_w"] = _normal(keys[10], (2 * H, 2 * H))
    p["ms_b"] = _normal(keys[11], (1, 2 * H))

    p["out_proj_w"] = _normal(keys[12], (H, VOCAB_SIZE))
    p["out_proj_b"] = _normal(keys[13], (1, VOCAB_SIZE))
    p["decproj_w"] = _normal(keys[14], (VOCAB_SIZE, H))
    p["decproj_b"] = _normal(keys[15], (1, H))
    p["cls_w"] = _normal(keys[16], (2 * H, NUM_LABELS))
    p["cls_b"] = _normal(keys[17], (1, NUM_LABELS))
    return p


def pack_params(p):
    """Repack logical params into a handful of kernel-friendly VMEM buffers."""
    H = HIDDEN_SIZE
    H2, H3, H6 = 2 * H, 3 * H, 6 * H
    E = EMBED_SIZE
    NL = NUM_LABELS
    f32 = jnp.float32

    emb = jnp.stack([p["enc_emb"], p["dec_emb"]])                     # (2, V, E)

    # ---- encoder: fuse directions (input concat + block-diag hidden) ----
    enc_w_layers = []
    bias_rows = []
    for l in range(NUM_LAYERS):
        wih_cat = jnp.concatenate([p["enc_wih"][l, 0], p["enc_wih"][l, 1]],
                                  axis=1)                             # (2H, 6H)
        z = jnp.zeros((H, H3), f32)
        whh_bd = jnp.concatenate(
            [jnp.concatenate([p["enc_whh"][l, 0], z], axis=1),
             jnp.concatenate([z, p["enc_whh"][l, 1]], axis=1)], axis=0)  # (2H, 6H)
        enc_w_layers.append(jnp.concatenate([wih_cat, whh_bd], axis=0))  # (4H, 6H)
        bias_rows.append(jnp.concatenate([p["enc_bih"][l, 0],
                                          p["enc_bih"][l, 1]], axis=1))
        bias_rows.append(jnp.concatenate([p["enc_bhh"][l, 0],
                                          p["enc_bhh"][l, 1]], axis=1))
    enc_w = jnp.stack(enc_w_layers)                                   # (L, 4H, 6H)

    # ---- decoder: layer0 stacked [Wih0; Whh0], layer1 block-diag ----
    w0 = jnp.concatenate([p["dec_wih"][0], p["dec_whh"][0]], axis=0)  # (E+H, 3H)
    w0 = jnp.pad(w0, ((0, 0), (0, H3)))                               # (2H, 6H)
    z = jnp.zeros((H, H3), f32)
    w1 = jnp.concatenate(
        [jnp.concatenate([p["dec_wih"][1], z], axis=1),
         jnp.concatenate([z, p["dec_whh"][1]], axis=1)], axis=0)      # (2H, 6H)
    dec_w = jnp.stack([w0, w1])                                       # (2, 2H, 6H)
    bias_rows.append(jnp.concatenate([p["dec_bih"][0], p["dec_bhh"][0]], axis=1))
    bias_rows.append(jnp.concatenate([p["dec_bih"][1], p["dec_bhh"][1]], axis=1))

    # ---- fold decoder_projection + classifier (all linear, exact) ----
    #   cls = enc @ cls_w[:H] + mean_t(logits) @ (decproj_w @ cls_w[H:])
    #         + (decproj_b @ cls_w[H:] + cls_b)
    #   mean_t(logits) = h_mean @ out_w + out_b
    w_dc = p["decproj_w"] @ p["cls_w"][H:]                            # (V, NL)
    w_cls2 = jnp.concatenate([p["cls_w"][:H], p["out_proj_w"] @ w_dc], axis=0)
    b_cls2 = (p["out_proj_b"] @ w_dc + p["decproj_b"] @ p["cls_w"][H:]
              + p["cls_b"])                                           # (1, NL)

    head_w = jnp.concatenate([
        p["ms_w"],                                                    # (2H, 2H)
        p["out_proj_w"],                                              # (H,  V)
        jnp.pad(w_cls2, ((0, 0), (0, H2 - NL))),                      # (2H, 2H)
    ], axis=0)                                                        # (5H, 2H)

    bias_rows.append(jnp.concatenate(
        [p["ms_b"], p["out_proj_b"], jnp.zeros((1, H6 - 4 * H), f32)], axis=1))
    bias_rows.append(jnp.concatenate(
        [b_cls2, jnp.zeros((1, H6 - NL), f32)], axis=1))
    biases = jnp.concatenate(bias_rows, axis=0)                       # (8, 6H)

    return {"emb": emb, "enc_w": enc_w, "dec_w": dec_w,
            "biases": biases, "head_w": head_w}


# ----------------------------- model forward ---------------------------------
def textvae_forward(packed, text, sample_key):
    text_input = text[:, :-1]                                         # (B, T)
    B, T = text_input.shape
    H = HIDDEN_SIZE

    ids_t = text_input.T.reshape(T * B, 1)                            # time-major ids
    sample = jax.random.normal(sample_key, (B, H), jnp.float32)

    logits_tb, mean, std, cls_logits = pl.pallas_call(
        textvae_kernel,
        out_shape=(
            jax.ShapeDtypeStruct((T * B, VOCAB_SIZE), jnp.float32),   # dense slab
            jax.ShapeDtypeStruct((B, H), jnp.float32),
            jax.ShapeDtypeStruct((B, H), jnp.float32),
            jax.ShapeDtypeStruct((B, NUM_LABELS), jnp.float32),
        ),
        in_specs=[_VMEM_SPEC] * 7,
        out_specs=(_VMEM_SPEC,) * 4,
        scratch_shapes=[
            pltpu.VMEM((T * B, 2 * H), jnp.float32),                  # encoder layer outs
            pltpu.VMEM((T * B, H), jnp.float32),                      # decoder layer-1 outs
        ],
    )(ids_t, packed["emb"], packed["enc_w"], packed["dec_w"],
      packed["biases"], packed["head_w"], sample)

    decoder_output = logits_tb.reshape(T, B, VOCAB_SIZE).transpose(1, 0, 2)
    return decoder_output, mean, std, cls_logits


# ----------------------------- main -------------------------------------------
if __name__ == "__main__":
    root = jax.random.PRNGKey(0)
    k_param, k_text, k_sample = jax.random.split(root, 3)

    params = init_params(k_param)
    packed = pack_params(params)

    # deterministic tokens in [1, V); trailing PAD on sequence 1 to exercise
    # the packed-sequence (variable-length) path.
    text = jax.random.randint(k_text, (BATCH, SEQ_LEN), 1, VOCAB_SIZE,
                              dtype=jnp.int32)
    text = text.at[1, SEQ_LEN - 2:].set(PAD_INDEX)

    fwd = jax.jit(functools.partial(textvae_forward, packed))
    decoder_output, mean, std, logits = fwd(text, k_sample)
    jax.block_until_ready((decoder_output, mean, std, logits))

    assert decoder_output.shape == (BATCH, SEQ_LEN - 1, VOCAB_SIZE)
    assert mean.shape == (BATCH, HIDDEN_SIZE)
    assert std.shape == (BATCH, HIDDEN_SIZE)
    assert logits.shape == (BATCH, NUM_LABELS)
    assert bool(jnp.all(std > 0.0))
    assert bool(jnp.all(jnp.isfinite(decoder_output)))
    assert bool(jnp.all(jnp.isfinite(logits)))

    print("KERNEL_OK")
</pallas_src>

<mosaic_0001>
module attributes {stable_mosaic.version = 11 : i64} {
  func.func @textvae_kernel(%arg0: memref<14x1xi32, #tpu.memory_space<vmem>>, %arg1: memref<2x64x32xf32, #tpu.memory_space<vmem>>, %arg2: memref<2x128x192xf32, #tpu.memory_space<vmem>>, %arg3: memref<2x64x192xf32, #tpu.memory_space<vmem>>, %arg4: memref<8x192xf32, #tpu.memory_space<vmem>>, %arg5: memref<160x64xf32, #tpu.memory_space<vmem>>, %arg6: memref<2x32xf32, #tpu.memory_space<vmem>>, %arg7: memref<14x64xf32, #tpu.memory_space<vmem>>, %arg8: memref<2x32xf32, #tpu.memory_space<vmem>>, %arg9: memref<2x32xf32, #tpu.memory_space<vmem>>, %arg10: memref<2x4xf32, #tpu.memory_space<vmem>>, %arg11: memref<14x64xf32, #tpu.memory_space<vmem>>, %arg12: memref<14x32xf32, #tpu.memory_space<vmem>>) attributes {dimension_semantics = [], scalar_prefetch = 0 : i64, scratch_operands = 2 : i64, tpu.core_type = #tpu.core_type<tc>} {
    %c0 = arith.constant 0 : index
    %c0_0 = arith.constant 0 : index
    %0 = vector.load %arg0[%c0, %c0_0] : memref<14x1xi32, #tpu.memory_space<vmem>>, vector<14x1xi32>
    %1 = tpu.iota {dimensions = array<i32: 1>} : vector<14x64xi32>
    %2 = vector.broadcast %0 : vector<14x1xi32> to vector<14x64xi32>
    %3 = arith.cmpi eq, %2, %1 : vector<14x64xi32>
    %4 = arith.extui %3 : vector<14x64xi1> to vector<14x64xi32>
    %5 = arith.sitofp %4 : vector<14x64xi32> to vector<14x64xf32>
    %c0_i32 = arith.constant 0 : i32
    %6 = vector.broadcast %c0_i32 : i32 to vector<14x1xi32>
    %7 = arith.cmpi ne, %0, %6 : vector<14x1xi32>
    %8 = arith.extui %7 : vector<14x1xi1> to vector<14x1xi32>
    %9 = arith.sitofp %8 : vector<14x1xi32> to vector<14x1xf32>
    %c0_1 = arith.constant 0 : index
    %c0_2 = arith.constant 0 : index
    %10 = vector.load %arg4[%c0_1, %c0_2] : memref<8x192xf32, #tpu.memory_space<vmem>>, vector<8x192xf32>
    %c0_3 = arith.constant 0 : index
    %c0_4 = arith.constant 0 : index
    %c0_5 = arith.constant 0 : index
    %11 = vector.load %arg1[%c0_3, %c0_4, %c0_5] : memref<2x64x32xf32, #tpu.memory_space<vmem>>, vector<1x64x32xf32>
    %12 = vector.shape_cast %11 : vector<1x64x32xf32> to vector<64x32xf32>
    %cst = arith.constant dense<0.000000e+00> : vector<14x32xf32>
    %13 = tpu.matmul %5, %12, %cst {dimension_numbers = #tpu.dot_dimension_numbers<[1], [0], [0], [1], [0, 0, 1, 1], [], []>} : vector<14x64xf32>, vector<64x32xf32>, vector<14x32xf32> -> vector<14x32xf32>
    %c0_6 = arith.constant 0 : index
    %c0_7 = arith.constant 0 : index
    %c0_8 = arith.constant 0 : index
    %14 = vector.load %arg2[%c0_6, %c0_7, %c0_8] : memref<2x128x192xf32, #tpu.memory_space<vmem>>, vector<1x128x192xf32>
    %15 = vector.shape_cast %14 : vector<1x128x192xf32> to vector<128x192xf32>
    %16 = vector.extract_strided_slice %10 {offsets = [0, 0], sizes = [1, 192], strides = [1, 1]} : vector<8x192xf32> to vector<1x192xf32>
    %17 = vector.extract_strided_slice %10 {offsets = [1, 0], sizes = [1, 192], strides = [1, 1]} : vector<8x192xf32> to vector<1x192xf32>
    %18 = vector.extract_strided_slice %15 {offsets = [0, 0], sizes = [32, 192], strides = [1, 1]} : vector<128x192xf32> to vector<32x192xf32>
    %cst_9 = arith.constant dense<0.000000e+00> : vector<14x192xf32>
    %19 = tpu.matmul %13, %18, %cst_9 {dimension_numbers = #tpu.dot_dimension_numbers<[1], [0], [0], [1], [0, 0, 1, 1], [], []>} : vector<14x32xf32>, vector<32x192xf32>, vector<14x192xf32> -> vector<14x192xf32>
    %20 = vector.broadcast %16 : vector<1x192xf32> to vector<14x192xf32>
    %21 = arith.addf %19, %20 : vector<14x192xf32>
    %22 = vector.extract_strided_slice %15 {offsets = [64, 0], sizes = [64, 192], strides = [1, 1]} : vector<128x192xf32> to vector<64x192xf32>
    %cst_10 = arith.constant 0.000000e+00 : f32
    %23 = vector.broadcast %cst_10 : f32 to vector<2x64xf32>
    %cst_11 = arith.constant dense<0.000000e+00> : vector<2x192xf32>
    %24 = tpu.matmul %23, %22, %cst_11 {dimension_numbers = #tpu.dot_dimension_numbers<[1], [0], [0], [1], [0, 0, 1, 1], [], []>} : vector<2x64xf32>, vector<64x192xf32>, vector<2x192xf32> -> vector<2x192xf32>
    %25 = vector.broadcast %17 : vector<1x192xf32> to vector<2x192xf32>
    %26 = arith.addf %24, %25 : vector<2x192xf32>
    %27 = vector.extract_strided_slice %21 {offsets = [0, 0], sizes = [2, 96], strides = [1, 1]} : vector<14x192xf32> to vector<2x96xf32>
    %28 = vector.extract_strided_slice %26 {offsets = [0, 0], sizes = [2, 96], strides = [1, 1]} : vector<2x192xf32> to vector<2x96xf32>
    %29 = vector.extract_strided_slice %23 {offsets = [0, 0], sizes = [2, 32], strides = [1, 1]} : vector<2x64xf32> to vector<2x32xf32>
    %30 = vector.extract_strided_slice %27 {offsets = [0, 0], sizes = [2, 32], strides = [1, 1]} : vector<2x96xf32> to vector<2x32xf32>
    %31 = vector.extract_strided_slice %28 {offsets = [0, 0], sizes = [2, 32], strides = [1, 1]} : vector<2x96xf32> to vector<2x32xf32>
    %32 = arith.addf %30, %31 : vector<2x32xf32>
    %33 = arith.negf %32 : vector<2x32xf32>
    %34 = math.exp %33 : vector<2x32xf32>
    %cst_12 = arith.constant 1.000000e+00 : f32
    %35 = vector.broadcast %cst_12 : f32 to vector<2x32xf32>
    %36 = arith.addf %35, %34 : vector<2x32xf32>
    %37 = arith.divf %35, %36 : vector<2x32xf32>
    %38 = vector.extract_strided_slice %27 {offsets = [0, 32], sizes = [2, 32], strides = [1, 1]} : vector<2x96xf32> to vector<2x32xf32>
    %39 = vector.extract_strided_slice %28 {offsets = [0, 32], sizes = [2, 32], strides = [1, 1]} : vector<2x96xf32> to vector<2x32xf32>
    %40 = arith.addf %38, %39 : vector<2x32xf32>
    %41 = arith.negf %40 : vector<2x32xf32>
    %42 = math.exp %41 : vector<2x32xf32>
    %cst_13 = arith.constant 1.000000e+00 : f32
    %43 = vector.broadcast %cst_13 : f32 to vector<2x32xf32>
    %44 = arith.addf %43, %42 : vector<2x32xf32>
    %45 = arith.divf %43, %44 : vector<2x32xf32>
    %46 = vector.extract_strided_slice %27 {offsets = [0, 64], sizes = [2, 32], strides = [1, 1]} : vector<2x96xf32> to vector<2x32xf32>
    %47 = vector.extract_strided_slice %28 {offsets = [0, 64], sizes = [2, 32], strides = [1, 1]} : vector<2x96xf32> to vector<2x32xf32>
    %48 = arith.mulf %37, %47 : vector<2x32xf32>
    %49 = arith.addf %46, %48 : vector<2x32xf32>
    %50 = math.tanh %49 : vector<2x32xf32>
    %cst_14 = arith.constant 1.000000e+00 : f32
    %51 = vector.broadcast %cst_14 : f32 to vector<2x32xf32>
    %52 = arith.subf %51, %45 : vector<2x32xf32>
    %53 = arith.mulf %52, %50 : vector<2x32xf32>
    %54 = arith.mulf %45, %29 : vector<2x32xf32>
    %55 = arith.addf %53, %54 : vector<2x32xf32>
    %56 = vector.extract_strided_slice %21 {offsets = [12, 96], sizes = [2, 96], strides = [1, 1]} : vector<14x192xf32> to vector<2x96xf32>
    %57 = vector.extract_strided_slice %26 {offsets = [0, 96], sizes = [2, 96], strides = [1, 1]} : vector<2x192xf32> to vector<2x96xf32>
    %58 = vector.extract_strided_slice %23 {offsets = [0, 32], sizes = [2, 32], strides = [1, 1]} : vector<2x64xf32> to vector<2x32xf32>
    %59 = vector.extract_strided_slice %56 {offsets = [0, 0], sizes = [2, 32], strides = [1, 1]} : vector<2x96xf32> to vector<2x32xf32>
    %60 = vector.extract_strided_slice %57 {offsets = [0, 0], sizes = [2, 32], strides = [1, 1]} : vector<2x96xf32> to vector<2x32xf32>
    %61 = arith.addf %59, %60 : vector<2x32xf32>
    %62 = arith.negf %61 : vector<2x32xf32>
    %63 = math.exp %62 : vector<2x32xf32>
    %cst_15 = arith.constant 1.000000e+00 : f32
    %64 = vector.broadcast %cst_15 : f32 to vector<2x32xf32>
    %65 = arith.addf %64, %63 : vector<2x32xf32>
    %66 = arith.divf %64, %65 : vector<2x32xf32>
    %67 = vector.extract_strided_slice %56 {offsets = [0, 32], sizes = [2, 32], strides = [1, 1]} : vector<2x96xf32> to vector<2x32xf32>
    %68 = vector.extract_strided_slice %57 {offsets = [0, 32], sizes = [2, 32], strides = [1, 1]} : vector<2x96xf32> to vector<2x32xf32>
    %69 = arith.addf %67, %68 : vector<2x32xf32>
    %70 = arith.negf %69 : vector<2x32xf32>
    %71 = math.exp %70 : vector<2x32xf32>
    %cst_16 = arith.constant 1.000000e+00 : f32
    %72 = vector.broadcast %cst_16 : f32 to vector<2x32xf32>
    %73 = arith.addf %72, %71 : vector<2x32xf32>
    %74 = arith.divf %72, %73 : vector<2x32xf32>
    %75 = vector.extract_strided_slice %56 {offsets = [0, 64], sizes = [2, 32], strides = [1, 1]} : vector<2x96xf32> to vector<2x32xf32>
    %76 = vector.extract_strided_slice %57 {offsets = [0, 64], sizes = [2, 32], strides = [1, 1]} : vector<2x96xf32> to vector<2x32xf32>
    %77 = arith.mulf %66, %76 : vector<2x32xf32>
    %78 = arith.addf %75, %77 : vector<2x32xf32>
    %79 = math.tanh %78 : vector<2x32xf32>
    %cst_17 = arith.constant 1.000000e+00 : f32
    %80 = vector.broadcast %cst_17 : f32 to vector<2x32xf32>
    %81 = arith.subf %80, %74 : vector<2x32xf32>
    %82 = arith.mulf %81, %79 : vector<2x32xf32>
    %83 = arith.mulf %74, %58 : vector<2x32xf32>
    %84 = arith.addf %82, %83 : vector<2x32xf32>
    %85 = vector.extract_strided_slice %9 {offsets = [0, 0], sizes = [2, 1], strides = [1, 1]} : vector<14x1xf32> to vector<2x1xf32>
    %86 = vector.extract_strided_slice %9 {offsets = [12, 0], sizes = [2, 1], strides = [1, 1]} : vector<14x1xf32> to vector<2x1xf32>
    %87 = vector.broadcast %85 : vector<2x1xf32> to vector<2x32xf32>
    %88 = arith.mulf %87, %55 : vector<2x32xf32>
    %cst_18 = arith.constant 1.000000e+00 : f32
    %89 = vector.broadcast %cst_18 : f32 to vector<2x1xf32>
    %90 = arith.subf %89, %85 : vector<2x1xf32>
    %91 = vector.extract_strided_slice %23 {offsets = [0, 0], sizes = [2, 32], strides = [1, 1]} : vector<2x64xf32> to vector<2x32xf32>
    %92 = vector.broadcast %90 : vector<2x1xf32> to vector<2x32xf32>
    %93 = arith.mulf %92, %91 : vector<2x32xf32>
    %94 = arith.addf %88, %93 : vector<2x32xf32>
    %95 = vector.broadcast %86 : vector<2x1xf32> to vector<2x32xf32>
    %96 = arith.mulf %95, %84 : vector<2x32xf32>
    %cst_19 = arith.constant 1.000000e+00 : f32
    %97 = vector.broadcast %cst_19 : f32 to vector<2x1xf32>
    %98 = arith.subf %97, %86 : vector<2x1xf32>
    %99 = vector.extract_strided_slice %23 {offsets = [0, 32], sizes = [2, 32], strides = [1, 1]} : vector<2x64xf32> to vector<2x32xf32>
    %100 = vector.broadcast %98 : vector<2x1xf32> to vector<2x32xf32>
    %101 = arith.mulf %100, %99 : vector<2x32xf32>
    %102 = arith.addf %96, %101 : vector<2x32xf32>
    %103 = tpu.concatenate %94, %102 in 1 : vector<2x32xf32>, vector<2x32xf32> -> vector<2x64xf32>
    %c0_20 = arith.constant 0 : index
    %c0_21 = arith.constant 0 : index
    %104 = vector.load %arg11[%c0_20, %c0_21] : memref<14x64xf32, #tpu.memory_space<vmem>>, vector<2x32xf32>
    tpu.vector_store %arg11[%c0_20, %c0_21], %94 {strides = array<i32>} : memref<14x64xf32, #tpu.memory_space<vmem>>, vector<2x32xf32>,
    %c12 = arith.constant 12 : index
    %c32 = arith.constant 32 : index
    %105 = vector.load %arg11[%c12, %c32] : memref<14x64xf32, #tpu.memory_space<vmem>>, vector<2x32xf32>
    tpu.vector_store %arg11[%c12, %c32], %102 {strides = array<i32>} : memref<14x64xf32, #tpu.memory_space<vmem>>, vector<2x32xf32>,
    %cst_22 = arith.constant dense<0.000000e+00> : vector<2x192xf32>
    %106 = tpu.matmul %103, %22, %cst_22 {dimension_numbers = #tpu.dot_dimension_numbers<[1], [0], [0], [1], [0, 0, 1, 1], [], []>} : vector<2x64xf32>, vector<64x192xf32>, vector<2x192xf32> -> vector<2x192xf32>
    %107 = vector.broadcast %17 : vector<1x192xf32> to vector<2x192xf32>
    %108 = arith.addf %106, %107 : vector<2x192xf32>
    %109 = vector.extract_strided_slice %21 {offsets = [2, 0], sizes = [2, 96], strides = [1, 1]} : vector<14x192xf32> to vector<2x96xf32>
    %110 = vector.extract_strided_slice %108 {offsets = [0, 0], sizes = [2, 96], strides = [1, 1]} : vector<2x192xf32> to vector<2x96xf32>
    %111 = vector.extract_strided_slice %103 {offsets = [0, 0], sizes = [2, 32], strides = [1, 1]} : vector<2x64xf32> to vector<2x32xf32>
    %112 = vector.extract_strided_slice %109 {offsets = [0, 0], sizes = [2, 32], strides = [1, 1]} : vector<2x96xf32> to vector<2x32xf32>
    %113 = vector.extract_strided_slice %110 {offsets = [0, 0], sizes = [2, 32], strides = [1, 1]} : vector<2x96xf32> to vector<2x32xf32>
    %114 = arith.addf %112, %113 : vector<2x32xf32>
    %115 = arith.negf %114 : vector<2x32xf32>
    %116 = math.exp %115 : vector<2x32xf32>
    %cst_23 = arith.constant 1.000000e+00 : f32
    %117 = vector.broadcast %cst_23 : f32 to vector<2x32xf32>
    %118 = arith.addf %117, %116 : vector<2x32xf32>
    %119 = arith.divf %117, %118 : vector<2x32xf32>
    %120 = vector.extract_strided_slice %109 {offsets = [0, 32], sizes = [2, 32], strides = [1, 1]} : vector<2x96xf32> to vector<2x32xf32>
    %121 = vector.extract_strided_slice %110 {offsets = [0, 32], sizes = [2, 32], strides = [1, 1]} : vector<2x96xf32> to vector<2x32xf32>
    %122 = arith.addf %120, %121 : vector<2x32xf32>
    %123 = arith.negf %122 : vector<2x32xf32>
    %124 = math.exp %123 : vector<2x32xf32>
    %cst_24 = arith.constant 1.000000e+00 : f32
    %125 = vector.broadcast %cst_24 : f32 to vector<2x32xf32>
    %126 = arith.addf %125, %124 : vector<2x32xf32>
    %127 = arith.divf %125, %126 : vector<2x32xf32>
    %128 = vector.extract_strided_slice %109 {offsets = [0, 64], sizes = [2, 32], strides = [1, 1]} : vector<2x96xf32> to vector<2x32xf32>
    %129 = vector.extract_strided_slice %110 {offsets = [0, 64], sizes = [2, 32], strides = [1, 1]} : vector<2x96xf32> to vector<2x32xf32>
    %130 = arith.mulf %119, %129 : vector<2x32xf32>
    %131 = arith.addf %128, %130 : vector<2x32xf32>
    %132 = math.tanh %131 : vector<2x32xf32>
    %cst_25 = arith.constant 1.000000e+00 : f32
    %133 = vector.broadcast %cst_25 : f32 to vector<2x32xf32>
    %134 = arith.subf %133, %127 : vector<2x32xf32>
    %135 = arith.mulf %134, %132 : vector<2x32xf32>
    %136 = arith.mulf %127, %111 : vector<2x32xf32>
    %137 = arith.addf %135, %136 : vector<2x32xf32>
    %138 = vector.extract_strided_slice %21 {offsets = [10, 96], sizes = [2, 96], strides = [1, 1]} : vector<14x192xf32> to vector<2x96xf32>
    %139 = vector.extract_strided_slice %108 {offsets = [0, 96], sizes = [2, 96], strides = [1, 1]} : vector<2x192xf32> to vector<2x96xf32>
    %140 = vector.extract_strided_slice %103 {offsets = [0, 32], sizes = [2, 32], strides = [1, 1]} : vector<2x64xf32> to vector<2x32xf32>
    %141 = vector.extract_strided_slice %138 {offsets = [0, 0], sizes = [2, 32], strides = [1, 1]} : vector<2x96xf32> to vector<2x32xf32>
    %142 = vector.extract_strided_slice %139 {offsets = [0, 0], sizes = [2, 32], strides = [1, 1]} : vector<2x96xf32> to vector<2x32xf32>
    %143 = arith.addf %141, %142 : vector<2x32xf32>
    %144 = arith.negf %143 : vector<2x32xf32>
    %145 = math.exp %144 : vector<2x32xf32>
    %cst_26 = arith.constant 1.000000e+00 : f32
    %146 = vector.broadcast %cst_26 : f32 to vector<2x32xf32>
    %147 = arith.addf %146, %145 : vector<2x32xf32>
    %148 = arith.divf %146, %147 : vector<2x32xf32>
    %149 = vector.extract_strided_slice %138 {offsets = [0, 32], sizes = [2, 32], strides = [1, 1]} : vector<2x96xf32> to vector<2x32xf32>
    %150 = vector.extract_strided_slice %139 {offsets = [0, 32], sizes = [2, 32], strides = [1, 1]} : vector<2x96xf32> to vector<2x32xf32>
    %151 = arith.addf %149, %150 : vector<2x32xf32>
    %152 = arith.negf %151 : vector<2x32xf32>
    %153 = math.exp %152 : vector<2x32xf32>
    %cst_27 = arith.constant 1.000000e+00 : f32
    %154 = vector.broadcast %cst_27 : f32 to vector<2x32xf32>
    %155 = arith.addf %154, %153 : vector<2x32xf32>
    %156 = arith.divf %154, %155 : vector<2x32xf32>
    %157 = vector.extract_strided_slice %138 {offsets = [0, 64], sizes = [2, 32], strides = [1, 1]} : vector<2x96xf32> to vector<2x32xf32>
    %158 = vector.extract_strided_slice %139 {offsets = [0, 64], sizes = [2, 32], strides = [1, 1]} : vector<2x96xf32> to vector<2x32xf32>
    %159 = arith.mulf %148, %158 : vector<2x32xf32>
    %160 = arith.addf %157, %159 : vector<2x32xf32>
    %161 = math.tanh %160 : vector<2x32xf32>
    %cst_28 = arith.constant 1.000000e+00 : f32
    %162 = vector.broadcast %cst_28 : f32 to vector<2x32xf32>
    %163 = arith.subf %162, %156 : vector<2x32xf32>
    %164 = arith.mulf %163, %161 : vector<2x32xf32>
    %165 = arith.mulf %156, %140 : vector<2x32xf32>
    %166 = arith.addf %164, %165 : vector<2x32xf32>
    %167 = vector.extract_strided_slice %9 {offsets = [2, 0], sizes = [2, 1], strides = [1, 1]} : vector<14x1xf32> to vector<2x1xf32>
    %168 = vector.extract_strided_slice %9 {offsets = [10, 0], sizes = [2, 1], strides = [1, 1]} : vector<14x1xf32> to vector<2x1xf32>
    %169 = vector.broadcast %167 : vector<2x1xf32> to vector<2x32xf32>
    %170 = arith.mulf %169, %137 : vector<2x32xf32>
    %cst_29 = arith.constant 1.000000e+00 : f32
    %171 = vector.broadcast %cst_29 : f32 to vector<2x1xf32>
    %172 = arith.subf %171, %167 : vector<2x1xf32>
    %173 = vector.extract_strided_slice %103 {offsets = [0, 0], sizes = [2, 32], strides = [1, 1]} : vector<2x64xf32> to vector<2x32xf32>
    %174 = vector.broadcast %172 : vector<2x1xf32> to vector<2x32xf32>
    %175 = arith.mulf %174, %173 : vector<2x32xf32>
    %176 = arith.addf %170, %175 : vector<2x32xf32>
    %177 = vector.broadcast %168 : vector<2x1xf32> to vector<2x32xf32>
    %178 = arith.mulf %177, %166 : vector<2x32xf32>
    %cst_30 = arith.constant 1.000000e+00 : f32
    %179 = vector.broadcast %cst_30 : f32 to vector<2x1xf32>
    %180 = arith.subf %179, %168 : vector<2x1xf32>
    %181 = vector.extract_strided_slice %103 {offsets = [0, 32], sizes = [2, 32], strides = [1, 1]} : vector<2x64xf32> to vector<2x32xf32>
    %182 = vector.broadcast %180 : vector<2x1xf32> to vector<2x32xf32>
    %183 = arith.mulf %182, %181 : vector<2x32xf32>
    %184 = arith.addf %178, %183 : vector<2x32xf32>
    %185 = tpu.concatenate %176, %184 in 1 : vector<2x32xf32>, vector<2x32xf32> -> vector<2x64xf32>
    %c2 = arith.constant 2 : index
    %c0_31 = arith.constant 0 : index
    %186 = vector.load %arg11[%c2, %c0_31] : memref<14x64xf32, #tpu.memory_space<vmem>>, vector<2x32xf32>
    tpu.vector_store %arg11[%c2, %c0_31], %176 {strides = array<i32>} : memref<14x64xf32, #tpu.memory_space<vmem>>, vector<2x32xf32>,
    %c10 = arith.constant 10 : index
    %c32_32 = arith.constant 32 : index
    %187 = vector.load %arg11[%c10, %c32_32] : memref<14x64xf32, #tpu.memory_space<vmem>>, vector<2x32xf32>
    tpu.vector_store %arg11[%c10, %c32_32], %184 {strides = array<i32>} : memref<14x64xf32, #tpu.memory_space<vmem>>, vector<2x32xf32>,
    %cst_33 = arith.constant dense<0.000000e+00> : vector<2x192xf32>
    %188 = tpu.matmul %185, %22, %cst_33 {dimension_numbers = #tpu.dot_dimension_numbers<[1], [0], [0], [1], [0, 0, 1, 1], [], []>} : vector<2x64xf32>, vector<64x192xf32>, vector<2x192xf32> -> vector<2x192xf32>
    %189 = vector.broadcast %17 : vector<1x192xf32> to vector<2x192xf32>
    %190 = arith.addf %188, %189 : vector<2x192xf32>
    %191 = vector.extract_strided_slice %21 {offsets = [4, 0], sizes = [2, 96], strides = [1, 1]} : vector<14x192xf32> to vector<2x96xf32>
    %192 = vector.extract_strided_slice %190 {offsets = [0, 0], sizes = [2, 96], strides = [1, 1]} : vector<2x192xf32> to vector<2x96xf32>
    %193 = vector.extract_strided_slice %185 {offsets = [0, 0], sizes = [2, 32], strides = [1, 1]} : vector<2x64xf32> to vector<2x32xf32>
    %194 = vector.extract_strided_slice %191 {offsets = [0, 0], sizes = [2, 32], strides = [1, 1]} : vector<2x96xf32> to vector<2x32xf32>
    %195 = vector.extract_strided_slice %192 {offsets = [0, 0], sizes = [2, 32], strides = [1, 1]} : vector<2x96xf32> to vector<2x32xf32>
    %196 = arith.addf %194, %195 : vector<2x32xf32>
    %197 = arith.negf %196 : vector<2x32xf32>
    %198 = math.exp %197 : vector<2x32xf32>
    %cst_34 = arith.constant 1.000000e+00 : f32
    %199 = vector.broadcast %cst_34 : f32 to vector<2x32xf32>
    %200 = arith.addf %199, %198 : vector<2x32xf32>
    %201 = arith.divf %199, %200 : vector<2x32xf32>
    %202 = vector.extract_strided_slice %191 {offsets = [0, 32], sizes = [2, 32], strides = [1, 1]} : vector<2x96xf32> to vector<2x32xf32>
    %203 = vector.extract_strided_slice %192 {offsets = [0, 32], sizes = [2, 32], strides = [1, 1]} : vector<2x96xf32> to vector<2x32xf32>
    %204 = arith.addf %202, %203 : vector<2x32xf32>
    %205 = arith.negf %204 : vector<2x32xf32>
    %206 = math.exp %205 : vector<2x32xf32>
    %cst_35 = arith.constant 1.000000e+00 : f32
    %207 = vector.broadcast %cst_35 : f32 to vector<2x32xf32>
    %208 = arith.addf %207, %206 : vector<2x32xf32>
    %209 = arith.divf %207, %208 : vector<2x32xf32>
    %210 = vector.extract_strided_slice %191 {offsets = [0, 64], sizes = [2, 32], strides = [1, 1]} : vector<2x96xf32> to vector<2x32xf32>
    %211 = vector.extract_strided_slice %192 {offsets = [0, 64], sizes = [2, 32], strides = [1, 1]} : vector<2x96xf32> to vector<2x32xf32>
    %212 = arith.mulf %201, %211 : vector<2x32xf32>
    %213 = arith.addf %210, %212 : vector<2x32xf32>
    %214 = math.tanh %213 : vector<2x32xf32>
    %cst_36 = arith.constant 1.000000e+00 : f32
    %215 = vector.broadcast %cst_36 : f32 to vector<2x32xf32>
    %216 = arith.subf %215, %209 : vector<2x32xf32>
    %217 = arith.mulf %216, %214 : vector<2x32xf32>
    %218 = arith.mulf %209, %193 : vector<2x32xf32>
    %219 = arith.addf %217, %218 : vector<2x32xf32>
    %220 = vector.extract_strided_slice %21 {offsets = [8, 96], sizes = [2, 96], strides = [1, 1]} : vector<14x192xf32> to vector<2x96xf32>
    %221 = vector.extract_strided_slice %190 {offsets = [0, 96], sizes = [2, 96], strides = [1, 1]} : vector<2x192xf32> to vector<2x96xf32>
    %222 = vector.extract_strided_slice %185 {offsets = [0, 32], sizes = [2, 32], strides = [1, 1]} : vector<2x64xf32> to vector<2x32xf32>
    %223 = vector.extract_strided_slice %220 {offsets = [0, 0], sizes = [2, 32], strides = [1, 1]} : vector<2x96xf32> to vector<2x32xf32>
    %224 = vector.extract_strided_slice %221 {offsets = [0, 0], sizes = [2, 32], strides = [1, 1]} : vector<2x96xf32> to vector<2x32xf32>
    %225 = arith.addf %223, %224 : vector<2x32xf32>
    %226 = arith.negf %225 : vector<2x32xf32>
    %227 = math.exp %226 : vector<2x32xf32>
    %cst_37 = arith.constant 1.000000e+00 : f32
    %228 = vector.broadcast %cst_37 : f32 to vector<2x32xf32>
    %229 = arith.addf %228, %227 : vector<2x32xf32>
    %230 = arith.divf %228, %229 : vector<2x32xf32>
    %231 = vector.extract_strided_slice %220 {offsets = [0, 32], sizes = [2, 32], strides = [1, 1]} : vector<2x96xf32> to vector<2x32xf32>
    %232 = vector.extract_strided_slice %221 {offsets = [0, 32], sizes = [2, 32], strides = [1, 1]} : vector<2x96xf32> to vector<2x32xf32>
    %233 = arith.addf %231, %232 : vector<2x32xf32>
    %234 = arith.negf %233 : vector<2x32xf32>
    %235 = math.exp %234 : vector<2x32xf32>
    %cst_38 = arith.constant 1.000000e+00 : f32
    %236 = vector.broadcast %cst_38 : f32 to vector<2x32xf32>
    %237 = arith.addf %236, %235 : vector<2x32xf32>
    %238 = arith.divf %236, %237 : vector<2x32xf32>
    %239 = vector.extract_strided_slice %220 {offsets = [0, 64], sizes = [2, 32], strides = [1, 1]} : vector<2x96xf32> to vector<2x32xf32>
    %240 = vector.extract_strided_slice %221 {offsets = [0, 64], sizes = [2, 32], strides = [1, 1]} : vector<2x96xf32> to vector<2x32xf32>
    %241 = arith.mulf %230, %240 : vector<2x32xf32>
    %242 = arith.addf %239, %241 : vector<2x32xf32>
    %243 = math.tanh %242 : vector<2x32xf32>
    %cst_39 = arith.constant 1.000000e+00 : f32
    %244 = vector.broadcast %cst_39 : f32 to vector<2x32xf32>
    %245 = arith.subf %244, %238 : vector<2x32xf32>
    %246 = arith.mulf %245, %243 : vector<2x32xf32>
    %247 = arith.mulf %238, %222 : vector<2x32xf32>
    %248 = arith.addf %246, %247 : vector<2x32xf32>
    %249 = vector.extract_strided_slice %9 {offsets = [4, 0], sizes = [2, 1], strides = [1, 1]} : vector<14x1xf32> to vector<2x1xf32>
    %250 = vector.extract_strided_slice %9 {offsets = [8, 0], sizes = [2, 1], strides = [1, 1]} : vector<14x1xf32> to vector<2x1xf32>
    %251 = vector.broadcast %249 : vector<2x1xf32> to vector<2x32xf32>
    %252 = arith.mulf %251, %219 : vector<2x32xf32>
    %cst_40 = arith.constant 1.000000e+00 : f32
    %253 = vector.broadcast %cst_40 : f32 to vector<2x1xf32>
    %254 = arith.subf %253, %249 : vector<2x1xf32>
    %255 = vector.extract_strided_slice %185 {offsets = [0, 0], sizes = [2, 32], strides = [1, 1]} : vector<2x64xf32> to vector<2x32xf32>
    %256 = vector.broadcast %254 : vector<2x1xf32> to vector<2x32xf32>
    %257 = arith.mulf %256, %255 : vector<2x32xf32>
    %258 = arith.addf %252, %257 : vector<2x32xf32>
    %259 = vector.broadcast %250 : vector<2x1xf32> to vector<2x32xf32>
    %260 = arith.mulf %259, %248 : vector<2x32xf32>
    %cst_41 = arith.constant 1.000000e+00 : f32
    %261 = vector.broadcast %cst_41 : f32 to vector<2x1xf32>
    %262 = arith.subf %261, %250 : vector<2x1xf32>
    %263 = vector.extract_strided_slice %185 {offsets = [0, 32], sizes = [2, 32], strides = [1, 1]} : vector<2x64xf32> to vector<2x32xf32>
    %264 = vector.broadcast %262 : vector<2x1xf32> to vector<2x32xf32>
    %265 = arith.mulf %264, %263 : vector<2x32xf32>
    %266 = arith.addf %260, %265 : vector<2x32xf32>
    %267 = tpu.concatenate %258, %266 in 1 : vector<2x32xf32>, vector<2x32xf32> -> vector<2x64xf32>
    %c4 = arith.constant 4 : index
    %c0_42 = arith.constant 0 : index
    %268 = vector.load %arg11[%c4, %c0_42] : memref<14x64xf32, #tpu.memory_space<vmem>>, vector<2x32xf32>
    tpu.vector_store %arg11[%c4, %c0_42], %258 {strides = array<i32>} : memref<14x64xf32, #tpu.memory_space<vmem>>, vector<2x32xf32>,
    %c8 = arith.constant 8 : index
    %c32_43 = arith.constant 32 : index
    %269 = vector.load %arg11[%c8, %c32_43] : memref<14x64xf32, #tpu.memory_space<vmem>>, vector<2x32xf32>
    tpu.vector_store %arg11[%c8, %c32_43], %266 {strides = array<i32>} : memref<14x64xf32, #tpu.memory_space<vmem>>, vector<2x32xf32>,
    %cst_44 = arith.constant dense<0.000000e+00> : vector<2x192xf32>
    %270 = tpu.matmul %267, %22, %cst_44 {dimension_numbers = #tpu.dot_dimension_numbers<[1], [0], [0], [1], [0, 0, 1, 1], [], []>} : vector<2x64xf32>, vector<64x192xf32>, vector<2x192xf32> -> vector<2x192xf32>
    %271 = vector.broadcast %17 : vector<1x192xf32> to vector<2x192xf32>
    %272 = arith.addf %270, %271 : vector<2x192xf32>
    %273 = vector.extract_strided_slice %21 {offsets = [6, 0], sizes = [2, 96], strides = [1, 1]} : vector<14x192xf32> to vector<2x96xf32>
    %274 = vector.extract_strided_slice %272 {offsets = [0, 0], sizes = [2, 96], strides = [1, 1]} : vector<2x192xf32> to vector<2x96xf32>
    %275 = vector.extract_strided_slice %267 {offsets = [0, 0], sizes = [2, 32], strides = [1, 1]} : vector<2x64xf32> to vector<2x32xf32>
    %276 = vector.extract_strided_slice %273 {offsets = [0, 0], sizes = [2, 32], strides = [1, 1]} : vector<2x96xf32> to vector<2x32xf32>
    %277 = vector.extract_strided_slice %274 {offsets = [0, 0], sizes = [2, 32], strides = [1, 1]} : vector<2x96xf32> to vector<2x32xf32>
    %278 = arith.addf %276, %277 : vector<2x32xf32>
    %279 = arith.negf %278 : vector<2x32xf32>
    %280 = math.exp %279 : vector<2x32xf32>
    %cst_45 = arith.constant 1.000000e+00 : f32
    %281 = vector.broadcast %cst_45 : f32 to vector<2x32xf32>
    %282 = arith.addf %281, %280 : vector<2x32xf32>
    %283 = arith.divf %281, %282 : vector<2x32xf32>
    %284 = vector.extract_strided_slice %273 {offsets = [0, 32], sizes = [2, 32], strides = [1, 1]} : vector<2x96xf32> to vector<2x32xf32>
    %285 = vector.extract_strided_slice %274 {offsets = [0, 32], sizes = [2, 32], strides = [1, 1]} : vector<2x96xf32> to vector<2x32xf32>
    %286 = arith.addf %284, %285 : vector<2x32xf32>
    %287 = arith.negf %286 : vector<2x32xf32>
    %288 = math.exp %287 : vector<2x32xf32>
    %cst_46 = arith.constant 1.000000e+00 : f32
    %289 = vector.broadcast %cst_46 : f32 to vector<2x32xf32>
    %290 = arith.addf %289, %288 : vector<2x32xf32>
    %291 = arith.divf %289, %290 : vector<2x32xf32>
    %292 = vector.extract_strided_slice %273 {offsets = [0, 64], sizes = [2, 32], strides = [1, 1]} : vector<2x96xf32> to vector<2x32xf32>
    %293 = vector.extract_strided_slice %274 {offsets = [0, 64], sizes = [2, 32], strides = [1, 1]} : vector<2x96xf32> to vector<2x32xf32>
    %294 = arith.mulf %283, %293 : vector<2x32xf32>
    %295 = arith.addf %292, %294 : vector<2x32xf32>
    %296 = math.tanh %295 : vector<2x32xf32>
    %cst_47 = arith.constant 1.000000e+00 : f32
    %297 = vector.broadcast %cst_47 : f32 to vector<2x32xf32>
    %298 = arith.subf %297, %291 : vector<2x32xf32>
    %299 = arith.mulf %298, %296 : vector<2x32xf32>
    %300 = arith.mulf %291, %275 : vector<2x32xf32>
    %301 = arith.addf %299, %300 : vector<2x32xf32>
    %302 = vector.extract_strided_slice %21 {offsets = [6, 96], sizes = [2, 96], strides = [1, 1]} : vector<14x192xf32> to vector<2x96xf32>
    %303 = vector.extract_strided_slice %272 {offsets = [0, 96], sizes = [2, 96], strides = [1, 1]} : vector<2x192xf32> to vector<2x96xf32>
    %304 = vector.extract_strided_slice %267 {offsets = [0, 32], sizes = [2, 32], strides = [1, 1]} : vector<2x64xf32> to vector<2x32xf32>
    %305 = vector.extract_strided_slice %302 {offsets = [0, 0], sizes = [2, 32], strides = [1, 1]} : vector<2x96xf32> to vector<2x32xf32>
    %306 = vector.extract_strided_slice %303 {offsets = [0, 0], sizes = [2, 32], strides = [1, 1]} : vector<2x96xf32> to vector<2x32xf32>
    %307 = arith.addf %305, %306 : vector<2x32xf32>
    %308 = arith.negf %307 : vector<2x32xf32>
    %309 = math.exp %308 : vector<2x32xf32>
    %cst_48 = arith.constant 1.000000e+00 : f32
    %310 = vector.broadcast %cst_48 : f32 to vector<2x32xf32>
    %311 = arith.addf %310, %309 : vector<2x32xf32>
    %312 = arith.divf %310, %311 : vector<2x32xf32>
    %313 = vector.extract_strided_slice %302 {offsets = [0, 32], sizes = [2, 32], strides = [1, 1]} : vector<2x96xf32> to vector<2x32xf32>
    %314 = vector.extract_strided_slice %303 {offsets = [0, 32], sizes = [2, 32], strides = [1, 1]} : vector<2x96xf32> to vector<2x32xf32>
    %315 = arith.addf %313, %314 : vector<2x32xf32>
    %316 = arith.negf %315 : vector<2x32xf32>
    %317 = math.exp %316 : vector<2x32xf32>
    %cst_49 = arith.constant 1.000000e+00 : f32
    %318 = vector.broadcast %cst_49 : f32 to vector<2x32xf32>
    %319 = arith.addf %318, %317 : vector<2x32xf32>
    %320 = arith.divf %318, %319 : vector<2x32xf32>
    %321 = vector.extract_strided_slice %302 {offsets = [0, 64], sizes = [2, 32], strides = [1, 1]} : vector<2x96xf32> to vector<2x32xf32>
    %322 = vector.extract_strided_slice %303 {offsets = [0, 64], sizes = [2, 32], strides = [1, 1]} : vector<2x96xf32> to vector<2x32xf32>
    %323 = arith.mulf %312, %322 : vector<2x32xf32>
    %324 = arith.addf %321, %323 : vector<2x32xf32>
    %325 = math.tanh %324 : vector<2x32xf32>
    %cst_50 = arith.constant 1.000000e+00 : f32
    %326 = vector.broadcast %cst_50 : f32 to vector<2x32xf32>
    %327 = arith.subf %326, %320 : vector<2x32xf32>
    %328 = arith.mulf %327, %325 : vector<2x32xf32>
    %329 = arith.mulf %320, %304 : vector<2x32xf32>
    %330 = arith.addf %328, %329 : vector<2x32xf32>
    %331 = vector.extract_strided_slice %9 {offsets = [6, 0], sizes = [2, 1], strides = [1, 1]} : vector<14x1xf32> to vector<2x1xf32>
    %332 = vector.extract_strided_slice %9 {offsets = [6, 0], sizes = [2, 1], strides = [1, 1]} : vector<14x1xf32> to vector<2x1xf32>
    %333 = vector.broadcast %331 : vector<2x1xf32> to vector<2x32xf32>
    %334 = arith.mulf %333, %301 : vector<2x32xf32>
    %cst_51 = arith.constant 1.000000e+00 : f32
    %335 = vector.broadcast %cst_51 : f32 to vector<2x1xf32>
    %336 = arith.subf %335, %331 : vector<2x1xf32>
    %337 = vector.extract_strided_slice %267 {offsets = [0, 0], sizes = [2, 32], strides = [1, 1]} : vector<2x64xf32> to vector<2x32xf32>
    %338 = vector.broadcast %336 : vector<2x1xf32> to vector<2x32xf32>
    %339 = arith.mulf %338, %337 : vector<2x32xf32>
    %340 = arith.addf %334, %339 : vector<2x32xf32>
    %341 = vector.broadcast %332 : vector<2x1xf32> to vector<2x32xf32>
    %342 = arith.mulf %341, %330 : vector<2x32xf32>
    %cst_52 = arith.constant 1.000000e+00 : f32
    %343 = vector.broadcast %cst_52 : f32 to vector<2x1xf32>
    %344 = arith.subf %343, %332 : vector<2x1xf32>
    %345 = vector.extract_strided_slice %267 {offsets = [0, 32], sizes = [2, 32], strides = [1, 1]} : vector<2x64xf32> to vector<2x32xf32>
    %346 = vector.broadcast %344 : vector<2x1xf32> to vector<2x32xf32>
    %347 = arith.mulf %346, %345 : vector<2x32xf32>
    %348 = arith.addf %342, %347 : vector<2x32xf32>
    %349 = tpu.concatenate %340, %348 in 1 : vector<2x32xf32>, vector<2x32xf32> -> vector<2x64xf32>
    %c6 = arith.constant 6 : index
    %c0_53 = arith.constant 0 : index
    %350 = vector.load %arg11[%c6, %c0_53] : memref<14x64xf32, #tpu.memory_space<vmem>>, vector<2x32xf32>
    tpu.vector_store %arg11[%c6, %c0_53], %340 {strides = array<i32>} : memref<14x64xf32, #tpu.memory_space<vmem>>, vector<2x32xf32>,
    %c6_54 = arith.constant 6 : index
    %c32_55 = arith.constant 32 : index
    %351 = vector.load %arg11[%c6_54, %c32_55] : memref<14x64xf32, #tpu.memory_space<vmem>>, vector<2x32xf32>
    tpu.vector_store %arg11[%c6_54, %c32_55], %348 {strides = array<i32>} : memref<14x64xf32, #tpu.memory_space<vmem>>, vector<2x32xf32>,
    %cst_56 = arith.constant dense<0.000000e+00> : vector<2x192xf32>
    %352 = tpu.matmul %349, %22, %cst_56 {dimension_numbers = #tpu.dot_dimension_numbers<[1], [0], [0], [1], [0, 0, 1, 1], [], []>} : vector<2x64xf32>, vector<64x192xf32>, vector<2x192xf32> -> vector<2x192xf32>
    %353 = vector.broadcast %17 : vector<1x192xf32> to vector<2x192xf32>
    %354 = arith.addf %352, %353 : vector<2x192xf32>
    %355 = vector.extract_strided_slice %21 {offsets = [8, 0], sizes = [2, 96], strides = [1, 1]} : vector<14x192xf32> to vector<2x96xf32>
    %356 = vector.extract_strided_slice %354 {offsets = [0, 0], sizes = [2, 96], strides = [1, 1]} : vector<2x192xf32> to vector<2x96xf32>
    %357 = vector.extract_strided_slice %349 {offsets = [0, 0], sizes = [2, 32], strides = [1, 1]} : vector<2x64xf32> to vector<2x32xf32>
    %358 = vector.extract_strided_slice %355 {offsets = [0, 0], sizes = [2, 32], strides = [1, 1]} : vector<2x96xf32> to vector<2x32xf32>
    %359 = vector.extract_strided_slice %356 {offsets = [0, 0], sizes = [2, 32], strides = [1, 1]} : vector<2x96xf32> to vector<2x32xf32>
    %360 = arith.addf %358, %359 : vector<2x32xf32>
    %361 = arith.negf %360 : vector<2x32xf32>
    %362 = math.exp %361 : vector<2x32xf32>
    %cst_57 = arith.constant 1.000000e+00 : f32
    %363 = vector.broadcast %cst_57 : f32 to vector<2x32xf32>
    %364 = arith.addf %363, %362 : vector<2x32xf32>
    %365 = arith.divf %363, %364 : vector<2x32xf32>
    %366 = vector.extract_strided_slice %355 {offsets = [0, 32], sizes = [2, 32], strides = [1, 1]} : vector<2x96xf32> to vector<2x32xf32>
    %367 = vector.extract_strided_slice %356 {offsets = [0, 32], sizes = [2, 32], strides = [1, 1]} : vector<2x96xf32> to vector<2x32xf32>
    %368 = arith.addf %366, %367 : vector<2x32xf32>
    %369 = arith.negf %368 : vector<2x32xf32>
    %370 = math.exp %369 : vector<2x32xf32>
    %cst_58 = arith.constant 1.000000e+00 : f32
    %371 = vector.broadcast %cst_58 : f32 to vector<2x32xf32>
    %372 = arith.addf %371, %370 : vector<2x32xf32>
    %373 = arith.divf %371, %372 : vector<2x32xf32>
    %374 = vector.extract_strided_slice %355 {offsets = [0, 64], sizes = [2, 32], strides = [1, 1]} : vector<2x96xf32> to vector<2x32xf32>
    %375 = vector.extract_strided_slice %356 {offsets = [0, 64], sizes = [2, 32], strides = [1, 1]} : vector<2x96xf32> to vector<2x32xf32>
    %376 = arith.mulf %365, %375 : vector<2x32xf32>
    %377 = arith.addf %374, %376 : vector<2x32xf32>
    %378 = math.tanh %377 : vector<2x32xf32>
    %cst_59 = arith.constant 1.000000e+00 : f32
    %379 = vector.broadcast %cst_59 : f32 to vector<2x32xf32>
    %380 = arith.subf %379, %373 : vector<2x32xf32>
    %381 = arith.mulf %380, %378 : vector<2x32xf32>
    %382 = arith.mulf %373, %357 : vector<2x32xf32>
    %383 = arith.addf %381, %382 : vector<2x32xf32>
    %384 = vector.extract_strided_slice %21 {offsets = [4, 96], sizes = [2, 96], strides = [1, 1]} : vector<14x192xf32> to vector<2x96xf32>
    %385 = vector.extract_strided_slice %354 {offsets = [0, 96], sizes = [2, 96], strides = [1, 1]} : vector<2x192xf32> to vector<2x96xf32>
    %386 = vector.extract_strided_slice %349 {offsets = [0, 32], sizes = [2, 32], strides = [1, 1]} : vector<2x64xf32> to vector<2x32xf32>
    %387 = vector.extract_strided_slice %384 {offsets = [0, 0], sizes = [2, 32], strides = [1, 1]} : vector<2x96xf32> to vector<2x32xf32>
    %388 = vector.extract_strided_slice %385 {offsets = [0, 0], sizes = [2, 32], strides = [1, 1]} : vector<2x96xf32> to vector<2x32xf32>
    %389 = arith.addf %387, %388 : vector<2x32xf32>
    %390 = arith.negf %389 : vector<2x32xf32>
    %391 = math.exp %390 : vector<2x32xf32>
    %cst_60 = arith.constant 1.000000e+00 : f32
    %392 = vector.broadcast %cst_60 : f32 to vector<2x32xf32>
    %393 = arith.addf %392, %391 : vector<2x32xf32>
    %394 = arith.divf %392, %393 : vector<2x32xf32>
    %395 = vector.extract_strided_slice %384 {offsets = [0, 32], sizes = [2, 32], strides = [1, 1]} : vector<2x96xf32> to vector<2x32xf32>
    %396 = vector.extract_strided_slice %385 {offsets = [0, 32], sizes = [2, 32], strides = [1, 1]} : vector<2x96xf32> to vector<2x32xf32>
    %397 = arith.addf %395, %396 : vector<2x32xf32>
    %398 = arith.negf %397 : vector<2x32xf32>
    %399 = math.exp %398 : vector<2x32xf32>
    %cst_61 = arith.constant 1.000000e+00 : f32
    %400 = vector.broadcast %cst_61 : f32 to vector<2x32xf32>
    %401 = arith.addf %400, %399 : vector<2x32xf32>
    %402 = arith.divf %400, %401 : vector<2x32xf32>
    %403 = vector.extract_strided_slice %384 {offsets = [0, 64], sizes = [2, 32], strides = [1, 1]} : vector<2x96xf32> to vector<2x32xf32>
    %404 = vector.extract_strided_slice %385 {offsets = [0, 64], sizes = [2, 32], strides = [1, 1]} : vector<2x96xf32> to vector<2x32xf32>
    %405 = arith.mulf %394, %404 : vector<2x32xf32>
    %406 = arith.addf %403, %405 : vector<2x32xf32>
    %407 = math.tanh %406 : vector<2x32xf32>
    %cst_62 = arith.constant 1.000000e+00 : f32
    %408 = vector.broadcast %cst_62 : f32 to vector<2x32xf32>
    %409 = arith.subf %408, %402 : vector<2x32xf32>
    %410 = arith.mulf %409, %407 : vector<2x32xf32>
    %411 = arith.mulf %402, %386 : vector<2x32xf32>
    %412 = arith.addf %410, %411 : vector<2x32xf32>
    %413 = vector.extract_strided_slice %9 {offsets = [8, 0], sizes = [2, 1], strides = [1, 1]} : vector<14x1xf32> to vector<2x1xf32>
    %414 = vector.extract_strided_slice %9 {offsets = [4, 0], sizes = [2, 1], strides = [1, 1]} : vector<14x1xf32> to vector<2x1xf32>
    %415 = vector.broadcast %413 : vector<2x1xf32> to vector<2x32xf32>
    %416 = arith.mulf %415, %383 : vector<2x32xf32>
    %cst_63 = arith.constant 1.000000e+00 : f32
    %417 = vector.broadcast %cst_63 : f32 to vector<2x1xf32>
    %418 = arith.subf %417, %413 : vector<2x1xf32>
    %419 = vector.extract_strided_slice %349 {offsets = [0, 0], sizes = [2, 32], strides = [1, 1]} : vector<2x64xf32> to vector<2x32xf32>
    %420 = vector.broadcast %418 : vector<2x1xf32> to vector<2x32xf32>
    %421 = arith.mulf %420, %419 : vector<2x32xf32>
    %422 = arith.addf %416, %421 : vector<2x32xf32>
    %423 = vector.broadcast %414 : vector<2x1xf32> to vector<2x32xf32>
    %424 = arith.mulf %423, %412 : vector<2x32xf32>
    %cst_64 = arith.constant 1.000000e+00 : f32
    %425 = vector.broadcast %cst_64 : f32 to vector<2x1xf32>
    %426 = arith.subf %425, %414 : vector<2x1xf32>
    %427 = vector.extract_strided_slice %349 {offsets = [0, 32], sizes = [2, 32], strides = [1, 1]} : vector<2x64xf32> to vector<2x32xf32>
    %428 = vector.broadcast %426 : vector<2x1xf32> to vector<2x32xf32>
    %429 = arith.mulf %428, %427 : vector<2x32xf32>
    %430 = arith.addf %424, %429 : vector<2x32xf32>
    %431 = tpu.concatenate %422, %430 in 1 : vector<2x32xf32>, vector<2x32xf32> -> vector<2x64xf32>
    %c8_65 = arith.constant 8 : index
    %c0_66 = arith.constant 0 : index
    %432 = vector.load %arg11[%c8_65, %c0_66] : memref<14x64xf32, #tpu.memory_space<vmem>>, vector<2x32xf32>
    tpu.vector_store %arg11[%c8_65, %c0_66], %422 {strides = array<i32>} : memref<14x64xf32, #tpu.memory_space<vmem>>, vector<2x32xf32>,
    %c4_67 = arith.constant 4 : index
    %c32_68 = arith.constant 32 : index
    %433 = vector.load %arg11[%c4_67, %c32_68] : memref<14x64xf32, #tpu.memory_space<vmem>>, vector<2x32xf32>
    tpu.vector_store %arg11[%c4_67, %c32_68], %430 {strides = array<i32>} : memref<14x64xf32, #tpu.memory_space<vmem>>, vector<2x32xf32>,
    %cst_69 = arith.constant dense<0.000000e+00> : vector<2x192xf32>
    %434 = tpu.matmul %431, %22, %cst_69 {dimension_numbers = #tpu.dot_dimension_numbers<[1], [0], [0], [1], [0, 0, 1, 1], [], []>} : vector<2x64xf32>, vector<64x192xf32>, vector<2x192xf32> -> vector<2x192xf32>
    %435 = vector.broadcast %17 : vector<1x192xf32> to vector<2x192xf32>
    %436 = arith.addf %434, %435 : vector<2x192xf32>
    %437 = vector.extract_strided_slice %21 {offsets = [10, 0], sizes = [2, 96], strides = [1, 1]} : vector<14x192xf32> to vector<2x96xf32>
    %438 = vector.extract_strided_slice %436 {offsets = [0, 0], sizes = [2, 96], strides = [1, 1]} : vector<2x192xf32> to vector<2x96xf32>
    %439 = vector.extract_strided_slice %431 {offsets = [0, 0], sizes = [2, 32], strides = [1, 1]} : vector<2x64xf32> to vector<2x32xf32>
    %440 = vector.extract_strided_slice %437 {offsets = [0, 0], sizes = [2, 32], strides = [1, 1]} : vector<2x96xf32> to vector<2x32xf32>
    %441 = vector.extract_strided_slice %438 {offsets = [0, 0], sizes = [2, 32], strides = [1, 1]} : vector<2x96xf32> to vector<2x32xf32>
    %442 = arith.addf %440, %441 : vector<2x32xf32>
    %443 = arith.negf %442 : vector<2x32xf32>
    %444 = math.exp %443 : vector<2x32xf32>
    %cst_70 = arith.constant 1.000000e+00 : f32
    %445 = vector.broadcast %cst_70 : f32 to vector<2x32xf32>
    %446 = arith.addf %445, %444 : vector<2x32xf32>
    %447 = arith.divf %445, %446 : vector<2x32xf32>
    %448 = vector.extract_strided_slice %437 {offsets = [0, 32], sizes = [2, 32], strides = [1, 1]} : vector<2x96xf32> to vector<2x32xf32>
    %449 = vector.extract_strided_slice %438 {offsets = [0, 32], sizes = [2, 32], strides = [1, 1]} : vector<2x96xf32> to vector<2x32xf32>
    %450 = arith.addf %448, %449 : vector<2x32xf32>
    %451 = arith.negf %450 : vector<2x32xf32>
    %452 = math.exp %451 : vector<2x32xf32>
    %cst_71 = arith.constant 1.000000e+00 : f32
    %453 = vector.broadcast %cst_71 : f32 to vector<2x32xf32>
    %454 = arith.addf %453, %452 : vector<2x32xf32>
    %455 = arith.divf %453, %454 : vector<2x32xf32>
    %456 = vector.extract_strided_slice %437 {offsets = [0, 64], sizes = [2, 32], strides = [1, 1]} : vector<2x96xf32> to vector<2x32xf32>
    %457 = vector.extract_strided_slice %438 {offsets = [0, 64], sizes = [2, 32], strides = [1, 1]} : vector<2x96xf32> to vector<2x32xf32>
    %458 = arith.mulf %447, %457 : vector<2x32xf32>
    %459 = arith.addf %456, %458 : vector<2x32xf32>
    %460 = math.tanh %459 : vector<2x32xf32>
    %cst_72 = arith.constant 1.000000e+00 : f32
    %461 = vector.broadcast %cst_72 : f32 to vector<2x32xf32>
    %462 = arith.subf %461, %455 : vector<2x32xf32>
    %463 = arith.mulf %462, %460 : vector<2x32xf32>
    %464 = arith.mulf %455, %439 : vector<2x32xf32>
    %465 = arith.addf %463, %464 : vector<2x32xf32>
    %466 = vector.extract_strided_slice %21 {offsets = [2, 96], sizes = [2, 96], strides = [1, 1]} : vector<14x192xf32> to vector<2x96xf32>
    %467 = vector.extract_strided_slice %436 {offsets = [0, 96], sizes = [2, 96], strides = [1, 1]} : vector<2x192xf32> to vector<2x96xf32>
    %468 = vector.extract_strided_slice %431 {offsets = [0, 32], sizes = [2, 32], strides = [1, 1]} : vector<2x64xf32> to vector<2x32xf32>
    %469 = vector.extract_strided_slice %466 {offsets = [0, 0], sizes = [2, 32], strides = [1, 1]} : vector<2x96xf32> to vector<2x32xf32>
    %470 = vector.extract_strided_slice %467 {offsets = [0, 0], sizes = [2, 32], strides = [1, 1]} : vector<2x96xf32> to vector<2x32xf32>
    %471 = arith.addf %469, %470 : vector<2x32xf32>
    %472 = arith.negf %471 : vector<2x32xf32>
    %473 = math.exp %472 : vector<2x32xf32>
    %cst_73 = arith.constant 1.000000e+00 : f32
    %474 = vector.broadcast %cst_73 : f32 to vector<2x32xf32>
    %475 = arith.addf %474, %473 : vector<2x32xf32>
    %476 = arith.divf %474, %475 : vector<2x32xf32>
    %477 = vector.extract_strided_slice %466 {offsets = [0, 32], sizes = [2, 32], strides = [1, 1]} : vector<2x96xf32> to vector<2x32xf32>
    %478 = vector.extract_strided_slice %467 {offsets = [0, 32], sizes = [2, 32], strides = [1, 1]} : vector<2x96xf32> to vector<2x32xf32>
    %479 = arith.addf %477, %478 : vector<2x32xf32>
    %480 = arith.negf %479 : vector<2x32xf32>
    %481 = math.exp %480 : vector<2x32xf32>
    %cst_74 = arith.constant 1.000000e+00 : f32
    %482 = vector.broadcast %cst_74 : f32 to vector<2x32xf32>
    %483 = arith.addf %482, %481 : vector<2x32xf32>
    %484 = arith.divf %482, %483 : vector<2x32xf32>
    %485 = vector.extract_strided_slice %466 {offsets = [0, 64], sizes = [2, 32], strides = [1, 1]} : vector<2x96xf32> to vector<2x32xf32>
    %486 = vector.extract_strided_slice %467 {offsets = [0, 64], sizes = [2, 32], strides = [1, 1]} : vector<2x96xf32> to vector<2x32xf32>
    %487 = arith.mulf %476, %486 : vector<2x32xf32>
    %488 = arith.addf %485, %487 : vector<2x32xf32>
    %489 = math.tanh %488 : vector<2x32xf32>
    %cst_75 = arith.constant 1.000000e+00 : f32
    %490 = vector.broadcast %cst_75 : f32 to vector<2x32xf32>
    %491 = arith.subf %490, %484 : vector<2x32xf32>
    %492 = arith.mulf %491, %489 : vector<2x32xf32>
    %493 = arith.mulf %484, %468 : vector<2x32xf32>
    %494 = arith.addf %492, %493 : vector<2x32xf32>
    %495 = vector.extract_strided_slice %9 {offsets = [10, 0], sizes = [2, 1], strides = [1, 1]} : vector<14x1xf32> to vector<2x1xf32>
    %496 = vector.extract_strided_slice %9 {offsets = [2, 0], sizes = [2, 1], strides = [1, 1]} : vector<14x1xf32> to vector<2x1xf32>
    %497 = vector.broadcast %495 : vector<2x1xf32> to vector<2x32xf32>
    %498 = arith.mulf %497, %465 : vector<2x32xf32>
    %cst_76 = arith.constant 1.000000e+00 : f32
    %499 = vector.broadcast %cst_76 : f32 to vector<2x1xf32>
    %500 = arith.subf %499, %495 : vector<2x1xf32>
    %501 = vector.extract_strided_slice %431 {offsets = [0, 0], sizes = [2, 32], strides = [1, 1]} : vector<2x64xf32> to vector<2x32xf32>
    %502 = vector.broadcast %500 : vector<2x1xf32> to vector<2x32xf32>
    %503 = arith.mulf %502, %501 : vector<2x32xf32>
    %504 = arith.addf %498, %503 : vector<2x32xf32>
    %505 = vector.broadcast %496 : vector<2x1xf32> to vector<2x32xf32>
    %506 = arith.mulf %505, %494 : vector<2x32xf32>
    %cst_77 = arith.constant 1.000000e+00 : f32
    %507 = vector.broadcast %cst_77 : f32 to vector<2x1xf32>
    %508 = arith.subf %507, %496 : vector<2x1xf32>
    %509 = vector.extract_strided_slice %431 {offsets = [0, 32], sizes = [2, 32], strides = [1, 1]} : vector<2x64xf32> to vector<2x32xf32>
    %510 = vector.broadcast %508 : vector<2x1xf32> to vector<2x32xf32>
    %511 = arith.mulf %510, %509 : vector<2x32xf32>
    %512 = arith.addf %506, %511 : vector<2x32xf32>
    %513 = tpu.concatenate %504, %512 in 1 : vector<2x32xf32>, vector<2x32xf32> -> vector<2x64xf32>
    %c10_78 = arith.constant 10 : index
    %c0_79 = arith.constant 0 : index
    %514 = vector.load %arg11[%c10_78, %c0_79] : memref<14x64xf32, #tpu.memory_space<vmem>>, vector<2x32xf32>
    tpu.vector_store %arg11[%c10_78, %c0_79], %504 {strides = array<i32>} : memref<14x64xf32, #tpu.memory_space<vmem>>, vector<2x32xf32>,
    %c2_80 = arith.constant 2 : index
    %c32_81 = arith.constant 32 : index
    %515 = vector.load %arg11[%c2_80, %c32_81] : memref<14x64xf32, #tpu.memory_space<vmem>>, vector<2x32xf32>
    tpu.vector_store %arg11[%c2_80, %c32_81], %512 {strides = array<i32>} : memref<14x64xf32, #tpu.memory_space<vmem>>, vector<2x32xf32>,
    %cst_82 = arith.constant dense<0.000000e+00> : vector<2x192xf32>
    %516 = tpu.matmul %513, %22, %cst_82 {dimension_numbers = #tpu.dot_dimension_numbers<[1], [0], [0], [1], [0, 0, 1, 1], [], []>} : vector<2x64xf32>, vector<64x192xf32>, vector<2x192xf32> -> vector<2x192xf32>
    %517 = vector.broadcast %17 : vector<1x192xf32> to vector<2x192xf32>
    %518 = arith.addf %516, %517 : vector<2x192xf32>
    %519 = vector.extract_strided_slice %21 {offsets = [12, 0], sizes = [2, 96], strides = [1, 1]} : vector<14x192xf32> to vector<2x96xf32>
    %520 = vector.extract_strided_slice %518 {offsets = [0, 0], sizes = [2, 96], strides = [1, 1]} : vector<2x192xf32> to vector<2x96xf32>
    %521 = vector.extract_strided_slice %513 {offsets = [0, 0], sizes = [2, 32], strides = [1, 1]} : vector<2x64xf32> to vector<2x32xf32>
    %522 = vector.extract_strided_slice %519 {offsets = [0, 0], sizes = [2, 32], strides = [1, 1]} : vector<2x96xf32> to vector<2x32xf32>
    %523 = vector.extract_strided_slice %520 {offsets = [0, 0], sizes = [2, 32], strides = [1, 1]} : vector<2x96xf32> to vector<2x32xf32>
    %524 = arith.addf %522, %523 : vector<2x32xf32>
    %525 = arith.negf %524 : vector<2x32xf32>
    %526 = math.exp %525 : vector<2x32xf32>
    %cst_83 = arith.constant 1.000000e+00 : f32
    %527 = vector.broadcast %cst_83 : f32 to vector<2x32xf32>
    %528 = arith.addf %527, %526 : vector<2x32xf32>
    %529 = arith.divf %527, %528 : vector<2x32xf32>
    %530 = vector.extract_strided_slice %519 {offsets = [0, 32], sizes = [2, 32], strides = [1, 1]} : vector<2x96xf32> to vector<2x32xf32>
    %531 = vector.extract_strided_slice %520 {offsets = [0, 32], sizes = [2, 32], strides = [1, 1]} : vector<2x96xf32> to vector<2x32xf32>
    %532 = arith.addf %530, %531 : vector<2x32xf32>
    %533 = arith.negf %532 : vector<2x32xf32>
    %534 = math.exp %533 : vector<2x32xf32>
    %cst_84 = arith.constant 1.000000e+00 : f32
    %535 = vector.broadcast %cst_84 : f32 to vector<2x32xf32>
    %536 = arith.addf %535, %534 : vector<2x32xf32>
    %537 = arith.divf %535, %536 : vector<2x32xf32>
    %538 = vector.extract_strided_slice %519 {offsets = [0, 64], sizes = [2, 32], strides = [1, 1]} : vector<2x96xf32> to vector<2x32xf32>
    %539 = vector.extract_strided_slice %520 {offsets = [0, 64], sizes = [2, 32], strides = [1, 1]} : vector<2x96xf32> to vector<2x32xf32>
    %540 = arith.mulf %529, %539 : vector<2x32xf32>
    %541 = arith.addf %538, %540 : vector<2x32xf32>
    %542 = math.tanh %541 : vector<2x32xf32>
    %cst_85 = arith.constant 1.000000e+00 : f32
    %543 = vector.broadcast %cst_85 : f32 to vector<2x32xf32>
    %544 = arith.subf %543, %537 : vector<2x32xf32>
    %545 = arith.mulf %544, %542 : vector<2x32xf32>
    %546 = arith.mulf %537, %521 : vector<2x32xf32>
    %547 = arith.addf %545, %546 : vector<2x32xf32>
    %548 = vector.extract_strided_slice %21 {offsets = [0, 96], sizes = [2, 96], strides = [1, 1]} : vector<14x192xf32> to vector<2x96xf32>
    %549 = vector.extract_strided_slice %518 {offsets = [0, 96], sizes = [2, 96], strides = [1, 1]} : vector<2x192xf32> to vector<2x96xf32>
    %550 = vector.extract_strided_slice %513 {offsets = [0, 32], sizes = [2, 32], strides = [1, 1]} : vector<2x64xf32> to vector<2x32xf32>
    %551 = vector.extract_strided_slice %548 {offsets = [0, 0], sizes = [2, 32], strides = [1, 1]} : vector<2x96xf32> to vector<2x32xf32>
    %552 = vector.extract_strided_slice %549 {offsets = [0, 0], sizes = [2, 32], strides = [1, 1]} : vector<2x96xf32> to vector<2x32xf32>
    %553 = arith.addf %551, %552 : vector<2x32xf32>
    %554 = arith.negf %553 : vector<2x32xf32>
    %555 = math.exp %554 : vector<2x32xf32>
    %cst_86 = arith.constant 1.000000e+00 : f32
    %556 = vector.broadcast %cst_86 : f32 to vector<2x32xf32>
    %557 = arith.addf %556, %555 : vector<2x32xf32>
    %558 = arith.divf %556, %557 : vector<2x32xf32>
    %559 = vector.extract_strided_slice %548 {offsets = [0, 32], sizes = [2, 32], strides = [1, 1]} : vector<2x96xf32> to vector<2x32xf32>
    %560 = vector.extract_strided_slice %549 {offsets = [0, 32], sizes = [2, 32], strides = [1, 1]} : vector<2x96xf32> to vector<2x32xf32>
    %561 = arith.addf %559, %560 : vector<2x32xf32>
    %562 = arith.negf %561 : vector<2x32xf32>
    %563 = math.exp %562 : vector<2x32xf32>
    %cst_87 = arith.constant 1.000000e+00 : f32
    %564 = vector.broadcast %cst_87 : f32 to vector<2x32xf32>
    %565 = arith.addf %564, %563 : vector<2x32xf32>
    %566 = arith.divf %564, %565 : vector<2x32xf32>
    %567 = vector.extract_strided_slice %548 {offsets = [0, 64], sizes = [2, 32], strides = [1, 1]} : vector<2x96xf32> to vector<2x32xf32>
    %568 = vector.extract_strided_slice %549 {offsets = [0, 64], sizes = [2, 32], strides = [1, 1]} : vector<2x96xf32> to vector<2x32xf32>
    %569 = arith.mulf %558, %568 : vector<2x32xf32>
    %570 = arith.addf %567, %569 : vector<2x32xf32>
    %571 = math.tanh %570 : vector<2x32xf32>
    %cst_88 = arith.constant 1.000000e+00 : f32
    %572 = vector.broadcast %cst_88 : f32 to vector<2x32xf32>
    %573 = arith.subf %572, %566 : vector<2x32xf32>
    %574 = arith.mulf %573, %571 : vector<2x32xf32>
    %575 = arith.mulf %566, %550 : vector<2x32xf32>
    %576 = arith.addf %574, %575 : vector<2x32xf32>
    %577 = vector.extract_strided_slice %9 {offsets = [12, 0], sizes = [2, 1], strides = [1, 1]} : vector<14x1xf32> to vector<2x1xf32>
    %578 = vector.extract_strided_slice %9 {offsets = [0, 0], sizes = [2, 1], strides = [1, 1]} : vector<14x1xf32> to vector<2x1xf32>
    %579 = vector.broadcast %577 : vector<2x1xf32> to vector<2x32xf32>
    %580 = arith.mulf %579, %547 : vector<2x32xf32>
    %cst_89 = arith.constant 1.000000e+00 : f32
    %581 = vector.broadcast %cst_89 : f32 to vector<2x1xf32>
    %582 = arith.subf %581, %577 : vector<2x1xf32>
    %583 = vector.extract_strided_slice %513 {offsets = [0, 0], sizes = [2, 32], strides = [1, 1]} : vector<2x64xf32> to vector<2x32xf32>
    %584 = vector.broadcast %582 : vector<2x1xf32> to vector<2x32xf32>
    %585 = arith.mulf %584, %583 : vector<2x32xf32>
    %586 = arith.addf %580, %585 : vector<2x32xf32>
    %587 = vector.broadcast %578 : vector<2x1xf32> to vector<2x32xf32>
    %588 = arith.mulf %587, %576 : vector<2x32xf32>
    %cst_90 = arith.constant 1.000000e+00 : f32
    %589 = vector.broadcast %cst_90 : f32 to vector<2x1xf32>
    %590 = arith.subf %589, %578 : vector<2x1xf32>
    %591 = vector.extract_strided_slice %513 {offsets = [0, 32], sizes = [2, 32], strides = [1, 1]} : vector<2x64xf32> to vector<2x32xf32>
    %592 = vector.broadcast %590 : vector<2x1xf32> to vector<2x32xf32>
    %593 = arith.mulf %592, %591 : vector<2x32xf32>
    %594 = arith.addf %588, %593 : vector<2x32xf32>
    %c12_91 = arith.constant 12 : index
    %c0_92 = arith.constant 0 : index
    %595 = vector.load %arg11[%c12_91, %c0_92] : memref<14x64xf32, #tpu.memory_space<vmem>>, vector<2x32xf32>
    tpu.vector_store %arg11[%c12_91, %c0_92], %586 {strides = array<i32>} : memref<14x64xf32, #tpu.memory_space<vmem>>, vector<2x32xf32>,
    %c0_93 = arith.constant 0 : index
    %c32_94 = arith.constant 32 : index
    %596 = vector.load %arg11[%c0_93, %c32_94] : memref<14x64xf32, #tpu.memory_space<vmem>>, vector<2x32xf32>
    tpu.vector_store %arg11[%c0_93, %c32_94], %594 {strides = array<i32>} : memref<14x64xf32, #tpu.memory_space<vmem>>, vector<2x32xf32>,
    %c0_95 = arith.constant 0 : index
    %c0_96 = arith.constant 0 : index
    %597 = vector.load %arg11[%c0_95, %c0_96] : memref<14x64xf32, #tpu.memory_space<vmem>>, vector<14x64xf32>
    %598 = vector.broadcast %9 : vector<14x1xf32> to vector<14x64xf32>
    %599 = arith.mulf %597, %598 : vector<14x64xf32>
    %c1 = arith.constant 1 : index
    %c0_97 = arith.constant 0 : index
    %c0_98 = arith.constant 0 : index
    %600 = vector.load %arg2[%c1, %c0_97, %c0_98] : memref<2x128x192xf32, #tpu.memory_space<vmem>>, vector<1x128x192xf32>
    %601 = vector.shape_cast %600 : vector<1x128x192xf32> to vector<128x192xf32>
    %602 = vector.extract_strided_slice %10 {offsets = [2, 0], sizes = [1, 192], strides = [1, 1]} : vector<8x192xf32> to vector<1x192xf32>
    %603 = vector.extract_strided_slice %10 {offsets = [3, 0], sizes = [1, 192], strides = [1, 1]} : vector<8x192xf32> to vector<1x192xf32>
    %604 = vector.extract_strided_slice %601 {offsets = [0, 0], sizes = [64, 192], strides = [1, 1]} : vector<128x192xf32> to vector<64x192xf32>
    %cst_99 = arith.constant dense<0.000000e+00> : vector<14x192xf32>
    %605 = tpu.matmul %599, %604, %cst_99 {dimension_numbers = #tpu.dot_dimension_numbers<[1], [0], [0], [1], [0, 0, 1, 1], [], []>} : vector<14x64xf32>, vector<64x192xf32>, vector<14x192xf32> -> vector<14x192xf32>
    %606 = vector.broadcast %602 : vector<1x192xf32> to vector<14x192xf32>
    %607 = arith.addf %605, %606 : vector<14x192xf32>
    %608 = vector.extract_strided_slice %601 {offsets = [64, 0], sizes = [64, 192], strides = [1, 1]} : vector<128x192xf32> to vector<64x192xf32>
    %cst_100 = arith.constant 0.000000e+00 : f32
    %609 = vector.broadcast %cst_100 : f32 to vector<2x64xf32>
    %cst_101 = arith.constant dense<0.000000e+00> : vector<2x192xf32>
    %610 = tpu.matmul %609, %608, %cst_101 {dimension_numbers = #tpu.dot_dimension_numbers<[1], [0], [0], [1], [0, 0, 1, 1], [], []>} : vector<2x64xf32>, vector<64x192xf32>, vector<2x192xf32> -> vector<2x192xf32>
    %611 = vector.broadcast %603 : vector<1x192xf32> to vector<2x192xf32>
    %612 = arith.addf %610, %611 : vector<2x192xf32>
    %613 = vector.extract_strided_slice %607 {offsets = [0, 0], sizes = [2, 96], strides = [1, 1]} : vector<14x192xf32> to vector<2x96xf32>
    %614 = vector.extract_strided_slice %612 {offsets = [0, 0], sizes = [2, 96], strides = [1, 1]} : vector<2x192xf32> to vector<2x96xf32>
    %615 = vector.extract_strided_slice %609 {offsets = [0, 0], sizes = [2, 32], strides = [1, 1]} : vector<2x64xf32> to vector<2x32xf32>
    %616 = vector.extract_strided_slice %613 {offsets = [0, 0], sizes = [2, 32], strides = [1, 1]} : vector<2x96xf32> to vector<2x32xf32>
    %617 = vector.extract_strided_slice %614 {offsets = [0, 0], sizes = [2, 32], strides = [1, 1]} : vector<2x96xf32> to vector<2x32xf32>
    %618 = arith.addf %616, %617 : vector<2x32xf32>
    %619 = arith.negf %618 : vector<2x32xf32>
    %620 = math.exp %619 : vector<2x32xf32>
    %cst_102 = arith.constant 1.000000e+00 : f32
    %621 = vector.broadcast %cst_102 : f32 to vector<2x32xf32>
    %622 = arith.addf %621, %620 : vector<2x32xf32>
    %623 = arith.divf %621, %622 : vector<2x32xf32>
    %624 = vector.extract_strided_slice %613 {offsets = [0, 32], sizes = [2, 32], strides = [1, 1]} : vector<2x96xf32> to vector<2x32xf32>
    %625 = vector.extract_strided_slice %614 {offsets = [0, 32], sizes = [2, 32], strides = [1, 1]} : vector<2x96xf32> to vector<2x32xf32>
    %626 = arith.addf %624, %625 : vector<2x32xf32>
    %627 = arith.negf %626 : vector<2x32xf32>
    %628 = math.exp %627 : vector<2x32xf32>
    %cst_103 = arith.constant 1.000000e+00 : f32
    %629 = vector.broadcast %cst_103 : f32 to vector<2x32xf32>
    %630 = arith.addf %629, %628 : vector<2x32xf32>
    %631 = arith.divf %629, %630 : vector<2x32xf32>
    %632 = vector.extract_strided_slice %613 {offsets = [0, 64], sizes = [2, 32], strides = [1, 1]} : vector<2x96xf32> to vector<2x32xf32>
    %633 = vector.extract_strided_slice %614 {offsets = [0, 64], sizes = [2, 32], strides = [1, 1]} : vector<2x96xf32> to vector<2x32xf32>
    %634 = arith.mulf %623, %633 : vector<2x32xf32>
    %635 = arith.addf %632, %634 : vector<2x32xf32>
    %636 = math.tanh %635 : vector<2x32xf32>
    %cst_104 = arith.constant 1.000000e+00 : f32
    %637 = vector.broadcast %cst_104 : f32 to vector<2x32xf32>
    %638 = arith.subf %637, %631 : vector<2x32xf32>
    %639 = arith.mulf %638, %636 : vector<2x32xf32>
    %640 = arith.mulf %631, %615 : vector<2x32xf32>
    %641 = arith.addf %639, %640 : vector<2x32xf32>
    %642 = vector.extract_strided_slice %607 {offsets = [12, 96], sizes = [2, 96], strides = [1, 1]} : vector<14x192xf32> to vector<2x96xf32>
    %643 = vector.extract_strided_slice %612 {offsets = [0, 96], sizes = [2, 96], strides = [1, 1]} : vector<2x192xf32> to vector<2x96xf32>
    %644 = vector.extract_strided_slice %609 {offsets = [0, 32], sizes = [2, 32], strides = [1, 1]} : vector<2x64xf32> to vector<2x32xf32>
    %645 = vector.extract_strided_slice %642 {offsets = [0, 0], sizes = [2, 32], strides = [1, 1]} : vector<2x96xf32> to vector<2x32xf32>
    %646 = vector.extract_strided_slice %643 {offsets = [0, 0], sizes = [2, 32], strides = [1, 1]} : vector<2x96xf32> to vector<2x32xf32>
    %647 = arith.addf %645, %646 : vector<2x32xf32>
    %648 = arith.negf %647 : vector<2x32xf32>
    %649 = math.exp %648 : vector<2x32xf32>
    %cst_105 = arith.constant 1.000000e+00 : f32
    %650 = vector.broadcast %cst_105 : f32 to vector<2x32xf32>
    %651 = arith.addf %650, %649 : vector<2x32xf32>
    %652 = arith.divf %650, %651 : vector<2x32xf32>
    %653 = vector.extract_strided_slice %642 {offsets = [0, 32], sizes = [2, 32], strides = [1, 1]} : vector<2x96xf32> to vector<2x32xf32>
    %654 = vector.extract_strided_slice %643 {offsets = [0, 32], sizes = [2, 32], strides = [1, 1]} : vector<2x96xf32> to vector<2x32xf32>
    %655 = arith.addf %653, %654 : vector<2x32xf32>
    %656 = arith.negf %655 : vector<2x32xf32>
    %657 = math.exp %656 : vector<2x32xf32>
    %cst_106 = arith.constant 1.000000e+00 : f32
    %658 = vector.broadcast %cst_106 : f32 to vector<2x32xf32>
    %659 = arith.addf %658, %657 : vector<2x32xf32>
    %660 = arith.divf %658, %659 : vector<2x32xf32>
    %661 = vector.extract_strided_slice %642 {offsets = [0, 64], sizes = [2, 32], strides = [1, 1]} : vector<2x96xf32> to vector<2x32xf32>
    %662 = vector.extract_strided_slice %643 {offsets = [0, 64], sizes = [2, 32], strides = [1, 1]} : vector<2x96xf32> to vector<2x32xf32>
    %663 = arith.mulf %652, %662 : vector<2x32xf32>
    %664 = arith.addf %661, %663 : vector<2x32xf32>
    %665 = math.tanh %664 : vector<2x32xf32>
    %cst_107 = arith.constant 1.000000e+00 : f32
    %666 = vector.broadcast %cst_107 : f32 to vector<2x32xf32>
    %667 = arith.subf %666, %660 : vector<2x32xf32>
    %668 = arith.mulf %667, %665 : vector<2x32xf32>
    %669 = arith.mulf %660, %644 : vector<2x32xf32>
    %670 = arith.addf %668, %669 : vector<2x32xf32>
    %671 = vector.extract_strided_slice %9 {offsets = [0, 0], sizes = [2, 1], strides = [1, 1]} : vector<14x1xf32> to vector<2x1xf32>
    %672 = vector.extract_strided_slice %9 {offsets = [12, 0], sizes = [2, 1], strides = [1, 1]} : vector<14x1xf32> to vector<2x1xf32>
    %673 = vector.broadcast %671 : vector<2x1xf32> to vector<2x32xf32>
    %674 = arith.mulf %673, %641 : vector<2x32xf32>
    %cst_108 = arith.constant 1.000000e+00 : f32
    %675 = vector.broadcast %cst_108 : f32 to vector<2x1xf32>
    %676 = arith.subf %675, %671 : vector<2x1xf32>
    %677 = vector.extract_strided_slice %609 {offsets = [0, 0], sizes = [2, 32], strides = [1, 1]} : vector<2x64xf32> to vector<2x32xf32>
    %678 = vector.broadcast %676 : vector<2x1xf32> to vector<2x32xf32>
    %679 = arith.mulf %678, %677 : vector<2x32xf32>
    %680 = arith.addf %674, %679 : vector<2x32xf32>
    %681 = vector.broadcast %672 : vector<2x1xf32> to vector<2x32xf32>
    %682 = arith.mulf %681, %670 : vector<2x32xf32>
    %cst_109 = arith.constant 1.000000e+00 : f32
    %683 = vector.broadcast %cst_109 : f32 to vector<2x1xf32>
    %684 = arith.subf %683, %672 : vector<2x1xf32>
    %685 = vector.extract_strided_slice %609 {offsets = [0, 32], sizes = [2, 32], strides = [1, 1]} : vector<2x64xf32> to vector<2x32xf32>
    %686 = vector.broadcast %684 : vector<2x1xf32> to vector<2x32xf32>
    %687 = arith.mulf %686, %685 : vector<2x32xf32>
    %688 = arith.addf %682, %687 : vector<2x32xf32>
    %689 = tpu.concatenate %680, %688 in 1 : vector<2x32xf32>, vector<2x32xf32> -> vector<2x64xf32>
    %cst_110 = arith.constant dense<0.000000e+00> : vector<2x192xf32>
    %690 = tpu.matmul %689, %608, %cst_110 {dimension_numbers = #tpu.dot_dimension_numbers<[1], [0], [0], [1], [0, 0, 1, 1], [], []>} : vector<2x64xf32>, vector<64x192xf32>, vector<2x192xf32> -> vector<2x192xf32>
    %691 = vector.broadcast %603 : vector<1x192xf32> to vector<2x192xf32>
    %692 = arith.addf %690, %691 : vector<2x192xf32>
    %693 = vector.extract_strided_slice %607 {offsets = [2, 0], sizes = [2, 96], strides = [1, 1]} : vector<14x192xf32> to vector<2x96xf32>
    %694 = vector.extract_strided_slice %692 {offsets = [0, 0], sizes = [2, 96], strides = [1, 1]} : vector<2x192xf32> to vector<2x96xf32>
    %695 = vector.extract_strided_slice %689 {offsets = [0, 0], sizes = [2, 32], strides = [1, 1]} : vector<2x64xf32> to vector<2x32xf32>
    %696 = vector.extract_strided_slice %693 {offsets = [0, 0], sizes = [2, 32], strides = [1, 1]} : vector<2x96xf32> to vector<2x32xf32>
    %697 = vector.extract_strided_slice %694 {offsets = [0, 0], sizes = [2, 32], strides = [1, 1]} : vector<2x96xf32> to vector<2x32xf32>
    %698 = arith.addf %696, %697 : vector<2x32xf32>
    %699 = arith.negf %698 : vector<2x32xf32>
    %700 = math.exp %699 : vector<2x32xf32>
    %cst_111 = arith.constant 1.000000e+00 : f32
    %701 = vector.broadcast %cst_111 : f32 to vector<2x32xf32>
    %702 = arith.addf %701, %700 : vector<2x32xf32>
    %703 = arith.divf %701, %702 : vector<2x32xf32>
    %704 = vector.extract_strided_slice %693 {offsets = [0, 32], sizes = [2, 32], strides = [1, 1]} : vector<2x96xf32> to vector<2x32xf32>
    %705 = vector.extract_strided_slice %694 {offsets = [0, 32], sizes = [2, 32], strides = [1, 1]} : vector<2x96xf32> to vector<2x32xf32>
    %706 = arith.addf %704, %705 : vector<2x32xf32>
    %707 = arith.negf %706 : vector<2x32xf32>
    %708 = math.exp %707 : vector<2x32xf32>
    %cst_112 = arith.constant 1.000000e+00 : f32
    %709 = vector.broadcast %cst_112 : f32 to vector<2x32xf32>
    %710 = arith.addf %709, %708 : vector<2x32xf32>
    %711 = arith.divf %709, %710 : vector<2x32xf32>
    %712 = vector.extract_strided_slice %693 {offsets = [0, 64], sizes = [2, 32], strides = [1, 1]} : vector<2x96xf32> to vector<2x32xf32>
    %713 = vector.extract_strided_slice %694 {offsets = [0, 64], sizes = [2, 32], strides = [1, 1]} : vector<2x96xf32> to vector<2x32xf32>
    %714 = arith.mulf %703, %713 : vector<2x32xf32>
    %715 = arith.addf %712, %714 : vector<2x32xf32>
    %716 = math.tanh %715 : vector<2x32xf32>
    %cst_113 = arith.constant 1.000000e+00 : f32
    %717 = vector.broadcast %cst_113 : f32 to vector<2x32xf32>
    %718 = arith.subf %717, %711 : vector<2x32xf32>
    %719 = arith.mulf %718, %716 : vector<2x32xf32>
    %720 = arith.mulf %711, %695 : vector<2x32xf32>
    %721 = arith.addf %719, %720 : vector<2x32xf32>
    %722 = vector.extract_strided_slice %607 {offsets = [10, 96], sizes = [2, 96], strides = [1, 1]} : vector<14x192xf32> to vector<2x96xf32>
    %723 = vector.extract_strided_slice %692 {offsets = [0, 96], sizes = [2, 96], strides = [1, 1]} : vector<2x192xf32> to vector<2x96xf32>
    %724 = vector.extract_strided_slice %689 {offsets = [0, 32], sizes = [2, 32], strides = [1, 1]} : vector<2x64xf32> to vector<2x32xf32>
    %725 = vector.extract_strided_slice %722 {offsets = [0, 0], sizes = [2, 32], strides = [1, 1]} : vector<2x96xf32> to vector<2x32xf32>
    %726 = vector.extract_strided_slice %723 {offsets = [0, 0], sizes = [2, 32], strides = [1, 1]} : vector<2x96xf32> to vector<2x32xf32>
    %727 = arith.addf %725, %726 : vector<2x32xf32>
    %728 = arith.negf %727 : vector<2x32xf32>
    %729 = math.exp %728 : vector<2x32xf32>
    %cst_114 = arith.constant 1.000000e+00 : f32
    %730 = vector.broadcast %cst_114 : f32 to vector<2x32xf32>
    %731 = arith.addf %730, %729 : vector<2x32xf32>
    %732 = arith.divf %730, %731 : vector<2x32xf32>
    %733 = vector.extract_strided_slice %722 {offsets = [0, 32], sizes = [2, 32], strides = [1, 1]} : vector<2x96xf32> to vector<2x32xf32>
    %734 = vector.extract_strided_slice %723 {offsets = [0, 32], sizes = [2, 32], strides = [1, 1]} : vector<2x96xf32> to vector<2x32xf32>
    %735 = arith.addf %733, %734 : vector<2x32xf32>
    %736 = arith.negf %735 : vector<2x32xf32>
    %737 = math.exp %736 : vector<2x32xf32>
    %cst_115 = arith.constant 1.000000e+00 : f32
    %738 = vector.broadcast %cst_115 : f32 to vector<2x32xf32>
    %739 = arith.addf %738, %737 : vector<2x32xf32>
    %740 = arith.divf %738, %739 : vector<2x32xf32>
    %741 = vector.extract_strided_slice %722 {offsets = [0, 64], sizes = [2, 32], strides = [1, 1]} : vector<2x96xf32> to vector<2x32xf32>
    %742 = vector.extract_strided_slice %723 {offsets = [0, 64], sizes = [2, 32], strides = [1, 1]} : vector<2x96xf32> to vector<2x32xf32>
    %743 = arith.mulf %732, %742 : vector<2x32xf32>
    %744 = arith.addf %741, %743 : vector<2x32xf32>
    %745 = math.tanh %744 : vector<2x32xf32>
    %cst_116 = arith.constant 1.000000e+00 : f32
    %746 = vector.broadcast %cst_116 : f32 to vector<2x32xf32>
    %747 = arith.subf %746, %740 : vector<2x32xf32>
    %748 = arith.mulf %747, %745 : vector<2x32xf32>
    %749 = arith.mulf %740, %724 : vector<2x32xf32>
    %750 = arith.addf %748, %749 : vector<2x32xf32>
    %751 = vector.extract_strided_slice %9 {offsets = [2, 0], sizes = [2, 1], strides = [1, 1]} : vector<14x1xf32> to vector<2x1xf32>
    %752 = vector.extract_strided_slice %9 {offsets = [10, 0], sizes = [2, 1], strides = [1, 1]} : vector<14x1xf32> to vector<2x1xf32>
    %753 = vector.broadcast %751 : vector<2x1xf32> to vector<2x32xf32>
    %754 = arith.mulf %753, %721 : vector<2x32xf32>
    %cst_117 = arith.constant 1.000000e+00 : f32
    %755 = vector.broadcast %cst_117 : f32 to vector<2x1xf32>
    %756 = arith.subf %755, %751 : vector<2x1xf32>
    %757 = vector.extract_strided_slice %689 {offsets = [0, 0], sizes = [2, 32], strides = [1, 1]} : vector<2x64xf32> to vector<2x32xf32>
    %758 = vector.broadcast %756 : vector<2x1xf32> to vector<2x32xf32>
    %759 = arith.mulf %758, %757 : vector<2x32xf32>
    %760 = arith.addf %754, %759 : vector<2x32xf32>
    %761 = vector.broadcast %752 : vector<2x1xf32> to vector<2x32xf32>
    %762 = arith.mulf %761, %750 : vector<2x32xf32>
    %cst_118 = arith.constant 1.000000e+00 : f32
    %763 = vector.broadcast %cst_118 : f32 to vector<2x1xf32>
    %764 = arith.subf %763, %752 : vector<2x1xf32>
    %765 = vector.extract_strided_slice %689 {offsets = [0, 32], sizes = [2, 32], strides = [1, 1]} : vector<2x64xf32> to vector<2x32xf32>
    %766 = vector.broadcast %764 : vector<2x1xf32> to vector<2x32xf32>
    %767 = arith.mulf %766, %765 : vector<2x32xf32>
    %768 = arith.addf %762, %767 : vector<2x32xf32>
    %769 = tpu.concatenate %760, %768 in 1 : vector<2x32xf32>, vector<2x32xf32> -> vector<2x64xf32>
    %cst_119 = arith.constant dense<0.000000e+00> : vector<2x192xf32>
    %770 = tpu.matmul %769, %608, %cst_119 {dimension_numbers = #tpu.dot_dimension_numbers<[1], [0], [0], [1], [0, 0, 1, 1], [], []>} : vector<2x64xf32>, vector<64x192xf32>, vector<2x192xf32> -> vector<2x192xf32>
    %771 = vector.broadcast %603 : vector<1x192xf32> to vector<2x192xf32>
    %772 = arith.addf %770, %771 : vector<2x192xf32>
    %773 = vector.extract_strided_slice %607 {offsets = [4, 0], sizes = [2, 96], strides = [1, 1]} : vector<14x192xf32> to vector<2x96xf32>
    %774 = vector.extract_strided_slice %772 {offsets = [0, 0], sizes = [2, 96], strides = [1, 1]} : vector<2x192xf32> to vector<2x96xf32>
    %775 = vector.extract_strided_slice %769 {offsets = [0, 0], sizes = [2, 32], strides = [1, 1]} : vector<2x64xf32> to vector<2x32xf32>
    %776 = vector.extract_strided_slice %773 {offsets = [0, 0], sizes = [2, 32], strides = [1, 1]} : vector<2x96xf32> to vector<2x32xf32>
    %777 = vector.extract_strided_slice %774 {offsets = [0, 0], sizes = [2, 32], strides = [1, 1]} : vector<2x96xf32> to vector<2x32xf32>
    %778 = arith.addf %776, %777 : vector<2x32xf32>
    %779 = arith.negf %778 : vector<2x32xf32>
    %780 = math.exp %779 : vector<2x32xf32>
    %cst_120 = arith.constant 1.000000e+00 : f32
    %781 = vector.broadcast %cst_120 : f32 to vector<2x32xf32>
    %782 = arith.addf %781, %780 : vector<2x32xf32>
    %783 = arith.divf %781, %782 : vector<2x32xf32>
    %784 = vector.extract_strided_slice %773 {offsets = [0, 32], sizes = [2, 32], strides = [1, 1]} : vector<2x96xf32> to vector<2x32xf32>
    %785 = vector.extract_strided_slice %774 {offsets = [0, 32], sizes = [2, 32], strides = [1, 1]} : vector<2x96xf32> to vector<2x32xf32>
    %786 = arith.addf %784, %785 : vector<2x32xf32>
    %787 = arith.negf %786 : vector<2x32xf32>
    %788 = math.exp %787 : vector<2x32xf32>
    %cst_121 = arith.constant 1.000000e+00 : f32
    %789 = vector.broadcast %cst_121 : f32 to vector<2x32xf32>
    %790 = arith.addf %789, %788 : vector<2x32xf32>
    %791 = arith.divf %789, %790 : vector<2x32xf32>
    %792 = vector.extract_strided_slice %773 {offsets = [0, 64], sizes = [2, 32], strides = [1, 1]} : vector<2x96xf32> to vector<2x32xf32>
    %793 = vector.extract_strided_slice %774 {offsets = [0, 64], sizes = [2, 32], strides = [1, 1]} : vector<2x96xf32> to vector<2x32xf32>
    %794 = arith.mulf %783, %793 : vector<2x32xf32>
    %795 = arith.addf %792, %794 : vector<2x32xf32>
    %796 = math.tanh %795 : vector<2x32xf32>
    %cst_122 = arith.constant 1.000000e+00 : f32
    %797 = vector.broadcast %cst_122 : f32 to vector<2x32xf32>
    %798 = arith.subf %797, %791 : vector<2x32xf32>
    %799 = arith.mulf %798, %796 : vector<2x32xf32>
    %800 = arith.mulf %791, %775 : vector<2x32xf32>
    %801 = arith.addf %799, %800 : vector<2x32xf32>
    %802 = vector.extract_strided_slice %607 {offsets = [8, 96], sizes = [2, 96], strides = [1, 1]} : vector<14x192xf32> to vector<2x96xf32>
    %803 = vector.extract_strided_slice %772 {offsets = [0, 96], sizes = [2, 96], strides = [1, 1]} : vector<2x192xf32> to vector<2x96xf32>
    %804 = vector.extract_strided_slice %769 {offsets = [0, 32], sizes = [2, 32], strides = [1, 1]} : vector<2x64xf32> to vector<2x32xf32>
    %805 = vector.extract_strided_slice %802 {offsets = [0, 0], sizes = [2, 32], strides = [1, 1]} : vector<2x96xf32> to vector<2x32xf32>
    %806 = vector.extract_strided_slice %803 {offsets = [0, 0], sizes = [2, 32], strides = [1, 1]} : vector<2x96xf32> to vector<2x32xf32>
    %807 = arith.addf %805, %806 : vector<2x32xf32>
    %808 = arith.negf %807 : vector<2x32xf32>
    %809 = math.exp %808 : vector<2x32xf32>
    %cst_123 = arith.constant 1.000000e+00 : f32
    %810 = vector.broadcast %cst_123 : f32 to vector<2x32xf32>
    %811 = arith.addf %810, %809 : vector<2x32xf32>
    %812 = arith.divf %810, %811 : vector<2x32xf32>
    %813 = vector.extract_strided_slice %802 {offsets = [0, 32], sizes = [2, 32], strides = [1, 1]} : vector<2x96xf32> to vector<2x32xf32>
    %814 = vector.extract_strided_slice %803 {offsets = [0, 32], sizes = [2, 32], strides = [1, 1]} : vector<2x96xf32> to vector<2x32xf32>
    %815 = arith.addf %813, %814 : vector<2x32xf32>
    %816 = arith.negf %815 : vector<2x32xf32>
    %817 = math.exp %816 : vector<2x32xf32>
    %cst_124 = arith.constant 1.000000e+00 : f32
    %818 = vector.broadcast %cst_124 : f32 to vector<2x32xf32>
    %819 = arith.addf %818, %817 : vector<2x32xf32>
    %820 = arith.divf %818, %819 : vector<2x32xf32>
    %821 = vector.extract_strided_slice %802 {offsets = [0, 64], sizes = [2, 32], strides = [1, 1]} : vector<2x96xf32> to vector<2x32xf32>
    %822 = vector.extract_strided_slice %803 {offsets = [0, 64], sizes = [2, 32], strides = [1, 1]} : vector<2x96xf32> to vector<2x32xf32>
    %823 = arith.mulf %812, %822 : vector<2x32xf32>
    %824 = arith.addf %821, %823 : vector<2x32xf32>
    %825 = math.tanh %824 : vector<2x32xf32>
    %cst_125 = arith.constant 1.000000e+00 : f32
    %826 = vector.broadcast %cst_125 : f32 to vector<2x32xf32>
    %827 = arith.subf %826, %820 : vector<2x32xf32>
    %828 = arith.mulf %827, %825 : vector<2x32xf32>
    %829 = arith.mulf %820, %804 : vector<2x32xf32>
    %830 = arith.addf %828, %829 : vector<2x32xf32>
    %831 = vector.extract_strided_slice %9 {offsets = [4, 0], sizes = [2, 1], strides = [1, 1]} : vector<14x1xf32> to vector<2x1xf32>
    %832 = vector.extract_strided_slice %9 {offsets = [8, 0], sizes = [2, 1], strides = [1, 1]} : vector<14x1xf32> to vector<2x1xf32>
    %833 = vector.broadcast %831 : vector<2x1xf32> to vector<2x32xf32>
    %834 = arith.mulf %833, %801 : vector<2x32xf32>
    %cst_126 = arith.constant 1.000000e+00 : f32
    %835 = vector.broadcast %cst_126 : f32 to vector<2x1xf32>
    %836 = arith.subf %835, %831 : vector<2x1xf32>
    %837 = vector.extract_strided_slice %769 {offsets = [0, 0], sizes = [2, 32], strides = [1, 1]} : vector<2x64xf32> to vector<2x32xf32>
    %838 = vector.broadcast %836 : vector<2x1xf32> to vector<2x32xf32>
    %839 = arith.mulf %838, %837 : vector<2x32xf32>
    %840 = arith.addf %834, %839 : vector<2x32xf32>
    %841 = vector.broadcast %832 : vector<2x1xf32> to vector<2x32xf32>
    %842 = arith.mulf %841, %830 : vector<2x32xf32>
    %cst_127 = arith.constant 1.000000e+00 : f32
    %843 = vector.broadcast %cst_127 : f32 to vector<2x1xf32>
    %844 = arith.subf %843, %832 : vector<2x1xf32>
    %845 = vector.extract_strided_slice %769 {offsets = [0, 32], sizes = [2, 32], strides = [1, 1]} : vector<2x64xf32> to vector<2x32xf32>
    %846 = vector.broadcast %844 : vector<2x1xf32> to vector<2x32xf32>
    %847 = arith.mulf %846, %845 : vector<2x32xf32>
    %848 = arith.addf %842, %847 : vector<2x32xf32>
    %849 = tpu.concatenate %840, %848 in 1 : vector<2x32xf32>, vector<2x32xf32> -> vector<2x64xf32>
    %cst_128 = arith.constant dense<0.000000e+00> : vector<2x192xf32>
    %850 = tpu.matmul %849, %608, %cst_128 {dimension_numbers = #tpu.dot_dimension_numbers<[1], [0], [0], [1], [0, 0, 1, 1], [], []>} : vector<2x64xf32>, vector<64x192xf32>, vector<2x192xf32> -> vector<2x192xf32>
    %851 = vector.broadcast %603 : vector<1x192xf32> to vector<2x192xf32>
    %852 = arith.addf %850, %851 : vector<2x192xf32>
    %853 = vector.extract_strided_slice %607 {offsets = [6, 0], sizes = [2, 96], strides = [1, 1]} : vector<14x192xf32> to vector<2x96xf32>
    %854 = vector.extract_strided_slice %852 {offsets = [0, 0], sizes = [2, 96], strides = [1, 1]} : vector<2x192xf32> to vector<2x96xf32>
    %855 = vector.extract_strided_slice %849 {offsets = [0, 0], sizes = [2, 32], strides = [1, 1]} : vector<2x64xf32> to vector<2x32xf32>
    %856 = vector.extract_strided_slice %853 {offsets = [0, 0], sizes = [2, 32], strides = [1, 1]} : vector<2x96xf32> to vector<2x32xf32>
    %857 = vector.extract_strided_slice %854 {offsets = [0, 0], sizes = [2, 32], strides = [1, 1]} : vector<2x96xf32> to vector<2x32xf32>
    %858 = arith.addf %856, %857 : vector<2x32xf32>
    %859 = arith.negf %858 : vector<2x32xf32>
    %860 = math.exp %859 : vector<2x32xf32>
    %cst_129 = arith.constant 1.000000e+00 : f32
    %861 = vector.broadcast %cst_129 : f32 to vector<2x32xf32>
    %862 = arith.addf %861, %860 : vector<2x32xf32>
    %863 = arith.divf %861, %862 : vector<2x32xf32>
    %864 = vector.extract_strided_slice %853 {offsets = [0, 32], sizes = [2, 32], strides = [1, 1]} : vector<2x96xf32> to vector<2x32xf32>
    %865 = vector.extract_strided_slice %854 {offsets = [0, 32], sizes = [2, 32], strides = [1, 1]} : vector<2x96xf32> to vector<2x32xf32>
    %866 = arith.addf %864, %865 : vector<2x32xf32>
    %867 = arith.negf %866 : vector<2x32xf32>
    %868 = math.exp %867 : vector<2x32xf32>
    %cst_130 = arith.constant 1.000000e+00 : f32
    %869 = vector.broadcast %cst_130 : f32 to vector<2x32xf32>
    %870 = arith.addf %869, %868 : vector<2x32xf32>
    %871 = arith.divf %869, %870 : vector<2x32xf32>
    %872 = vector.extract_strided_slice %853 {offsets = [0, 64], sizes = [2, 32], strides = [1, 1]} : vector<2x96xf32> to vector<2x32xf32>
    %873 = vector.extract_strided_slice %854 {offsets = [0, 64], sizes = [2, 32], strides = [1, 1]} : vector<2x96xf32> to vector<2x32xf32>
    %874 = arith.mulf %863, %873 : vector<2x32xf32>
    %875 = arith.addf %872, %874 : vector<2x32xf32>
    %876 = math.tanh %875 : vector<2x32xf32>
    %cst_131 = arith.constant 1.000000e+00 : f32
    %877 = vector.broadcast %cst_131 : f32 to vector<2x32xf32>
    %878 = arith.subf %877, %871 : vector<2x32xf32>
    %879 = arith.mulf %878, %876 : vector<2x32xf32>
    %880 = arith.mulf %871, %855 : vector<2x32xf32>
    %881 = arith.addf %879, %880 : vector<2x32xf32>
    %882 = vector.extract_strided_slice %607 {offsets = [6, 96], sizes = [2, 96], strides = [1, 1]} : vector<14x192xf32> to vector<2x96xf32>
    %883 = vector.extract_strided_slice %852 {offsets = [0, 96], sizes = [2, 96], strides = [1, 1]} : vector<2x192xf32> to vector<2x96xf32>
    %884 = vector.extract_strided_slice %849 {offsets = [0, 32], sizes = [2, 32], strides = [1, 1]} : vector<2x64xf32> to vector<2x32xf32>
    %885 = vector.extract_strided_slice %882 {offsets = [0, 0], sizes = [2, 32], strides = [1, 1]} : vector<2x96xf32> to vector<2x32xf32>
    %886 = vector.extract_strided_slice %883 {offsets = [0, 0], sizes = [2, 32], strides = [1, 1]} : vector<2x96xf32> to vector<2x32xf32>
    %887 = arith.addf %885, %886 : vector<2x32xf32>
    %888 = arith.negf %887 : vector<2x32xf32>
    %889 = math.exp %888 : vector<2x32xf32>
    %cst_132 = arith.constant 1.000000e+00 : f32
    %890 = vector.broadcast %cst_132 : f32 to vector<2x32xf32>
    %891 = arith.addf %890, %889 : vector<2x32xf32>
    %892 = arith.divf %890, %891 : vector<2x32xf32>
    %893 = vector.extract_strided_slice %882 {offsets = [0, 32], sizes = [2, 32], strides = [1, 1]} : vector<2x96xf32> to vector<2x32xf32>
    %894 = vector.extract_strided_slice %883 {offsets = [0, 32], sizes = [2, 32], strides = [1, 1]} : vector<2x96xf32> to vector<2x32xf32>
    %895 = arith.addf %893, %894 : vector<2x32xf32>
    %896 = arith.negf %895 : vector<2x32xf32>
    %897 = math.exp %896 : vector<2x32xf32>
    %cst_133 = arith.constant 1.000000e+00 : f32
    %898 = vector.broadcast %cst_133 : f32 to vector<2x32xf32>
    %899 = arith.addf %898, %897 : vector<2x32xf32>
    %900 = arith.divf %898, %899 : vector<2x32xf32>
    %901 = vector.extract_strided_slice %882 {offsets = [0, 64], sizes = [2, 32], strides = [1, 1]} : vector<2x96xf32> to vector<2x32xf32>
    %902 = vector.extract_strided_slice %883 {offsets = [0, 64], sizes = [2, 32], strides = [1, 1]} : vector<2x96xf32> to vector<2x32xf32>
    %903 = arith.mulf %892, %902 : vector<2x32xf32>
    %904 = arith.addf %901, %903 : vector<2x32xf32>
    %905 = math.tanh %904 : vector<2x32xf32>
    %cst_134 = arith.constant 1.000000e+00 : f32
    %906 = vector.broadcast %cst_134 : f32 to vector<2x32xf32>
    %907 = arith.subf %906, %900 : vector<2x32xf32>
    %908 = arith.mulf %907, %905 : vector<2x32xf32>
    %909 = arith.mulf %900, %884 : vector<2x32xf32>
    %910 = arith.addf %908, %909 : vector<2x32xf32>
    %911 = vector.extract_strided_slice %9 {offsets = [6, 0], sizes = [2, 1], strides = [1, 1]} : vector<14x1xf32> to vector<2x1xf32>
    %912 = vector.extract_strided_slice %9 {offsets = [6, 0], sizes = [2, 1], strides = [1, 1]} : vector<14x1xf32> to vector<2x1xf32>
    %913 = vector.broadcast %911 : vector<2x1xf32> to vector<2x32xf32>
    %914 = arith.mulf %913, %881 : vector<2x32xf32>
    %cst_135 = arith.constant 1.000000e+00 : f32
    %915 = vector.broadcast %cst_135 : f32 to vector<2x1xf32>
    %916 = arith.subf %915, %911 : vector<2x1xf32>
    %917 = vector.extract_strided_slice %849 {offsets = [0, 0], sizes = [2, 32], strides = [1, 1]} : vector<2x64xf32> to vector<2x32xf32>
    %918 = vector.broadcast %916 : vector<2x1xf32> to vector<2x32xf32>
    %919 = arith.mulf %918, %917 : vector<2x32xf32>
    %920 = arith.addf %914, %919 : vector<2x32xf32>
    %921 = vector.broadcast %912 : vector<2x1xf32> to vector<2x32xf32>
    %922 = arith.mulf %921, %910 : vector<2x32xf32>
    %cst_136 = arith.constant 1.000000e+00 : f32
    %923 = vector.broadcast %cst_136 : f32 to vector<2x1xf32>
    %924 = arith.subf %923, %912 : vector<2x1xf32>
    %925 = vector.extract_strided_slice %849 {offsets = [0, 32], sizes = [2, 32], strides = [1, 1]} : vector<2x64xf32> to vector<2x32xf32>
    %926 = vector.broadcast %924 : vector<2x1xf32> to vector<2x32xf32>
    %927 = arith.mulf %926, %925 : vector<2x32xf32>
    %928 = arith.addf %922, %927 : vector<2x32xf32>
    %929 = tpu.concatenate %920, %928 in 1 : vector<2x32xf32>, vector<2x32xf32> -> vector<2x64xf32>
    %cst_137 = arith.constant dense<0.000000e+00> : vector<2x192xf32>
    %930 = tpu.matmul %929, %608, %cst_137 {dimension_numbers = #tpu.dot_dimension_numbers<[1], [0], [0], [1], [0, 0, 1, 1], [], []>} : vector<2x64xf32>, vector<64x192xf32>, vector<2x192xf32> -> vector<2x192xf32>
    %931 = vector.broadcast %603 : vector<1x192xf32> to vector<2x192xf32>
    %932 = arith.addf %930, %931 : vector<2x192xf32>
    %933 = vector.extract_strided_slice %607 {offsets = [8, 0], sizes = [2, 96], strides = [1, 1]} : vector<14x192xf32> to vector<2x96xf32>
    %934 = vector.extract_strided_slice %932 {offsets = [0, 0], sizes = [2, 96], strides = [1, 1]} : vector<2x192xf32> to vector<2x96xf32>
    %935 = vector.extract_strided_slice %929 {offsets = [0, 0], sizes = [2, 32], strides = [1, 1]} : vector<2x64xf32> to vector<2x32xf32>
    %936 = vector.extract_strided_slice %933 {offsets = [0, 0], sizes = [2, 32], strides = [1, 1]} : vector<2x96xf32> to vector<2x32xf32>
    %937 = vector.extract_strided_slice %934 {offsets = [0, 0], sizes = [2, 32], strides = [1, 1]} : vector<2x96xf32> to vector<2x32xf32>
    %938 = arith.addf %936, %937 : vector<2x32xf32>
    %939 = arith.negf %938 : vector<2x32xf32>
    %940 = math.exp %939 : vector<2x32xf32>
    %cst_138 = arith.constant 1.000000e+00 : f32
    %941 = vector.broadcast %cst_138 : f32 to vector<2x32xf32>
    %942 = arith.addf %941, %940 : vector<2x32xf32>
    %943 = arith.divf %941, %942 : vector<2x32xf32>
    %944 = vector.extract_strided_slice %933 {offsets = [0, 32], sizes = [2, 32], strides = [1, 1]} : vector<2x96xf32> to vector<2x32xf32>
    %945 = vector.extract_strided_slice %934 {offsets = [0, 32], sizes = [2, 32], strides = [1, 1]} : vector<2x96xf32> to vector<2x32xf32>
    %946 = arith.addf %944, %945 : vector<2x32xf32>
    %947 = arith.negf %946 : vector<2x32xf32>
    %948 = math.exp %947 : vector<2x32xf32>
    %cst_139 = arith.constant 1.000000e+00 : f32
    %949 = vector.broadcast %cst_139 : f32 to vector<2x32xf32>
    %950 = arith.addf %949, %948 : vector<2x32xf32>
    %951 = arith.divf %949, %950 : vector<2x32xf32>
    %952 = vector.extract_strided_slice %933 {offsets = [0, 64], sizes = [2, 32], strides = [1, 1]} : vector<2x96xf32> to vector<2x32xf32>
    %953 = vector.extract_strided_slice %934 {offsets = [0, 64], sizes = [2, 32], strides = [1, 1]} : vector<2x96xf32> to vector<2x32xf32>
    %954 = arith.mulf %943, %953 : vector<2x32xf32>
    %955 = arith.addf %952, %954 : vector<2x32xf32>
    %956 = math.tanh %955 : vector<2x32xf32>
    %cst_140 = arith.constant 1.000000e+00 : f32
    %957 = vector.broadcast %cst_140 : f32 to vector<2x32xf32>
    %958 = arith.subf %957, %951 : vector<2x32xf32>
    %959 = arith.mulf %958, %956 : vector<2x32xf32>
    %960 = arith.mulf %951, %935 : vector<2x32xf32>
    %961 = arith.addf %959, %960 : vector<2x32xf32>
    %962 = vector.extract_strided_slice %607 {offsets = [4, 96], sizes = [2, 96], strides = [1, 1]} : vector<14x192xf32> to vector<2x96xf32>
    %963 = vector.extract_strided_slice %932 {offsets = [0, 96], sizes = [2, 96], strides = [1, 1]} : vector<2x192xf32> to vector<2x96xf32>
    %964 = vector.extract_strided_slice %929 {offsets = [0, 32], sizes = [2, 32], strides = [1, 1]} : vector<2x64xf32> to vector<2x32xf32>
    %965 = vector.extract_strided_slice %962 {offsets = [0, 0], sizes = [2, 32], strides = [1, 1]} : vector<2x96xf32> to vector<2x32xf32>
    %966 = vector.extract_strided_slice %963 {offsets = [0, 0], sizes = [2, 32], strides = [1, 1]} : vector<2x96xf32> to vector<2x32xf32>
    %967 = arith.addf %965, %966 : vector<2x32xf32>
    %968 = arith.negf %967 : vector<2x32xf32>
    %969 = math.exp %968 : vector<2x32xf32>
    %cst_141 = arith.constant 1.000000e+00 : f32
    %970 = vector.broadcast %cst_141 : f32 to vector<2x32xf32>
    %971 = arith.addf %970, %969 : vector<2x32xf32>
    %972 = arith.divf %970, %971 : vector<2x32xf32>
    %973 = vector.extract_strided_slice %962 {offsets = [0, 32], sizes = [2, 32], strides = [1, 1]} : vector<2x96xf32> to vector<2x32xf32>
    %974 = vector.extract_strided_slice %963 {offsets = [0, 32], sizes = [2, 32], strides = [1, 1]} : vector<2x96xf32> to vector<2x32xf32>
    %975 = arith.addf %973, %974 : vector<2x32xf32>
    %976 = arith.negf %975 : vector<2x32xf32>
    %977 = math.exp %976 : vector<2x32xf32>
    %cst_142 = arith.constant 1.000000e+00 : f32
    %978 = vector.broadcast %cst_142 : f32 to vector<2x32xf32>
    %979 = arith.addf %978, %977 : vector<2x32xf32>
    %980 = arith.divf %978, %979 : vector<2x32xf32>
    %981 = vector.extract_strided_slice %962 {offsets = [0, 64], sizes = [2, 32], strides = [1, 1]} : vector<2x96xf32> to vector<2x32xf32>
    %982 = vector.extract_strided_slice %963 {offsets = [0, 64], sizes = [2, 32], strides = [1, 1]} : vector<2x96xf32> to vector<2x32xf32>
    %983 = arith.mulf %972, %982 : vector<2x32xf32>
    %984 = arith.addf %981, %983 : vector<2x32xf32>
    %985 = math.tanh %984 : vector<2x32xf32>
    %cst_143 = arith.constant 1.000000e+00 : f32
    %986 = vector.broadcast %cst_143 : f32 to vector<2x32xf32>
    %987 = arith.subf %986, %980 : vector<2x32xf32>
    %988 = arith.mulf %987, %985 : vector<2x32xf32>
    %989 = arith.mulf %980, %964 : vector<2x32xf32>
    %990 = arith.addf %988, %989 : vector<2x32xf32>
    %991 = vector.extract_strided_slice %9 {offsets = [8, 0], sizes = [2, 1], strides = [1, 1]} : vector<14x1xf32> to vector<2x1xf32>
    %992 = vector.extract_strided_slice %9 {offsets = [4, 0], sizes = [2, 1], strides = [1, 1]} : vector<14x1xf32> to vector<2x1xf32>
    %993 = vector.broadcast %991 : vector<2x1xf32> to vector<2x32xf32>
    %994 = arith.mulf %993, %961 : vector<2x32xf32>
    %cst_144 = arith.constant 1.000000e+00 : f32
    %995 = vector.broadcast %cst_144 : f32 to vector<2x1xf32>
    %996 = arith.subf %995, %991 : vector<2x1xf32>
    %997 = vector.extract_strided_slice %929 {offsets = [0, 0], sizes = [2, 32], strides = [1, 1]} : vector<2x64xf32> to vector<2x32xf32>
    %998 = vector.broadcast %996 : vector<2x1xf32> to vector<2x32xf32>
    %999 = arith.mulf %998, %997 : vector<2x32xf32>
    %1000 = arith.addf %994, %999 : vector<2x32xf32>
    %1001 = vector.broadcast %992 : vector<2x1xf32> to vector<2x32xf32>
    %1002 = arith.mulf %1001, %990 : vector<2x32xf32>
    %cst_145 = arith.constant 1.000000e+00 : f32
    %1003 = vector.broadcast %cst_145 : f32 to vector<2x1xf32>
    %1004 = arith.subf %1003, %992 : vector<2x1xf32>
    %1005 = vector.extract_strided_slice %929 {offsets = [0, 32], sizes = [2, 32], strides = [1, 1]} : vector<2x64xf32> to vector<2x32xf32>
    %1006 = vector.broadcast %1004 : vector<2x1xf32> to vector<2x32xf32>
    %1007 = arith.mulf %1006, %1005 : vector<2x32xf32>
    %1008 = arith.addf %1002, %1007 : vector<2x32xf32>
    %1009 = tpu.concatenate %1000, %1008 in 1 : vector<2x32xf32>, vector<2x32xf32> -> vector<2x64xf32>
    %cst_146 = arith.constant dense<0.000000e+00> : vector<2x192xf32>
    %1010 = tpu.matmul %1009, %608, %cst_146 {dimension_numbers = #tpu.dot_dimension_numbers<[1], [0], [0], [1], [0, 0, 1, 1], [], []>} : vector<2x64xf32>, vector<64x192xf32>, vector<2x192xf32> -> vector<2x192xf32>
    %1011 = vector.broadcast %603 : vector<1x192xf32> to vector<2x192xf32>
    %1012 = arith.addf %1010, %1011 : vector<2x192xf32>
    %1013 = vector.extract_strided_slice %607 {offsets = [10, 0], sizes = [2, 96], strides = [1, 1]} : vector<14x192xf32> to vector<2x96xf32>
    %1014 = vector.extract_strided_slice %1012 {offsets = [0, 0], sizes = [2, 96], strides = [1, 1]} : vector<2x192xf32> to vector<2x96xf32>
    %1015 = vector.extract_strided_slice %1009 {offsets = [0, 0], sizes = [2, 32], strides = [1, 1]} : vector<2x64xf32> to vector<2x32xf32>
    %1016 = vector.extract_strided_slice %1013 {offsets = [0, 0], sizes = [2, 32], strides = [1, 1]} : vector<2x96xf32> to vector<2x32xf32>
    %1017 = vector.extract_strided_slice %1014 {offsets = [0, 0], sizes = [2, 32], strides = [1, 1]} : vector<2x96xf32> to vector<2x32xf32>
    %1018 = arith.addf %1016, %1017 : vector<2x32xf32>
    %1019 = arith.negf %1018 : vector<2x32xf32>
    %1020 = math.exp %1019 : vector<2x32xf32>
    %cst_147 = arith.constant 1.000000e+00 : f32
    %1021 = vector.broadcast %cst_147 : f32 to vector<2x32xf32>
    %1022 = arith.addf %1021, %1020 : vector<2x32xf32>
    %1023 = arith.divf %1021, %1022 : vector<2x32xf32>
    %1024 = vector.extract_strided_slice %1013 {offsets = [0, 32], sizes = [2, 32], strides = [1, 1]} : vector<2x96xf32> to vector<2x32xf32>
    %1025 = vector.extract_strided_slice %1014 {offsets = [0, 32], sizes = [2, 32], strides = [1, 1]} : vector<2x96xf32> to vector<2x32xf32>
    %1026 = arith.addf %1024, %1025 : vector<2x32xf32>
    %1027 = arith.negf %1026 : vector<2x32xf32>
    %1028 = math.exp %1027 : vector<2x32xf32>
    %cst_148 = arith.constant 1.000000e+00 : f32
    %1029 = vector.broadcast %cst_148 : f32 to vector<2x32xf32>
    %1030 = arith.addf %1029, %1028 : vector<2x32xf32>
    %1031 = arith.divf %1029, %1030 : vector<2x32xf32>
    %1032 = vector.extract_strided_slice %1013 {offsets = [0, 64], sizes = [2, 32], strides = [1, 1]} : vector<2x96xf32> to vector<2x32xf32>
    %1033 = vector.extract_strided_slice %1014 {offsets = [0, 64], sizes = [2, 32], strides = [1, 1]} : vector<2x96xf32> to vector<2x32xf32>
    %1034 = arith.mulf %1023, %1033 : vector<2x32xf32>
    %1035 = arith.addf %1032, %1034 : vector<2x32xf32>
    %1036 = math.tanh %1035 : vector<2x32xf32>
    %cst_149 = arith.constant 1.000000e+00 : f32
    %1037 = vector.broadcast %cst_149 : f32 to vector<2x32xf32>
    %1038 = arith.subf %1037, %1031 : vector<2x32xf32>
    %1039 = arith.mulf %1038, %1036 : vector<2x32xf32>
    %1040 = arith.mulf %1031, %1015 : vector<2x32xf32>
    %1041 = arith.addf %1039, %1040 : vector<2x32xf32>
    %1042 = vector.extract_strided_slice %607 {offsets = [2, 96], sizes = [2, 96], strides = [1, 1]} : vector<14x192xf32> to vector<2x96xf32>
    %1043 = vector.extract_strided_slice %1012 {offsets = [0, 96], sizes = [2, 96], strides = [1, 1]} : vector<2x192xf32> to vector<2x96xf32>
    %1044 = vector.extract_strided_slice %1009 {offsets = [0, 32], sizes = [2, 32], strides = [1, 1]} : vector<2x64xf32> to vector<2x32xf32>
    %1045 = vector.extract_strided_slice %1042 {offsets = [0, 0], sizes = [2, 32], strides = [1, 1]} : vector<2x96xf32> to vector<2x32xf32>
    %1046 = vector.extract_strided_slice %1043 {offsets = [0, 0], sizes = [2, 32], strides = [1, 1]} : vector<2x96xf32> to vector<2x32xf32>
    %1047 = arith.addf %1045, %1046 : vector<2x32xf32>
    %1048 = arith.negf %1047 : vector<2x32xf32>
    %1049 = math.exp %1048 : vector<2x32xf32>
    %cst_150 = arith.constant 1.000000e+00 : f32
    %1050 = vector.broadcast %cst_150 : f32 to vector<2x32xf32>
    %1051 = arith.addf %1050, %1049 : vector<2x32xf32>
    %1052 = arith.divf %1050, %1051 : vector<2x32xf32>
    %1053 = vector.extract_strided_slice %1042 {offsets = [0, 32], sizes = [2, 32], strides = [1, 1]} : vector<2x96xf32> to vector<2x32xf32>
    %1054 = vector.extract_strided_slice %1043 {offsets = [0, 32], sizes = [2, 32], strides = [1, 1]} : vector<2x96xf32> to vector<2x32xf32>
    %1055 = arith.addf %1053, %1054 : vector<2x32xf32>
    %1056 = arith.negf %1055 : vector<2x32xf32>
    %1057 = math.exp %1056 : vector<2x32xf32>
    %cst_151 = arith.constant 1.000000e+00 : f32
    %1058 = vector.broadcast %cst_151 : f32 to vector<2x32xf32>
    %1059 = arith.addf %1058, %1057 : vector<2x32xf32>
    %1060 = arith.divf %1058, %1059 : vector<2x32xf32>
    %1061 = vector.extract_strided_slice %1042 {offsets = [0, 64], sizes = [2, 32], strides = [1, 1]} : vector<2x96xf32> to vector<2x32xf32>
    %1062 = vector.extract_strided_slice %1043 {offsets = [0, 64], sizes = [2, 32], strides = [1, 1]} : vector<2x96xf32> to vector<2x32xf32>
    %1063 = arith.mulf %1052, %1062 : vector<2x32xf32>
    %1064 = arith.addf %1061, %1063 : vector<2x32xf32>
    %1065 = math.tanh %1064 : vector<2x32xf32>
    %cst_152 = arith.constant 1.000000e+00 : f32
    %1066 = vector.broadcast %cst_152 : f32 to vector<2x32xf32>
    %1067 = arith.subf %1066, %1060 : vector<2x32xf32>
    %1068 = arith.mulf %1067, %1065 : vector<2x32xf32>
    %1069 = arith.mulf %1060, %1044 : vector<2x32xf32>
    %1070 = arith.addf %1068, %1069 : vector<2x32xf32>
    %1071 = vector.extract_strided_slice %9 {offsets = [10, 0], sizes = [2, 1], strides = [1, 1]} : vector<14x1xf32> to vector<2x1xf32>
    %1072 = vector.extract_strided_slice %9 {offsets = [2, 0], sizes = [2, 1], strides = [1, 1]} : vector<14x1xf32> to vector<2x1xf32>
    %1073 = vector.broadcast %1071 : vector<2x1xf32> to vector<2x32xf32>
    %1074 = arith.mulf %1073, %1041 : vector<2x32xf32>
    %cst_153 = arith.constant 1.000000e+00 : f32
    %1075 = vector.broadcast %cst_153 : f32 to vector<2x1xf32>
    %1076 = arith.subf %1075, %1071 : vector<2x1xf32>
    %1077 = vector.extract_strided_slice %1009 {offsets = [0, 0], sizes = [2, 32], strides = [1, 1]} : vector<2x64xf32> to vector<2x32xf32>
    %1078 = vector.broadcast %1076 : vector<2x1xf32> to vector<2x32xf32>
    %1079 = arith.mulf %1078, %1077 : vector<2x32xf32>
    %1080 = arith.addf %1074, %1079 : vector<2x32xf32>
    %1081 = vector.broadcast %1072 : vector<2x1xf32> to vector<2x32xf32>
    %1082 = arith.mulf %1081, %1070 : vector<2x32xf32>
    %cst_154 = arith.constant 1.000000e+00 : f32
    %1083 = vector.broadcast %cst_154 : f32 to vector<2x1xf32>
    %1084 = arith.subf %1083, %1072 : vector<2x1xf32>
    %1085 = vector.extract_strided_slice %1009 {offsets = [0, 32], sizes = [2, 32], strides = [1, 1]} : vector<2x64xf32> to vector<2x32xf32>
    %1086 = vector.broadcast %1084 : vector<2x1xf32> to vector<2x32xf32>
    %1087 = arith.mulf %1086, %1085 : vector<2x32xf32>
    %1088 = arith.addf %1082, %1087 : vector<2x32xf32>
    %1089 = tpu.concatenate %1080, %1088 in 1 : vector<2x32xf32>, vector<2x32xf32> -> vector<2x64xf32>
    %cst_155 = arith.constant dense<0.000000e+00> : vector<2x192xf32>
    %1090 = tpu.matmul %1089, %608, %cst_155 {dimension_numbers = #tpu.dot_dimension_numbers<[1], [0], [0], [1], [0, 0, 1, 1], [], []>} : vector<2x64xf32>, vector<64x192xf32>, vector<2x192xf32> -> vector<2x192xf32>
    %1091 = vector.broadcast %603 : vector<1x192xf32> to vector<2x192xf32>
    %1092 = arith.addf %1090, %1091 : vector<2x192xf32>
    %1093 = vector.extract_strided_slice %607 {offsets = [12, 0], sizes = [2, 96], strides = [1, 1]} : vector<14x192xf32> to vector<2x96xf32>
    %1094 = vector.extract_strided_slice %1092 {offsets = [0, 0], sizes = [2, 96], strides = [1, 1]} : vector<2x192xf32> to vector<2x96xf32>
    %1095 = vector.extract_strided_slice %1089 {offsets = [0, 0], sizes = [2, 32], strides = [1, 1]} : vector<2x64xf32> to vector<2x32xf32>
    %1096 = vector.extract_strided_slice %1093 {offsets = [0, 0], sizes = [2, 32], strides = [1, 1]} : vector<2x96xf32> to vector<2x32xf32>
    %1097 = vector.extract_strided_slice %1094 {offsets = [0, 0], sizes = [2, 32], strides = [1, 1]} : vector<2x96xf32> to vector<2x32xf32>
    %1098 = arith.addf %1096, %1097 : vector<2x32xf32>
    %1099 = arith.negf %1098 : vector<2x32xf32>
    %1100 = math.exp %1099 : vector<2x32xf32>
    %cst_156 = arith.constant 1.000000e+00 : f32
    %1101 = vector.broadcast %cst_156 : f32 to vector<2x32xf32>
    %1102 = arith.addf %1101, %1100 : vector<2x32xf32>
    %1103 = arith.divf %1101, %1102 : vector<2x32xf32>
    %1104 = vector.extract_strided_slice %1093 {offsets = [0, 32], sizes = [2, 32], strides = [1, 1]} : vector<2x96xf32> to vector<2x32xf32>
    %1105 = vector.extract_strided_slice %1094 {offsets = [0, 32], sizes = [2, 32], strides = [1, 1]} : vector<2x96xf32> to vector<2x32xf32>
    %1106 = arith.addf %1104, %1105 : vector<2x32xf32>
    %1107 = arith.negf %1106 : vector<2x32xf32>
    %1108 = math.exp %1107 : vector<2x32xf32>
    %cst_157 = arith.constant 1.000000e+00 : f32
    %1109 = vector.broadcast %cst_157 : f32 to vector<2x32xf32>
    %1110 = arith.addf %1109, %1108 : vector<2x32xf32>
    %1111 = arith.divf %1109, %1110 : vector<2x32xf32>
    %1112 = vector.extract_strided_slice %1093 {offsets = [0, 64], sizes = [2, 32], strides = [1, 1]} : vector<2x96xf32> to vector<2x32xf32>
    %1113 = vector.extract_strided_slice %1094 {offsets = [0, 64], sizes = [2, 32], strides = [1, 1]} : vector<2x96xf32> to vector<2x32xf32>
    %1114 = arith.mulf %1103, %1113 : vector<2x32xf32>
    %1115 = arith.addf %1112, %1114 : vector<2x32xf32>
    %1116 = math.tanh %1115 : vector<2x32xf32>
    %cst_158 = arith.constant 1.000000e+00 : f32
    %1117 = vector.broadcast %cst_158 : f32 to vector<2x32xf32>
    %1118 = arith.subf %1117, %1111 : vector<2x32xf32>
    %1119 = arith.mulf %1118, %1116 : vector<2x32xf32>
    %1120 = arith.mulf %1111, %1095 : vector<2x32xf32>
    %1121 = arith.addf %1119, %1120 : vector<2x32xf32>
    %1122 = vector.extract_strided_slice %607 {offsets = [0, 96], sizes = [2, 96], strides = [1, 1]} : vector<14x192xf32> to vector<2x96xf32>
    %1123 = vector.extract_strided_slice %1092 {offsets = [0, 96], sizes = [2, 96], strides = [1, 1]} : vector<2x192xf32> to vector<2x96xf32>
    %1124 = vector.extract_strided_slice %1089 {offsets = [0, 32], sizes = [2, 32], strides = [1, 1]} : vector<2x64xf32> to vector<2x32xf32>
    %1125 = vector.extract_strided_slice %1122 {offsets = [0, 0], sizes = [2, 32], strides = [1, 1]} : vector<2x96xf32> to vector<2x32xf32>
    %1126 = vector.extract_strided_slice %1123 {offsets = [0, 0], sizes = [2, 32], strides = [1, 1]} : vector<2x96xf32> to vector<2x32xf32>
    %1127 = arith.addf %1125, %1126 : vector<2x32xf32>
    %1128 = arith.negf %1127 : vector<2x32xf32>
    %1129 = math.exp %1128 : vector<2x32xf32>
    %cst_159 = arith.constant 1.000000e+00 : f32
    %1130 = vector.broadcast %cst_159 : f32 to vector<2x32xf32>
    %1131 = arith.addf %1130, %1129 : vector<2x32xf32>
    %1132 = arith.divf %1130, %1131 : vector<2x32xf32>
    %1133 = vector.extract_strided_slice %1122 {offsets = [0, 32], sizes = [2, 32], strides = [1, 1]} : vector<2x96xf32> to vector<2x32xf32>
    %1134 = vector.extract_strided_slice %1123 {offsets = [0, 32], sizes = [2, 32], strides = [1, 1]} : vector<2x96xf32> to vector<2x32xf32>
    %1135 = arith.addf %1133, %1134 : vector<2x32xf32>
    %1136 = arith.negf %1135 : vector<2x32xf32>
    %1137 = math.exp %1136 : vector<2x32xf32>
    %cst_160 = arith.constant 1.000000e+00 : f32
    %1138 = vector.broadcast %cst_160 : f32 to vector<2x32xf32>
    %1139 = arith.addf %1138, %1137 : vector<2x32xf32>
    %1140 = arith.divf %1138, %1139 : vector<2x32xf32>
    %1141 = vector.extract_strided_slice %1122 {offsets = [0, 64], sizes = [2, 32], strides = [1, 1]} : vector<2x96xf32> to vector<2x32xf32>
    %1142 = vector.extract_strided_slice %1123 {offsets = [0, 64], sizes = [2, 32], strides = [1, 1]} : vector<2x96xf32> to vector<2x32xf32>
    %1143 = arith.mulf %1132, %1142 : vector<2x32xf32>
    %1144 = arith.addf %1141, %1143 : vector<2x32xf32>
    %1145 = math.tanh %1144 : vector<2x32xf32>
    %cst_161 = arith.constant 1.000000e+00 : f32
    %1146 = vector.broadcast %cst_161 : f32 to vector<2x32xf32>
    %1147 = arith.subf %1146, %1140 : vector<2x32xf32>
    %1148 = arith.mulf %1147, %1145 : vector<2x32xf32>
    %1149 = arith.mulf %1140, %1124 : vector<2x32xf32>
    %1150 = arith.addf %1148, %1149 : vector<2x32xf32>
    %1151 = vector.extract_strided_slice %9 {offsets = [12, 0], sizes = [2, 1], strides = [1, 1]} : vector<14x1xf32> to vector<2x1xf32>
    %1152 = vector.extract_strided_slice %9 {offsets = [0, 0], sizes = [2, 1], strides = [1, 1]} : vector<14x1xf32> to vector<2x1xf32>
    %1153 = vector.broadcast %1151 : vector<2x1xf32> to vector<2x32xf32>
    %1154 = arith.mulf %1153, %1121 : vector<2x32xf32>
    %cst_162 = arith.constant 1.000000e+00 : f32
    %1155 = vector.broadcast %cst_162 : f32 to vector<2x1xf32>
    %1156 = arith.subf %1155, %1151 : vector<2x1xf32>
    %1157 = vector.extract_strided_slice %1089 {offsets = [0, 0], sizes = [2, 32], strides = [1, 1]} : vector<2x64xf32> to vector<2x32xf32>
    %1158 = vector.broadcast %1156 : vector<2x1xf32> to vector<2x32xf32>
    %1159 = arith.mulf %1158, %1157 : vector<2x32xf32>
    %1160 = arith.addf %1154, %1159 : vector<2x32xf32>
    %1161 = vector.broadcast %1152 : vector<2x1xf32> to vector<2x32xf32>
    %1162 = arith.mulf %1161, %1150 : vector<2x32xf32>
    %cst_163 = arith.constant 1.000000e+00 : f32
    %1163 = vector.broadcast %cst_163 : f32 to vector<2x1xf32>
    %1164 = arith.subf %1163, %1152 : vector<2x1xf32>
    %1165 = vector.extract_strided_slice %1089 {offsets = [0, 32], sizes = [2, 32], strides = [1, 1]} : vector<2x64xf32> to vector<2x32xf32>
    %1166 = vector.broadcast %1164 : vector<2x1xf32> to vector<2x32xf32>
    %1167 = arith.mulf %1166, %1165 : vector<2x32xf32>
    %1168 = arith.addf %1162, %1167 : vector<2x32xf32>
    %1169 = tpu.concatenate %1160, %1168 in 1 : vector<2x32xf32>, vector<2x32xf32> -> vector<2x64xf32>
    %c0_164 = arith.constant 0 : index
    %c0_165 = arith.constant 0 : index
    %1170 = vector.load %arg5[%c0_164, %c0_165] : memref<160x64xf32, #tpu.memory_space<vmem>>, vector<160x64xf32>
    %1171 = vector.extract_strided_slice %1170 {offsets = [0, 0], sizes = [64, 64], strides = [1, 1]} : vector<160x64xf32> to vector<64x64xf32>
    %cst_166 = arith.constant dense<0.000000e+00> : vector<2x64xf32>
    %1172 = tpu.matmul %1169, %1171, %cst_166 {dimension_numbers = #tpu.dot_dimension_numbers<[1], [0], [0], [1], [0, 0, 1, 1], [], []>} : vector<2x64xf32>, vector<64x64xf32>, vector<2x64xf32> -> vector<2x64xf32>
    %1173 = vector.extract_strided_slice %10 {offsets = [6, 0], sizes = [1, 64], strides = [1, 1]} : vector<8x192xf32> to vector<1x64xf32>
    %1174 = vector.broadcast %1173 : vector<1x64xf32> to vector<2x64xf32>
    %1175 = arith.addf %1172, %1174 : vector<2x64xf32>
    %1176 = vector.extract_strided_slice %1175 {offsets = [0, 0], sizes = [2, 32], strides = [1, 1]} : vector<2x64xf32> to vector<2x32xf32>
    %1177 = vector.extract_strided_slice %1175 {offsets = [0, 32], sizes = [2, 32], strides = [1, 1]} : vector<2x64xf32> to vector<2x32xf32>
    %cst_167 = arith.constant 0.000000e+00 : f32
    %1178 = vector.broadcast %cst_167 : f32 to vector<2x32xf32>
    %1179 = arith.maximumf %1177, %1178 : vector<2x32xf32>
    %1180 = vector.broadcast %cst_167 : f32 to vector<2x32xf32>
    %1181 = arith.subf %1177, %1180 : vector<2x32xf32>
    %1182 = arith.cmpf one, %1181, %1181 : vector<2x32xf32>
    %1183 = vector.broadcast %cst_167 : f32 to vector<2x32xf32>
    %1184 = arith.addf %1177, %1183 : vector<2x32xf32>
    %1185 = math.absf %1181 : vector<2x32xf32>
    %cst_168 = arith.constant 0.000000e+00 : f32
    %1186 = vector.broadcast %cst_168 : f32 to vector<2x32xf32>
    %1187 = arith.subf %1186, %1185 : vector<2x32xf32>
    %1188 = math.exp %1187 : vector<2x32xf32>
    %1189 = math.log1p %1188 : vector<2x32xf32>
    %1190 = arith.addf %1179, %1189 : vector<2x32xf32>
    %1191 = arith.select %1182, %1184, %1190 : vector<2x32xi1>, vector<2x32xf32>
    %c0_169 = arith.constant 0 : index
    %c0_170 = arith.constant 0 : index
    %1192 = vector.load %arg6[%c0_169, %c0_170] : memref<2x32xf32, #tpu.memory_space<vmem>>, vector<2x32xf32>
    %1193 = arith.mulf %1191, %1192 : vector<2x32xf32>
    %1194 = arith.addf %1176, %1193 : vector<2x32xf32>
    %c0_171 = arith.constant 0 : index
    %c0_172 = arith.constant 0 : index
    %1195 = vector.load %arg8[%c0_171, %c0_172] : memref<2x32xf32, #tpu.memory_space<vmem>>, vector<2x32xf32>
    tpu.vector_store %arg8[%c0_171, %c0_172], %1176 {strides = array<i32>} : memref<2x32xf32, #tpu.memory_space<vmem>>, vector<2x32xf32>,
    %c0_173 = arith.constant 0 : index
    %c0_174 = arith.constant 0 : index
    %1196 = vector.load %arg9[%c0_173, %c0_174] : memref<2x32xf32, #tpu.memory_space<vmem>>, vector<2x32xf32>
    tpu.vector_store %arg9[%c0_173, %c0_174], %1191 {strides = array<i32>} : memref<2x32xf32, #tpu.memory_space<vmem>>, vector<2x32xf32>,
    %c1_175 = arith.constant 1 : index
    %c0_176 = arith.constant 0 : index
    %c0_177 = arith.constant 0 : index
    %1197 = vector.load %arg1[%c1_175, %c0_176, %c0_177] : memref<2x64x32xf32, #tpu.memory_space<vmem>>, vector<1x64x32xf32>
    %1198 = vector.shape_cast %1197 : vector<1x64x32xf32> to vector<64x32xf32>
    %cst_178 = arith.constant dense<0.000000e+00> : vector<14x32xf32>
    %1199 = tpu.matmul %5, %1198, %cst_178 {dimension_numbers = #tpu.dot_dimension_numbers<[1], [0], [0], [1], [0, 0, 1, 1], [], []>} : vector<14x64xf32>, vector<64x32xf32>, vector<14x32xf32> -> vector<14x32xf32>
    %c0_179 = arith.constant 0 : index
    %c0_180 = arith.constant 0 : index
    %c0_181 = arith.constant 0 : index
    %1200 = vector.load %arg3[%c0_179, %c0_180, %c0_181] : memref<2x64x192xf32, #tpu.memory_space<vmem>>, vector<1x64x192xf32>
    %1201 = vector.shape_cast %1200 : vector<1x64x192xf32> to vector<64x192xf32>
    %c1_182 = arith.constant 1 : index
    %c0_183 = arith.constant 0 : index
    %c0_184 = arith.constant 0 : index
    %1202 = vector.load %arg3[%c1_182, %c0_183, %c0_184] : memref<2x64x192xf32, #tpu.memory_space<vmem>>, vector<1x64x192xf32>
    %1203 = vector.shape_cast %1202 : vector<1x64x192xf32> to vector<64x192xf32>
    %1204 = vector.extract_strided_slice %10 {offsets = [4, 0], sizes = [1, 192], strides = [1, 1]} : vector<8x192xf32> to vector<1x192xf32>
    %1205 = vector.extract_strided_slice %10 {offsets = [5, 0], sizes = [1, 192], strides = [1, 1]} : vector<8x192xf32> to vector<1x192xf32>
    %1206 = vector.extract_strided_slice %1201 {offsets = [0, 0], sizes = [32, 96], strides = [1, 1]} : vector<64x192xf32> to vector<32x96xf32>
    %cst_185 = arith.constant dense<0.000000e+00> : vector<14x96xf32>
    %1207 = tpu.matmul %1199, %1206, %cst_185 {dimension_numbers = #tpu.dot_dimension_numbers<[1], [0], [0], [1], [0, 0, 1, 1], [], []>} : vector<14x32xf32>, vector<32x96xf32>, vector<14x96xf32> -> vector<14x96xf32>
    %1208 = vector.extract_strided_slice %1204 {offsets = [0, 0], sizes = [1, 96], strides = [1, 1]} : vector<1x192xf32> to vector<1x96xf32>
    %1209 = vector.broadcast %1208 : vector<1x96xf32> to vector<14x96xf32>
    %1210 = arith.addf %1207, %1209 : vector<14x96xf32>
    %1211 = vector.extract_strided_slice %1201 {offsets = [32, 0], sizes = [32, 96], strides = [1, 1]} : vector<64x192xf32> to vector<32x96xf32>
    %1212 = vector.extract_strided_slice %1204 {offsets = [0, 96], sizes = [1, 96], strides = [1, 1]} : vector<1x192xf32> to vector<1x96xf32>
    %cst_186 = arith.constant 0.000000e+00 : f32
    %1213 = vector.broadcast %cst_186 : f32 to vector<2x32xf32>
    %cst_187 = arith.constant dense<0.000000e+00> : vector<2x96xf32>
    %1214 = tpu.matmul %1194, %1211, %cst_187 {dimension_numbers = #tpu.dot_dimension_numbers<[1], [0], [0], [1], [0, 0, 1, 1], [], []>} : vector<2x32xf32>, vector<32x96xf32>, vector<2x96xf32> -> vector<2x96xf32>
    %1215 = vector.broadcast %1212 : vector<1x96xf32> to vector<2x96xf32>
    %1216 = arith.addf %1214, %1215 : vector<2x96xf32>
    %1217 = vector.extract_strided_slice %1210 {offsets = [0, 0], sizes = [2, 96], strides = [1, 1]} : vector<14x96xf32> to vector<2x96xf32>
    %1218 = vector.extract_strided_slice %1217 {offsets = [0, 0], sizes = [2, 32], strides = [1, 1]} : vector<2x96xf32> to vector<2x32xf32>
    %1219 = vector.extract_strided_slice %1216 {offsets = [0, 0], sizes = [2, 32], strides = [1, 1]} : vector<2x96xf32> to vector<2x32xf32>
    %1220 = arith.addf %1218, %1219 : vector<2x32xf32>
    %1221 = arith.negf %1220 : vector<2x32xf32>
    %1222 = math.exp %1221 : vector<2x32xf32>
    %cst_188 = arith.constant 1.000000e+00 : f32
    %1223 = vector.broadcast %cst_188 : f32 to vector<2x32xf32>
    %1224 = arith.addf %1223, %1222 : vector<2x32xf32>
    %1225 = arith.divf %1223, %1224 : vector<2x32xf32>
    %1226 = vector.extract_strided_slice %1217 {offsets = [0, 32], sizes = [2, 32], strides = [1, 1]} : vector<2x96xf32> to vector<2x32xf32>
    %1227 = vector.extract_strided_slice %1216 {offsets = [0, 32], sizes = [2, 32], strides = [1, 1]} : vector<2x96xf32> to vector<2x32xf32>
    %1228 = arith.addf %1226, %1227 : vector<2x32xf32>
    %1229 = arith.negf %1228 : vector<2x32xf32>
    %1230 = math.exp %1229 : vector<2x32xf32>
    %cst_189 = arith.constant 1.000000e+00 : f32
    %1231 = vector.broadcast %cst_189 : f32 to vector<2x32xf32>
    %1232 = arith.addf %1231, %1230 : vector<2x32xf32>
    %1233 = arith.divf %1231, %1232 : vector<2x32xf32>
    %1234 = vector.extract_strided_slice %1217 {offsets = [0, 64], sizes = [2, 32], strides = [1, 1]} : vector<2x96xf32> to vector<2x32xf32>
    %1235 = vector.extract_strided_slice %1216 {offsets = [0, 64], sizes = [2, 32], strides = [1, 1]} : vector<2x96xf32> to vector<2x32xf32>
    %1236 = arith.mulf %1225, %1235 : vector<2x32xf32>
    %1237 = arith.addf %1234, %1236 : vector<2x32xf32>
    %1238 = math.tanh %1237 : vector<2x32xf32>
    %cst_190 = arith.constant 1.000000e+00 : f32
    %1239 = vector.broadcast %cst_190 : f32 to vector<2x32xf32>
    %1240 = arith.subf %1239, %1233 : vector<2x32xf32>
    %1241 = arith.mulf %1240, %1238 : vector<2x32xf32>
    %1242 = arith.mulf %1233, %1194 : vector<2x32xf32>
    %1243 = arith.addf %1241, %1242 : vector<2x32xf32>
    %1244 = tpu.concatenate %1243, %1194 in 1 : vector<2x32xf32>, vector<2x32xf32> -> vector<2x64xf32>
    %cst_191 = arith.constant dense<0.000000e+00> : vector<2x192xf32>
    %1245 = tpu.matmul %1244, %1203, %cst_191 {dimension_numbers = #tpu.dot_dimension_numbers<[1], [0], [0], [1], [0, 0, 1, 1], [], []>} : vector<2x64xf32>, vector<64x192xf32>, vector<2x192xf32> -> vector<2x192xf32>
    %1246 = vector.broadcast %1205 : vector<1x192xf32> to vector<2x192xf32>
    %1247 = arith.addf %1245, %1246 : vector<2x192xf32>
    %1248 = vector.extract_strided_slice %1247 {offsets = [0, 0], sizes = [2, 96], strides = [1, 1]} : vector<2x192xf32> to vector<2x96xf32>
    %1249 = vector.extract_strided_slice %1247 {offsets = [0, 96], sizes = [2, 96], strides = [1, 1]} : vector<2x192xf32> to vector<2x96xf32>
    %1250 = vector.extract_strided_slice %1248 {offsets = [0, 0], sizes = [2, 32], strides = [1, 1]} : vector<2x96xf32> to vector<2x32xf32>
    %1251 = vector.extract_strided_slice %1249 {offsets = [0, 0], sizes = [2, 32], strides = [1, 1]} : vector<2x96xf32> to vector<2x32xf32>
    %1252 = arith.addf %1250, %1251 : vector<2x32xf32>
    %1253 = arith.negf %1252 : vector<2x32xf32>
    %1254 = math.exp %1253 : vector<2x32xf32>
    %cst_192 = arith.constant 1.000000e+00 : f32
    %1255 = vector.broadcast %cst_192 : f32 to vector<2x32xf32>
    %1256 = arith.addf %1255, %1254 : vector<2x32xf32>
    %1257 = arith.divf %1255, %1256 : vector<2x32xf32>
    %1258 = vector.extract_strided_slice %1248 {offsets = [0, 32], sizes = [2, 32], strides = [1, 1]} : vector<2x96xf32> to vector<2x32xf32>
    %1259 = vector.extract_strided_slice %1249 {offsets = [0, 32], sizes = [2, 32], strides = [1, 1]} : vector<2x96xf32> to vector<2x32xf32>
    %1260 = arith.addf %1258, %1259 : vector<2x32xf32>
    %1261 = arith.negf %1260 : vector<2x32xf32>
    %1262 = math.exp %1261 : vector<2x32xf32>
    %cst_193 = arith.constant 1.000000e+00 : f32
    %1263 = vector.broadcast %cst_193 : f32 to vector<2x32xf32>
    %1264 = arith.addf %1263, %1262 : vector<2x32xf32>
    %1265 = arith.divf %1263, %1264 : vector<2x32xf32>
    %1266 = vector.extract_strided_slice %1248 {offsets = [0, 64], sizes = [2, 32], strides = [1, 1]} : vector<2x96xf32> to vector<2x32xf32>
    %1267 = vector.extract_strided_slice %1249 {offsets = [0, 64], sizes = [2, 32], strides = [1, 1]} : vector<2x96xf32> to vector<2x32xf32>
    %1268 = arith.mulf %1257, %1267 : vector<2x32xf32>
    %1269 = arith.addf %1266, %1268 : vector<2x32xf32>
    %1270 = math.tanh %1269 : vector<2x32xf32>
    %cst_194 = arith.constant 1.000000e+00 : f32
    %1271 = vector.broadcast %cst_194 : f32 to vector<2x32xf32>
    %1272 = arith.subf %1271, %1265 : vector<2x32xf32>
    %1273 = arith.mulf %1272, %1270 : vector<2x32xf32>
    %1274 = arith.mulf %1265, %1194 : vector<2x32xf32>
    %1275 = arith.addf %1273, %1274 : vector<2x32xf32>
    %c0_195 = arith.constant 0 : index
    %c0_196 = arith.constant 0 : index
    %1276 = vector.load %arg12[%c0_195, %c0_196] : memref<14x32xf32, #tpu.memory_space<vmem>>, vector<2x32xf32>
    tpu.vector_store %arg12[%c0_195, %c0_196], %1275 {strides = array<i32>} : memref<14x32xf32, #tpu.memory_space<vmem>>, vector<2x32xf32>,
    %1277 = arith.addf %1213, %1275 : vector<2x32xf32>
    %cst_197 = arith.constant dense<0.000000e+00> : vector<2x96xf32>
    %1278 = tpu.matmul %1243, %1211, %cst_197 {dimension_numbers = #tpu.dot_dimension_numbers<[1], [0], [0], [1], [0, 0, 1, 1], [], []>} : vector<2x32xf32>, vector<32x96xf32>, vector<2x96xf32> -> vector<2x96xf32>
    %1279 = vector.broadcast %1212 : vector<1x96xf32> to vector<2x96xf32>
    %1280 = arith.addf %1278, %1279 : vector<2x96xf32>
    %1281 = vector.extract_strided_slice %1210 {offsets = [2, 0], sizes = [2, 96], strides = [1, 1]} : vector<14x96xf32> to vector<2x96xf32>
    %1282 = vector.extract_strided_slice %1281 {offsets = [0, 0], sizes = [2, 32], strides = [1, 1]} : vector<2x96xf32> to vector<2x32xf32>
    %1283 = vector.extract_strided_slice %1280 {offsets = [0, 0], sizes = [2, 32], strides = [1, 1]} : vector<2x96xf32> to vector<2x32xf32>
    %1284 = arith.addf %1282, %1283 : vector<2x32xf32>
    %1285 = arith.negf %1284 : vector<2x32xf32>
    %1286 = math.exp %1285 : vector<2x32xf32>
    %cst_198 = arith.constant 1.000000e+00 : f32
    %1287 = vector.broadcast %cst_198 : f32 to vector<2x32xf32>
    %1288 = arith.addf %1287, %1286 : vector<2x32xf32>
    %1289 = arith.divf %1287, %1288 : vector<2x32xf32>
    %1290 = vector.extract_strided_slice %1281 {offsets = [0, 32], sizes = [2, 32], strides = [1, 1]} : vector<2x96xf32> to vector<2x32xf32>
    %1291 = vector.extract_strided_slice %1280 {offsets = [0, 32], sizes = [2, 32], strides = [1, 1]} : vector<2x96xf32> to vector<2x32xf32>
    %1292 = arith.addf %1290, %1291 : vector<2x32xf32>
    %1293 = arith.negf %1292 : vector<2x32xf32>
    %1294 = math.exp %1293 : vector<2x32xf32>
    %cst_199 = arith.constant 1.000000e+00 : f32
    %1295 = vector.broadcast %cst_199 : f32 to vector<2x32xf32>
    %1296 = arith.addf %1295, %1294 : vector<2x32xf32>
    %1297 = arith.divf %1295, %1296 : vector<2x32xf32>
    %1298 = vector.extract_strided_slice %1281 {offsets = [0, 64], sizes = [2, 32], strides = [1, 1]} : vector<2x96xf32> to vector<2x32xf32>
    %1299 = vector.extract_strided_slice %1280 {offsets = [0, 64], sizes = [2, 32], strides = [1, 1]} : vector<2x96xf32> to vector<2x32xf32>
    %1300 = arith.mulf %1289, %1299 : vector<2x32xf32>
    %1301 = arith.addf %1298, %1300 : vector<2x32xf32>
    %1302 = math.tanh %1301 : vector<2x32xf32>
    %cst_200 = arith.constant 1.000000e+00 : f32
    %1303 = vector.broadcast %cst_200 : f32 to vector<2x32xf32>
    %1304 = arith.subf %1303, %1297 : vector<2x32xf32>
    %1305 = arith.mulf %1304, %1302 : vector<2x32xf32>
    %1306 = arith.mulf %1297, %1243 : vector<2x32xf32>
    %1307 = arith.addf %1305, %1306 : vector<2x32xf32>
    %1308 = tpu.concatenate %1307, %1275 in 1 : vector<2x32xf32>, vector<2x32xf32> -> vector<2x64xf32>
    %cst_201 = arith.constant dense<0.000000e+00> : vector<2x192xf32>
    %1309 = tpu.matmul %1308, %1203, %cst_201 {dimension_numbers = #tpu.dot_dimension_numbers<[1], [0], [0], [1], [0, 0, 1, 1], [], []>} : vector<2x64xf32>, vector<64x192xf32>, vector<2x192xf32> -> vector<2x192xf32>
    %1310 = vector.broadcast %1205 : vector<1x192xf32> to vector<2x192xf32>
    %1311 = arith.addf %1309, %1310 : vector<2x192xf32>
    %1312 = vector.extract_strided_slice %1311 {offsets = [0, 0], sizes = [2, 96], strides = [1, 1]} : vector<2x192xf32> to vector<2x96xf32>
    %1313 = vector.extract_strided_slice %1311 {offsets = [0, 96], sizes = [2, 96], strides = [1, 1]} : vector<2x192xf32> to vector<2x96xf32>
    %1314 = vector.extract_strided_slice %1312 {offsets = [0, 0], sizes = [2, 32], strides = [1, 1]} : vector<2x96xf32> to vector<2x32xf32>
    %1315 = vector.extract_strided_slice %1313 {offsets = [0, 0], sizes = [2, 32], strides = [1, 1]} : vector<2x96xf32> to vector<2x32xf32>
    %1316 = arith.addf %1314, %1315 : vector<2x32xf32>
    %1317 = arith.negf %1316 : vector<2x32xf32>
    %1318 = math.exp %1317 : vector<2x32xf32>
    %cst_202 = arith.constant 1.000000e+00 : f32
    %1319 = vector.broadcast %cst_202 : f32 to vector<2x32xf32>
    %1320 = arith.addf %1319, %1318 : vector<2x32xf32>
    %1321 = arith.divf %1319, %1320 : vector<2x32xf32>
    %1322 = vector.extract_strided_slice %1312 {offsets = [0, 32], sizes = [2, 32], strides = [1, 1]} : vector<2x96xf32> to vector<2x32xf32>
    %1323 = vector.extract_strided_slice %1313 {offsets = [0, 32], sizes = [2, 32], strides = [1, 1]} : vector<2x96xf32> to vector<2x32xf32>
    %1324 = arith.addf %1322, %1323 : vector<2x32xf32>
    %1325 = arith.negf %1324 : vector<2x32xf32>
    %1326 = math.exp %1325 : vector<2x32xf32>
    %cst_203 = arith.constant 1.000000e+00 : f32
    %1327 = vector.broadcast %cst_203 : f32 to vector<2x32xf32>
    %1328 = arith.addf %1327, %1326 : vector<2x32xf32>
    %1329 = arith.divf %1327, %1328 : vector<2x32xf32>
    %1330 = vector.extract_strided_slice %1312 {offsets = [0, 64], sizes = [2, 32], strides = [1, 1]} : vector<2x96xf32> to vector<2x32xf32>
    %1331 = vector.extract_strided_slice %1313 {offsets = [0, 64], sizes = [2, 32], strides = [1, 1]} : vector<2x96xf32> to vector<2x32xf32>
    %1332 = arith.mulf %1321, %1331 : vector<2x32xf32>
    %1333 = arith.addf %1330, %1332 : vector<2x32xf32>
    %1334 = math.tanh %1333 : vector<2x32xf32>
    %cst_204 = arith.constant 1.000000e+00 : f32
    %1335 = vector.broadcast %cst_204 : f32 to vector<2x32xf32>
    %1336 = arith.subf %1335, %1329 : vector<2x32xf32>
    %1337 = arith.mulf %1336, %1334 : vector<2x32xf32>
    %1338 = arith.mulf %1329, %1275 : vector<2x32xf32>
    %1339 = arith.addf %1337, %1338 : vector<2x32xf32>
    %c2_205 = arith.constant 2 : index
    %c0_206 = arith.constant 0 : index
    %1340 = vector.load %arg12[%c2_205, %c0_206] : memref<14x32xf32, #tpu.memory_space<vmem>>, vector<2x32xf32>
    tpu.vector_store %arg12[%c2_205, %c0_206], %1339 {strides = array<i32>} : memref<14x32xf32, #tpu.memory_space<vmem>>, vector<2x32xf32>,
    %1341 = arith.addf %1277, %1339 : vector<2x32xf32>
    %cst_207 = arith.constant dense<0.000000e+00> : vector<2x96xf32>
    %1342 = tpu.matmul %1307, %1211, %cst_207 {dimension_numbers = #tpu.dot_dimension_numbers<[1], [0], [0], [1], [0, 0, 1, 1], [], []>} : vector<2x32xf32>, vector<32x96xf32>, vector<2x96xf32> -> vector<2x96xf32>
    %1343 = vector.broadcast %1212 : vector<1x96xf32> to vector<2x96xf32>
    %1344 = arith.addf %1342, %1343 : vector<2x96xf32>
    %1345 = vector.extract_strided_slice %1210 {offsets = [4, 0], sizes = [2, 96], strides = [1, 1]} : vector<14x96xf32> to vector<2x96xf32>
    %1346 = vector.extract_strided_slice %1345 {offsets = [0, 0], sizes = [2, 32], strides = [1, 1]} : vector<2x96xf32> to vector<2x32xf32>
    %1347 = vector.extract_strided_slice %1344 {offsets = [0, 0], sizes = [2, 32], strides = [1, 1]} : vector<2x96xf32> to vector<2x32xf32>
    %1348 = arith.addf %1346, %1347 : vector<2x32xf32>
    %1349 = arith.negf %1348 : vector<2x32xf32>
    %1350 = math.exp %1349 : vector<2x32xf32>
    %cst_208 = arith.constant 1.000000e+00 : f32
    %1351 = vector.broadcast %cst_208 : f32 to vector<2x32xf32>
    %1352 = arith.addf %1351, %1350 : vector<2x32xf32>
    %1353 = arith.divf %1351, %1352 : vector<2x32xf32>
    %1354 = vector.extract_strided_slice %1345 {offsets = [0, 32], sizes = [2, 32], strides = [1, 1]} : vector<2x96xf32> to vector<2x32xf32>
    %1355 = vector.extract_strided_slice %1344 {offsets = [0, 32], sizes = [2, 32], strides = [1, 1]} : vector<2x96xf32> to vector<2x32xf32>
    %1356 = arith.addf %1354, %1355 : vector<2x32xf32>
    %1357 = arith.negf %1356 : vector<2x32xf32>
    %1358 = math.exp %1357 : vector<2x32xf32>
    %cst_209 = arith.constant 1.000000e+00 : f32
    %1359 = vector.broadcast %cst_209 : f32 to vector<2x32xf32>
    %1360 = arith.addf %1359, %1358 : vector<2x32xf32>
    %1361 = arith.divf %1359, %1360 : vector<2x32xf32>
    %1362 = vector.extract_strided_slice %1345 {offsets = [0, 64], sizes = [2, 32], strides = [1, 1]} : vector<2x96xf32> to vector<2x32xf32>
    %1363 = vector.extract_strided_slice %1344 {offsets = [0, 64], sizes = [2, 32], strides = [1, 1]} : vector<2x96xf32> to vector<2x32xf32>
    %1364 = arith.mulf %1353, %1363 : vector<2x32xf32>
    %1365 = arith.addf %1362, %1364 : vector<2x32xf32>
    %1366 = math.tanh %1365 : vector<2x32xf32>
    %cst_210 = arith.constant 1.000000e+00 : f32
    %1367 = vector.broadcast %cst_210 : f32 to vector<2x32xf32>
    %1368 = arith.subf %1367, %1361 : vector<2x32xf32>
    %1369 = arith.mulf %1368, %1366 : vector<2x32xf32>
    %1370 = arith.mulf %1361, %1307 : vector<2x32xf32>
    %1371 = arith.addf %1369, %1370 : vector<2x32xf32>
    %1372 = tpu.concatenate %1371, %1339 in 1 : vector<2x32xf32>, vector<2x32xf32> -> vector<2x64xf32>
    %cst_211 = arith.constant dense<0.000000e+00> : vector<2x192xf32>
    %1373 = tpu.matmul %1372, %1203, %cst_211 {dimension_numbers = #tpu.dot_dimension_numbers<[1], [0], [0], [1], [0, 0, 1, 1], [], []>} : vector<2x64xf32>, vector<64x192xf32>, vector<2x192xf32> -> vector<2x192xf32>
    %1374 = vector.broadcast %1205 : vector<1x192xf32> to vector<2x192xf32>
    %1375 = arith.addf %1373, %1374 : vector<2x192xf32>
    %1376 = vector.extract_strided_slice %1375 {offsets = [0, 0], sizes = [2, 96], strides = [1, 1]} : vector<2x192xf32> to vector<2x96xf32>
    %1377 = vector.extract_strided_slice %1375 {offsets = [0, 96], sizes = [2, 96], strides = [1, 1]} : vector<2x192xf32> to vector<2x96xf32>
    %1378 = vector.extract_strided_slice %1376 {offsets = [0, 0], sizes = [2, 32], strides = [1, 1]} : vector<2x96xf32> to vector<2x32xf32>
    %1379 = vector.extract_strided_slice %1377 {offsets = [0, 0], sizes = [2, 32], strides = [1, 1]} : vector<2x96xf32> to vector<2x32xf32>
    %1380 = arith.addf %1378, %1379 : vector<2x32xf32>
    %1381 = arith.negf %1380 : vector<2x32xf32>
    %1382 = math.exp %1381 : vector<2x32xf32>
    %cst_212 = arith.constant 1.000000e+00 : f32
    %1383 = vector.broadcast %cst_212 : f32 to vector<2x32xf32>
    %1384 = arith.addf %1383, %1382 : vector<2x32xf32>
    %1385 = arith.divf %1383, %1384 : vector<2x32xf32>
    %1386 = vector.extract_strided_slice %1376 {offsets = [0, 32], sizes = [2, 32], strides = [1, 1]} : vector<2x96xf32> to vector<2x32xf32>
    %1387 = vector.extract_strided_slice %1377 {offsets = [0, 32], sizes = [2, 32], strides = [1, 1]} : vector<2x96xf32> to vector<2x32xf32>
    %1388 = arith.addf %1386, %1387 : vector<2x32xf32>
    %1389 = arith.negf %1388 : vector<2x32xf32>
    %1390 = math.exp %1389 : vector<2x32xf32>
    %cst_213 = arith.constant 1.000000e+00 : f32
    %1391 = vector.broadcast %cst_213 : f32 to vector<2x32xf32>
    %1392 = arith.addf %1391, %1390 : vector<2x32xf32>
    %1393 = arith.divf %1391, %1392 : vector<2x32xf32>
    %1394 = vector.extract_strided_slice %1376 {offsets = [0, 64], sizes = [2, 32], strides = [1, 1]} : vector<2x96xf32> to vector<2x32xf32>
    %1395 = vector.extract_strided_slice %1377 {offsets = [0, 64], sizes = [2, 32], strides = [1, 1]} : vector<2x96xf32> to vector<2x32xf32>
    %1396 = arith.mulf %1385, %1395 : vector<2x32xf32>
    %1397 = arith.addf %1394, %1396 : vector<2x32xf32>
    %1398 = math.tanh %1397 : vector<2x32xf32>
    %cst_214 = arith.constant 1.000000e+00 : f32
    %1399 = vector.broadcast %cst_214 : f32 to vector<2x32xf32>
    %1400 = arith.subf %1399, %1393 : vector<2x32xf32>
    %1401 = arith.mulf %1400, %1398 : vector<2x32xf32>
    %1402 = arith.mulf %1393, %1339 : vector<2x32xf32>
    %1403 = arith.addf %1401, %1402 : vector<2x32xf32>
    %c4_215 = arith.constant 4 : index
    %c0_216 = arith.constant 0 : index
    %1404 = vector.load %arg12[%c4_215, %c0_216] : memref<14x32xf32, #tpu.memory_space<vmem>>, vector<2x32xf32>
    tpu.vector_store %arg12[%c4_215, %c0_216], %1403 {strides = array<i32>} : memref<14x32xf32, #tpu.memory_space<vmem>>, vector<2x32xf32>,
    %1405 = arith.addf %1341, %1403 : vector<2x32xf32>
    %cst_217 = arith.constant dense<0.000000e+00> : vector<2x96xf32>
    %1406 = tpu.matmul %1371, %1211, %cst_217 {dimension_numbers = #tpu.dot_dimension_numbers<[1], [0], [0], [1], [0, 0, 1, 1], [], []>} : vector<2x32xf32>, vector<32x96xf32>, vector<2x96xf32> -> vector<2x96xf32>
    %1407 = vector.broadcast %1212 : vector<1x96xf32> to vector<2x96xf32>
    %1408 = arith.addf %1406, %1407 : vector<2x96xf32>
    %1409 = vector.extract_strided_slice %1210 {offsets = [6, 0], sizes = [2, 96], strides = [1, 1]} : vector<14x96xf32> to vector<2x96xf32>
    %1410 = vector.extract_strided_slice %1409 {offsets = [0, 0], sizes = [2, 32], strides = [1, 1]} : vector<2x96xf32> to vector<2x32xf32>
    %1411 = vector.extract_strided_slice %1408 {offsets = [0, 0], sizes = [2, 32], strides = [1, 1]} : vector<2x96xf32> to vector<2x32xf32>
    %1412 = arith.addf %1410, %1411 : vector<2x32xf32>
    %1413 = arith.negf %1412 : vector<2x32xf32>
    %1414 = math.exp %1413 : vector<2x32xf32>
    %cst_218 = arith.constant 1.000000e+00 : f32
    %1415 = vector.broadcast %cst_218 : f32 to vector<2x32xf32>
    %1416 = arith.addf %1415, %1414 : vector<2x32xf32>
    %1417 = arith.divf %1415, %1416 : vector<2x32xf32>
    %1418 = vector.extract_strided_slice %1409 {offsets = [0, 32], sizes = [2, 32], strides = [1, 1]} : vector<2x96xf32> to vector<2x32xf32>
    %1419 = vector.extract_strided_slice %1408 {offsets = [0, 32], sizes = [2, 32], strides = [1, 1]} : vector<2x96xf32> to vector<2x32xf32>
    %1420 = arith.addf %1418, %1419 : vector<2x32xf32>
    %1421 = arith.negf %1420 : vector<2x32xf32>
    %1422 = math.exp %1421 : vector<2x32xf32>
    %cst_219 = arith.constant 1.000000e+00 : f32
    %1423 = vector.broadcast %cst_219 : f32 to vector<2x32xf32>
    %1424 = arith.addf %1423, %1422 : vector<2x32xf32>
    %1425 = arith.divf %1423, %1424 : vector<2x32xf32>
    %1426 = vector.extract_strided_slice %1409 {offsets = [0, 64], sizes = [2, 32], strides = [1, 1]} : vector<2x96xf32> to vector<2x32xf32>
    %1427 = vector.extract_strided_slice %1408 {offsets = [0, 64], sizes = [2, 32], strides = [1, 1]} : vector<2x96xf32> to vector<2x32xf32>
    %1428 = arith.mulf %1417, %1427 : vector<2x32xf32>
    %1429 = arith.addf %1426, %1428 : vector<2x32xf32>
    %1430 = math.tanh %1429 : vector<2x32xf32>
    %cst_220 = arith.constant 1.000000e+00 : f32
    %1431 = vector.broadcast %cst_220 : f32 to vector<2x32xf32>
    %1432 = arith.subf %1431, %1425 : vector<2x32xf32>
    %1433 = arith.mulf %1432, %1430 : vector<2x32xf32>
    %1434 = arith.mulf %1425, %1371 : vector<2x32xf32>
    %1435 = arith.addf %1433, %1434 : vector<2x32xf32>
    %1436 = tpu.concatenate %1435, %1403 in 1 : vector<2x32xf32>, vector<2x32xf32> -> vector<2x64xf32>
    %cst_221 = arith.constant dense<0.000000e+00> : vector<2x192xf32>
    %1437 = tpu.matmul %1436, %1203, %cst_221 {dimension_numbers = #tpu.dot_dimension_numbers<[1], [0], [0], [1], [0, 0, 1, 1], [], []>} : vector<2x64xf32>, vector<64x192xf32>, vector<2x192xf32> -> vector<2x192xf32>
    %1438 = vector.broadcast %1205 : vector<1x192xf32> to vector<2x192xf32>
    %1439 = arith.addf %1437, %1438 : vector<2x192xf32>
    %1440 = vector.extract_strided_slice %1439 {offsets = [0, 0], sizes = [2, 96], strides = [1, 1]} : vector<2x192xf32> to vector<2x96xf32>
    %1441 = vector.extract_strided_slice %1439 {offsets = [0, 96], sizes = [2, 96], strides = [1, 1]} : vector<2x192xf32> to vector<2x96xf32>
    %1442 = vector.extract_strided_slice %1440 {offsets = [0, 0], sizes = [2, 32], strides = [1, 1]} : vector<2x96xf32> to vector<2x32xf32>
    %1443 = vector.extract_strided_slice %1441 {offsets = [0, 0], sizes = [2, 32], strides = [1, 1]} : vector<2x96xf32> to vector<2x32xf32>
    %1444 = arith.addf %1442, %1443 : vector<2x32xf32>
    %1445 = arith.negf %1444 : vector<2x32xf32>
    %1446 = math.exp %1445 : vector<2x32xf32>
    %cst_222 = arith.constant 1.000000e+00 : f32
    %1447 = vector.broadcast %cst_222 : f32 to vector<2x32xf32>
    %1448 = arith.addf %1447, %1446 : vector<2x32xf32>
    %1449 = arith.divf %1447, %1448 : vector<2x32xf32>
    %1450 = vector.extract_strided_slice %1440 {offsets = [0, 32], sizes = [2, 32], strides = [1, 1]} : vector<2x96xf32> to vector<2x32xf32>
    %1451 = vector.extract_strided_slice %1441 {offsets = [0, 32], sizes = [2, 32], strides = [1, 1]} : vector<2x96xf32> to vector<2x32xf32>
    %1452 = arith.addf %1450, %1451 : vector<2x32xf32>
    %1453 = arith.negf %1452 : vector<2x32xf32>
    %1454 = math.exp %1453 : vector<2x32xf32>
    %cst_223 = arith.constant 1.000000e+00 : f32
    %1455 = vector.broadcast %cst_223 : f32 to vector<2x32xf32>
    %1456 = arith.addf %1455, %1454 : vector<2x32xf32>
    %1457 = arith.divf %1455, %1456 : vector<2x32xf32>
    %1458 = vector.extract_strided_slice %1440 {offsets = [0, 64], sizes = [2, 32], strides = [1, 1]} : vector<2x96xf32> to vector<2x32xf32>
    %1459 = vector.extract_strided_slice %1441 {offsets = [0, 64], sizes = [2, 32], strides = [1, 1]} : vector<2x96xf32> to vector<2x32xf32>
    %1460 = arith.mulf %1449, %1459 : vector<2x32xf32>
    %1461 = arith.addf %1458, %1460 : vector<2x32xf32>
    %1462 = math.tanh %1461 : vector<2x32xf32>
    %cst_224 = arith.constant 1.000000e+00 : f32
    %1463 = vector.broadcast %cst_224 : f32 to vector<2x32xf32>
    %1464 = arith.subf %1463, %1457 : vector<2x32xf32>
    %1465 = arith.mulf %1464, %1462 : vector<2x32xf32>
    %1466 = arith.mulf %1457, %1403 : vector<2x32xf32>
    %1467 = arith.addf %1465, %1466 : vector<2x32xf32>
    %c6_225 = arith.constant 6 : index
    %c0_226 = arith.constant 0 : index
    %1468 = vector.load %arg12[%c6_225, %c0_226] : memref<14x32xf32, #tpu.memory_space<vmem>>, vector<2x32xf32>
    tpu.vector_store %arg12[%c6_225, %c0_226], %1467 {strides = array<i32>} : memref<14x32xf32, #tpu.memory_space<vmem>>, vector<2x32xf32>,
    %1469 = arith.addf %1405, %1467 : vector<2x32xf32>
    %cst_227 = arith.constant dense<0.000000e+00> : vector<2x96xf32>
    %1470 = tpu.matmul %1435, %1211, %cst_227 {dimension_numbers = #tpu.dot_dimension_numbers<[1], [0], [0], [1], [0, 0, 1, 1], [], []>} : vector<2x32xf32>, vector<32x96xf32>, vector<2x96xf32> -> vector<2x96xf32>
    %1471 = vector.broadcast %1212 : vector<1x96xf32> to vector<2x96xf32>
    %1472 = arith.addf %1470, %1471 : vector<2x96xf32>
    %1473 = vector.extract_strided_slice %1210 {offsets = [8, 0], sizes = [2, 96], strides = [1, 1]} : vector<14x96xf32> to vector<2x96xf32>
    %1474 = vector.extract_strided_slice %1473 {offsets = [0, 0], sizes = [2, 32], strides = [1, 1]} : vector<2x96xf32> to vector<2x32xf32>
    %1475 = vector.extract_strided_slice %1472 {offsets = [0, 0], sizes = [2, 32], strides = [1, 1]} : vector<2x96xf32> to vector<2x32xf32>
    %1476 = arith.addf %1474, %1475 : vector<2x32xf32>
    %1477 = arith.negf %1476 : vector<2x32xf32>
    %1478 = math.exp %1477 : vector<2x32xf32>
    %cst_228 = arith.constant 1.000000e+00 : f32
    %1479 = vector.broadcast %cst_228 : f32 to vector<2x32xf32>
    %1480 = arith.addf %1479, %1478 : vector<2x32xf32>
    %1481 = arith.divf %1479, %1480 : vector<2x32xf32>
    %1482 = vector.extract_strided_slice %1473 {offsets = [0, 32], sizes = [2, 32], strides = [1, 1]} : vector<2x96xf32> to vector<2x32xf32>
    %1483 = vector.extract_strided_slice %1472 {offsets = [0, 32], sizes = [2, 32], strides = [1, 1]} : vector<2x96xf32> to vector<2x32xf32>
    %1484 = arith.addf %1482, %1483 : vector<2x32xf32>
    %1485 = arith.negf %1484 : vector<2x32xf32>
    %1486 = math.exp %1485 : vector<2x32xf32>
    %cst_229 = arith.constant 1.000000e+00 : f32
    %1487 = vector.broadcast %cst_229 : f32 to vector<2x32xf32>
    %1488 = arith.addf %1487, %1486 : vector<2x32xf32>
    %1489 = arith.divf %1487, %1488 : vector<2x32xf32>
    %1490 = vector.extract_strided_slice %1473 {offsets = [0, 64], sizes = [2, 32], strides = [1, 1]} : vector<2x96xf32> to vector<2x32xf32>
    %1491 = vector.extract_strided_slice %1472 {offsets = [0, 64], sizes = [2, 32], strides = [1, 1]} : vector<2x96xf32> to vector<2x32xf32>
    %1492 = arith.mulf %1481, %1491 : vector<2x32xf32>
    %1493 = arith.addf %1490, %1492 : vector<2x32xf32>
    %1494 = math.tanh %1493 : vector<2x32xf32>
    %cst_230 = arith.constant 1.000000e+00 : f32
    %1495 = vector.broadcast %cst_230 : f32 to vector<2x32xf32>
    %1496 = arith.subf %1495, %1489 : vector<2x32xf32>
    %1497 = arith.mulf %1496, %1494 : vector<2x32xf32>
    %1498 = arith.mulf %1489, %1435 : vector<2x32xf32>
    %1499 = arith.addf %1497, %1498 : vector<2x32xf32>
    %1500 = tpu.concatenate %1499, %1467 in 1 : vector<2x32xf32>, vector<2x32xf32> -> vector<2x64xf32>
    %cst_231 = arith.constant dense<0.000000e+00> : vector<2x192xf32>
    %1501 = tpu.matmul %1500, %1203, %cst_231 {dimension_numbers = #tpu.dot_dimension_numbers<[1], [0], [0], [1], [0, 0, 1, 1], [], []>} : vector<2x64xf32>, vector<64x192xf32>, vector<2x192xf32> -> vector<2x192xf32>
    %1502 = vector.broadcast %1205 : vector<1x192xf32> to vector<2x192xf32>
    %1503 = arith.addf %1501, %1502 : vector<2x192xf32>
    %1504 = vector.extract_strided_slice %1503 {offsets = [0, 0], sizes = [2, 96], strides = [1, 1]} : vector<2x192xf32> to vector<2x96xf32>
    %1505 = vector.extract_strided_slice %1503 {offsets = [0, 96], sizes = [2, 96], strides = [1, 1]} : vector<2x192xf32> to vector<2x96xf32>
    %1506 = vector.extract_strided_slice %1504 {offsets = [0, 0], sizes = [2, 32], strides = [1, 1]} : vector<2x96xf32> to vector<2x32xf32>
    %1507 = vector.extract_strided_slice %1505 {offsets = [0, 0], sizes = [2, 32], strides = [1, 1]} : vector<2x96xf32> to vector<2x32xf32>
    %1508 = arith.addf %1506, %1507 : vector<2x32xf32>
    %1509 = arith.negf %1508 : vector<2x32xf32>
    %1510 = math.exp %1509 : vector<2x32xf32>
    %cst_232 = arith.constant 1.000000e+00 : f32
    %1511 = vector.broadcast %cst_232 : f32 to vector<2x32xf32>
    %1512 = arith.addf %1511, %1510 : vector<2x32xf32>
    %1513 = arith.divf %1511, %1512 : vector<2x32xf32>
    %1514 = vector.extract_strided_slice %1504 {offsets = [0, 32], sizes = [2, 32], strides = [1, 1]} : vector<2x96xf32> to vector<2x32xf32>
    %1515 = vector.extract_strided_slice %1505 {offsets = [0, 32], sizes = [2, 32], strides = [1, 1]} : vector<2x96xf32> to vector<2x32xf32>
    %1516 = arith.addf %1514, %1515 : vector<2x32xf32>
    %1517 = arith.negf %1516 : vector<2x32xf32>
    %1518 = math.exp %1517 : vector<2x32xf32>
    %cst_233 = arith.constant 1.000000e+00 : f32
    %1519 = vector.broadcast %cst_233 : f32 to vector<2x32xf32>
    %1520 = arith.addf %1519, %1518 : vector<2x32xf32>
    %1521 = arith.divf %1519, %1520 : vector<2x32xf32>
    %1522 = vector.extract_strided_slice %1504 {offsets = [0, 64], sizes = [2, 32], strides = [1, 1]} : vector<2x96xf32> to vector<2x32xf32>
    %1523 = vector.extract_strided_slice %1505 {offsets = [0, 64], sizes = [2, 32], strides = [1, 1]} : vector<2x96xf32> to vector<2x32xf32>
    %1524 = arith.mulf %1513, %1523 : vector<2x32xf32>
    %1525 = arith.addf %1522, %1524 : vector<2x32xf32>
    %1526 = math.tanh %1525 : vector<2x32xf32>
    %cst_234 = arith.constant 1.000000e+00 : f32
    %1527 = vector.broadcast %cst_234 : f32 to vector<2x32xf32>
    %1528 = arith.subf %1527, %1521 : vector<2x32xf32>
    %1529 = arith.mulf %1528, %1526 : vector<2x32xf32>
    %1530 = arith.mulf %1521, %1467 : vector<2x32xf32>
    %1531 = arith.addf %1529, %1530 : vector<2x32xf32>
    %c8_235 = arith.constant 8 : index
    %c0_236 = arith.constant 0 : index
    %1532 = vector.load %arg12[%c8_235, %c0_236] : memref<14x32xf32, #tpu.memory_space<vmem>>, vector<2x32xf32>
    tpu.vector_store %arg12[%c8_235, %c0_236], %1531 {strides = array<i32>} : memref<14x32xf32, #tpu.memory_space<vmem>>, vector<2x32xf32>,
    %1533 = arith.addf %1469, %1531 : vector<2x32xf32>
    %cst_237 = arith.constant dense<0.000000e+00> : vector<2x96xf32>
    %1534 = tpu.matmul %1499, %1211, %cst_237 {dimension_numbers = #tpu.dot_dimension_numbers<[1], [0], [0], [1], [0, 0, 1, 1], [], []>} : vector<2x32xf32>, vector<32x96xf32>, vector<2x96xf32> -> vector<2x96xf32>
    %1535 = vector.broadcast %1212 : vector<1x96xf32> to vector<2x96xf32>
    %1536 = arith.addf %1534, %1535 : vector<2x96xf32>
    %1537 = vector.extract_strided_slice %1210 {offsets = [10, 0], sizes = [2, 96], strides = [1, 1]} : vector<14x96xf32> to vector<2x96xf32>
    %1538 = vector.extract_strided_slice %1537 {offsets = [0, 0], sizes = [2, 32], strides = [1, 1]} : vector<2x96xf32> to vector<2x32xf32>
    %1539 = vector.extract_strided_slice %1536 {offsets = [0, 0], sizes = [2, 32], strides = [1, 1]} : vector<2x96xf32> to vector<2x32xf32>
    %1540 = arith.addf %1538, %1539 : vector<2x32xf32>
    %1541 = arith.negf %1540 : vector<2x32xf32>
    %1542 = math.exp %1541 : vector<2x32xf32>
    %cst_238 = arith.constant 1.000000e+00 : f32
    %1543 = vector.broadcast %cst_238 : f32 to vector<2x32xf32>
    %1544 = arith.addf %1543, %1542 : vector<2x32xf32>
    %1545 = arith.divf %1543, %1544 : vector<2x32xf32>
    %1546 = vector.extract_strided_slice %1537 {offsets = [0, 32], sizes = [2, 32], strides = [1, 1]} : vector<2x96xf32> to vector<2x32xf32>
    %1547 = vector.extract_strided_slice %1536 {offsets = [0, 32], sizes = [2, 32], strides = [1, 1]} : vector<2x96xf32> to vector<2x32xf32>
    %1548 = arith.addf %1546, %1547 : vector<2x32xf32>
    %1549 = arith.negf %1548 : vector<2x32xf32>
    %1550 = math.exp %1549 : vector<2x32xf32>
    %cst_239 = arith.constant 1.000000e+00 : f32
    %1551 = vector.broadcast %cst_239 : f32 to vector<2x32xf32>
    %1552 = arith.addf %1551, %1550 : vector<2x32xf32>
    %1553 = arith.divf %1551, %1552 : vector<2x32xf32>
    %1554 = vector.extract_strided_slice %1537 {offsets = [0, 64], sizes = [2, 32], strides = [1, 1]} : vector<2x96xf32> to vector<2x32xf32>
    %1555 = vector.extract_strided_slice %1536 {offsets = [0, 64], sizes = [2, 32], strides = [1, 1]} : vector<2x96xf32> to vector<2x32xf32>
    %1556 = arith.mulf %1545, %1555 : vector<2x32xf32>
    %1557 = arith.addf %1554, %1556 : vector<2x32xf32>
    %1558 = math.tanh %1557 : vector<2x32xf32>
    %cst_240 = arith.constant 1.000000e+00 : f32
    %1559 = vector.broadcast %cst_240 : f32 to vector<2x32xf32>
    %1560 = arith.subf %1559, %1553 : vector<2x32xf32>
    %1561 = arith.mulf %1560, %1558 : vector<2x32xf32>
    %1562 = arith.mulf %1553, %1499 : vector<2x32xf32>
    %1563 = arith.addf %1561, %1562 : vector<2x32xf32>
    %1564 = tpu.concatenate %1563, %1531 in 1 : vector<2x32xf32>, vector<2x32xf32> -> vector<2x64xf32>
    %cst_241 = arith.constant dense<0.000000e+00> : vector<2x192xf32>
    %1565 = tpu.matmul %1564, %1203, %cst_241 {dimension_numbers = #tpu.dot_dimension_numbers<[1], [0], [0], [1], [0, 0, 1, 1], [], []>} : vector<2x64xf32>, vector<64x192xf32>, vector<2x192xf32> -> vector<2x192xf32>
    %1566 = vector.broadcast %1205 : vector<1x192xf32> to vector<2x192xf32>
    %1567 = arith.addf %1565, %1566 : vector<2x192xf32>
    %1568 = vector.extract_strided_slice %1567 {offsets = [0, 0], sizes = [2, 96], strides = [1, 1]} : vector<2x192xf32> to vector<2x96xf32>
    %1569 = vector.extract_strided_slice %1567 {offsets = [0, 96], sizes = [2, 96], strides = [1, 1]} : vector<2x192xf32> to vector<2x96xf32>
    %1570 = vector.extract_strided_slice %1568 {offsets = [0, 0], sizes = [2, 32], strides = [1, 1]} : vector<2x96xf32> to vector<2x32xf32>
    %1571 = vector.extract_strided_slice %1569 {offsets = [0, 0], sizes = [2, 32], strides = [1, 1]} : vector<2x96xf32> to vector<2x32xf32>
    %1572 = arith.addf %1570, %1571 : vector<2x32xf32>
    %1573 = arith.negf %1572 : vector<2x32xf32>
    %1574 = math.exp %1573 : vector<2x32xf32>
    %cst_242 = arith.constant 1.000000e+00 : f32
    %1575 = vector.broadcast %cst_242 : f32 to vector<2x32xf32>
    %1576 = arith.addf %1575, %1574 : vector<2x32xf32>
    %1577 = arith.divf %1575, %1576 : vector<2x32xf32>
    %1578 = vector.extract_strided_slice %1568 {offsets = [0, 32], sizes = [2, 32], strides = [1, 1]} : vector<2x96xf32> to vector<2x32xf32>
    %1579 = vector.extract_strided_slice %1569 {offsets = [0, 32], sizes = [2, 32], strides = [1, 1]} : vector<2x96xf32> to vector<2x32xf32>
    %1580 = arith.addf %1578, %1579 : vector<2x32xf32>
    %1581 = arith.negf %1580 : vector<2x32xf32>
    %1582 = math.exp %1581 : vector<2x32xf32>
    %cst_243 = arith.constant 1.000000e+00 : f32
    %1583 = vector.broadcast %cst_243 : f32 to vector<2x32xf32>
    %1584 = arith.addf %1583, %1582 : vector<2x32xf32>
    %1585 = arith.divf %1583, %1584 : vector<2x32xf32>
    %1586 = vector.extract_strided_slice %1568 {offsets = [0, 64], sizes = [2, 32], strides = [1, 1]} : vector<2x96xf32> to vector<2x32xf32>
    %1587 = vector.extract_strided_slice %1569 {offsets = [0, 64], sizes = [2, 32], strides = [1, 1]} : vector<2x96xf32> to vector<2x32xf32>
    %1588 = arith.mulf %1577, %1587 : vector<2x32xf32>
    %1589 = arith.addf %1586, %1588 : vector<2x32xf32>
    %1590 = math.tanh %1589 : vector<2x32xf32>
    %cst_244 = arith.constant 1.000000e+00 : f32
    %1591 = vector.broadcast %cst_244 : f32 to vector<2x32xf32>
    %1592 = arith.subf %1591, %1585 : vector<2x32xf32>
    %1593 = arith.mulf %1592, %1590 : vector<2x32xf32>
    %1594 = arith.mulf %1585, %1531 : vector<2x32xf32>
    %1595 = arith.addf %1593, %1594 : vector<2x32xf32>
    %c10_245 = arith.constant 10 : index
    %c0_246 = arith.constant 0 : index
    %1596 = vector.load %arg12[%c10_245, %c0_246] : memref<14x32xf32, #tpu.memory_space<vmem>>, vector<2x32xf32>
    tpu.vector_store %arg12[%c10_245, %c0_246], %1595 {strides = array<i32>} : memref<14x32xf32, #tpu.memory_space<vmem>>, vector<2x32xf32>,
    %1597 = arith.addf %1533, %1595 : vector<2x32xf32>
    %cst_247 = arith.constant dense<0.000000e+00> : vector<2x96xf32>
    %1598 = tpu.matmul %1563, %1211, %cst_247 {dimension_numbers = #tpu.dot_dimension_numbers<[1], [0], [0], [1], [0, 0, 1, 1], [], []>} : vector<2x32xf32>, vector<32x96xf32>, vector<2x96xf32> -> vector<2x96xf32>
    %1599 = vector.broadcast %1212 : vector<1x96xf32> to vector<2x96xf32>
    %1600 = arith.addf %1598, %1599 : vector<2x96xf32>
    %1601 = vector.extract_strided_slice %1210 {offsets = [12, 0], sizes = [2, 96], strides = [1, 1]} : vector<14x96xf32> to vector<2x96xf32>
    %1602 = vector.extract_strided_slice %1601 {offsets = [0, 0], sizes = [2, 32], strides = [1, 1]} : vector<2x96xf32> to vector<2x32xf32>
    %1603 = vector.extract_strided_slice %1600 {offsets = [0, 0], sizes = [2, 32], strides = [1, 1]} : vector<2x96xf32> to vector<2x32xf32>
    %1604 = arith.addf %1602, %1603 : vector<2x32xf32>
    %1605 = arith.negf %1604 : vector<2x32xf32>
    %1606 = math.exp %1605 : vector<2x32xf32>
    %cst_248 = arith.constant 1.000000e+00 : f32
    %1607 = vector.broadcast %cst_248 : f32 to vector<2x32xf32>
    %1608 = arith.addf %1607, %1606 : vector<2x32xf32>
    %1609 = arith.divf %1607, %1608 : vector<2x32xf32>
    %1610 = vector.extract_strided_slice %1601 {offsets = [0, 32], sizes = [2, 32], strides = [1, 1]} : vector<2x96xf32> to vector<2x32xf32>
    %1611 = vector.extract_strided_slice %1600 {offsets = [0, 32], sizes = [2, 32], strides = [1, 1]} : vector<2x96xf32> to vector<2x32xf32>
    %1612 = arith.addf %1610, %1611 : vector<2x32xf32>
    %1613 = arith.negf %1612 : vector<2x32xf32>
    %1614 = math.exp %1613 : vector<2x32xf32>
    %cst_249 = arith.constant 1.000000e+00 : f32
    %1615 = vector.broadcast %cst_249 : f32 to vector<2x32xf32>
    %1616 = arith.addf %1615, %1614 : vector<2x32xf32>
    %1617 = arith.divf %1615, %1616 : vector<2x32xf32>
    %1618 = vector.extract_strided_slice %1601 {offsets = [0, 64], sizes = [2, 32], strides = [1, 1]} : vector<2x96xf32> to vector<2x32xf32>
    %1619 = vector.extract_strided_slice %1600 {offsets = [0, 64], sizes = [2, 32], strides = [1, 1]} : vector<2x96xf32> to vector<2x32xf32>
    %1620 = arith.mulf %1609, %1619 : vector<2x32xf32>
    %1621 = arith.addf %1618, %1620 : vector<2x32xf32>
    %1622 = math.tanh %1621 : vector<2x32xf32>
    %cst_250 = arith.constant 1.000000e+00 : f32
    %1623 = vector.broadcast %cst_250 : f32 to vector<2x32xf32>
    %1624 = arith.subf %1623, %1617 : vector<2x32xf32>
    %1625 = arith.mulf %1624, %1622 : vector<2x32xf32>
    %1626 = arith.mulf %1617, %1563 : vector<2x32xf32>
    %1627 = arith.addf %1625, %1626 : vector<2x32xf32>
    %1628 = tpu.concatenate %1627, %1595 in 1 : vector<2x32xf32>, vector<2x32xf32> -> vector<2x64xf32>
    %cst_251 = arith.constant dense<0.000000e+00> : vector<2x192xf32>
    %1629 = tpu.matmul %1628, %1203, %cst_251 {dimension_numbers = #tpu.dot_dimension_numbers<[1], [0], [0], [1], [0, 0, 1, 1], [], []>} : vector<2x64xf32>, vector<64x192xf32>, vector<2x192xf32> -> vector<2x192xf32>
    %1630 = vector.broadcast %1205 : vector<1x192xf32> to vector<2x192xf32>
    %1631 = arith.addf %1629, %1630 : vector<2x192xf32>
    %1632 = vector.extract_strided_slice %1631 {offsets = [0, 0], sizes = [2, 96], strides = [1, 1]} : vector<2x192xf32> to vector<2x96xf32>
    %1633 = vector.extract_strided_slice %1631 {offsets = [0, 96], sizes = [2, 96], strides = [1, 1]} : vector<2x192xf32> to vector<2x96xf32>
    %1634 = vector.extract_strided_slice %1632 {offsets = [0, 0], sizes = [2, 32], strides = [1, 1]} : vector<2x96xf32> to vector<2x32xf32>
    %1635 = vector.extract_strided_slice %1633 {offsets = [0, 0], sizes = [2, 32], strides = [1, 1]} : vector<2x96xf32> to vector<2x32xf32>
    %1636 = arith.addf %1634, %1635 : vector<2x32xf32>
    %1637 = arith.negf %1636 : vector<2x32xf32>
    %1638 = math.exp %1637 : vector<2x32xf32>
    %cst_252 = arith.constant 1.000000e+00 : f32
    %1639 = vector.broadcast %cst_252 : f32 to vector<2x32xf32>
    %1640 = arith.addf %1639, %1638 : vector<2x32xf32>
    %1641 = arith.divf %1639, %1640 : vector<2x32xf32>
    %1642 = vector.extract_strided_slice %1632 {offsets = [0, 32], sizes = [2, 32], strides = [1, 1]} : vector<2x96xf32> to vector<2x32xf32>
    %1643 = vector.extract_strided_slice %1633 {offsets = [0, 32], sizes = [2, 32], strides = [1, 1]} : vector<2x96xf32> to vector<2x32xf32>
    %1644 = arith.addf %1642, %1643 : vector<2x32xf32>
    %1645 = arith.negf %1644 : vector<2x32xf32>
    %1646 = math.exp %1645 : vector<2x32xf32>
    %cst_253 = arith.constant 1.000000e+00 : f32
    %1647 = vector.broadcast %cst_253 : f32 to vector<2x32xf32>
    %1648 = arith.addf %1647, %1646 : vector<2x32xf32>
    %1649 = arith.divf %1647, %1648 : vector<2x32xf32>
    %1650 = vector.extract_strided_slice %1632 {offsets = [0, 64], sizes = [2, 32], strides = [1, 1]} : vector<2x96xf32> to vector<2x32xf32>
    %1651 = vector.extract_strided_slice %1633 {offsets = [0, 64], sizes = [2, 32], strides = [1, 1]} : vector<2x96xf32> to vector<2x32xf32>
    %1652 = arith.mulf %1641, %1651 : vector<2x32xf32>
    %1653 = arith.addf %1650, %1652 : vector<2x32xf32>
    %1654 = math.tanh %1653 : vector<2x32xf32>
    %cst_254 = arith.constant 1.000000e+00 : f32
    %1655 = vector.broadcast %cst_254 : f32 to vector<2x32xf32>
    %1656 = arith.subf %1655, %1649 : vector<2x32xf32>
    %1657 = arith.mulf %1656, %1654 : vector<2x32xf32>
    %1658 = arith.mulf %1649, %1595 : vector<2x32xf32>
    %1659 = arith.addf %1657, %1658 : vector<2x32xf32>
    %c12_255 = arith.constant 12 : index
    %c0_256 = arith.constant 0 : index
    %1660 = vector.load %arg12[%c12_255, %c0_256] : memref<14x32xf32, #tpu.memory_space<vmem>>, vector<2x32xf32>
    tpu.vector_store %arg12[%c12_255, %c0_256], %1659 {strides = array<i32>} : memref<14x32xf32, #tpu.memory_space<vmem>>, vector<2x32xf32>,
    %1661 = arith.addf %1597, %1659 : vector<2x32xf32>
    %1662 = vector.extract_strided_slice %1170 {offsets = [64, 0], sizes = [32, 64], strides = [1, 1]} : vector<160x64xf32> to vector<32x64xf32>
    %1663 = vector.extract_strided_slice %10 {offsets = [6, 64], sizes = [1, 64], strides = [1, 1]} : vector<8x192xf32> to vector<1x64xf32>
    %c0_257 = arith.constant 0 : index
    %c0_258 = arith.constant 0 : index
    %1664 = vector.load %arg12[%c0_257, %c0_258] : memref<14x32xf32, #tpu.memory_space<vmem>>, vector<14x32xf32>
    %cst_259 = arith.constant dense<0.000000e+00> : vector<14x64xf32>
    %1665 = tpu.matmul %1664, %1662, %cst_259 {dimension_numbers = #tpu.dot_dimension_numbers<[1], [0], [0], [1], [0, 0, 1, 1], [], []>} : vector<14x32xf32>, vector<32x64xf32>, vector<14x64xf32> -> vector<14x64xf32>
    %1666 = vector.broadcast %1663 : vector<1x64xf32> to vector<14x64xf32>
    %1667 = arith.addf %1665, %1666 : vector<14x64xf32>
    %c0_260 = arith.constant 0 : index
    %c0_261 = arith.constant 0 : index
    %1668 = vector.load %arg7[%c0_260, %c0_261] : memref<14x64xf32, #tpu.memory_space<vmem>>, vector<14x64xf32>
    tpu.vector_store %arg7[%c0_260, %c0_261], %1667 {strides = array<i32>} : memref<14x64xf32, #tpu.memory_space<vmem>>, vector<14x64xf32>,
    %cst_262 = arith.constant 0.142857149 : f32
    %1669 = vector.broadcast %cst_262 : f32 to vector<2x32xf32>
    %1670 = arith.mulf %1661, %1669 : vector<2x32xf32>
    %1671 = tpu.concatenate %1194, %1670 in 1 : vector<2x32xf32>, vector<2x32xf32> -> vector<2x64xf32>
    %1672 = vector.extract_strided_slice %1170 {offsets = [96, 0], sizes = [64, 64], strides = [1, 1]} : vector<160x64xf32> to vector<64x64xf32>
    %cst_263 = arith.constant dense<0.000000e+00> : vector<2x64xf32>
    %1673 = tpu.matmul %1671, %1672, %cst_263 {dimension_numbers = #tpu.dot_dimension_numbers<[1], [0], [0], [1], [0, 0, 1, 1], [], []>} : vector<2x64xf32>, vector<64x64xf32>, vector<2x64xf32> -> vector<2x64xf32>
    %1674 = vector.extract_strided_slice %10 {offsets = [7, 0], sizes = [1, 64], strides = [1, 1]} : vector<8x192xf32> to vector<1x64xf32>
    %1675 = vector.broadcast %1674 : vector<1x64xf32> to vector<2x64xf32>
    %1676 = arith.addf %1673, %1675 : vector<2x64xf32>
    %1677 = vector.extract_strided_slice %1676 {offsets = [0, 0], sizes = [2, 4], strides = [1, 1]} : vector<2x64xf32> to vector<2x4xf32>
    %c0_264 = arith.constant 0 : index
    %c0_265 = arith.constant 0 : index
    %1678 = vector.load %arg10[%c0_264, %c0_265] : memref<2x4xf32, #tpu.memory_space<vmem>>, vector<2x4xf32>
    tpu.vector_store %arg10[%c0_264, %c0_265], %1677 {strides = array<i32>} : memref<2x4xf32, #tpu.memory_space<vmem>>, vector<2x4xf32>,
    return
  }
}

</mosaic_0001>

<llo_original>
// kernel: textvae_forward.1
$region0: #{textvae_forward.1}
  #allocation0 [shape = 'u32[]', space=smem, size = 0x4, offset = 0x4, fixed_abs, tag = 'smem constant byte address 0x4 - core index']
  #allocation1 [shape = 'u32[72,128]{1,0:T(1,128)}', space=vmem, size = 0x9000, scoped, tag = 'internal scratch']
  #allocation2 [shape = 'f32[14,64]{1,0:T(8,128)}', space=vmem, size = 0x2000, scoped, tag = 'scratch operand']
  #allocation3 [shape = 'f32[14,32]{1,0:T(8,128)}', space=vmem, size = 0x2000, scoped, tag = 'scratch operand']
  %s0 = inlined_call_operand.vmem [shape: s32[14,1], index: 0, kind: input, shape index: {}]
  %s1 = inlined_call_operand.hbm [shape: f32[2,64,32], index: 1, kind: input, shape index: {}]
  %s2 = inlined_call_operand.hbm [shape: f32[2,128,192], index: 2, kind: input, shape index: {}]
  %s3 = inlined_call_operand.hbm [shape: f32[2,64,192], index: 3, kind: input, shape index: {}]
  %s4 = inlined_call_operand.vmem [shape: f32[8,192], index: 4, kind: input, shape index: {}]
  %s5 = inlined_call_operand.hbm [shape: f32[160,64], index: 5, kind: input, shape index: {}]
  %s6 = inlined_call_operand.vmem [shape: f32[2,32], index: 6, kind: input, shape index: {}]
  %s7 = inlined_call_operand.vmem [shape: f32[14,64], index: 7, kind: output, shape index: {0}]
  %s8 = inlined_call_operand.hbm [shape: f32[2,32], index: 8, kind: output, shape index: {1}]
  %s9 = inlined_call_operand.hbm [shape: f32[2,32], index: 9, kind: output, shape index: {2}]
  %s10 = inlined_call_operand.hbm [shape: f32[2,4], index: 10, kind: output, shape index: {3}]
  %11 = xla_tuple %s7, %s8, %s9, %s10
  %s12 = sld [smem:[#allocation0]]
  $region78: #{textvae_forward.1} parent=0
    _
  %s14 = ssub.s32 1, %s12
  %s15 = scalar_select 0, %s14, %s12
  $region1: #{textvae_forward.1} parent=0
    #allocation4 [shape = 'u8[65536]{0}', space=vmem, size = 0x10000, scoped, tag = 'input window, operand 1, single buffered']
    #allocation5 [shape = 's32[1]{0}', space=sflag, size = 0x4, scoped, tag = 'scoped memory for textvae_forward.1']
    #allocation6 [shape = 's32[1]{0}', space=sflag, size = 0x4, scoped, tag = 'scoped memory for textvae_forward.1']
    #allocation7 [shape = 'u8[262144]{0}', space=vmem, size = 0x40000, scoped, tag = 'input window, operand 2, single buffered']
    #allocation8 [shape = 's32[1]{0}', space=sflag, size = 0x4, scoped, tag = 'scoped memory for textvae_forward.1']
    #allocation9 [shape = 'u8[131072]{0}', space=vmem, size = 0x20000, scoped, tag = 'input window, operand 3, single buffered']
    #allocation10 [shape = 'u8[81920]{0}', space=vmem, size = 0x14000, scoped, tag = 'input window, operand 5, single buffered']
    #allocation11 [shape = 's32[1]{0}', space=sflag, size = 0x4, scoped, tag = 'scoped memory for textvae_forward.1']
    #allocation12 [shape = 'u8[1024]{0}', space=vmem, size = 0x400, scoped, tag = 'output window, operand 1, single buffered']
    #allocation13 [shape = 'u8[1024]{0}', space=vmem, size = 0x400, scoped, tag = 'output window, operand 2, single buffered']
    #allocation14 [shape = 's32[1]{0}', space=sflag, size = 0x4, scoped, tag = 'scoped memory for textvae_forward.1']
    #allocation15 [shape = 'u8[1024]{0}', space=vmem, size = 0x400, scoped, tag = 'output window, operand 3, single buffered']
    %16 = vsyncpa [#allocation5], 0
    %17 = vsyncpa [#allocation8], 0
    %18 = vsyncpa [#allocation11], 0
    %19 = vsyncpa [#allocation6], 0
    %20 = vsyncpa [#allocation14], 0
    // Predicated region
    $region2: #{textvae_forward.1} parent=1 // pred_check
      _
    $region3: #{textvae_forward.1} parent=1 // pred_check_branch
      %22 = sbr.rel (0) target = $region5
    $region4: #{textvae_forward.1} parent=1 // pred_region
      _
    $region5: #{textvae_forward.1} parent=1 // pred_fallthru
      _
    // Predicated region
    $region6: #{textvae_forward.1} parent=1 // pred_check
      _
    $region7: #{textvae_forward.1} parent=1 // pred_check_branch
      %24 = sbr.rel (0) target = $region9
    $region8: #{textvae_forward.1} parent=1 // pred_region
      %26 = vsyncadd [#allocation5], 0
      %s27 = sshll.u32 %s1, 4
      %s28 = int_to_ptr.hbm [resolvable:$true] %s27
      %s29 = sshll.u32 [#allocation4], 4
      %s30 = int_to_ptr.vmem [resolvable:$true] %s29
      %35 = dma.hbm_to_vmem [thread:$0]  %s28, 2048, %s30, [#allocation5], 128, 128, 8
    $region9: #{textvae_forward.1} parent=1 // pred_fallthru
      _
    // Predicated region
    $region10: #{textvae_forward.1} parent=1 // pred_check
      _
    $region11: #{textvae_forward.1} parent=1 // pred_check_branch
      %37 = sbr.rel (0) target = $region13
    $region12: #{textvae_forward.1} parent=1 // pred_region
      %39 = vsyncadd [#allocation8], 0
      %s40 = sshll.u32 %s2, 4
      %s41 = int_to_ptr.hbm [resolvable:$true] %s40
      %s42 = sshll.u32 [#allocation7], 4
      %s43 = int_to_ptr.vmem [resolvable:$true] %s42
      %48 = dma.hbm_to_vmem [thread:$0]  %s41, 8192, %s43, [#allocation8], 256, 256, 16
    $region13: #{textvae_forward.1} parent=1 // pred_fallthru
      _
    // Predicated region
    $region14: #{textvae_forward.1} parent=1 // pred_check
      _
    $region15: #{textvae_forward.1} parent=1 // pred_check_branch
      %50 = sbr.rel (0) target = $region17
    $region16: #{textvae_forward.1} parent=1 // pred_region
      %52 = vsyncadd [#allocation8], 0
      %s53 = sshll.u32 %s3, 4
      %s54 = int_to_ptr.hbm [resolvable:$true] %s53
      %s55 = sshll.u32 [#allocation9], 4
      %s56 = int_to_ptr.vmem [resolvable:$true] %s55
      %61 = dma.hbm_to_vmem [thread:$0]  %s54, 4096, %s56, [#allocation8], 256, 256, 16
    $region17: #{textvae_forward.1} parent=1 // pred_fallthru
      _
    // Predicated region
    $region18: #{textvae_forward.1} parent=1 // pred_check
      _
    $region19: #{textvae_forward.1} parent=1 // pred_check_branch
      %63 = sbr.rel (0) target = $region21
    $region20: #{textvae_forward.1} parent=1 // pred_region
      _
    $region21: #{textvae_forward.1} parent=1 // pred_fallthru
      _
    // Predicated region
    $region22: #{textvae_forward.1} parent=1 // pred_check
      _
    $region23: #{textvae_forward.1} parent=1 // pred_check_branch
      %65 = sbr.rel (0) target = $region25
    $region24: #{textvae_forward.1} parent=1 // pred_region
      %67 = vsyncadd [#allocation11], 0
      %s68 = sshll.u32 %s5, 4
      %s69 = int_to_ptr.hbm [resolvable:$true] %s68
      %s70 = sshll.u32 [#allocation10], 4
      %s71 = int_to_ptr.vmem [resolvable:$true] %s70
      %76 = dma.hbm_to_vmem [thread:$0]  %s69, 2560, %s71, [#allocation11], 128, 128, 8
    $region25: #{textvae_forward.1} parent=1 // pred_fallthru
      _
    // Predicated region
    $region26: #{textvae_forward.1} parent=1 // pred_check
      _
    $region27: #{textvae_forward.1} parent=1 // pred_check_branch
      %78 = sbr.rel (0) target = $region29
    $region28: #{textvae_forward.1} parent=1 // pred_region
      _
    $region29: #{textvae_forward.1} parent=1 // pred_fallthru
      _
    // Predicated region
    $region30: #{textvae_forward.1} parent=1 // pred_check
      _
    $region31: #{textvae_forward.1} parent=1 // pred_check_branch
      %80 = sbr.rel (0) target = $region33
    $region32: #{textvae_forward.1} parent=1 // pred_region
      %82 = dma.done [#allocation5], 2048
    $region33: #{textvae_forward.1} parent=1 // pred_fallthru
      _
    // Predicated region
    $region34: #{textvae_forward.1} parent=1 // pred_check
      _
    $region35: #{textvae_forward.1} parent=1 // pred_check_branch
      %84 = sbr.rel (0) target = $region37
    $region36: #{textvae_forward.1} parent=1 // pred_region
      %86 = dma.done [#allocation8], 8192
    $region37: #{textvae_forward.1} parent=1 // pred_fallthru
      _
    // Predicated region
    $region38: #{textvae_forward.1} parent=1 // pred_check
      _
    $region39: #{textvae_forward.1} parent=1 // pred_check_branch
      %88 = sbr.rel (0) target = $region41
    $region40: #{textvae_forward.1} parent=1 // pred_region
      %90 = dma.done [#allocation8], 4096
    $region41: #{textvae_forward.1} parent=1 // pred_fallthru
      _
    // Predicated region
    $region42: #{textvae_forward.1} parent=1 // pred_check
      _
    $region43: #{textvae_forward.1} parent=1 // pred_check_branch
      %92 = sbr.rel (0) target = $region45
    $region44: #{textvae_forward.1} parent=1 // pred_region
      %94 = dma.done [#allocation11], 2560
    $region45: #{textvae_forward.1} parent=1 // pred_fallthru
      _
    %v95 = vld [vmem:[%s0] sm:$0xff]
    %v96 = vld [vmem:[%s0 + $0x8] sm:$0x3f]
    %v97 = vlaneseq
    %v98 = vand.u32 %v97, 127
    %99 = vset.pattern.permute.xlu0 0
    %100 = vperm.xlu0 %99, %v95
    %v101 = vpop.permute.xlu0 %100
    %102 = vset.pattern.permute.xlu0 0
    %103 = vperm.xlu0 %102, %v96
    %v104 = vpop.permute.xlu0 %103
    %vm105 = vcmp.eq.s32.totalorder %v101, %v98
    %vm106 = vcmp.eq.s32.totalorder %v104, %v98
    %v107 = vsel %vm105, 1, 0
    %v108 = vsel %vm106, 1, 0
    %v109 = vcvt.s32.f32 %v107
    %v110 = vcvt.s32.f32 %v108
    %vm111 = vcmp.ne.s32.totalorder %v95, 0
    %vm112 = vcmp.ne.s32.totalorder %v96, 0
    %v113 = vsel %vm111, 1, 0
    %v114 = vsel %vm112, 1, 0
    %v115 = vcvt.s32.f32 %v113
    %v116 = vcvt.s32.f32 %v114
    %v117 = vld [vmem:[%s4] sm:$0xff]
    %v118 = vld [vmem:[%s4 + $0x8] sm:$0xff]
    %v119 = vld [vmem:[#allocation4] sm:$0xff]
    %v120 = vld [vmem:[#allocation4 + $0x8] sm:$0xff]
    %v121 = vld [vmem:[#allocation4 + $0x10] sm:$0xff]
    %v122 = vld [vmem:[#allocation4 + $0x18] sm:$0xff]
    %v123 = vld [vmem:[#allocation4 + $0x20] sm:$0xff]
    %v124 = vld [vmem:[#allocation4 + $0x28] sm:$0xff]
    %v125 = vld [vmem:[#allocation4 + $0x30] sm:$0xff]
    %v126 = vld [vmem:[#allocation4 + $0x38] sm:$0xff]
    %vm127 = vcmask 523264
    %v129 = vsel %vm127, %v109, 0
    %v132 = vsel %vm127, %v110, 0
    %134 = vmatpush.msra.mxu0 0.0
    %135 = vmatpush.msra.mxu0 0.0
    %136 = vmatpush.msra.mxu0 0.0
    %137 = vmatpush.msra.mxu0 0.0
    %138 = vmatpush.msra.mxu0 0.0
    %139 = vmatpush.msra.mxu0 0.0
    %140 = vmatpush.msra.mxu0 0.0
    %141 = vmatpush.msra.mxu0 0.0
    %142 = vmatpush.msra.mxu0 %v126
    %143 = vmatpush.msra.mxu0 %v125
    %144 = vmatpush.msra.mxu0 %v124
    %145 = vmatpush.msra.mxu0 %v123
    %146 = vmatpush.msra.mxu0 %v122
    %147 = vmatpush.msra.mxu0 %v121
    %148 = vmatpush.msra.mxu0 %v120
    %149 = vmatpush.msra.mxu0 %v119
    %150 = vmatmul.f32.gmra.mxu0 %v129
    %v151 = vpop.f32.mrf.mxu0
    %v152 = vadd.f32 0.0, %v151
    %153 = vmatmul.f32.gmra.mxu0 %v132
    %v154 = vpop.f32.mrf.mxu0
    %v155 = vadd.f32 0.0, %v154
    %156 = vdwg.mxu0
    %v157 = vld [vmem:[#allocation7] sm:$0xff]
    %v158 = vld [vmem:[#allocation7 + $0x8] sm:$0xff]
    %v159 = vld [vmem:[#allocation7 + $0x10] sm:$0xff]
    %v160 = vld [vmem:[#allocation7 + $0x18] sm:$0xff]
    %v161 = vld [vmem:[#allocation7 + $0x20] sm:$0xff]
    %v162 = vld [vmem:[#allocation7 + $0x28] sm:$0xff]
    %v163 = vld [vmem:[#allocation7 + $0x30] sm:$0xff]
    %v164 = vld [vmem:[#allocation7 + $0x38] sm:$0xff]
    %v165 = vld [vmem:[#allocation7 + $0x80] sm:$0xff]
    %v166 = vld [vmem:[#allocation7 + $0x88] sm:$0xff]
    %v167 = vld [vmem:[#allocation7 + $0x90] sm:$0xff]
    %v168 = vld [vmem:[#allocation7 + $0x98] sm:$0xff]
    %v169 = vld [vmem:[#allocation7 + $0xa0] sm:$0xff]
    %v170 = vld [vmem:[#allocation7 + $0xa8] sm:$0xff]
    %v171 = vld [vmem:[#allocation7 + $0xb0] sm:$0xff]
    %v172 = vld [vmem:[#allocation7 + $0xb8] sm:$0xff]
    %v173 = vld [vmem:[#allocation7 + $0xc0] sm:$0xff]
    %v174 = vld [vmem:[#allocation7 + $0xc8] sm:$0xff]
    %v175 = vld [vmem:[#allocation7 + $0xd0] sm:$0xff]
    %v176 = vld [vmem:[#allocation7 + $0xd8] sm:$0xff]
    %v177 = vld [vmem:[#allocation7 + $0xe0] sm:$0xff]
    %v178 = vld [vmem:[#allocation7 + $0xe8] sm:$0xff]
    %v179 = vld [vmem:[#allocation7 + $0xf0] sm:$0xff]
    %v180 = vld [vmem:[#allocation7 + $0xf8] sm:$0xff]
    %v181 = vperm.slane %v117, 0
    %v182 = vperm.slane %v118, 0
    %vm183 = vcmask 261120
    %v185 = vsel %vm183, %v152, 0
    %v188 = vsel %vm183, %v155, 0
    %190 = vmatpush.msra.mxu0 0.0
    %191 = vmatpush.msra.mxu0 0.0
    %192 = vmatpush.msra.mxu0 0.0
    %193 = vmatpush.msra.mxu0 0.0
    %194 = vmatpush.msra.mxu0 0.0
    %195 = vmatpush.msra.mxu0 0.0
    %196 = vmatpush.msra.mxu0 0.0
    %197 = vmatpush.msra.mxu0 0.0
    %198 = vmatpush.msra.mxu0 0.0
    %199 = vmatpush.msra.mxu0 0.0
    %200 = vmatpush.msra.mxu0 0.0
    %201 = vmatpush.msra.mxu0 0.0
    %202 = vmatpush.msra.mxu0 %v163
    %203 = vmatpush.msra.mxu0 %v161
    %204 = vmatpush.msra.mxu0 %v159
    %205 = vmatpush.msra.mxu0 %v157
    %206 = vmatmul.f32.gmra.mxu0 %v185
    %v207 = vpop.f32.mrf.mxu0
    %v208 = vadd.f32 %v181, %v207
    %209 = vmatmul.f32.gmra.mxu0 %v188
    %v210 = vpop.f32.mrf.mxu0
    %v211 = vadd.f32 %v181, %v210
    %212 = vdwg.mxu0
    %213 = vmatpush.msra.mxu0 0.0
    %214 = vmatpush.msra.mxu0 0.0
    %215 = vmatpush.msra.mxu0 0.0
    %216 = vmatpush.msra.mxu0 0.0
    %217 = vmatpush.msra.mxu0 0.0
    %218 = vmatpush.msra.mxu0 0.0
    %219 = vmatpush.msra.mxu0 0.0
    %220 = vmatpush.msra.mxu0 0.0
    %221 = vmatpush.msra.mxu0 0.0
    %222 = vmatpush.msra.mxu0 0.0
    %223 = vmatpush.msra.mxu0 0.0
    %224 = vmatpush.msra.mxu0 0.0
    %225 = vmatpush.msra.mxu0 %v164
    %226 = vmatpush.msra.mxu0 %v162
    %227 = vmatpush.msra.mxu0 %v160
    %228 = vmatpush.msra.mxu0 %v158
    %229 = vmatmul.f32.gmra.mxu0 %v185
    %v230 = vpop.f32.mrf.mxu0
    %v231 = vadd.f32 %v182, %v230
    %232 = vmatmul.f32.gmra.mxu0 %v188
    %v233 = vpop.f32.mrf.mxu0
    %v234 = vadd.f32 %v182, %v233
    %235 = vdwg.mxu0
    %v236 = vperm.slane %v117, 1
    %v237 = vperm.slane %v118, 1
    %v239 = vsel %vm127, 0.0, 0
    %241 = vmatpush.msra.mxu0 0.0
    %242 = vmatpush.msra.mxu0 0.0
    %243 = vmatpush.msra.mxu0 0.0
    %244 = vmatpush.msra.mxu0 0.0
    %245 = vmatpush.msra.mxu0 0.0
    %246 = vmatpush.msra.mxu0 0.0
    %247 = vmatpush.msra.mxu0 0.0
    %248 = vmatpush.msra.mxu0 0.0
    %249 = vmatpush.msra.mxu0 %v179
    %250 = vmatpush.msra.mxu0 %v177
    %251 = vmatpush.msra.mxu0 %v175
    %252 = vmatpush.msra.mxu0 %v173
    %253 = vmatpush.msra.mxu0 %v171
    %254 = vmatpush.msra.mxu0 %v169
    %255 = vmatpush.msra.mxu0 %v167
    %256 = vmatpush.msra.mxu0 %v165
    %257 = vmatmul.f32.gmra.mxu0 %v239
    %v258 = vpop.f32.mrf.mxu0
    %v259 = vadd.f32 %v236, %v258
    %260 = vdwg.mxu0
    %261 = vmatpush.msra.mxu0 0.0
    %262 = vmatpush.msra.mxu0 0.0
    %263 = vmatpush.msra.mxu0 0.0
    %264 = vmatpush.msra.mxu0 0.0
    %265 = vmatpush.msra.mxu0 0.0
    %266 = vmatpush.msra.mxu0 0.0
    %267 = vmatpush.msra.mxu0 0.0
    %268 = vmatpush.msra.mxu0 0.0
    %269 = vmatpush.msra.mxu0 %v180
    %270 = vmatpush.msra.mxu0 %v178
    %271 = vmatpush.msra.mxu0 %v176
    %272 = vmatpush.msra.mxu0 %v174
    %273 = vmatpush.msra.mxu0 %v172
    %274 = vmatpush.msra.mxu0 %v170
    %275 = vmatpush.msra.mxu0 %v168
    %276 = vmatpush.msra.mxu0 %v166
    %277 = vmatmul.f32.gmra.mxu0 %v239
    %v278 = vpop.f32.mrf.mxu0
    %v279 = vadd.f32 %v237, %v278
    %280 = vdwg.mxu0
    %v281 = vadd.f32 %v208, %v259
    %v282 = vxor.u32 %v281, 2147483648
    %v283 = vmul.f32 %v282, 1.442695
    %v284 = vpow.pop %v283
    %v285 = vadd.f32 %v284, 1.0
    %v286 = vrcp.pop %v285
    %v287 = vmul.f32 %v285, %v286
    %v288 = vsub.f32 1.0, %v287
    %v289 = vmul.f32 %v286, %v288
    %v290 = vadd.f32 %v286, %v289
    %vm291 = vweird.f32 %v285
    %vm292 = vweird.f32 %v286
    %vm293 = vmor %vm291, %vm292
    %v294 = vsel %vm293, %v286, %v290
    %v295 = vand.u32 2147483647, %v285
    %vm296 = vcmp.eq.f32.partialorder %v295, 8.507059e+37
    %v297 = vand.u32 %v285, 2147483648
    %v298 = vor.u32 1.1754944e-38, %v297
    %v299 = vsel %vm296, %v298, %v294
    %v300 = vmul.f32 1.0, %v299
    %302 = vrot.lane.b32.xlu0 %v259, 64
    %v303 = vpop.permute.xlu0 %302
    %v305 = vmul.f32 %v300, %v303
    %307 = vrot.lane.b32.xlu0 %v305, 64
    %v308 = vpop.permute.xlu0 %307
    %v310 = vadd.f32 %v208, %v308
    %v311 = vtanh.pop %v310
    %v312 = vsub.f32 1.0, %v300
    %314 = vrot.lane.b32.xlu0 %v311, 96
    %v315 = vpop.permute.xlu0 %314
    %v317 = vmul.f32 %v312, %v315
    %v318 = vmul.f32 %v300, 0.0
    %v319 = vadd.f32 %v317, %v318
    %v320 = vrot.slane %v259, 4
    %v322 = vadd.f32 %v211, %v320
    %v323 = vxor.u32 %v322, 2147483648
    %v324 = vmul.f32 %v323, 1.442695
    %v325 = vpow.pop %v324
    %v326 = vadd.f32 %v325, 1.0
    %v327 = vrcp.pop %v326
    %v328 = vmul.f32 %v326, %v327
    %v329 = vsub.f32 1.0, %v328
    %v330 = vmul.f32 %v327, %v329
    %v331 = vadd.f32 %v327, %v330
    %vm332 = vweird.f32 %v326
    %vm333 = vweird.f32 %v327
    %vm334 = vmor %vm332, %vm333
    %v335 = vsel %vm334, %v327, %v331
    %v336 = vand.u32 2147483647, %v326
    %vm337 = vcmp.eq.f32.partialorder %v336, 8.507059e+37
    %v338 = vand.u32 %v326, 2147483648
    %v339 = vor.u32 1.1754944e-38, %v338
    %v340 = vsel %vm337, %v339, %v335
    %v341 = vmul.f32 1.0, %v340
    %v343 = vrot.slane %v279, 4
    %v345 = vadd.f32 %v234, %v343
    %v346 = vxor.u32 %v345, 2147483648
    %v347 = vmul.f32 %v346, 1.442695
    %v348 = vpow.pop %v347
    %v349 = vadd.f32 %v348, 1.0
    %v350 = vrcp.pop %v349
    %v351 = vmul.f32 %v349, %v350
    %v352 = vsub.f32 1.0, %v351
    %v353 = vmul.f32 %v350, %v352
    %v354 = vadd.f32 %v350, %v353
    %vm355 = vweird.f32 %v349
    %vm356 = vweird.f32 %v350
    %vm357 = vmor %vm355, %vm356
    %v358 = vsel %vm357, %v350, %v354
    %v359 = vand.u32 2147483647, %v349
    %vm360 = vcmp.eq.f32.partialorder %v359, 8.507059e+37
    %v361 = vand.u32 %v349, 2147483648
    %v362 = vor.u32 1.1754944e-38, %v361
    %v363 = vsel %vm360, %v362, %v358
    %v364 = vmul.f32 1.0, %v363
    %365 = vrot.lane.b32.xlu0 %v343, 64
    %v366 = vpop.permute.xlu0 %365
    %v368 = vmul.f32 %v341, %v366
    %370 = vrot.lane.b32.xlu0 %v368, 64
    %v371 = vpop.permute.xlu0 %370
    %v373 = vadd.f32 %v234, %v371
    %v374 = vtanh.pop %v373
    %v375 = vsub.f32 1.0, %v364
    %377 = vrot.lane.b32.xlu0 %v374, 96
    %v378 = vpop.permute.xlu0 %377
    %v380 = vmul.f32 %v375, %v378
    %v381 = vmul.f32 %v364, 0.0
    %v382 = vadd.f32 %v380, %v381
    %384 = vset.pattern.permute.xlu0 0
    %385 = vperm.xlu0 %384, %v115
    %v386 = vpop.permute.xlu0 %385
    %v388 = vmul.f32 %v386, %v319
    %v389 = vsub.f32 1.0, %v115
    %391 = vset.pattern.permute.xlu0 0
    %392 = vperm.xlu0 %391, %v389
    %v393 = vpop.permute.xlu0 %392
    %v395 = vmul.f32 %v393, 0.0
    %v396 = vadd.f32 %v388, %v395
    %398 = vset.pattern.permute.xlu0 0
    %399 = vperm.xlu0 %398, %v116
    %v400 = vpop.permute.xlu0 %399
    %v402 = vmul.f32 %v400, %v382
    %v403 = vsub.f32 1.0, %v116
    %405 = vset.pattern.permute.xlu0 0
    %406 = vperm.xlu0 %405, %v403
    %v407 = vpop.permute.xlu0 %406
    %v409 = vmul.f32 %v407, 0.0
    %v410 = vadd.f32 %v402, %v409
    %412 = vrot.lane.b32.xlu0 %v396, 96
    %v413 = vpop.permute.xlu0 %412
    %v416 = vrot.slane %v410, 4
    %417 = vrot.lane.b32.xlu0 %v416, 32
    %v418 = vpop.permute.xlu0 %417
    %v420 = vsel %vm183, %v413, %v418
    %vm421 = vcmask 254976
    %422 = vst.msk [vmem:[#allocation2] sm:$0x3] %vm421, %v413
    %423 = vrot.lane.b32.xlu0 %v410, 32
    %v424 = vpop.permute.xlu0 %423
    %vm426 = vcmask 521476
    %427 = vst.msk [vmem:[#allocation2 + $0x8] sm:$0x30] %vm426, %v424
    %v429 = vsel %vm127, %v420, 0
    %431 = vmatpush.msra.mxu0 0.0
    %432 = vmatpush.msra.mxu0 0.0
    %433 = vmatpush.msra.mxu0 0.0
    %434 = vmatpush.msra.mxu0 0.0
    %435 = vmatpush.msra.mxu0 0.0
    %436 = vmatpush.msra.mxu0 0.0
    %437 = vmatpush.msra.mxu0 0.0
    %438 = vmatpush.msra.mxu0 0.0
    %439 = vmatpush.msra.mxu0 %v179
    %440 = vmatpush.msra.mxu0 %v177
    %441 = vmatpush.msra.mxu0 %v175
    %442 = vmatpush.msra.mxu0 %v173
    %443 = vmatpush.msra.mxu0 %v171
    %444 = vmatpush.msra.mxu0 %v169
    %445 = vmatpush.msra.mxu0 %v167
    %446 = vmatpush.msra.mxu0 %v165
    %447 = vmatmul.f32.gmra.mxu0 %v429
    %v448 = vpop.f32.mrf.mxu0
    %v449 = vadd.f32 %v236, %v448
    %450 = vdwg.mxu0
    %451 = vmatpush.msra.mxu0 0.0
    %452 = vmatpush.msra.mxu0 0.0
    %453 = vmatpush.msra.mxu0 0.0
    %454 = vmatpush.msra.mxu0 0.0
    %455 = vmatpush.msra.mxu0 0.0
    %456 = vmatpush.msra.mxu0 0.0
    %457 = vmatpush.msra.mxu0 0.0
    %458 = vmatpush.msra.mxu0 0.0
    %459 = vmatpush.msra.mxu0 %v180
    %460 = vmatpush.msra.mxu0 %v178
    %461 = vmatpush.msra.mxu0 %v176
    %462 = vmatpush.msra.mxu0 %v174
    %463 = vmatpush.msra.mxu0 %v172
    %464 = vmatpush.msra.mxu0 %v170
    %465 = vmatpush.msra.mxu0 %v168
    %466 = vmatpush.msra.mxu0 %v166
    %467 = vmatmul.f32.gmra.mxu0 %v429
    %v468 = vpop.f32.mrf.mxu0
    %v469 = vadd.f32 %v237, %v468
    %470 = vdwg.mxu0
    %v472 = vrot.slane %v449, 6
    %v474 = vadd.f32 %v208, %v472
    %v475 = vxor.u32 %v474, 2147483648
    %v476 = vmul.f32 %v475, 1.442695
    %v477 = vpow.pop %v476
    %v478 = vadd.f32 %v477, 1.0
    %v479 = vrcp.pop %v478
    %v480 = vmul.f32 %v478, %v479
    %v481 = vsub.f32 1.0, %v480
    %v482 = vmul.f32 %v479, %v481
    %v483 = vadd.f32 %v479, %v482
    %vm484 = vweird.f32 %v478
    %vm485 = vweird.f32 %v479
    %vm486 = vmor %vm484, %vm485
    %v487 = vsel %vm486, %v479, %v483
    %v488 = vand.u32 2147483647, %v478
    %vm489 = vcmp.eq.f32.partialorder %v488, 8.507059e+37
    %v490 = vand.u32 %v478, 2147483648
    %v491 = vor.u32 1.1754944e-38, %v490
    %v492 = vsel %vm489, %v491, %v487
    %v493 = vmul.f32 1.0, %v492
    %494 = vrot.lane.b32.xlu0 %v472, 64
    %v495 = vpop.permute.xlu0 %494
    %v497 = vmul.f32 %v493, %v495
    %499 = vrot.lane.b32.xlu0 %v497, 64
    %v500 = vpop.permute.xlu0 %499
    %v502 = vadd.f32 %v208, %v500
    %v503 = vtanh.pop %v502
    %v504 = vsub.f32 1.0, %v493
    %506 = vrot.lane.b32.xlu0 %v503, 96
    %v507 = vpop.permute.xlu0 %506
    %v509 = vmul.f32 %v504, %v507
    %v510 = vrot.slane %v420, 6
    %511 = vrot.lane.b32.xlu0 %v510, 32
    %v512 = vpop.permute.xlu0 %511
    %v514 = vmul.f32 %v493, %v512
    %v515 = vadd.f32 %v509, %v514
    %v516 = vadd.f32 %v211, %v472
    %v517 = vxor.u32 %v516, 2147483648
    %v518 = vmul.f32 %v517, 1.442695
    %v519 = vpow.pop %v518
    %v520 = vadd.f32 %v519, 1.0
    %v521 = vrcp.pop %v520
    %v522 = vmul.f32 %v520, %v521
    %v523 = vsub.f32 1.0, %v522
    %v524 = vmul.f32 %v521, %v523
    %v525 = vadd.f32 %v521, %v524
    %vm526 = vweird.f32 %v520
    %vm527 = vweird.f32 %v521
    %vm528 = vmor %vm526, %vm527
    %v529 = vsel %vm528, %v521, %v525
    %v530 = vand.u32 2147483647, %v520
    %vm531 = vcmp.eq.f32.partialorder %v530, 8.507059e+37
    %v532 = vand.u32 %v520, 2147483648
    %v533 = vor.u32 1.1754944e-38, %v532
    %v534 = vsel %vm531, %v533, %v529
    %v535 = vmul.f32 1.0, %v534
    %v537 = vrot.slane %v469, 6
    %v539 = vadd.f32 %v234, %v537
    %v540 = vxor.u32 %v539, 2147483648
    %v541 = vmul.f32 %v540, 1.442695
    %v542 = vpow.pop %v541
    %v543 = vadd.f32 %v542, 1.0
    %v544 = vrcp.pop %v543
    %v545 = vmul.f32 %v543, %v544
    %v546 = vsub.f32 1.0, %v545
    %v547 = vmul.f32 %v544, %v546
    %v548 = vadd.f32 %v544, %v547
    %vm549 = vweird.f32 %v543
    %vm550 = vweird.f32 %v544
    %vm551 = vmor %vm549, %vm550
    %v552 = vsel %vm551, %v544, %v548
    %v553 = vand.u32 2147483647, %v543
    %vm554 = vcmp.eq.f32.partialorder %v553, 8.507059e+37
    %v555 = vand.u32 %v543, 2147483648
    %v556 = vor.u32 1.1754944e-38, %v555
    %v557 = vsel %vm554, %v556, %v552
    %v558 = vmul.f32 1.0, %v557
    %559 = vrot.lane.b32.xlu0 %v537, 64
    %v560 = vpop.permute.xlu0 %559
    %v562 = vmul.f32 %v535, %v560
    %564 = vrot.lane.b32.xlu0 %v562, 64
    %v565 = vpop.permute.xlu0 %564
    %v567 = vadd.f32 %v234, %v565
    %v568 = vtanh.pop %v567
    %v569 = vsub.f32 1.0, %v558
    %571 = vrot.lane.b32.xlu0 %v568, 96
    %v572 = vpop.permute.xlu0 %571
    %v574 = vmul.f32 %v569, %v572
    %575 = vrot.lane.b32.xlu0 %v510, 96
    %v576 = vpop.permute.xlu0 %575
    %v578 = vmul.f32 %v558, %v576
    %v579 = vadd.f32 %v574, %v578
    %v580 = vmul.f32 %v386, %v515
    %v582 = vmul.f32 %v393, %v510
    %584 = vrot.lane.b32.xlu0 %v582, 32
    %v585 = vpop.permute.xlu0 %584
    %v587 = vadd.f32 %v580, %v585
    %v588 = vmul.f32 %v400, %v579
    %v589 = vmul.f32 %v407, %v576
    %v590 = vadd.f32 %v588, %v589
    %592 = vrot.lane.b32.xlu0 %v587, 96
    %v593 = vpop.permute.xlu0 %592
    %596 = vrot.lane.b32.xlu0 %v590, 32
    %v597 = vpop.permute.xlu0 %596
    %v599 = vsel %vm183, %v593, %v597
    %vm600 = vcmask 257026
    %601 = vst.msk [vmem:[#allocation2] sm:$0xc] %vm600, %v593
    %vm602 = vcmask 519426
    %603 = vst.msk [vmem:[#allocation2 + $0x8] sm:$0xc] %vm602, %v597
    %v605 = vrot.slane %v599, 2
    %v606 = vsel %vm127, %v605, 0
    %608 = vmatpush.msra.mxu0 0.0
    %609 = vmatpush.msra.mxu0 0.0
    %610 = vmatpush.msra.mxu0 0.0
    %611 = vmatpush.msra.mxu0 0.0
    %612 = vmatpush.msra.mxu0 0.0
    %613 = vmatpush.msra.mxu0 0.0
    %614 = vmatpush.msra.mxu0 0.0
    %615 = vmatpush.msra.mxu0 0.0
    %616 = vmatpush.msra.mxu0 %v179
    %617 = vmatpush.msra.mxu0 %v177
    %618 = vmatpush.msra.mxu0 %v175
    %619 = vmatpush.msra.mxu0 %v173
    %620 = vmatpush.msra.mxu0 %v171
    %621 = vmatpush.msra.mxu0 %v169
    %622 = vmatpush.msra.mxu0 %v167
    %623 = vmatpush.msra.mxu0 %v165
    %624 = vmatmul.f32.gmra.mxu0 %v606
    %v625 = vpop.f32.mrf.mxu0
    %v626 = vadd.f32 %v236, %v625
    %627 = vdwg.mxu0
    %628 = vmatpush.msra.mxu0 0.0
    %629 = vmatpush.msra.mxu0 0.0
    %630 = vmatpush.msra.mxu0 0.0
    %631 = vmatpush.msra.mxu0 0.0
    %632 = vmatpush.msra.mxu0 0.0
    %633 = vmatpush.msra.mxu0 0.0
    %634 = vmatpush.msra.mxu0 0.0
    %635 = vmatpush.msra.mxu0 0.0
    %636 = vmatpush.msra.mxu0 %v180
    %637 = vmatpush.msra.mxu0 %v178
    %638 = vmatpush.msra.mxu0 %v176
    %639 = vmatpush.msra.mxu0 %v174
    %640 = vmatpush.msra.mxu0 %v172
    %641 = vmatpush.msra.mxu0 %v170
    %642 = vmatpush.msra.mxu0 %v168
    %643 = vmatpush.msra.mxu0 %v166
    %644 = vmatmul.f32.gmra.mxu0 %v606
    %v645 = vpop.f32.mrf.mxu0
    %v646 = vadd.f32 %v237, %v645
    %647 = vdwg.mxu0
    %v649 = vrot.slane %v626, 4
    %v651 = vadd.f32 %v208, %v649
    %v652 = vxor.u32 %v651, 2147483648
    %v653 = vmul.f32 %v652, 1.442695
    %v654 = vpow.pop %v653
    %v655 = vadd.f32 %v654, 1.0
    %v656 = vrcp.pop %v655
    %v657 = vmul.f32 %v655, %v656
    %v658 = vsub.f32 1.0, %v657
    %v659 = vmul.f32 %v656, %v658
    %v660 = vadd.f32 %v656, %v659
    %vm661 = vweird.f32 %v655
    %vm662 = vweird.f32 %v656
    %vm663 = vmor %vm661, %vm662
    %v664 = vsel %vm663, %v656, %v660
    %v665 = vand.u32 2147483647, %v655
    %vm666 = vcmp.eq.f32.partialorder %v665, 8.507059e+37
    %v667 = vand.u32 %v655, 2147483648
    %v668 = vor.u32 1.1754944e-38, %v667
    %v669 = vsel %vm666, %v668, %v664
    %v670 = vmul.f32 1.0, %v669
    %671 = vrot.lane.b32.xlu0 %v649, 64
    %v672 = vpop.permute.xlu0 %671
    %v674 = vmul.f32 %v670, %v672
    %676 = vrot.lane.b32.xlu0 %v674, 64
    %v677 = vpop.permute.xlu0 %676
    %v679 = vadd.f32 %v208, %v677
    %v680 = vtanh.pop %v679
    %v681 = vsub.f32 1.0, %v670
    %683 = vrot.lane.b32.xlu0 %v680, 96
    %v684 = vpop.permute.xlu0 %683
    %v686 = vmul.f32 %v681, %v684
    %v687 = vrot.slane %v599, 6
    %688 = vrot.lane.b32.xlu0 %v687, 32
    %v689 = vpop.permute.xlu0 %688
    %v691 = vmul.f32 %v670, %v689
    %v692 = vadd.f32 %v686, %v691
    %v693 = vadd.f32 %v211, %v626
    %v694 = vxor.u32 %v693, 2147483648
    %v695 = vmul.f32 %v694, 1.442695
    %v696 = vpow.pop %v695
    %v697 = vadd.f32 %v696, 1.0
    %v698 = vrcp.pop %v697
    %v699 = vmul.f32 %v697, %v698
    %v700 = vsub.f32 1.0, %v699
    %v701 = vmul.f32 %v698, %v700
    %v702 = vadd.f32 %v698, %v701
    %vm703 = vweird.f32 %v697
    %vm704 = vweird.f32 %v698
    %vm705 = vmor %vm703, %vm704
    %v706 = vsel %vm705, %v698, %v702
    %v707 = vand.u32 2147483647, %v697
    %vm708 = vcmp.eq.f32.partialorder %v707, 8.507059e+37
    %v709 = vand.u32 %v697, 2147483648
    %v710 = vor.u32 1.1754944e-38, %v709
    %v711 = vsel %vm708, %v710, %v706
    %v712 = vmul.f32 1.0, %v711
    %v713 = vadd.f32 %v234, %v646
    %v714 = vxor.u32 %v713, 2147483648
    %v715 = vmul.f32 %v714, 1.442695
    %v716 = vpow.pop %v715
    %v717 = vadd.f32 %v716, 1.0
    %v718 = vrcp.pop %v717
    %v719 = vmul.f32 %v717, %v718
    %v720 = vsub.f32 1.0, %v719
    %v721 = vmul.f32 %v718, %v720
    %v722 = vadd.f32 %v718, %v721
    %vm723 = vweird.f32 %v717
    %vm724 = vweird.f32 %v718
    %vm725 = vmor %vm723, %vm724
    %v726 = vsel %vm725, %v718, %v722
    %v727 = vand.u32 2147483647, %v717
    %vm728 = vcmp.eq.f32.partialorder %v727, 8.507059e+37
    %v729 = vand.u32 %v717, 2147483648
    %v730 = vor.u32 1.1754944e-38, %v729
    %v731 = vsel %vm728, %v730, %v726
    %v732 = vmul.f32 1.0, %v731
    %734 = vrot.lane.b32.xlu0 %v646, 64
    %v735 = vpop.permute.xlu0 %734
    %v737 = vmul.f32 %v712, %v735
    %739 = vrot.lane.b32.xlu0 %v737, 64
    %v740 = vpop.permute.xlu0 %739
    %v742 = vadd.f32 %v234, %v740
    %v743 = vtanh.pop %v742
    %v744 = vsub.f32 1.0, %v732
    %746 = vrot.lane.b32.xlu0 %v743, 96
    %v747 = vpop.permute.xlu0 %746
    %v749 = vmul.f32 %v744, %v747
    %750 = vrot.lane.b32.xlu0 %v605, 96
    %v751 = vpop.permute.xlu0 %750
    %v753 = vmul.f32 %v732, %v751
    %v754 = vadd.f32 %v749, %v753
    %v755 = vmul.f32 %v386, %v692
    %v757 = vmul.f32 %v393, %v687
    %759 = vrot.lane.b32.xlu0 %v757, 32
    %v760 = vpop.permute.xlu0 %759
    %v762 = vadd.f32 %v755, %v760
    %v763 = vmul.f32 %v400, %v754
    %v764 = vmul.f32 %v407, %v751
    %v765 = vadd.f32 %v763, %v764
    %767 = vrot.lane.b32.xlu0 %v762, 96
    %v768 = vpop.permute.xlu0 %767
    %v771 = vrot.slane %v765, 4
    %772 = vrot.lane.b32.xlu0 %v771, 32
    %v773 = vpop.permute.xlu0 %772
    %v775 = vsel %vm183, %v768, %v773
    %vm776 = vcmask 259076
    %777 = vst.msk [vmem:[#allocation2] sm:$0x30] %vm776, %v768
    %778 = vrot.lane.b32.xlu0 %v765, 32
    %v779 = vpop.permute.xlu0 %778
    %vm781 = vcmask 517376
    %782 = vst.msk [vmem:[#allocation2 + $0x8] sm:$0x3] %vm781, %v779
    %v784 = vrot.slane %v775, 4
    %v785 = vsel %vm127, %v784, 0
    %787 = vmatpush.msra.mxu0 0.0
    %788 = vmatpush.msra.mxu0 0.0
    %789 = vmatpush.msra.mxu0 0.0
    %790 = vmatpush.msra.mxu0 0.0
    %791 = vmatpush.msra.mxu0 0.0
    %792 = vmatpush.msra.mxu0 0.0
    %793 = vmatpush.msra.mxu0 0.0
    %794 = vmatpush.msra.mxu0 0.0
    %795 = vmatpush.msra.mxu0 %v179
    %796 = vmatpush.msra.mxu0 %v177
    %797 = vmatpush.msra.mxu0 %v175
    %798 = vmatpush.msra.mxu0 %v173
    %799 = vmatpush.msra.mxu0 %v171
    %800 = vmatpush.msra.mxu0 %v169
    %801 = vmatpush.msra.mxu0 %v167
    %802 = vmatpush.msra.mxu0 %v165
    %803 = vmatmul.f32.gmra.mxu0 %v785
    %v804 = vpop.f32.mrf.mxu0
    %v805 = vadd.f32 %v236, %v804
    %806 = vdwg.mxu0
    %807 = vmatpush.msra.mxu0 0.0
    %808 = vmatpush.msra.mxu0 0.0
    %809 = vmatpush.msra.mxu0 0.0
    %810 = vmatpush.msra.mxu0 0.0
    %811 = vmatpush.msra.mxu0 0.0
    %812 = vmatpush.msra.mxu0 0.0
    %813 = vmatpush.msra.mxu0 0.0
    %814 = vmatpush.msra.mxu0 0.0
    %815 = vmatpush.msra.mxu0 %v180
    %816 = vmatpush.msra.mxu0 %v178
    %817 = vmatpush.msra.mxu0 %v176
    %818 = vmatpush.msra.mxu0 %v174
    %819 = vmatpush.msra.mxu0 %v172
    %820 = vmatpush.msra.mxu0 %v170
    %821 = vmatpush.msra.mxu0 %v168
    %822 = vmatpush.msra.mxu0 %v166
    %823 = vmatmul.f32.gmra.mxu0 %v785
    %v824 = vpop.f32.mrf.mxu0
    %v825 = vadd.f32 %v237, %v824
    %826 = vdwg.mxu0
    %v828 = vrot.slane %v805, 2
    %v830 = vadd.f32 %v208, %v828
    %v831 = vxor.u32 %v830, 2147483648
    %v832 = vmul.f32 %v831, 1.442695
    %v833 = vpow.pop %v832
    %v834 = vadd.f32 %v833, 1.0
    %v835 = vrcp.pop %v834
    %v836 = vmul.f32 %v834, %v835
    %v837 = vsub.f32 1.0, %v836
    %v838 = vmul.f32 %v835, %v837
    %v839 = vadd.f32 %v835, %v838
    %vm840 = vweird.f32 %v834
    %vm841 = vweird.f32 %v835
    %vm842 = vmor %vm840, %vm841
    %v843 = vsel %vm842, %v835, %v839
    %v844 = vand.u32 2147483647, %v834
    %vm845 = vcmp.eq.f32.partialorder %v844, 8.507059e+37
    %v846 = vand.u32 %v834, 2147483648
    %v847 = vor.u32 1.1754944e-38, %v846
    %v848 = vsel %vm845, %v847, %v843
    %v849 = vmul.f32 1.0, %v848
    %850 = vrot.lane.b32.xlu0 %v828, 64
    %v851 = vpop.permute.xlu0 %850
    %v853 = vmul.f32 %v849, %v851
    %855 = vrot.lane.b32.xlu0 %v853, 64
    %v856 = vpop.permute.xlu0 %855
    %v858 = vadd.f32 %v208, %v856
    %v859 = vtanh.pop %v858
    %v860 = vsub.f32 1.0, %v849
    %862 = vrot.lane.b32.xlu0 %v859, 96
    %v863 = vpop.permute.xlu0 %862
    %v865 = vmul.f32 %v860, %v863
    %v866 = vrot.slane %v775, 6
    %867 = vrot.lane.b32.xlu0 %v866, 32
    %v868 = vpop.permute.xlu0 %867
    %v870 = vmul.f32 %v849, %v868
    %v871 = vadd.f32 %v865, %v870
    %v873 = vrot.slane %v825, 2
    %v875 = vadd.f32 %v231, %v873
    %v876 = vxor.u32 %v875, 2147483648
    %v877 = vmul.f32 %v876, 1.442695
    %v878 = vpow.pop %v877
    %v879 = vadd.f32 %v878, 1.0
    %v880 = vrcp.pop %v879
    %v881 = vmul.f32 %v879, %v880
    %v882 = vsub.f32 1.0, %v881
    %v883 = vmul.f32 %v880, %v882
    %v884 = vadd.f32 %v880, %v883
    %vm885 = vweird.f32 %v879
    %vm886 = vweird.f32 %v880
    %vm887 = vmor %vm885, %vm886
    %v888 = vsel %vm887, %v880, %v884
    %v889 = vand.u32 2147483647, %v879
    %vm890 = vcmp.eq.f32.partialorder %v889, 8.507059e+37
    %v891 = vand.u32 %v879, 2147483648
    %v892 = vor.u32 1.1754944e-38, %v891
    %v893 = vsel %vm890, %v892, %v888
    %v894 = vmul.f32 1.0, %v893
    %895 = vrot.lane.b32.xlu0 %v873, 64
    %v896 = vpop.permute.xlu0 %895
    %v898 = vmul.f32 %v849, %v896
    %900 = vrot.lane.b32.xlu0 %v898, 64
    %v901 = vpop.permute.xlu0 %900
    %v903 = vadd.f32 %v231, %v901
    %v904 = vtanh.pop %v903
    %v905 = vsub.f32 1.0, %v894
    %907 = vrot.lane.b32.xlu0 %v904, 96
    %v908 = vpop.permute.xlu0 %907
    %v910 = vmul.f32 %v905, %v908
    %911 = vrot.lane.b32.xlu0 %v866, 96
    %v912 = vpop.permute.xlu0 %911
    %v914 = vmul.f32 %v894, %v912
    %v915 = vadd.f32 %v910, %v914
    %v916 = vmul.f32 %v386, %v871
    %v918 = vmul.f32 %v393, %v866
    %920 = vrot.lane.b32.xlu0 %v918, 32
    %v921 = vpop.permute.xlu0 %920
    %v923 = vadd.f32 %v916, %v921
    %v924 = vmul.f32 %v386, %v915
    %v925 = vmul.f32 %v393, %v912
    %v926 = vadd.f32 %v924, %v925
    %928 = vrot.lane.b32.xlu0 %v923, 96
    %v929 = vpop.permute.xlu0 %928
    %932 = vrot.lane.b32.xlu0 %v926, 32
    %v933 = vpop.permute.xlu0 %932
    %v935 = vsel %vm183, %v929, %v933
    %vm936 = vcmask 261126
    %937 = vst.msk [vmem:[#allocation2] sm:$0xc0] %vm936, %v929
    %vm938 = vcmask 523526
    %939 = vst.msk [vmem:[#allocation2] sm:$0xc0] %vm938, %v933
    %v941 = vrot.slane %v935, 6
    %v942 = vsel %vm127, %v941, 0
    %944 = vmatpush.msra.mxu0 0.0
    %945 = vmatpush.msra.mxu0 0.0
    %946 = vmatpush.msra.mxu0 0.0
    %947 = vmatpush.msra.mxu0 0.0
    %948 = vmatpush.msra.mxu0 0.0
    %949 = vmatpush.msra.mxu0 0.0
    %950 = vmatpush.msra.mxu0 0.0
    %951 = vmatpush.msra.mxu0 0.0
    %952 = vmatpush.msra.mxu0 %v179
    %953 = vmatpush.msra.mxu0 %v177
    %954 = vmatpush.msra.mxu0 %v175
    %955 = vmatpush.msra.mxu0 %v173
    %956 = vmatpush.msra.mxu0 %v171
    %957 = vmatpush.msra.mxu0 %v169
    %958 = vmatpush.msra.mxu0 %v167
    %959 = vmatpush.msra.mxu0 %v165
    %960 = vmatmul.f32.gmra.mxu0 %v942
    %v961 = vpop.f32.mrf.mxu0
    %v962 = vadd.f32 %v236, %v961
    %963 = vdwg.mxu0
    %964 = vmatpush.msra.mxu0 0.0
    %965 = vmatpush.msra.mxu0 0.0
    %966 = vmatpush.msra.mxu0 0.0
    %967 = vmatpush.msra.mxu0 0.0
    %968 = vmatpush.msra.mxu0 0.0
    %969 = vmatpush.msra.mxu0 0.0
    %970 = vmatpush.msra.mxu0 0.0
    %971 = vmatpush.msra.mxu0 0.0
    %972 = vmatpush.msra.mxu0 %v180
    %973 = vmatpush.msra.mxu0 %v178
    %974 = vmatpush.msra.mxu0 %v176
    %975 = vmatpush.msra.mxu0 %v174
    %976 = vmatpush.msra.mxu0 %v172
    %977 = vmatpush.msra.mxu0 %v170
    %978 = vmatpush.msra.mxu0 %v168
    %979 = vmatpush.msra.mxu0 %v166
    %980 = vmatmul.f32.gmra.mxu0 %v942
    %v981 = vpop.f32.mrf.mxu0
    %v982 = vadd.f32 %v237, %v981
    %983 = vdwg.mxu0
    %v984 = vadd.f32 %v211, %v962
    %v985 = vxor.u32 %v984, 2147483648
    %v986 = vmul.f32 %v985, 1.442695
    %v987 = vpow.pop %v986
    %v988 = vadd.f32 %v987, 1.0
    %v989 = vrcp.pop %v988
    %v990 = vmul.f32 %v988, %v989
    %v991 = vsub.f32 1.0, %v990
    %v992 = vmul.f32 %v989, %v991
    %v993 = vadd.f32 %v989, %v992
    %vm994 = vweird.f32 %v988
    %vm995 = vweird.f32 %v989
    %vm996 = vmor %vm994, %vm995
    %v997 = vsel %vm996, %v989, %v993
    %v998 = vand.u32 2147483647, %v988
    %vm999 = vcmp.eq.f32.partialorder %v998, 8.507059e+37
    %v1000 = vand.u32 %v988, 2147483648
    %v1001 = vor.u32 1.1754944e-38, %v1000
    %v1002 = vsel %vm999, %v1001, %v997
    %v1003 = vmul.f32 1.0, %v1002
    %1005 = vrot.lane.b32.xlu0 %v962, 64
    %v1006 = vpop.permute.xlu0 %1005
    %v1008 = vmul.f32 %v1003, %v1006
    %1010 = vrot.lane.b32.xlu0 %v1008, 64
    %v1011 = vpop.permute.xlu0 %1010
    %v1013 = vadd.f32 %v211, %v1011
    %v1014 = vtanh.pop %v1013
    %v1015 = vsub.f32 1.0, %v1003
    %1017 = vrot.lane.b32.xlu0 %v1014, 96
    %v1018 = vpop.permute.xlu0 %1017
    %v1020 = vmul.f32 %v1015, %v1018
    %1021 = vrot.lane.b32.xlu0 %v941, 32
    %v1022 = vpop.permute.xlu0 %1021
    %v1024 = vmul.f32 %v1003, %v1022
    %v1025 = vadd.f32 %v1020, %v1024
    %v1026 = vrot.slane %v962, 4
    %v1028 = vadd.f32 %v208, %v1026
    %v1029 = vxor.u32 %v1028, 2147483648
    %v1030 = vmul.f32 %v1029, 1.442695
    %v1031 = vpow.pop %v1030
    %v1032 = vadd.f32 %v1031, 1.0
    %v1033 = vrcp.pop %v1032
    %v1034 = vmul.f32 %v1032, %v1033
    %v1035 = vsub.f32 1.0, %v1034
    %v1036 = vmul.f32 %v1033, %v1035
    %v1037 = vadd.f32 %v1033, %v1036
    %vm1038 = vweird.f32 %v1032
    %vm1039 = vweird.f32 %v1033
    %vm1040 = vmor %vm1038, %vm1039
    %v1041 = vsel %vm1040, %v1033, %v1037
    %v1042 = vand.u32 2147483647, %v1032
    %vm1043 = vcmp.eq.f32.partialorder %v1042, 8.507059e+37
    %v1044 = vand.u32 %v1032, 2147483648
    %v1045 = vor.u32 1.1754944e-38, %v1044
    %v1046 = vsel %vm1043, %v1045, %v1041
    %v1047 = vmul.f32 1.0, %v1046
    %v1049 = vrot.slane %v982, 4
    %v1051 = vadd.f32 %v231, %v1049
    %v1052 = vxor.u32 %v1051, 2147483648
    %v1053 = vmul.f32 %v1052, 1.442695
    %v1054 = vpow.pop %v1053
    %v1055 = vadd.f32 %v1054, 1.0
    %v1056 = vrcp.pop %v1055
    %v1057 = vmul.f32 %v1055, %v1056
    %v1058 = vsub.f32 1.0, %v1057
    %v1059 = vmul.f32 %v1056, %v1058
    %v1060 = vadd.f32 %v1056, %v1059
    %vm1061 = vweird.f32 %v1055
    %vm1062 = vweird.f32 %v1056
    %vm1063 = vmor %vm1061, %vm1062
    %v1064 = vsel %vm1063, %v1056, %v1060
    %v1065 = vand.u32 2147483647, %v1055
    %vm1066 = vcmp.eq.f32.partialorder %v1065, 8.507059e+37
    %v1067 = vand.u32 %v1055, 2147483648
    %v1068 = vor.u32 1.1754944e-38, %v1067
    %v1069 = vsel %vm1066, %v1068, %v1064
    %v1070 = vmul.f32 1.0, %v1069
    %1071 = vrot.lane.b32.xlu0 %v1049, 64
    %v1072 = vpop.permute.xlu0 %1071
    %v1074 = vmul.f32 %v1047, %v1072
    %1076 = vrot.lane.b32.xlu0 %v1074, 64
    %v1077 = vpop.permute.xlu0 %1076
    %v1079 = vadd.f32 %v231, %v1077
    %v1080 = vtanh.pop %v1079
    %v1081 = vsub.f32 1.0, %v1070
    %1083 = vrot.lane.b32.xlu0 %v1080, 96
    %v1084 = vpop.permute.xlu0 %1083
    %v1086 = vmul.f32 %v1081, %v1084
    %v1087 = vrot.slane %v935, 2
    %1088 = vrot.lane.b32.xlu0 %v1087, 96
    %v1089 = vpop.permute.xlu0 %1088
    %v1091 = vmul.f32 %v1070, %v1089
    %v1092 = vadd.f32 %v1086, %v1091
    %v1093 = vmul.f32 %v400, %v1025
    %v1095 = vmul.f32 %v407, %v941
    %1097 = vrot.lane.b32.xlu0 %v1095, 32
    %v1098 = vpop.permute.xlu0 %1097
    %v1100 = vadd.f32 %v1093, %v1098
    %v1101 = vmul.f32 %v386, %v1092
    %v1102 = vmul.f32 %v393, %v1089
    %v1103 = vadd.f32 %v1101, %v1102
    %1105 = vrot.lane.b32.xlu0 %v1100, 96
    %v1106 = vpop.permute.xlu0 %1105
    %v1109 = vrot.slane %v1103, 4
    %1110 = vrot.lane.b32.xlu0 %v1109, 32
    %v1111 = vpop.permute.xlu0 %1110
    %v1113 = vsel %vm183, %v1106, %v1111
    %1114 = vst.msk [vmem:[#allocation2 + $0x8] sm:$0x3] %vm421, %v1106
    %1115 = vrot.lane.b32.xlu0 %v1103, 32
    %v1116 = vpop.permute.xlu0 %1115
    %1118 = vst.msk [vmem:[#allocation2] sm:$0x30] %vm426, %v1116
    %v1120 = vsel %vm127, %v1113, 0
    %1122 = vmatpush.msra.mxu0 0.0
    %1123 = vmatpush.msra.mxu0 0.0
    %1124 = vmatpush.msra.mxu0 0.0
    %1125 = vmatpush.msra.mxu0 0.0
    %1126 = vmatpush.msra.mxu0 0.0
    %1127 = vmatpush.msra.mxu0 0.0
    %1128 = vmatpush.msra.mxu0 0.0
    %1129 = vmatpush.msra.mxu0 0.0
    %1130 = vmatpush.msra.mxu0 %v179
    %1131 = vmatpush.msra.mxu0 %v177
    %1132 = vmatpush.msra.mxu0 %v175
    %1133 = vmatpush.msra.mxu0 %v173
    %1134 = vmatpush.msra.mxu0 %v171
    %1135 = vmatpush.msra.mxu0 %v169
    %1136 = vmatpush.msra.mxu0 %v167
    %1137 = vmatpush.msra.mxu0 %v165
    %1138 = vmatmul.f32.gmra.mxu0 %v1120
    %v1139 = vpop.f32.mrf.mxu0
    %v1140 = vadd.f32 %v236, %v1139
    %1141 = vdwg.mxu0
    %1142 = vmatpush.msra.mxu0 0.0
    %1143 = vmatpush.msra.mxu0 0.0
    %1144 = vmatpush.msra.mxu0 0.0
    %1145 = vmatpush.msra.mxu0 0.0
    %1146 = vmatpush.msra.mxu0 0.0
    %1147 = vmatpush.msra.mxu0 0.0
    %1148 = vmatpush.msra.mxu0 0.0
    %1149 = vmatpush.msra.mxu0 0.0
    %1150 = vmatpush.msra.mxu0 %v180
    %1151 = vmatpush.msra.mxu0 %v178
    %1152 = vmatpush.msra.mxu0 %v176
    %1153 = vmatpush.msra.mxu0 %v174
    %1154 = vmatpush.msra.mxu0 %v172
    %1155 = vmatpush.msra.mxu0 %v170
    %1156 = vmatpush.msra.mxu0 %v168
    %1157 = vmatpush.msra.mxu0 %v166
    %1158 = vmatmul.f32.gmra.mxu0 %v1120
    %v1159 = vpop.f32.mrf.mxu0
    %v1160 = vadd.f32 %v237, %v1159
    %1161 = vdwg.mxu0
    %v1163 = vrot.slane %v1140, 6
    %v1165 = vadd.f32 %v211, %v1163
    %v1166 = vxor.u32 %v1165, 2147483648
    %v1167 = vmul.f32 %v1166, 1.442695
    %v1168 = vpow.pop %v1167
    %v1169 = vadd.f32 %v1168, 1.0
    %v1170 = vrcp.pop %v1169
    %v1171 = vmul.f32 %v1169, %v1170
    %v1172 = vsub.f32 1.0, %v1171
    %v1173 = vmul.f32 %v1170, %v1172
    %v1174 = vadd.f32 %v1170, %v1173
    %vm1175 = vweird.f32 %v1169
    %vm1176 = vweird.f32 %v1170
    %vm1177 = vmor %vm1175, %vm1176
    %v1178 = vsel %vm1177, %v1170, %v1174
    %v1179 = vand.u32 2147483647, %v1169
    %vm1180 = vcmp.eq.f32.partialorder %v1179, 8.507059e+37
    %v1181 = vand.u32 %v1169, 2147483648
    %v1182 = vor.u32 1.1754944e-38, %v1181
    %v1183 = vsel %vm1180, %v1182, %v1178
    %v1184 = vmul.f32 1.0, %v1183
    %1185 = vrot.lane.b32.xlu0 %v1163, 64
    %v1186 = vpop.permute.xlu0 %1185
    %v1188 = vmul.f32 %v1184, %v1186
    %1190 = vrot.lane.b32.xlu0 %v1188, 64
    %v1191 = vpop.permute.xlu0 %1190
    %v1193 = vadd.f32 %v211, %v1191
    %v1194 = vtanh.pop %v1193
    %v1195 = vsub.f32 1.0, %v1184
    %1197 = vrot.lane.b32.xlu0 %v1194, 96
    %v1198 = vpop.permute.xlu0 %1197
    %v1200 = vmul.f32 %v1195, %v1198
    %v1201 = vrot.slane %v1113, 6
    %1202 = vrot.lane.b32.xlu0 %v1201, 32
    %v1203 = vpop.permute.xlu0 %1202
    %v1205 = vmul.f32 %v1184, %v1203
    %v1206 = vadd.f32 %v1200, %v1205
    %v1207 = vadd.f32 %v208, %v1163
    %v1208 = vxor.u32 %v1207, 2147483648
    %v1209 = vmul.f32 %v1208, 1.442695
    %v1210 = vpow.pop %v1209
    %v1211 = vadd.f32 %v1210, 1.0
    %v1212 = vrcp.pop %v1211
    %v1213 = vmul.f32 %v1211, %v1212
    %v1214 = vsub.f32 1.0, %v1213
    %v1215 = vmul.f32 %v1212, %v1214
    %v1216 = vadd.f32 %v1212, %v1215
    %vm1217 = vweird.f32 %v1211
    %vm1218 = vweird.f32 %v1212
    %vm1219 = vmor %vm1217, %vm1218
    %v1220 = vsel %vm1219, %v1212, %v1216
    %v1221 = vand.u32 2147483647, %v1211
    %vm1222 = vcmp.eq.f32.partialorder %v1221, 8.507059e+37
    %v1223 = vand.u32 %v1211, 2147483648
    %v1224 = vor.u32 1.1754944e-38, %v1223
    %v1225 = vsel %vm1222, %v1224, %v1220
    %v1226 = vmul.f32 1.0, %v1225
    %v1228 = vrot.slane %v1160, 6
    %v1230 = vadd.f32 %v231, %v1228
    %v1231 = vxor.u32 %v1230, 2147483648
    %v1232 = vmul.f32 %v1231, 1.442695
    %v1233 = vpow.pop %v1232
    %v1234 = vadd.f32 %v1233, 1.0
    %v1235 = vrcp.pop %v1234
    %v1236 = vmul.f32 %v1234, %v1235
    %v1237 = vsub.f32 1.0, %v1236
    %v1238 = vmul.f32 %v1235, %v1237
    %v1239 = vadd.f32 %v1235, %v1238
    %vm1240 = vweird.f32 %v1234
    %vm1241 = vweird.f32 %v1235
    %vm1242 = vmor %vm1240, %vm1241
    %v1243 = vsel %vm1242, %v1235, %v1239
    %v1244 = vand.u32 2147483647, %v1234
    %vm1245 = vcmp.eq.f32.partialorder %v1244, 8.507059e+37
    %v1246 = vand.u32 %v1234, 2147483648
    %v1247 = vor.u32 1.1754944e-38, %v1246
    %v1248 = vsel %vm1245, %v1247, %v1243
    %v1249 = vmul.f32 1.0, %v1248
    %1250 = vrot.lane.b32.xlu0 %v1228, 64
    %v1251 = vpop.permute.xlu0 %1250
    %v1253 = vmul.f32 %v1226, %v1251
    %1255 = vrot.lane.b32.xlu0 %v1253, 64
    %v1256 = vpop.permute.xlu0 %1255
    %v1258 = vadd.f32 %v231, %v1256
    %v1259 = vtanh.pop %v1258
    %v1260 = vsub.f32 1.0, %v1249
    %1262 = vrot.lane.b32.xlu0 %v1259, 96
    %v1263 = vpop.permute.xlu0 %1262
    %v1265 = vmul.f32 %v1260, %v1263
    %1266 = vrot.lane.b32.xlu0 %v1201, 96
    %v1267 = vpop.permute.xlu0 %1266
    %v1269 = vmul.f32 %v1249, %v1267
    %v1270 = vadd.f32 %v1265, %v1269
    %v1271 = vmul.f32 %v400, %v1206
    %v1273 = vmul.f32 %v407, %v1201
    %1275 = vrot.lane.b32.xlu0 %v1273, 32
    %v1276 = vpop.permute.xlu0 %1275
    %v1278 = vadd.f32 %v1271, %v1276
    %v1279 = vmul.f32 %v386, %v1270
    %v1280 = vmul.f32 %v393, %v1267
    %v1281 = vadd.f32 %v1279, %v1280
    %1283 = vrot.lane.b32.xlu0 %v1278, 96
    %v1284 = vpop.permute.xlu0 %1283
    %1287 = vrot.lane.b32.xlu0 %v1281, 32
    %v1288 = vpop.permute.xlu0 %1287
    %v1290 = vsel %vm183, %v1284, %v1288
    %1291 = vst.msk [vmem:[#allocation2 + $0x8] sm:$0xc] %vm600, %v1284
    %1292 = vst.msk [vmem:[#allocation2] sm:$0xc] %vm602, %v1288
    %v1294 = vrot.slane %v1290, 2
    %v1295 = vsel %vm127, %v1294, 0
    %1297 = vmatpush.msra.mxu0 0.0
    %1298 = vmatpush.msra.mxu0 0.0
    %1299 = vmatpush.msra.mxu0 0.0
    %1300 = vmatpush.msra.mxu0 0.0
    %1301 = vmatpush.msra.mxu0 0.0
    %1302 = vmatpush.msra.mxu0 0.0
    %1303 = vmatpush.msra.mxu0 0.0
    %1304 = vmatpush.msra.mxu0 0.0
    %1305 = vmatpush.msra.mxu0 %v179
    %1306 = vmatpush.msra.mxu0 %v177
    %1307 = vmatpush.msra.mxu0 %v175
    %1308 = vmatpush.msra.mxu0 %v173
    %1309 = vmatpush.msra.mxu0 %v171
    %1310 = vmatpush.msra.mxu0 %v169
    %1311 = vmatpush.msra.mxu0 %v167
    %1312 = vmatpush.msra.mxu0 %v165
    %1313 = vmatmul.f32.gmra.mxu0 %v1295
    %v1314 = vpop.f32.mrf.mxu0
    %v1315 = vadd.f32 %v236, %v1314
    %1316 = vdwg.mxu0
    %1317 = vmatpush.msra.mxu0 0.0
    %1318 = vmatpush.msra.mxu0 0.0
    %1319 = vmatpush.msra.mxu0 0.0
    %1320 = vmatpush.msra.mxu0 0.0
    %1321 = vmatpush.msra.mxu0 0.0
    %1322 = vmatpush.msra.mxu0 0.0
    %1323 = vmatpush.msra.mxu0 0.0
    %1324 = vmatpush.msra.mxu0 0.0
    %1325 = vmatpush.msra.mxu0 %v180
    %1326 = vmatpush.msra.mxu0 %v178
    %1327 = vmatpush.msra.mxu0 %v176
    %1328 = vmatpush.msra.mxu0 %v174
    %1329 = vmatpush.msra.mxu0 %v172
    %1330 = vmatpush.msra.mxu0 %v170
    %1331 = vmatpush.msra.mxu0 %v168
    %1332 = vmatpush.msra.mxu0 %v166
    %1333 = vmatmul.f32.gmra.mxu0 %v1295
    %v1334 = vpop.f32.mrf.mxu0
    %v1335 = vadd.f32 %v237, %v1334
    %1336 = vdwg.mxu0
    %v1338 = vrot.slane %v1315, 4
    %v1340 = vadd.f32 %v211, %v1338
    %v1341 = vxor.u32 %v1340, 2147483648
    %v1342 = vmul.f32 %v1341, 1.442695
    %v1343 = vpow.pop %v1342
    %v1344 = vadd.f32 %v1343, 1.0
    %v1345 = vrcp.pop %v1344
    %v1346 = vmul.f32 %v1344, %v1345
    %v1347 = vsub.f32 1.0, %v1346
    %v1348 = vmul.f32 %v1345, %v1347
    %v1349 = vadd.f32 %v1345, %v1348
    %vm1350 = vweird.f32 %v1344
    %vm1351 = vweird.f32 %v1345
    %vm1352 = vmor %vm1350, %vm1351
    %v1353 = vsel %vm1352, %v1345, %v1349
    %v1354 = vand.u32 2147483647, %v1344
    %vm1355 = vcmp.eq.f32.partialorder %v1354, 8.507059e+37
    %v1356 = vand.u32 %v1344, 2147483648
    %v1357 = vor.u32 1.1754944e-38, %v1356
    %v1358 = vsel %vm1355, %v1357, %v1353
    %v1359 = vmul.f32 1.0, %v1358
    %1360 = vrot.lane.b32.xlu0 %v1338, 64
    %v1361 = vpop.permute.xlu0 %1360
    %v1363 = vmul.f32 %v1359, %v1361
    %1365 = vrot.lane.b32.xlu0 %v1363, 64
    %v1366 = vpop.permute.xlu0 %1365
    %v1368 = vadd.f32 %v211, %v1366
    %v1369 = vtanh.pop %v1368
    %v1370 = vsub.f32 1.0, %v1359
    %1372 = vrot.lane.b32.xlu0 %v1369, 96
    %v1373 = vpop.permute.xlu0 %1372
    %v1375 = vmul.f32 %v1370, %v1373
    %v1376 = vrot.slane %v1290, 6
    %1377 = vrot.lane.b32.xlu0 %v1376, 32
    %v1378 = vpop.permute.xlu0 %1377
    %v1380 = vmul.f32 %v1359, %v1378
    %v1381 = vadd.f32 %v1375, %v1380
    %v1382 = vadd.f32 %v208, %v1315
    %v1383 = vxor.u32 %v1382, 2147483648
    %v1384 = vmul.f32 %v1383, 1.442695
    %v1385 = vpow.pop %v1384
    %v1386 = vadd.f32 %v1385, 1.0
    %v1387 = vrcp.pop %v1386
    %v1388 = vmul.f32 %v1386, %v1387
    %v1389 = vsub.f32 1.0, %v1388
    %v1390 = vmul.f32 %v1387, %v1389
    %v1391 = vadd.f32 %v1387, %v1390
    %vm1392 = vweird.f32 %v1386
    %vm1393 = vweird.f32 %v1387
    %vm1394 = vmor %vm1392, %vm1393
    %v1395 = vsel %vm1394, %v1387, %v1391
    %v1396 = vand.u32 2147483647, %v1386
    %vm1397 = vcmp.eq.f32.partialorder %v1396, 8.507059e+37
    %v1398 = vand.u32 %v1386, 2147483648
    %v1399 = vor.u32 1.1754944e-38, %v1398
    %v1400 = vsel %vm1397, %v1399, %v1395
    %v1401 = vmul.f32 1.0, %v1400
    %v1402 = vadd.f32 %v231, %v1335
    %v1403 = vxor.u32 %v1402, 2147483648
    %v1404 = vmul.f32 %v1403, 1.442695
    %v1405 = vpow.pop %v1404
    %v1406 = vadd.f32 %v1405, 1.0
    %v1407 = vrcp.pop %v1406
    %v1408 = vmul.f32 %v1406, %v1407
    %v1409 = vsub.f32 1.0, %v1408
    %v1410 = vmul.f32 %v1407, %v1409
    %v1411 = vadd.f32 %v1407, %v1410
    %vm1412 = vweird.f32 %v1406
    %vm1413 = vweird.f32 %v1407
    %vm1414 = vmor %vm1412, %vm1413
    %v1415 = vsel %vm1414, %v1407, %v1411
    %v1416 = vand.u32 2147483647, %v1406
    %vm1417 = vcmp.eq.f32.partialorder %v1416, 8.507059e+37
    %v1418 = vand.u32 %v1406, 2147483648
    %v1419 = vor.u32 1.1754944e-38, %v1418
    %v1420 = vsel %vm1417, %v1419, %v1415
    %v1421 = vmul.f32 1.0, %v1420
    %1423 = vrot.lane.b32.xlu0 %v1335, 64
    %v1424 = vpop.permute.xlu0 %1423
    %v1426 = vmul.f32 %v1401, %v1424
    %1428 = vrot.lane.b32.xlu0 %v1426, 64
    %v1429 = vpop.permute.xlu0 %1428
    %v1431 = vadd.f32 %v231, %v1429
    %v1432 = vtanh.pop %v1431
    %v1433 = vsub.f32 1.0, %v1421
    %1435 = vrot.lane.b32.xlu0 %v1432, 96
    %v1436 = vpop.permute.xlu0 %1435
    %v1438 = vmul.f32 %v1433, %v1436
    %1439 = vrot.lane.b32.xlu0 %v1294, 96
    %v1440 = vpop.permute.xlu0 %1439
    %v1442 = vmul.f32 %v1421, %v1440
    %v1443 = vadd.f32 %v1438, %v1442
    %v1444 = vmul.f32 %v400, %v1381
    %v1446 = vmul.f32 %v407, %v1376
    %1448 = vrot.lane.b32.xlu0 %v1446, 32
    %v1449 = vpop.permute.xlu0 %1448
    %v1451 = vadd.f32 %v1444, %v1449
    %v1452 = vmul.f32 %v386, %v1443
    %v1453 = vmul.f32 %v393, %v1440
    %v1454 = vadd.f32 %v1452, %v1453
    %1456 = vrot.lane.b32.xlu0 %v1451, 96
    %v1457 = vpop.permute.xlu0 %1456
    %1459 = vst.msk [vmem:[#allocation2 + $0x8] sm:$0x30] %vm776, %v1457
    %1461 = vrot.lane.b32.xlu0 %v1454, 32
    %v1462 = vpop.permute.xlu0 %1461
    %1464 = vst.msk [vmem:[#allocation2] sm:$0x3] %vm781, %v1462
    %v1465 = vld [vmem:[#allocation2] sm:$0xff]
    %v1466 = vld [vmem:[#allocation2 + $0x8] sm:$0x3f]
    %v1467 = vmul.f32 %v1465, %v386
    %v1468 = vmul.f32 %v1466, %v400
    %s1469 = scalar_lea.vmem [#allocation7], 256
    %v1470 = vld [vmem:[%s1469] sm:$0xff]
    %v1471 = vld [vmem:[%s1469 + $0x8] sm:$0xff]
    %v1472 = vld [vmem:[%s1469 + $0x10] sm:$0xff]
    %v1473 = vld [vmem:[%s1469 + $0x18] sm:$0xff]
    %v1474 = vld [vmem:[%s1469 + $0x20] sm:$0xff]
    %v1475 = vld [vmem:[%s1469 + $0x28] sm:$0xff]
    %v1476 = vld [vmem:[%s1469 + $0x30] sm:$0xff]
    %v1477 = vld [vmem:[%s1469 + $0x38] sm:$0xff]
    %v1478 = vld [vmem:[%s1469 + $0x40] sm:$0xff]
    %v1479 = vld [vmem:[%s1469 + $0x48] sm:$0xff]
    %v1480 = vld [vmem:[%s1469 + $0x50] sm:$0xff]
    %v1481 = vld [vmem:[%s1469 + $0x58] sm:$0xff]
    %v1482 = vld [vmem:[%s1469 + $0x60] sm:$0xff]
    %v1483 = vld [vmem:[%s1469 + $0x68] sm:$0xff]
    %v1484 = vld [vmem:[%s1469 + $0x70] sm:$0xff]
    %v1485 = vld [vmem:[%s1469 + $0x78] sm:$0xff]
    %v1486 = vld [vmem:[%s1469 + $0x80] sm:$0xff]
    %v1487 = vld [vmem:[%s1469 + $0x88] sm:$0xff]
    %v1488 = vld [vmem:[%s1469 + $0x90] sm:$0xff]
    %v1489 = vld [vmem:[%s1469 + $0x98] sm:$0xff]
    %v1490 = vld [vmem:[%s1469 + $0xa0] sm:$0xff]
    %v1491 = vld [vmem:[%s1469 + $0xa8] sm:$0xff]
    %v1492 = vld [vmem:[%s1469 + $0xb0] sm:$0xff]
    %v1493 = vld [vmem:[%s1469 + $0xb8] sm:$0xff]
    %v1494 = vld [vmem:[%s1469 + $0xc0] sm:$0xff]
    %v1495 = vld [vmem:[%s1469 + $0xc8] sm:$0xff]
    %v1496 = vld [vmem:[%s1469 + $0xd0] sm:$0xff]
    %v1497 = vld [vmem:[%s1469 + $0xd8] sm:$0xff]
    %v1498 = vld [vmem:[%s1469 + $0xe0] sm:$0xff]
    %v1499 = vld [vmem:[%s1469 + $0xe8] sm:$0xff]
    %v1500 = vld [vmem:[%s1469 + $0xf0] sm:$0xff]
    %v1501 = vld [vmem:[%s1469 + $0xf8] sm:$0xff]
    %v1502 = vperm.slane %v117, 2
    %v1503 = vperm.slane %v118, 2
    %v1505 = vsel %vm127, %v1467, 0
    %v1508 = vsel %vm127, %v1468, 0
    %1510 = vmatpush.msra.mxu0 0.0
    %1511 = vmatpush.msra.mxu0 0.0
    %1512 = vmatpush.msra.mxu0 0.0
    %1513 = vmatpush.msra.mxu0 0.0
    %1514 = vmatpush.msra.mxu0 0.0
    %1515 = vmatpush.msra.mxu0 0.0
    %1516 = vmatpush.msra.mxu0 0.0
    %1517 = vmatpush.msra.mxu0 0.0
    %1518 = vmatpush.msra.mxu0 %v1484
    %1519 = vmatpush.msra.mxu0 %v1482
    %1520 = vmatpush.msra.mxu0 %v1480
    %1521 = vmatpush.msra.mxu0 %v1478
    %1522 = vmatpush.msra.mxu0 %v1476
    %1523 = vmatpush.msra.mxu0 %v1474
    %1524 = vmatpush.msra.mxu0 %v1472
    %1525 = vmatpush.msra.mxu0 %v1470
    %1526 = vmatmul.f32.gmra.mxu0 %v1505
    %v1527 = vpop.f32.mrf.mxu0
    %v1528 = vadd.f32 %v1502, %v1527
    %1529 = vmatmul.f32.gmra.mxu0 %v1508
    %v1530 = vpop.f32.mrf.mxu0
    %v1531 = vadd.f32 %v1502, %v1530
    %1532 = vdwg.mxu0
    %1533 = vmatpush.msra.mxu0 0.0
    %1534 = vmatpush.msra.mxu0 0.0
    %1535 = vmatpush.msra.mxu0 0.0
    %1536 = vmatpush.msra.mxu0 0.0
    %1537 = vmatpush.msra.mxu0 0.0
    %1538 = vmatpush.msra.mxu0 0.0
    %1539 = vmatpush.msra.mxu0 0.0
    %1540 = vmatpush.msra.mxu0 0.0
    %1541 = vmatpush.msra.mxu0 %v1485
    %1542 = vmatpush.msra.mxu0 %v1483
    %1543 = vmatpush.msra.mxu0 %v1481
    %1544 = vmatpush.msra.mxu0 %v1479
    %1545 = vmatpush.msra.mxu0 %v1477
    %1546 = vmatpush.msra.mxu0 %v1475
    %1547 = vmatpush.msra.mxu0 %v1473
    %1548 = vmatpush.msra.mxu0 %v1471
    %1549 = vmatmul.f32.gmra.mxu0 %v1505
    %v1550 = vpop.f32.mrf.mxu0
    %v1551 = vadd.f32 %v1503, %v1550
    %1552 = vmatmul.f32.gmra.mxu0 %v1508
    %v1553 = vpop.f32.mrf.mxu0
    %v1554 = vadd.f32 %v1503, %v1553
    %1555 = vdwg.mxu0
    %v1556 = vperm.slane %v117, 3
    %v1557 = vperm.slane %v118, 3
    %1558 = vmatpush.msra.mxu0 0.0
    %1559 = vmatpush.msra.mxu0 0.0
    %1560 = vmatpush.msra.mxu0 0.0
    %1561 = vmatpush.msra.mxu0 0.0
    %1562 = vmatpush.msra.mxu0 0.0
    %1563 = vmatpush.msra.mxu0 0.0
    %1564 = vmatpush.msra.mxu0 0.0
    %1565 = vmatpush.msra.mxu0 0.0
    %1566 = vmatpush.msra.mxu0 %v1500
    %1567 = vmatpush.msra.mxu0 %v1498
    %1568 = vmatpush.msra.mxu0 %v1496
    %1569 = vmatpush.msra.mxu0 %v1494
    %1570 = vmatpush.msra.mxu0 %v1492
    %1571 = vmatpush.msra.mxu0 %v1490
    %1572 = vmatpush.msra.mxu0 %v1488
    %1573 = vmatpush.msra.mxu0 %v1486
    %1574 = vmatmul.f32.gmra.mxu0 %v239
    %v1575 = vpop.f32.mrf.mxu0
    %v1576 = vadd.f32 %v1556, %v1575
    %1577 = vdwg.mxu0
    %1578 = vmatpush.msra.mxu0 0.0
    %1579 = vmatpush.msra.mxu0 0.0
    %1580 = vmatpush.msra.mxu0 0.0
    %1581 = vmatpush.msra.mxu0 0.0
    %1582 = vmatpush.msra.mxu0 0.0
    %1583 = vmatpush.msra.mxu0 0.0
    %1584 = vmatpush.msra.mxu0 0.0
    %1585 = vmatpush.msra.mxu0 0.0
    %1586 = vmatpush.msra.mxu0 %v1501
    %1587 = vmatpush.msra.mxu0 %v1499
    %1588 = vmatpush.msra.mxu0 %v1497
    %1589 = vmatpush.msra.mxu0 %v1495
    %1590 = vmatpush.msra.mxu0 %v1493
    %1591 = vmatpush.msra.mxu0 %v1491
    %1592 = vmatpush.msra.mxu0 %v1489
    %1593 = vmatpush.msra.mxu0 %v1487
    %1594 = vmatmul.f32.gmra.mxu0 %v239
    %v1595 = vpop.f32.mrf.mxu0
    %v1596 = vadd.f32 %v1557, %v1595
    %1597 = vdwg.mxu0
    %v1598 = vadd.f32 %v1528, %v1576
    %v1599 = vxor.u32 %v1598, 2147483648
    %v1600 = vmul.f32 %v1599, 1.442695
    %v1601 = vpow.pop %v1600
    %v1602 = vadd.f32 %v1601, 1.0
    %v1603 = vrcp.pop %v1602
    %v1604 = vmul.f32 %v1602, %v1603
    %v1605 = vsub.f32 1.0, %v1604
    %v1606 = vmul.f32 %v1603, %v1605
    %v1607 = vadd.f32 %v1603, %v1606
    %vm1608 = vweird.f32 %v1602
    %vm1609 = vweird.f32 %v1603
    %vm1610 = vmor %vm1608, %vm1609
    %v1611 = vsel %vm1610, %v1603, %v1607
    %v1612 = vand.u32 2147483647, %v1602
    %vm1613 = vcmp.eq.f32.partialorder %v1612, 8.507059e+37
    %v1614 = vand.u32 %v1602, 2147483648
    %v1615 = vor.u32 1.1754944e-38, %v1614
    %v1616 = vsel %vm1613, %v1615, %v1611
    %v1617 = vmul.f32 1.0, %v1616
    %1619 = vrot.lane.b32.xlu0 %v1576, 64
    %v1620 = vpop.permute.xlu0 %1619
    %v1622 = vmul.f32 %v1617, %v1620
    %1624 = vrot.lane.b32.xlu0 %v1622, 64
    %v1625 = vpop.permute.xlu0 %1624
    %v1627 = vadd.f32 %v1528, %v1625
    %v1628 = vtanh.pop %v1627
    %v1629 = vsub.f32 1.0, %v1617
    %1631 = vrot.lane.b32.xlu0 %v1628, 96
    %v1632 = vpop.permute.xlu0 %1631
    %v1634 = vmul.f32 %v1629, %v1632
    %v1635 = vmul.f32 %v1617, 0.0
    %v1636 = vadd.f32 %v1634, %v1635
    %v1637 = vrot.slane %v1576, 4
    %v1639 = vadd.f32 %v1531, %v1637
    %v1640 = vxor.u32 %v1639, 2147483648
    %v1641 = vmul.f32 %v1640, 1.442695
    %v1642 = vpow.pop %v1641
    %v1643 = vadd.f32 %v1642, 1.0
    %v1644 = vrcp.pop %v1643
    %v1645 = vmul.f32 %v1643, %v1644
    %v1646 = vsub.f32 1.0, %v1645
    %v1647 = vmul.f32 %v1644, %v1646
    %v1648 = vadd.f32 %v1644, %v1647
    %vm1649 = vweird.f32 %v1643
    %vm1650 = vweird.f32 %v1644
    %vm1651 = vmor %vm1649, %vm1650
    %v1652 = vsel %vm1651, %v1644, %v1648
    %v1653 = vand.u32 2147483647, %v1643
    %vm1654 = vcmp.eq.f32.partialorder %v1653, 8.507059e+37
    %v1655 = vand.u32 %v1643, 2147483648
    %v1656 = vor.u32 1.1754944e-38, %v1655
    %v1657 = vsel %vm1654, %v1656, %v1652
    %v1658 = vmul.f32 1.0, %v1657
    %v1660 = vrot.slane %v1596, 4
    %v1662 = vadd.f32 %v1554, %v1660
    %v1663 = vxor.u32 %v1662, 2147483648
    %v1664 = vmul.f32 %v1663, 1.442695
    %v1665 = vpow.pop %v1664
    %v1666 = vadd.f32 %v1665, 1.0
    %v1667 = vrcp.pop %v1666
    %v1668 = vmul.f32 %v1666, %v1667
    %v1669 = vsub.f32 1.0, %v1668
    %v1670 = vmul.f32 %v1667, %v1669
    %v1671 = vadd.f32 %v1667, %v1670
    %vm1672 = vweird.f32 %v1666
    %vm1673 = vweird.f32 %v1667
    %vm1674 = vmor %vm1672, %vm1673
    %v1675 = vsel %vm1674, %v1667, %v1671
    %v1676 = vand.u32 2147483647, %v1666
    %vm1677 = vcmp.eq.f32.partialorder %v1676, 8.507059e+37
    %v1678 = vand.u32 %v1666, 2147483648
    %v1679 = vor.u32 1.1754944e-38, %v1678
    %v1680 = vsel %vm1677, %v1679, %v1675
    %v1681 = vmul.f32 1.0, %v1680
    %1682 = vrot.lane.b32.xlu0 %v1660, 64
    %v1683 = vpop.permute.xlu0 %1682
    %v1685 = vmul.f32 %v1658, %v1683
    %1687 = vrot.lane.b32.xlu0 %v1685, 64
    %v1688 = vpop.permute.xlu0 %1687
    %v1690 = vadd.f32 %v1554, %v1688
    %v1691 = vtanh.pop %v1690
    %v1692 = vsub.f32 1.0, %v1681
    %1694 = vrot.lane.b32.xlu0 %v1691, 96
    %v1695 = vpop.permute.xlu0 %1694
    %v1697 = vmul.f32 %v1692, %v1695
    %v1698 = vmul.f32 %v1681, 0.0
    %v1699 = vadd.f32 %v1697, %v1698
    %v1700 = vmul.f32 %v386, %v1636
    %v1701 = vadd.f32 %v1700, %v395
    %v1702 = vmul.f32 %v400, %v1699
    %v1703 = vadd.f32 %v1702, %v409
    %1705 = vrot.lane.b32.xlu0 %v1701, 96
    %v1706 = vpop.permute.xlu0 %1705
    %v1709 = vrot.slane %v1703, 4
    %1710 = vrot.lane.b32.xlu0 %v1709, 32
    %v1711 = vpop.permute.xlu0 %1710
    %v1713 = vsel %vm183, %v1706, %v1711
    %v1715 = vsel %vm127, %v1713, 0
    %1717 = vmatpush.msra.mxu0 0.0
    %1718 = vmatpush.msra.mxu0 0.0
    %1719 = vmatpush.msra.mxu0 0.0
    %1720 = vmatpush.msra.mxu0 0.0
    %1721 = vmatpush.msra.mxu0 0.0
    %1722 = vmatpush.msra.mxu0 0.0
    %1723 = vmatpush.msra.mxu0 0.0
    %1724 = vmatpush.msra.mxu0 0.0
    %1725 = vmatpush.msra.mxu0 %v1500
    %1726 = vmatpush.msra.mxu0 %v1498
    %1727 = vmatpush.msra.mxu0 %v1496
    %1728 = vmatpush.msra.mxu0 %v1494
    %1729 = vmatpush.msra.mxu0 %v1492
    %1730 = vmatpush.msra.mxu0 %v1490
    %1731 = vmatpush.msra.mxu0 %v1488
    %1732 = vmatpush.msra.mxu0 %v1486
    %1733 = vmatmul.f32.gmra.mxu0 %v1715
    %v1734 = vpop.f32.mrf.mxu0
    %v1735 = vadd.f32 %v1556, %v1734
    %1736 = vdwg.mxu0
    %1737 = vmatpush.msra.mxu0 0.0
    %1738 = vmatpush.msra.mxu0 0.0
    %1739 = vmatpush.msra.mxu0 0.0
    %1740 = vmatpush.msra.mxu0 0.0
    %1741 = vmatpush.msra.mxu0 0.0
    %1742 = vmatpush.msra.mxu0 0.0
    %1743 = vmatpush.msra.mxu0 0.0
    %1744 = vmatpush.msra.mxu0 0.0
    %1745 = vmatpush.msra.mxu0 %v1501
    %1746 = vmatpush.msra.mxu0 %v1499
    %1747 = vmatpush.msra.mxu0 %v1497
    %1748 = vmatpush.msra.mxu0 %v1495
    %1749 = vmatpush.msra.mxu0 %v1493
    %1750 = vmatpush.msra.mxu0 %v1491
    %1751 = vmatpush.msra.mxu0 %v1489
    %1752 = vmatpush.msra.mxu0 %v1487
    %1753 = vmatmul.f32.gmra.mxu0 %v1715
    %v1754 = vpop.f32.mrf.mxu0
    %v1755 = vadd.f32 %v1557, %v1754
    %1756 = vdwg.mxu0
    %v1758 = vrot.slane %v1735, 6
    %v1760 = vadd.f32 %v1528, %v1758
    %v1761 = vxor.u32 %v1760, 2147483648
    %v1762 = vmul.f32 %v1761, 1.442695
    %v1763 = vpow.pop %v1762
    %v1764 = vadd.f32 %v1763, 1.0
    %v1765 = vrcp.pop %v1764
    %v1766 = vmul.f32 %v1764, %v1765
    %v1767 = vsub.f32 1.0, %v1766
    %v1768 = vmul.f32 %v1765, %v1767
    %v1769 = vadd.f32 %v1765, %v1768
    %vm1770 = vweird.f32 %v1764
    %vm1771 = vweird.f32 %v1765
    %vm1772 = vmor %vm1770, %vm1771
    %v1773 = vsel %vm1772, %v1765, %v1769
    %v1774 = vand.u32 2147483647, %v1764
    %vm1775 = vcmp.eq.f32.partialorder %v1774, 8.507059e+37
    %v1776 = vand.u32 %v1764, 2147483648
    %v1777 = vor.u32 1.1754944e-38, %v1776
    %v1778 = vsel %vm1775, %v1777, %v1773
    %v1779 = vmul.f32 1.0, %v1778
    %1780 = vrot.lane.b32.xlu0 %v1758, 64
    %v1781 = vpop.permute.xlu0 %1780
    %v1783 = vmul.f32 %v1779, %v1781
    %1785 = vrot.lane.b32.xlu0 %v1783, 64
    %v1786 = vpop.permute.xlu0 %1785
    %v1788 = vadd.f32 %v1528, %v1786
    %v1789 = vtanh.pop %v1788
    %v1790 = vsub.f32 1.0, %v1779
    %1792 = vrot.lane.b32.xlu0 %v1789, 96
    %v1793 = vpop.permute.xlu0 %1792
    %v1795 = vmul.f32 %v1790, %v1793
    %v1796 = vrot.slane %v1713, 6
    %1797 = vrot.lane.b32.xlu0 %v1796, 32
    %v1798 = vpop.permute.xlu0 %1797
    %v1800 = vmul.f32 %v1779, %v1798
    %v1801 = vadd.f32 %v1795, %v1800
    %v1802 = vadd.f32 %v1531, %v1758
    %v1803 = vxor.u32 %v1802, 2147483648
    %v1804 = vmul.f32 %v1803, 1.442695
    %v1805 = vpow.pop %v1804
    %v1806 = vadd.f32 %v1805, 1.0
    %v1807 = vrcp.pop %v1806
    %v1808 = vmul.f32 %v1806, %v1807
    %v1809 = vsub.f32 1.0, %v1808
    %v1810 = vmul.f32 %v1807, %v1809
    %v1811 = vadd.f32 %v1807, %v1810
    %vm1812 = vweird.f32 %v1806
    %vm1813 = vweird.f32 %v1807
    %vm1814 = vmor %vm1812, %vm1813
    %v1815 = vsel %vm1814, %v1807, %v1811
    %v1816 = vand.u32 2147483647, %v1806
    %vm1817 = vcmp.eq.f32.partialorder %v1816, 8.507059e+37
    %v1818 = vand.u32 %v1806, 2147483648
    %v1819 = vor.u32 1.1754944e-38, %v1818
    %v1820 = vsel %vm1817, %v1819, %v1815
    %v1821 = vmul.f32 1.0, %v1820
    %v1823 = vrot.slane %v1755, 6
    %v1825 = vadd.f32 %v1554, %v1823
    %v1826 = vxor.u32 %v1825, 2147483648
    %v1827 = vmul.f32 %v1826, 1.442695
    %v1828 = vpow.pop %v1827
    %v1829 = vadd.f32 %v1828, 1.0
    %v1830 = vrcp.pop %v1829
    %v1831 = vmul.f32 %v1829, %v1830
    %v1832 = vsub.f32 1.0, %v1831
    %v1833 = vmul.f32 %v1830, %v1832
    %v1834 = vadd.f32 %v1830, %v1833
    %vm1835 = vweird.f32 %v1829
    %vm1836 = vweird.f32 %v1830
    %vm1837 = vmor %vm1835, %vm1836
    %v1838 = vsel %vm1837, %v1830, %v1834
    %v1839 = vand.u32 2147483647, %v1829
    %vm1840 = vcmp.eq.f32.partialorder %v1839, 8.507059e+37
    %v1841 = vand.u32 %v1829, 2147483648
    %v1842 = vor.u32 1.1754944e-38, %v1841
    %v1843 = vsel %vm1840, %v1842, %v1838
    %v1844 = vmul.f32 1.0, %v1843
    %1845 = vrot.lane.b32.xlu0 %v1823, 64
    %v1846 = vpop.permute.xlu0 %1845
    %v1848 = vmul.f32 %v1821, %v1846
    %1850 = vrot.lane.b32.xlu0 %v1848, 64
    %v1851 = vpop.permute.xlu0 %1850
    %v1853 = vadd.f32 %v1554, %v1851
    %v1854 = vtanh.pop %v1853
    %v1855 = vsub.f32 1.0, %v1844
    %1857 = vrot.lane.b32.xlu0 %v1854, 96
    %v1858 = vpop.permute.xlu0 %1857
    %v1860 = vmul.f32 %v1855, %v1858
    %1861 = vrot.lane.b32.xlu0 %v1796, 96
    %v1862 = vpop.permute.xlu0 %1861
    %v1864 = vmul.f32 %v1844, %v1862
    %v1865 = vadd.f32 %v1860, %v1864
    %v1866 = vmul.f32 %v386, %v1801
    %v1868 = vmul.f32 %v393, %v1796
    %1870 = vrot.lane.b32.xlu0 %v1868, 32
    %v1871 = vpop.permute.xlu0 %1870
    %v1873 = vadd.f32 %v1866, %v1871
    %v1874 = vmul.f32 %v400, %v1865
    %v1875 = vmul.f32 %v407, %v1862
    %v1876 = vadd.f32 %v1874, %v1875
    %1878 = vrot.lane.b32.xlu0 %v1873, 96
    %v1879 = vpop.permute.xlu0 %1878
    %1882 = vrot.lane.b32.xlu0 %v1876, 32
    %v1883 = vpop.permute.xlu0 %1882
    %v1885 = vsel %vm183, %v1879, %v1883
    %v1887 = vrot.slane %v1885, 2
    %v1888 = vsel %vm127, %v1887, 0
    %1890 = vmatpush.msra.mxu0 0.0
    %1891 = vmatpush.msra.mxu0 0.0
    %1892 = vmatpush.msra.mxu0 0.0
    %1893 = vmatpush.msra.mxu0 0.0
    %1894 = vmatpush.msra.mxu0 0.0
    %1895 = vmatpush.msra.mxu0 0.0
    %1896 = vmatpush.msra.mxu0 0.0
    %1897 = vmatpush.msra.mxu0 0.0
    %1898 = vmatpush.msra.mxu0 %v1500
    %1899 = vmatpush.msra.mxu0 %v1498
    %1900 = vmatpush.msra.mxu0 %v1496
    %1901 = vmatpush.msra.mxu0 %v1494
    %1902 = vmatpush.msra.mxu0 %v1492
    %1903 = vmatpush.msra.mxu0 %v1490
    %1904 = vmatpush.msra.mxu0 %v1488
    %1905 = vmatpush.msra.mxu0 %v1486
    %1906 = vmatmul.f32.gmra.mxu0 %v1888
    %v1907 = vpop.f32.mrf.mxu0
    %v1908 = vadd.f32 %v1556, %v1907
    %1909 = vdwg.mxu0
    %1910 = vmatpush.msra.mxu0 0.0
    %1911 = vmatpush.msra.mxu0 0.0
    %1912 = vmatpush.msra.mxu0 0.0
    %1913 = vmatpush.msra.mxu0 0.0
    %1914 = vmatpush.msra.mxu0 0.0
    %1915 = vmatpush.msra.mxu0 0.0
    %1916 = vmatpush.msra.mxu0 0.0
    %1917 = vmatpush.msra.mxu0 0.0
    %1918 = vmatpush.msra.mxu0 %v1501
    %1919 = vmatpush.msra.mxu0 %v1499
    %1920 = vmatpush.msra.mxu0 %v1497
    %1921 = vmatpush.msra.mxu0 %v1495
    %1922 = vmatpush.msra.mxu0 %v1493
    %1923 = vmatpush.msra.mxu0 %v1491
    %1924 = vmatpush.msra.mxu0 %v1489
    %1925 = vmatpush.msra.mxu0 %v1487
    %1926 = vmatmul.f32.gmra.mxu0 %v1888
    %v1927 = vpop.f32.mrf.mxu0
    %v1928 = vadd.f32 %v1557, %v1927
    %1929 = vdwg.mxu0
    %v1931 = vrot.slane %v1908, 4
    %v1933 = vadd.f32 %v1528, %v1931
    %v1934 = vxor.u32 %v1933, 2147483648
    %v1935 = vmul.f32 %v1934, 1.442695
    %v1936 = vpow.pop %v1935
    %v1937 = vadd.f32 %v1936, 1.0
    %v1938 = vrcp.pop %v1937
    %v1939 = vmul.f32 %v1937, %v1938
    %v1940 = vsub.f32 1.0, %v1939
    %v1941 = vmul.f32 %v1938, %v1940
    %v1942 = vadd.f32 %v1938, %v1941
    %vm1943 = vweird.f32 %v1937
    %vm1944 = vweird.f32 %v1938
    %vm1945 = vmor %vm1943, %vm1944
    %v1946 = vsel %vm1945, %v1938, %v1942
    %v1947 = vand.u32 2147483647, %v1937
    %vm1948 = vcmp.eq.f32.partialorder %v1947, 8.507059e+37
    %v1949 = vand.u32 %v1937, 2147483648
    %v1950 = vor.u32 1.1754944e-38, %v1949
    %v1951 = vsel %vm1948, %v1950, %v1946
    %v1952 = vmul.f32 1.0, %v1951
    %1953 = vrot.lane.b32.xlu0 %v1931, 64
    %v1954 = vpop.permute.xlu0 %1953
    %v1956 = vmul.f32 %v1952, %v1954
    %1958 = vrot.lane.b32.xlu0 %v1956, 64
    %v1959 = vpop.permute.xlu0 %1958
    %v1961 = vadd.f32 %v1528, %v1959
    %v1962 = vtanh.pop %v1961
    %v1963 = vsub.f32 1.0, %v1952
    %1965 = vrot.lane.b32.xlu0 %v1962, 96
    %v1966 = vpop.permute.xlu0 %1965
    %v1968 = vmul.f32 %v1963, %v1966
    %v1969 = vrot.slane %v1885, 6
    %1970 = vrot.lane.b32.xlu0 %v1969, 32
    %v1971 = vpop.permute.xlu0 %1970
    %v1973 = vmul.f32 %v1952, %v1971
    %v1974 = vadd.f32 %v1968, %v1973
    %v1975 = vadd.f32 %v1531, %v1908
    %v1976 = vxor.u32 %v1975, 2147483648
    %v1977 = vmul.f32 %v1976, 1.442695
    %v1978 = vpow.pop %v1977
    %v1979 = vadd.f32 %v1978, 1.0
    %v1980 = vrcp.pop %v1979
    %v1981 = vmul.f32 %v1979, %v1980
    %v1982 = vsub.f32 1.0, %v1981
    %v1983 = vmul.f32 %v1980, %v1982
    %v1984 = vadd.f32 %v1980, %v1983
    %vm1985 = vweird.f32 %v1979
    %vm1986 = vweird.f32 %v1980
    %vm1987 = vmor %vm1985, %vm1986
    %v1988 = vsel %vm1987, %v1980, %v1984
    %v1989 = vand.u32 2147483647, %v1979
    %vm1990 = vcmp.eq.f32.partialorder %v1989, 8.507059e+37
    %v1991 = vand.u32 %v1979, 2147483648
    %v1992 = vor.u32 1.1754944e-38, %v1991
    %v1993 = vsel %vm1990, %v1992, %v1988
    %v1994 = vmul.f32 1.0, %v1993
    %v1995 = vadd.f32 %v1554, %v1928
    %v1996 = vxor.u32 %v1995, 2147483648
    %v1997 = vmul.f32 %v1996, 1.442695
    %v1998 = vpow.pop %v1997
    %v1999 = vadd.f32 %v1998, 1.0
    %v2000 = vrcp.pop %v1999
    %v2001 = vmul.f32 %v1999, %v2000
    %v2002 = vsub.f32 1.0, %v2001
    %v2003 = vmul.f32 %v2000, %v2002
    %v2004 = vadd.f32 %v2000, %v2003
    %vm2005 = vweird.f32 %v1999
    %vm2006 = vweird.f32 %v2000
    %vm2007 = vmor %vm2005, %vm2006
    %v2008 = vsel %vm2007, %v2000, %v2004
    %v2009 = vand.u32 2147483647, %v1999
    %vm2010 = vcmp.eq.f32.partialorder %v2009, 8.507059e+37
    %v2011 = vand.u32 %v1999, 2147483648
    %v2012 = vor.u32 1.1754944e-38, %v2011
    %v2013 = vsel %vm2010, %v2012, %v2008
    %v2014 = vmul.f32 1.0, %v2013
    %2016 = vrot.lane.b32.xlu0 %v1928, 64
    %v2017 = vpop.permute.xlu0 %2016
    %v2019 = vmul.f32 %v1994, %v2017
    %2021 = vrot.lane.b32.xlu0 %v2019, 64
    %v2022 = vpop.permute.xlu0 %2021
    %v2024 = vadd.f32 %v1554, %v2022
    %v2025 = vtanh.pop %v2024
    %v2026 = vsub.f32 1.0, %v2014
    %2028 = vrot.lane.b32.xlu0 %v2025, 96
    %v2029 = vpop.permute.xlu0 %2028
    %v2031 = vmul.f32 %v2026, %v2029
    %2032 = vrot.lane.b32.xlu0 %v1887, 96
    %v2033 = vpop.permute.xlu0 %2032
    %v2035 = vmul.f32 %v2014, %v2033
    %v2036 = vadd.f32 %v2031, %v2035
    %v2037 = vmul.f32 %v386, %v1974
    %v2039 = vmul.f32 %v393, %v1969
    %2041 = vrot.lane.b32.xlu0 %v2039, 32
    %v2042 = vpop.permute.xlu0 %2041
    %v2044 = vadd.f32 %v2037, %v2042
    %v2045 = vmul.f32 %v400, %v2036
    %v2046 = vmul.f32 %v407, %v2033
    %v2047 = vadd.f32 %v2045, %v2046
    %2049 = vrot.lane.b32.xlu0 %v2044, 96
    %v2050 = vpop.permute.xlu0 %2049
    %v2053 = vrot.slane %v2047, 4
    %2054 = vrot.lane.b32.xlu0 %v2053, 32
    %v2055 = vpop.permute.xlu0 %2054
    %v2057 = vsel %vm183, %v2050, %v2055
    %v2059 = vrot.slane %v2057, 4
    %v2060 = vsel %vm127, %v2059, 0
    %2062 = vmatpush.msra.mxu0 0.0
    %2063 = vmatpush.msra.mxu0 0.0
    %2064 = vmatpush.msra.mxu0 0.0
    %2065 = vmatpush.msra.mxu0 0.0
    %2066 = vmatpush.msra.mxu0 0.0
    %2067 = vmatpush.msra.mxu0 0.0
    %2068 = vmatpush.msra.mxu0 0.0
    %2069 = vmatpush.msra.mxu0 0.0
    %2070 = vmatpush.msra.mxu0 %v1500
    %2071 = vmatpush.msra.mxu0 %v1498
    %2072 = vmatpush.msra.mxu0 %v1496
    %2073 = vmatpush.msra.mxu0 %v1494
    %2074 = vmatpush.msra.mxu0 %v1492
    %2075 = vmatpush.msra.mxu0 %v1490
    %2076 = vmatpush.msra.mxu0 %v1488
    %2077 = vmatpush.msra.mxu0 %v1486
    %2078 = vmatmul.f32.gmra.mxu0 %v2060
    %v2079 = vpop.f32.mrf.mxu0
    %v2080 = vadd.f32 %v1556, %v2079
    %2081 = vdwg.mxu0
    %2082 = vmatpush.msra.mxu0 0.0
    %2083 = vmatpush.msra.mxu0 0.0
    %2084 = vmatpush.msra.mxu0 0.0
    %2085 = vmatpush.msra.mxu0 0.0
    %2086 = vmatpush.msra.mxu0 0.0
    %2087 = vmatpush.msra.mxu0 0.0
    %2088 = vmatpush.msra.mxu0 0.0
    %2089 = vmatpush.msra.mxu0 0.0
    %2090 = vmatpush.msra.mxu0 %v1501
    %2091 = vmatpush.msra.mxu0 %v1499
    %2092 = vmatpush.msra.mxu0 %v1497
    %2093 = vmatpush.msra.mxu0 %v1495
    %2094 = vmatpush.msra.mxu0 %v1493
    %2095 = vmatpush.msra.mxu0 %v1491
    %2096 = vmatpush.msra.mxu0 %v1489
    %2097 = vmatpush.msra.mxu0 %v1487
    %2098 = vmatmul.f32.gmra.mxu0 %v2060
    %v2099 = vpop.f32.mrf.mxu0
    %v2100 = vadd.f32 %v1557, %v2099
    %2101 = vdwg.mxu0
    %v2103 = vrot.slane %v2080, 2
    %v2105 = vadd.f32 %v1528, %v2103
    %v2106 = vxor.u32 %v2105, 2147483648
    %v2107 = vmul.f32 %v2106, 1.442695
    %v2108 = vpow.pop %v2107
    %v2109 = vadd.f32 %v2108, 1.0
    %v2110 = vrcp.pop %v2109
    %v2111 = vmul.f32 %v2109, %v2110
    %v2112 = vsub.f32 1.0, %v2111
    %v2113 = vmul.f32 %v2110, %v2112
    %v2114 = vadd.f32 %v2110, %v2113
    %vm2115 = vweird.f32 %v2109
    %vm2116 = vweird.f32 %v2110
    %vm2117 = vmor %vm2115, %vm2116
    %v2118 = vsel %vm2117, %v2110, %v2114
    %v2119 = vand.u32 2147483647, %v2109
    %vm2120 = vcmp.eq.f32.partialorder %v2119, 8.507059e+37
    %v2121 = vand.u32 %v2109, 2147483648
    %v2122 = vor.u32 1.1754944e-38, %v2121
    %v2123 = vsel %vm2120, %v2122, %v2118
    %v2124 = vmul.f32 1.0, %v2123
    %2125 = vrot.lane.b32.xlu0 %v2103, 64
    %v2126 = vpop.permute.xlu0 %2125
    %v2128 = vmul.f32 %v2124, %v2126
    %2130 = vrot.lane.b32.xlu0 %v2128, 64
    %v2131 = vpop.permute.xlu0 %2130
    %v2133 = vadd.f32 %v1528, %v2131
    %v2134 = vtanh.pop %v2133
    %v2135 = vsub.f32 1.0, %v2124
    %2137 = vrot.lane.b32.xlu0 %v2134, 96
    %v2138 = vpop.permute.xlu0 %2137
    %v2140 = vmul.f32 %v2135, %v2138
    %v2141 = vrot.slane %v2057, 6
    %2142 = vrot.lane.b32.xlu0 %v2141, 32
    %v2143 = vpop.permute.xlu0 %2142
    %v2145 = vmul.f32 %v2124, %v2143
    %v2146 = vadd.f32 %v2140, %v2145
    %v2148 = vrot.slane %v2100, 2
    %v2150 = vadd.f32 %v1551, %v2148
    %v2151 = vxor.u32 %v2150, 2147483648
    %v2152 = vmul.f32 %v2151, 1.442695
    %v2153 = vpow.pop %v2152
    %v2154 = vadd.f32 %v2153, 1.0
    %v2155 = vrcp.pop %v2154
    %v2156 = vmul.f32 %v2154, %v2155
    %v2157 = vsub.f32 1.0, %v2156
    %v2158 = vmul.f32 %v2155, %v2157
    %v2159 = vadd.f32 %v2155, %v2158
    %vm2160 = vweird.f32 %v2154
    %vm2161 = vweird.f32 %v2155
    %vm2162 = vmor %vm2160, %vm2161
    %v2163 = vsel %vm2162, %v2155, %v2159
    %v2164 = vand.u32 2147483647, %v2154
    %vm2165 = vcmp.eq.f32.partialorder %v2164, 8.507059e+37
    %v2166 = vand.u32 %v2154, 2147483648
    %v2167 = vor.u32 1.1754944e-38, %v2166
    %v2168 = vsel %vm2165, %v2167, %v2163
    %v2169 = vmul.f32 1.0, %v2168
    %2170 = vrot.lane.b32.xlu0 %v2148, 64
    %v2171 = vpop.permute.xlu0 %2170
    %v2173 = vmul.f32 %v2124, %v2171
    %2175 = vrot.lane.b32.xlu0 %v2173, 64
    %v2176 = vpop.permute.xlu0 %2175
    %v2178 = vadd.f32 %v1551, %v2176
    %v2179 = vtanh.pop %v2178
    %v2180 = vsub.f32 1.0, %v2169
    %2182 = vrot.lane.b32.xlu0 %v2179, 96
    %v2183 = vpop.permute.xlu0 %2182
    %v2185 = vmul.f32 %v2180, %v2183
    %2186 = vrot.lane.b32.xlu0 %v2141, 96
    %v2187 = vpop.permute.xlu0 %2186
    %v2189 = vmul.f32 %v2169, %v2187
    %v2190 = vadd.f32 %v2185, %v2189
    %v2191 = vmul.f32 %v386, %v2146
    %v2193 = vmul.f32 %v393, %v2141
    %2195 = vrot.lane.b32.xlu0 %v2193, 32
    %v2196 = vpop.permute.xlu0 %2195
    %v2198 = vadd.f32 %v2191, %v2196
    %v2199 = vmul.f32 %v386, %v2190
    %v2200 = vmul.f32 %v393, %v2187
    %v2201 = vadd.f32 %v2199, %v2200
    %2203 = vrot.lane.b32.xlu0 %v2198, 96
    %v2204 = vpop.permute.xlu0 %2203
    %2207 = vrot.lane.b32.xlu0 %v2201, 32
    %v2208 = vpop.permute.xlu0 %2207
    %v2210 = vsel %vm183, %v2204, %v2208
    %v2212 = vrot.slane %v2210, 6
    %v2213 = vsel %vm127, %v2212, 0
    %2215 = vmatpush.msra.mxu0 0.0
    %2216 = vmatpush.msra.mxu0 0.0
    %2217 = vmatpush.msra.mxu0 0.0
    %2218 = vmatpush.msra.mxu0 0.0
    %2219 = vmatpush.msra.mxu0 0.0
    %2220 = vmatpush.msra.mxu0 0.0
    %2221 = vmatpush.msra.mxu0 0.0
    %2222 = vmatpush.msra.mxu0 0.0
    %2223 = vmatpush.msra.mxu0 %v1500
    %2224 = vmatpush.msra.mxu0 %v1498
    %2225 = vmatpush.msra.mxu0 %v1496
    %2226 = vmatpush.msra.mxu0 %v1494
    %2227 = vmatpush.msra.mxu0 %v1492
    %2228 = vmatpush.msra.mxu0 %v1490
    %2229 = vmatpush.msra.mxu0 %v1488
    %2230 = vmatpush.msra.mxu0 %v1486
    %2231 = vmatmul.f32.gmra.mxu0 %v2213
    %v2232 = vpop.f32.mrf.mxu0
    %v2233 = vadd.f32 %v1556, %v2232
    %2234 = vdwg.mxu0
    %2235 = vmatpush.msra.mxu0 0.0
    %2236 = vmatpush.msra.mxu0 0.0
    %2237 = vmatpush.msra.mxu0 0.0
    %2238 = vmatpush.msra.mxu0 0.0
    %2239 = vmatpush.msra.mxu0 0.0
    %2240 = vmatpush.msra.mxu0 0.0
    %2241 = vmatpush.msra.mxu0 0.0
    %2242 = vmatpush.msra.mxu0 0.0
    %2243 = vmatpush.msra.mxu0 %v1501
    %2244 = vmatpush.msra.mxu0 %v1499
    %2245 = vmatpush.msra.mxu0 %v1497
    %2246 = vmatpush.msra.mxu0 %v1495
    %2247 = vmatpush.msra.mxu0 %v1493
    %2248 = vmatpush.msra.mxu0 %v1491
    %2249 = vmatpush.msra.mxu0 %v1489
    %2250 = vmatpush.msra.mxu0 %v1487
    %2251 = vmatmul.f32.gmra.mxu0 %v2213
    %v2252 = vpop.f32.mrf.mxu0
    %v2253 = vadd.f32 %v1557, %v2252
    %2254 = vdwg.mxu0
    %v2255 = vadd.f32 %v1531, %v2233
    %v2256 = vxor.u32 %v2255, 2147483648
    %v2257 = vmul.f32 %v2256, 1.442695
    %v2258 = vpow.pop %v2257
    %v2259 = vadd.f32 %v2258, 1.0
    %v2260 = vrcp.pop %v2259
    %v2261 = vmul.f32 %v2259, %v2260
    %v2262 = vsub.f32 1.0, %v2261
    %v2263 = vmul.f32 %v2260, %v2262
    %v2264 = vadd.f32 %v2260, %v2263
    %vm2265 = vweird.f32 %v2259
    %vm2266 = vweird.f32 %v2260
    %vm2267 = vmor %vm2265, %vm2266
    %v2268 = vsel %vm2267, %v2260, %v2264
    %v2269 = vand.u32 2147483647, %v2259
    %vm2270 = vcmp.eq.f32.partialorder %v2269, 8.507059e+37
    %v2271 = vand.u32 %v2259, 2147483648
    %v2272 = vor.u32 1.1754944e-38, %v2271
    %v2273 = vsel %vm2270, %v2272, %v2268
    %v2274 = vmul.f32 1.0, %v2273
    %2276 = vrot.lane.b32.xlu0 %v2233, 64
    %v2277 = vpop.permute.xlu0 %2276
    %v2279 = vmul.f32 %v2274, %v2277
    %2281 = vrot.lane.b32.xlu0 %v2279, 64
    %v2282 = vpop.permute.xlu0 %2281
    %v2284 = vadd.f32 %v1531, %v2282
    %v2285 = vtanh.pop %v2284
    %v2286 = vsub.f32 1.0, %v2274
    %2288 = vrot.lane.b32.xlu0 %v2285, 96
    %v2289 = vpop.permute.xlu0 %2288
    %v2291 = vmul.f32 %v2286, %v2289
    %2292 = vrot.lane.b32.xlu0 %v2212, 32
    %v2293 = vpop.permute.xlu0 %2292
    %v2295 = vmul.f32 %v2274, %v2293
    %v2296 = vadd.f32 %v2291, %v2295
    %v2297 = vrot.slane %v2233, 4
    %v2299 = vadd.f32 %v1528, %v2297
    %v2300 = vxor.u32 %v2299, 2147483648
    %v2301 = vmul.f32 %v2300, 1.442695
    %v2302 = vpow.pop %v2301
    %v2303 = vadd.f32 %v2302, 1.0
    %v2304 = vrcp.pop %v2303
    %v2305 = vmul.f32 %v2303, %v2304
    %v2306 = vsub.f32 1.0, %v2305
    %v2307 = vmul.f32 %v2304, %v2306
    %v2308 = vadd.f32 %v2304, %v2307
    %vm2309 = vweird.f32 %v2303
    %vm2310 = vweird.f32 %v2304
    %vm2311 = vmor %vm2309, %vm2310
    %v2312 = vsel %vm2311, %v2304, %v2308
    %v2313 = vand.u32 2147483647, %v2303
    %vm2314 = vcmp.eq.f32.partialorder %v2313, 8.507059e+37
    %v2315 = vand.u32 %v2303, 2147483648
    %v2316 = vor.u32 1.1754944e-38, %v2315
    %v2317 = vsel %vm2314, %v2316, %v2312
    %v2318 = vmul.f32 1.0, %v2317
    %v2320 = vrot.slane %v2253, 4
    %v2322 = vadd.f32 %v1551, %v2320
    %v2323 = vxor.u32 %v2322, 2147483648
    %v2324 = vmul.f32 %v2323, 1.442695
    %v2325 = vpow.pop %v2324
    %v2326 = vadd.f32 %v2325, 1.0
    %v2327 = vrcp.pop %v2326
    %v2328 = vmul.f32 %v2326, %v2327
    %v2329 = vsub.f32 1.0, %v2328
    %v2330 = vmul.f32 %v2327, %v2329
    %v2331 = vadd.f32 %v2327, %v2330
    %vm2332 = vweird.f32 %v2326
    %vm2333 = vweird.f32 %v2327
    %vm2334 = vmor %vm2332, %vm2333
    %v2335 = vsel %vm2334, %v2327, %v2331
    %v2336 = vand.u32 2147483647, %v2326
    %vm2337 = vcmp.eq.f32.partialorder %v2336, 8.507059e+37
    %v2338 = vand.u32 %v2326, 2147483648
    %v2339 = vor.u32 1.1754944e-38, %v2338
    %v2340 = vsel %vm2337, %v2339, %v2335
    %v2341 = vmul.f32 1.0, %v2340
    %2342 = vrot.lane.b32.xlu0 %v2320, 64
    %v2343 = vpop.permute.xlu0 %2342
    %v2345 = vmul.f32 %v2318, %v2343
    %2347 = vrot.lane.b32.xlu0 %v2345, 64
    %v2348 = vpop.permute.xlu0 %2347
    %v2350 = vadd.f32 %v1551, %v2348
    %v2351 = vtanh.pop %v2350
    %v2352 = vsub.f32 1.0, %v2341
    %2354 = vrot.lane.b32.xlu0 %v2351, 96
    %v2355 = vpop.permute.xlu0 %2354
    %v2357 = vmul.f32 %v2352, %v2355
    %v2358 = vrot.slane %v2210, 2
    %2359 = vrot.lane.b32.xlu0 %v2358, 96
    %v2360 = vpop.permute.xlu0 %2359
    %v2362 = vmul.f32 %v2341, %v2360
    %v2363 = vadd.f32 %v2357, %v2362
    %v2364 = vmul.f32 %v400, %v2296
    %v2366 = vmul.f32 %v407, %v2212
    %2368 = vrot.lane.b32.xlu0 %v2366, 32
    %v2369 = vpop.permute.xlu0 %2368
    %v2371 = vadd.f32 %v2364, %v2369
    %v2372 = vmul.f32 %v386, %v2363
    %v2373 = vmul.f32 %v393, %v2360
    %v2374 = vadd.f32 %v2372, %v2373
    %2376 = vrot.lane.b32.xlu0 %v2371, 96
    %v2377 = vpop.permute.xlu0 %2376
    %v2380 = vrot.slane %v2374, 4
    %2381 = vrot.lane.b32.xlu0 %v2380, 32
    %v2382 = vpop.permute.xlu0 %2381
    %v2384 = vsel %vm183, %v2377, %v2382
    %v2386 = vsel %vm127, %v2384, 0
    %2388 = vmatpush.msra.mxu0 0.0
    %2389 = vmatpush.msra.mxu0 0.0
    %2390 = vmatpush.msra.mxu0 0.0
    %2391 = vmatpush.msra.mxu0 0.0
    %2392 = vmatpush.msra.mxu0 0.0
    %2393 = vmatpush.msra.mxu0 0.0
    %2394 = vmatpush.msra.mxu0 0.0
    %2395 = vmatpush.msra.mxu0 0.0
    %2396 = vmatpush.msra.mxu0 %v1500
    %2397 = vmatpush.msra.mxu0 %v1498
    %2398 = vmatpush.msra.mxu0 %v1496
    %2399 = vmatpush.msra.mxu0 %v1494
    %2400 = vmatpush.msra.mxu0 %v1492
    %2401 = vmatpush.msra.mxu0 %v1490
    %2402 = vmatpush.msra.mxu0 %v1488
    %2403 = vmatpush.msra.mxu0 %v1486
    %2404 = vmatmul.f32.gmra.mxu0 %v2386
    %v2405 = vpop.f32.mrf.mxu0
    %v2406 = vadd.f32 %v1556, %v2405
    %2407 = vdwg.mxu0
    %2408 = vmatpush.msra.mxu0 0.0
    %2409 = vmatpush.msra.mxu0 0.0
    %2410 = vmatpush.msra.mxu0 0.0
    %2411 = vmatpush.msra.mxu0 0.0
    %2412 = vmatpush.msra.mxu0 0.0
    %2413 = vmatpush.msra.mxu0 0.0
    %2414 = vmatpush.msra.mxu0 0.0
    %2415 = vmatpush.msra.mxu0 0.0
    %2416 = vmatpush.msra.mxu0 %v1501
    %2417 = vmatpush.msra.mxu0 %v1499
    %2418 = vmatpush.msra.mxu0 %v1497
    %2419 = vmatpush.msra.mxu0 %v1495
    %2420 = vmatpush.msra.mxu0 %v1493
    %2421 = vmatpush.msra.mxu0 %v1491
    %2422 = vmatpush.msra.mxu0 %v1489
    %2423 = vmatpush.msra.mxu0 %v1487
    %2424 = vmatmul.f32.gmra.mxu0 %v2386
    %v2425 = vpop.f32.mrf.mxu0
    %v2426 = vadd.f32 %v1557, %v2425
    %2427 = vdwg.mxu0
    %v2429 = vrot.slane %v2406, 6
    %v2431 = vadd.f32 %v1531, %v2429
    %v2432 = vxor.u32 %v2431, 2147483648
    %v2433 = vmul.f32 %v2432, 1.442695
    %v2434 = vpow.pop %v2433
    %v2435 = vadd.f32 %v2434, 1.0
    %v2436 = vrcp.pop %v2435
    %v2437 = vmul.f32 %v2435, %v2436
    %v2438 = vsub.f32 1.0, %v2437
    %v2439 = vmul.f32 %v2436, %v2438
    %v2440 = vadd.f32 %v2436, %v2439
    %vm2441 = vweird.f32 %v2435
    %vm2442 = vweird.f32 %v2436
    %vm2443 = vmor %vm2441, %vm2442
    %v2444 = vsel %vm2443, %v2436, %v2440
    %v2445 = vand.u32 2147483647, %v2435
    %vm2446 = vcmp.eq.f32.partialorder %v2445, 8.507059e+37
    %v2447 = vand.u32 %v2435, 2147483648
    %v2448 = vor.u32 1.1754944e-38, %v2447
    %v2449 = vsel %vm2446, %v2448, %v2444
    %v2450 = vmul.f32 1.0, %v2449
    %2451 = vrot.lane.b32.xlu0 %v2429, 64
    %v2452 = vpop.permute.xlu0 %2451
    %v2454 = vmul.f32 %v2450, %v2452
    %2456 = vrot.lane.b32.xlu0 %v2454, 64
    %v2457 = vpop.permute.xlu0 %2456
    %v2459 = vadd.f32 %v1531, %v2457
    %v2460 = vtanh.pop %v2459
    %v2461 = vsub.f32 1.0, %v2450
    %2463 = vrot.lane.b32.xlu0 %v2460, 96
    %v2464 = vpop.permute.xlu0 %2463
    %v2466 = vmul.f32 %v2461, %v2464
    %v2467 = vrot.slane %v2384, 6
    %2468 = vrot.lane.b32.xlu0 %v2467, 32
    %v2469 = vpop.permute.xlu0 %2468
    %v2471 = vmul.f32 %v2450, %v2469
    %v2472 = vadd.f32 %v2466, %v2471
    %v2473 = vadd.f32 %v1528, %v2429
    %v2474 = vxor.u32 %v2473, 2147483648
    %v2475 = vmul.f32 %v2474, 1.442695
    %v2476 = vpow.pop %v2475
    %v2477 = vadd.f32 %v2476, 1.0
    %v2478 = vrcp.pop %v2477
    %v2479 = vmul.f32 %v2477, %v2478
    %v2480 = vsub.f32 1.0, %v2479
    %v2481 = vmul.f32 %v2478, %v2480
    %v2482 = vadd.f32 %v2478, %v2481
    %vm2483 = vweird.f32 %v2477
    %vm2484 = vweird.f32 %v2478
    %vm2485 = vmor %vm2483, %vm2484
    %v2486 = vsel %vm2485, %v2478, %v2482
    %v2487 = vand.u32 2147483647, %v2477
    %vm2488 = vcmp.eq.f32.partialorder %v2487, 8.507059e+37
    %v2489 = vand.u32 %v2477, 2147483648
    %v2490 = vor.u32 1.1754944e-38, %v2489
    %v2491 = vsel %vm2488, %v2490, %v2486
    %v2492 = vmul.f32 1.0, %v2491
    %v2494 = vrot.slane %v2426, 6
    %v2496 = vadd.f32 %v1551, %v2494
    %v2497 = vxor.u32 %v2496, 2147483648
    %v2498 = vmul.f32 %v2497, 1.442695
    %v2499 = vpow.pop %v2498
    %v2500 = vadd.f32 %v2499, 1.0
    %v2501 = vrcp.pop %v2500
    %v2502 = vmul.f32 %v2500, %v2501
    %v2503 = vsub.f32 1.0, %v2502
    %v2504 = vmul.f32 %v2501, %v2503
    %v2505 = vadd.f32 %v2501, %v2504
    %vm2506 = vweird.f32 %v2500
    %vm2507 = vweird.f32 %v2501
    %vm2508 = vmor %vm2506, %vm2507
    %v2509 = vsel %vm2508, %v2501, %v2505
    %v2510 = vand.u32 2147483647, %v2500
    %vm2511 = vcmp.eq.f32.partialorder %v2510, 8.507059e+37
    %v2512 = vand.u32 %v2500, 2147483648
    %v2513 = vor.u32 1.1754944e-38, %v2512
    %v2514 = vsel %vm2511, %v2513, %v2509
    %v2515 = vmul.f32 1.0, %v2514
    %2516 = vrot.lane.b32.xlu0 %v2494, 64
    %v2517 = vpop.permute.xlu0 %2516
    %v2519 = vmul.f32 %v2492, %v2517
    %2521 = vrot.lane.b32.xlu0 %v2519, 64
    %v2522 = vpop.permute.xlu0 %2521
    %v2524 = vadd.f32 %v1551, %v2522
    %v2525 = vtanh.pop %v2524
    %v2526 = vsub.f32 1.0, %v2515
    %2528 = vrot.lane.b32.xlu0 %v2525, 96
    %v2529 = vpop.permute.xlu0 %2528
    %v2531 = vmul.f32 %v2526, %v2529
    %2532 = vrot.lane.b32.xlu0 %v2467, 96
    %v2533 = vpop.permute.xlu0 %2532
    %v2535 = vmul.f32 %v2515, %v2533
    %v2536 = vadd.f32 %v2531, %v2535
    %v2537 = vmul.f32 %v400, %v2472
    %v2539 = vmul.f32 %v407, %v2467
    %2541 = vrot.lane.b32.xlu0 %v2539, 32
    %v2542 = vpop.permute.xlu0 %2541
    %v2544 = vadd.f32 %v2537, %v2542
    %v2545 = vmul.f32 %v386, %v2536
    %v2546 = vmul.f32 %v393, %v2533
    %v2547 = vadd.f32 %v2545, %v2546
    %2549 = vrot.lane.b32.xlu0 %v2544, 96
    %v2550 = vpop.permute.xlu0 %2549
    %2553 = vrot.lane.b32.xlu0 %v2547, 32
    %v2554 = vpop.permute.xlu0 %2553
    %v2556 = vsel %vm183, %v2550, %v2554
    %v2558 = vrot.slane %v2556, 2
    %v2559 = vsel %vm127, %v2558, 0
    %2561 = vmatpush.msra.mxu0 0.0
    %2562 = vmatpush.msra.mxu0 0.0
    %2563 = vmatpush.msra.mxu0 0.0
    %2564 = vmatpush.msra.mxu0 0.0
    %2565 = vmatpush.msra.mxu0 0.0
    %2566 = vmatpush.msra.mxu0 0.0
    %2567 = vmatpush.msra.mxu0 0.0
    %2568 = vmatpush.msra.mxu0 0.0
    %2569 = vmatpush.msra.mxu0 %v1500
    %2570 = vmatpush.msra.mxu0 %v1498
    %2571 = vmatpush.msra.mxu0 %v1496
    %2572 = vmatpush.msra.mxu0 %v1494
    %2573 = vmatpush.msra.mxu0 %v1492
    %2574 = vmatpush.msra.mxu0 %v1490
    %2575 = vmatpush.msra.mxu0 %v1488
    %2576 = vmatpush.msra.mxu0 %v1486
    %2577 = vmatmul.f32.gmra.mxu0 %v2559
    %v2578 = vpop.f32.mrf.mxu0
    %v2579 = vadd.f32 %v1556, %v2578
    %2580 = vdwg.mxu0
    %2581 = vmatpush.msra.mxu0 0.0
    %2582 = vmatpush.msra.mxu0 0.0
    %2583 = vmatpush.msra.mxu0 0.0
    %2584 = vmatpush.msra.mxu0 0.0
    %2585 = vmatpush.msra.mxu0 0.0
    %2586 = vmatpush.msra.mxu0 0.0
    %2587 = vmatpush.msra.mxu0 0.0
    %2588 = vmatpush.msra.mxu0 0.0
    %2589 = vmatpush.msra.mxu0 %v1501
    %2590 = vmatpush.msra.mxu0 %v1499
    %2591 = vmatpush.msra.mxu0 %v1497
    %2592 = vmatpush.msra.mxu0 %v1495
    %2593 = vmatpush.msra.mxu0 %v1493
    %2594 = vmatpush.msra.mxu0 %v1491
    %2595 = vmatpush.msra.mxu0 %v1489
    %2596 = vmatpush.msra.mxu0 %v1487
    %2597 = vmatmul.f32.gmra.mxu0 %v2559
    %v2598 = vpop.f32.mrf.mxu0
    %v2599 = vadd.f32 %v1557, %v2598
    %2600 = vdwg.mxu0
    %v2602 = vrot.slane %v2579, 4
    %v2604 = vadd.f32 %v1531, %v2602
    %v2605 = vxor.u32 %v2604, 2147483648
    %v2606 = vmul.f32 %v2605, 1.442695
    %v2607 = vpow.pop %v2606
    %v2608 = vadd.f32 %v2607, 1.0
    %v2609 = vrcp.pop %v2608
    %v2610 = vmul.f32 %v2608, %v2609
    %v2611 = vsub.f32 1.0, %v2610
    %v2612 = vmul.f32 %v2609, %v2611
    %v2613 = vadd.f32 %v2609, %v2612
    %vm2614 = vweird.f32 %v2608
    %vm2615 = vweird.f32 %v2609
    %vm2616 = vmor %vm2614, %vm2615
    %v2617 = vsel %vm2616, %v2609, %v2613
    %v2618 = vand.u32 2147483647, %v2608
    %vm2619 = vcmp.eq.f32.partialorder %v2618, 8.507059e+37
    %v2620 = vand.u32 %v2608, 2147483648
    %v2621 = vor.u32 1.1754944e-38, %v2620
    %v2622 = vsel %vm2619, %v2621, %v2617
    %v2623 = vmul.f32 1.0, %v2622
    %2624 = vrot.lane.b32.xlu0 %v2602, 64
    %v2625 = vpop.permute.xlu0 %2624
    %v2627 = vmul.f32 %v2623, %v2625
    %2629 = vrot.lane.b32.xlu0 %v2627, 64
    %v2630 = vpop.permute.xlu0 %2629
    %v2632 = vadd.f32 %v1531, %v2630
    %v2633 = vtanh.pop %v2632
    %v2634 = vsub.f32 1.0, %v2623
    %2636 = vrot.lane.b32.xlu0 %v2633, 96
    %v2637 = vpop.permute.xlu0 %2636
    %v2639 = vmul.f32 %v2634, %v2637
    %v2640 = vrot.slane %v2556, 6
    %2641 = vrot.lane.b32.xlu0 %v2640, 32
    %v2642 = vpop.permute.xlu0 %2641
    %v2644 = vmul.f32 %v2623, %v2642
    %v2645 = vadd.f32 %v2639, %v2644
    %v2646 = vadd.f32 %v1528, %v2579
    %v2647 = vxor.u32 %v2646, 2147483648
    %v2648 = vmul.f32 %v2647, 1.442695
    %v2649 = vpow.pop %v2648
    %v2650 = vadd.f32 %v2649, 1.0
    %v2651 = vrcp.pop %v2650
    %v2652 = vmul.f32 %v2650, %v2651
    %v2653 = vsub.f32 1.0, %v2652
    %v2654 = vmul.f32 %v2651, %v2653
    %v2655 = vadd.f32 %v2651, %v2654
    %vm2656 = vweird.f32 %v2650
    %vm2657 = vweird.f32 %v2651
    %vm2658 = vmor %vm2656, %vm2657
    %v2659 = vsel %vm2658, %v2651, %v2655
    %v2660 = vand.u32 2147483647, %v2650
    %vm2661 = vcmp.eq.f32.partialorder %v2660, 8.507059e+37
    %v2662 = vand.u32 %v2650, 2147483648
    %v2663 = vor.u32 1.1754944e-38, %v2662
    %v2664 = vsel %vm2661, %v2663, %v2659
    %v2665 = vmul.f32 1.0, %v2664
    %v2666 = vadd.f32 %v1551, %v2599
    %v2667 = vxor.u32 %v2666, 2147483648
    %v2668 = vmul.f32 %v2667, 1.442695
    %v2669 = vpow.pop %v2668
    %v2670 = vadd.f32 %v2669, 1.0
    %v2671 = vrcp.pop %v2670
    %v2672 = vmul.f32 %v2670, %v2671
    %v2673 = vsub.f32 1.0, %v2672
    %v2674 = vmul.f32 %v2671, %v2673
    %v2675 = vadd.f32 %v2671, %v2674
    %vm2676 = vweird.f32 %v2670
    %vm2677 = vweird.f32 %v2671
    %vm2678 = vmor %vm2676, %vm2677
    %v2679 = vsel %vm2678, %v2671, %v2675
    %v2680 = vand.u32 2147483647, %v2670
    %vm2681 = vcmp.eq.f32.partialorder %v2680, 8.507059e+37
    %v2682 = vand.u32 %v2670, 2147483648
    %v2683 = vor.u32 1.1754944e-38, %v2682
    %v2684 = vsel %vm2681, %v2683, %v2679
    %v2685 = vmul.f32 1.0, %v2684
    %2687 = vrot.lane.b32.xlu0 %v2599, 64
    %v2688 = vpop.permute.xlu0 %2687
    %v2690 = vmul.f32 %v2665, %v2688
    %2692 = vrot.lane.b32.xlu0 %v2690, 64
    %v2693 = vpop.permute.xlu0 %2692
    %v2695 = vadd.f32 %v1551, %v2693
    %v2696 = vtanh.pop %v2695
    %v2697 = vsub.f32 1.0, %v2685
    %2699 = vrot.lane.b32.xlu0 %v2696, 96
    %v2700 = vpop.permute.xlu0 %2699
    %v2702 = vmul.f32 %v2697, %v2700
    %2703 = vrot.lane.b32.xlu0 %v2558, 96
    %v2704 = vpop.permute.xlu0 %2703
    %v2706 = vmul.f32 %v2685, %v2704
    %v2707 = vadd.f32 %v2702, %v2706
    %v2708 = vmul.f32 %v400, %v2645
    %v2710 = vmul.f32 %v407, %v2640
    %2712 = vrot.lane.b32.xlu0 %v2710, 32
    %v2713 = vpop.permute.xlu0 %2712
    %v2715 = vadd.f32 %v2708, %v2713
    %v2716 = vmul.f32 %v386, %v2707
    %v2717 = vmul.f32 %v393, %v2704
    %v2718 = vadd.f32 %v2716, %v2717
    %2720 = vrot.lane.b32.xlu0 %v2715, 96
    %v2721 = vpop.permute.xlu0 %2720
    %v2724 = vrot.slane %v2718, 4
    %2725 = vrot.lane.b32.xlu0 %v2724, 32
    %v2726 = vpop.permute.xlu0 %2725
    %v2728 = vsel %vm183, %v2721, %v2726
    %v2729 = vld [vmem:[#allocation10] sm:$0xff]
    %v2730 = vld [vmem:[#allocation10 + $0x8] sm:$0xff]
    %v2731 = vld [vmem:[#allocation10 + $0x10] sm:$0xff]
    %v2732 = vld [vmem:[#allocation10 + $0x18] sm:$0xff]
    %v2733 = vld [vmem:[#allocation10 + $0x20] sm:$0xff]
    %v2734 = vld [vmem:[#allocation10 + $0x28] sm:$0xff]
    %v2735 = vld [vmem:[#allocation10 + $0x30] sm:$0xff]
    %v2736 = vld [vmem:[#allocation10 + $0x38] sm:$0xff]
    %v2737 = vld [vmem:[#allocation10 + $0x40] sm:$0xff]
    %v2738 = vld [vmem:[#allocation10 + $0x48] sm:$0xff]
    %v2739 = vld [vmem:[#allocation10 + $0x50] sm:$0xff]
    %v2740 = vld [vmem:[#allocation10 + $0x58] sm:$0xff]
    %v2741 = vld [vmem:[#allocation10 + $0x60] sm:$0xff]
    %v2742 = vld [vmem:[#allocation10 + $0x68] sm:$0xff]
    %v2743 = vld [vmem:[#allocation10 + $0x70] sm:$0xff]
    %v2744 = vld [vmem:[#allocation10 + $0x78] sm:$0xff]
    %v2745 = vld [vmem:[#allocation10 + $0x80] sm:$0xff]
    %v2746 = vld [vmem:[#allocation10 + $0x88] sm:$0xff]
    %v2747 = vld [vmem:[#allocation10 + $0x90] sm:$0xff]
    %v2748 = vld [vmem:[#allocation10 + $0x98] sm:$0xff]
    %v2749 = vperm.slane %v117, 6
    %v2751 = vrot.slane %v2728, 4
    %v2752 = vsel %vm127, %v2751, 0
    %2754 = vmatpush.msra.mxu0 0.0
    %2755 = vmatpush.msra.mxu0 0.0
    %2756 = vmatpush.msra.mxu0 0.0
    %2757 = vmatpush.msra.mxu0 0.0
    %2758 = vmatpush.msra.mxu0 0.0
    %2759 = vmatpush.msra.mxu0 0.0
    %2760 = vmatpush.msra.mxu0 0.0
    %2761 = vmatpush.msra.mxu0 0.0
    %2762 = vmatpush.msra.mxu0 %v2736
    %2763 = vmatpush.msra.mxu0 %v2735
    %2764 = vmatpush.msra.mxu0 %v2734
    %2765 = vmatpush.msra.mxu0 %v2733
    %2766 = vmatpush.msra.mxu0 %v2732
    %2767 = vmatpush.msra.mxu0 %v2731
    %2768 = vmatpush.msra.mxu0 %v2730
    %2769 = vmatpush.msra.mxu0 %v2729
    %2770 = vmatmul.f32.gmra.mxu0 %v2752
    %v2771 = vpop.f32.mrf.mxu0
    %v2772 = vadd.f32 %v2749, %v2771
    %2773 = vdwg.mxu0
    %v2774 = vmax.f32 %v2772, 0.0
    %vm2775 = vcmp.ne.f32.partialorder %v2772, %v2772
    %v2776 = vadd.f32 %v2772, 0.0
    %v2777 = vand.u32 2147483647, %v2772
    %v2778 = vsub.f32 0.0, %v2777
    %v2779 = vmul.f32 %v2778, 1.442695
    %v2780 = vpow.pop %v2779
    %v2781 = vadd.f32 %v2780, 1.0
    %v2782 = vlog2.pop %v2781
    %v2783 = vmul.f32 %v2782, 0.6931472
    %v2784 = vmul.f32 -0.5, %v2780
    %v2785 = vadd.f32 %v2784, 1.0
    %v2786 = vmul.f32 %v2785, %v2780
    %v2787 = vand.u32 2147483647, %v2780
    %vm2788 = vcmp.lt.f32.partialorder %v2787, 0.0004427343
    %v2789 = vsel %vm2788, %v2786, %v2783
    %v2790 = vadd.f32 %v2774, %v2789
    %v2791 = vsel %vm2775, %v2776, %v2790
    %v2792 = vld [vmem:[%s6] sm:$0x3]
    %2794 = vrot.lane.b32.xlu0 %v2792, 32
    %v2795 = vpop.permute.xlu0 %2794
    %v2797 = vmul.f32 %v2791, %v2795
    %2799 = vrot.lane.b32.xlu0 %v2797, 96
    %v2800 = vpop.permute.xlu0 %2799
    %v2802 = vadd.f32 %v2772, %v2800
    %2803 = vst.msk [vmem:[#allocation12] sm:$0x3] %vm421, %v2772
    %2805 = vrot.lane.b32.xlu0 %v2791, 96
    %v2806 = vpop.permute.xlu0 %2805
    %2808 = vst.msk [vmem:[#allocation13] sm:$0x3] %vm421, %v2806
    %s2809 = scalar_lea.vmem [#allocation4], 64
    %v2810 = vld [vmem:[%s2809] sm:$0xff]
    %v2811 = vld [vmem:[%s2809 + $0x8] sm:$0xff]
    %v2812 = vld [vmem:[%s2809 + $0x10] sm:$0xff]
    %v2813 = vld [vmem:[%s2809 + $0x18] sm:$0xff]
    %v2814 = vld [vmem:[%s2809 + $0x20] sm:$0xff]
    %v2815 = vld [vmem:[%s2809 + $0x28] sm:$0xff]
    %v2816 = vld [vmem:[%s2809 + $0x30] sm:$0xff]
    %v2817 = vld [vmem:[%s2809 + $0x38] sm:$0xff]
    %2818 = vmatpush.msra.mxu0 0.0
    %2819 = vmatpush.msra.mxu0 0.0
    %2820 = vmatpush.msra.mxu0 0.0
    %2821 = vmatpush.msra.mxu0 0.0
    %2822 = vmatpush.msra.mxu0 0.0
    %2823 = vmatpush.msra.mxu0 0.0
    %2824 = vmatpush.msra.mxu0 0.0
    %2825 = vmatpush.msra.mxu0 0.0
    %2826 = vmatpush.msra.mxu0 %v2817
    %2827 = vmatpush.msra.mxu0 %v2816
    %2828 = vmatpush.msra.mxu0 %v2815
    %2829 = vmatpush.msra.mxu0 %v2814
    %2830 = vmatpush.msra.mxu0 %v2813
    %2831 = vmatpush.msra.mxu0 %v2812
    %2832 = vmatpush.msra.mxu0 %v2811
    %2833 = vmatpush.msra.mxu0 %v2810
    %2834 = vmatmul.f32.gmra.mxu0 %v129
    %v2835 = vpop.f32.mrf.mxu0
    %v2836 = vadd.f32 0.0, %v2835
    %2837 = vmatmul.f32.gmra.mxu0 %v132
    %v2838 = vpop.f32.mrf.mxu0
    %v2839 = vadd.f32 0.0, %v2838
    %2840 = vdwg.mxu0
    %v2841 = vld [vmem:[#allocation9] sm:$0xff]
    %v2842 = vld [vmem:[#allocation9 + $0x10] sm:$0xff]
    %v2843 = vld [vmem:[#allocation9 + $0x20] sm:$0xff]
    %v2844 = vld [vmem:[#allocation9 + $0x30] sm:$0xff]
    %v2845 = vld [vmem:[#allocation9 + $0x40] sm:$0xff]
    %v2846 = vld [vmem:[#allocation9 + $0x50] sm:$0xff]
    %v2847 = vld [vmem:[#allocation9 + $0x60] sm:$0xff]
    %v2848 = vld [vmem:[#allocation9 + $0x70] sm:$0xff]
    %s2849 = scalar_lea.vmem [#allocation9], 128
    %v2850 = vld [vmem:[%s2849] sm:$0xff]
    %v2851 = vld [vmem:[%s2849 + $0x8] sm:$0xff]
    %v2852 = vld [vmem:[%s2849 + $0x10] sm:$0xff]
    %v2853 = vld [vmem:[%s2849 + $0x18] sm:$0xff]
    %v2854 = vld [vmem:[%s2849 + $0x20] sm:$0xff]
    %v2855 = vld [vmem:[%s2849 + $0x28] sm:$0xff]
    %v2856 = vld [vmem:[%s2849 + $0x30] sm:$0xff]
    %v2857 = vld [vmem:[%s2849 + $0x38] sm:$0xff]
    %v2858 = vld [vmem:[%s2849 + $0x40] sm:$0xff]
    %v2859 = vld [vmem:[%s2849 + $0x48] sm:$0xff]
    %v2860 = vld [vmem:[%s2849 + $0x50] sm:$0xff]
    %v2861 = vld [vmem:[%s2849 + $0x58] sm:$0xff]
    %v2862 = vld [vmem:[%s2849 + $0x60] sm:$0xff]
    %v2863 = vld [vmem:[%s2849 + $0x68] sm:$0xff]
    %v2864 = vld [vmem:[%s2849 + $0x70] sm:$0xff]
    %v2865 = vld [vmem:[%s2849 + $0x78] sm:$0xff]
    %v2866 = vperm.slane %v117, 4
    %v2868 = vsel %vm183, %v2836, 0
    %v2871 = vsel %vm183, %v2839, 0
    %2873 = vmatpush.msra.mxu0 0.0
    %2874 = vmatpush.msra.mxu0 0.0
    %2875 = vmatpush.msra.mxu0 0.0
    %2876 = vmatpush.msra.mxu0 0.0
    %2877 = vmatpush.msra.mxu0 0.0
    %2878 = vmatpush.msra.mxu0 0.0
    %2879 = vmatpush.msra.mxu0 0.0
    %2880 = vmatpush.msra.mxu0 0.0
    %2881 = vmatpush.msra.mxu0 0.0
    %2882 = vmatpush.msra.mxu0 0.0
    %2883 = vmatpush.msra.mxu0 0.0
    %2884 = vmatpush.msra.mxu0 0.0
    %2885 = vmatpush.msra.mxu0 %v2844
    %2886 = vmatpush.msra.mxu0 %v2843
    %2887 = vmatpush.msra.mxu0 %v2842
    %2888 = vmatpush.msra.mxu0 %v2841
    %2889 = vmatmul.f32.gmra.mxu0 %v2868
    %v2890 = vpop.f32.mrf.mxu0
    %v2891 = vadd.f32 %v2866, %v2890
    %2892 = vmatmul.f32.gmra.mxu0 %v2871
    %v2893 = vpop.f32.mrf.mxu0
    %v2894 = vadd.f32 %v2866, %v2893
    %2895 = vdwg.mxu0
    %v2896 = vperm.slane %v118, 4
    %2899 = vrot.lane.b32.xlu0 %v2866, 32
    %v2900 = vpop.permute.xlu0 %2899
    %2901 = vrot.lane.b32.xlu0 %v2896, 32
    %v2902 = vpop.permute.xlu0 %2901
    %v2903 = vsel %vm183, %v2900, %v2902
    %v2906 = vsel %vm183, %v2802, 0
    %2908 = vmatpush.msra.mxu0 0.0
    %2909 = vmatpush.msra.mxu0 0.0
    %2910 = vmatpush.msra.mxu0 0.0
    %2911 = vmatpush.msra.mxu0 0.0
    %2912 = vmatpush.msra.mxu0 0.0
    %2913 = vmatpush.msra.mxu0 0.0
    %2914 = vmatpush.msra.mxu0 0.0
    %2915 = vmatpush.msra.mxu0 0.0
    %2916 = vmatpush.msra.mxu0 0.0
    %2917 = vmatpush.msra.mxu0 0.0
    %2918 = vmatpush.msra.mxu0 0.0
    %2919 = vmatpush.msra.mxu0 0.0
    %2920 = vmatpush.msra.mxu0 %v2848
    %2921 = vmatpush.msra.mxu0 %v2847
    %2922 = vmatpush.msra.mxu0 %v2846
    %2923 = vmatpush.msra.mxu0 %v2845
    %2924 = vmatmul.f32.gmra.mxu0 %v2906
    %v2925 = vpop.f32.mrf.mxu0
    %v2926 = vadd.f32 %v2903, %v2925
    %2927 = vdwg.mxu0
    %v2928 = vadd.f32 %v2891, %v2926
    %v2929 = vxor.u32 %v2928, 2147483648
    %v2930 = vmul.f32 %v2929, 1.442695
    %v2931 = vpow.pop %v2930
    %v2932 = vadd.f32 %v2931, 1.0
    %v2933 = vrcp.pop %v2932
    %v2934 = vmul.f32 %v2932, %v2933
    %v2935 = vsub.f32 1.0, %v2934
    %v2936 = vmul.f32 %v2933, %v2935
    %v2937 = vadd.f32 %v2933, %v2936
    %vm2938 = vweird.f32 %v2932
    %vm2939 = vweird.f32 %v2933
    %vm2940 = vmor %vm2938, %vm2939
    %v2941 = vsel %vm2940, %v2933, %v2937
    %v2942 = vand.u32 2147483647, %v2932
    %vm2943 = vcmp.eq.f32.partialorder %v2942, 8.507059e+37
    %v2944 = vand.u32 %v2932, 2147483648
    %v2945 = vor.u32 1.1754944e-38, %v2944
    %v2946 = vsel %vm2943, %v2945, %v2941
    %v2947 = vmul.f32 1.0, %v2946
    %2949 = vrot.lane.b32.xlu0 %v2926, 64
    %v2950 = vpop.permute.xlu0 %2949
    %v2952 = vmul.f32 %v2947, %v2950
    %2954 = vrot.lane.b32.xlu0 %v2952, 64
    %v2955 = vpop.permute.xlu0 %2954
    %v2957 = vadd.f32 %v2891, %v2955
    %v2958 = vtanh.pop %v2957
    %v2959 = vsub.f32 1.0, %v2947
    %2961 = vrot.lane.b32.xlu0 %v2958, 96
    %v2962 = vpop.permute.xlu0 %2961
    %v2964 = vmul.f32 %v2959, %v2962
    %2965 = vrot.lane.b32.xlu0 %v2802, 32
    %v2966 = vpop.permute.xlu0 %2965
    %v2968 = vmul.f32 %v2947, %v2966
    %v2969 = vadd.f32 %v2964, %v2968
    %2971 = vrot.lane.b32.xlu0 %v2969, 96
    %v2972 = vpop.permute.xlu0 %2971
    %v2974 = vsel %vm183, %v2972, %v2966
    %v2975 = vperm.slane %v117, 5
    %v2976 = vperm.slane %v118, 5
    %v2978 = vsel %vm127, %v2974, 0
    %2980 = vmatpush.msra.mxu0 0.0
    %2981 = vmatpush.msra.mxu0 0.0
    %2982 = vmatpush.msra.mxu0 0.0
    %2983 = vmatpush.msra.mxu0 0.0
    %2984 = vmatpush.msra.mxu0 0.0
    %2985 = vmatpush.msra.mxu0 0.0
    %2986 = vmatpush.msra.mxu0 0.0
    %2987 = vmatpush.msra.mxu0 0.0
    %2988 = vmatpush.msra.mxu0 %v2864
    %2989 = vmatpush.msra.mxu0 %v2862
    %2990 = vmatpush.msra.mxu0 %v2860
    %2991 = vmatpush.msra.mxu0 %v2858
    %2992 = vmatpush.msra.mxu0 %v2856
    %2993 = vmatpush.msra.mxu0 %v2854
    %2994 = vmatpush.msra.mxu0 %v2852
    %2995 = vmatpush.msra.mxu0 %v2850
    %2996 = vmatmul.f32.gmra.mxu0 %v2978
    %v2997 = vpop.f32.mrf.mxu0
    %v2998 = vadd.f32 %v2975, %v2997
    %2999 = vdwg.mxu0
    %3000 = vmatpush.msra.mxu0 0.0
    %3001 = vmatpush.msra.mxu0 0.0
    %3002 = vmatpush.msra.mxu0 0.0
    %3003 = vmatpush.msra.mxu0 0.0
    %3004 = vmatpush.msra.mxu0 0.0
    %3005 = vmatpush.msra.mxu0 0.0
    %3006 = vmatpush.msra.mxu0 0.0
    %3007 = vmatpush.msra.mxu0 0.0
    %3008 = vmatpush.msra.mxu0 %v2865
    %3009 = vmatpush.msra.mxu0 %v2863
    %3010 = vmatpush.msra.mxu0 %v2861
    %3011 = vmatpush.msra.mxu0 %v2859
    %3012 = vmatpush.msra.mxu0 %v2857
    %3013 = vmatpush.msra.mxu0 %v2855
    %3014 = vmatpush.msra.mxu0 %v2853
    %3015 = vmatpush.msra.mxu0 %v2851
    %3016 = vmatmul.f32.gmra.mxu0 %v2978
    %v3017 = vpop.f32.mrf.mxu0
    %v3018 = vadd.f32 %v2976, %v3017
    %3019 = vdwg.mxu0
    %3021 = vrot.lane.b32.xlu0 %v2998, 32
    %v3022 = vpop.permute.xlu0 %3021
    %v3024 = vadd.f32 %v2998, %v3022
    %v3025 = vxor.u32 %v3024, 2147483648
    %v3026 = vmul.f32 %v3025, 1.442695
    %v3027 = vpow.pop %v3026
    %v3028 = vadd.f32 %v3027, 1.0
    %v3029 = vrcp.pop %v3028
    %v3030 = vmul.f32 %v3028, %v3029
    %v3031 = vsub.f32 1.0, %v3030
    %v3032 = vmul.f32 %v3029, %v3031
    %v3033 = vadd.f32 %v3029, %v3032
    %vm3034 = vweird.f32 %v3028
    %vm3035 = vweird.f32 %v3029
    %vm3036 = vmor %vm3034, %vm3035
    %v3037 = vsel %vm3036, %v3029, %v3033
    %v3038 = vand.u32 2147483647, %v3028
    %vm3039 = vcmp.eq.f32.partialorder %v3038, 8.507059e+37
    %v3040 = vand.u32 %v3028, 2147483648
    %v3041 = vor.u32 1.1754944e-38, %v3040
    %v3042 = vsel %vm3039, %v3041, %v3037
    %v3043 = vmul.f32 1.0, %v3042
    %3045 = vrot.lane.b32.xlu0 %v3018, 32
    %v3046 = vpop.permute.xlu0 %3045
    %v3048 = vadd.f32 %v2998, %v3046
    %v3049 = vxor.u32 %v3048, 2147483648
    %v3050 = vmul.f32 %v3049, 1.442695
    %v3051 = vpow.pop %v3050
    %v3052 = vadd.f32 %v3051, 1.0
    %v3053 = vrcp.pop %v3052
    %v3054 = vmul.f32 %v3052, %v3053
    %v3055 = vsub.f32 1.0, %v3054
    %v3056 = vmul.f32 %v3053, %v3055
    %v3057 = vadd.f32 %v3053, %v3056
    %vm3058 = vweird.f32 %v3052
    %vm3059 = vweird.f32 %v3053
    %vm3060 = vmor %vm3058, %vm3059
    %v3061 = vsel %vm3060, %v3053, %v3057
    %v3062 = vand.u32 2147483647, %v3052
    %vm3063 = vcmp.eq.f32.partialorder %v3062, 8.507059e+37
    %v3064 = vand.u32 %v3052, 2147483648
    %v3065 = vor.u32 1.1754944e-38, %v3064
    %v3066 = vsel %vm3063, %v3065, %v3061
    %v3067 = vmul.f32 1.0, %v3066
    %3068 = vrot.lane.b32.xlu0 %v3018, 96
    %v3069 = vpop.permute.xlu0 %3068
    %v3071 = vmul.f32 %v3043, %v3069
    %3073 = vrot.lane.b32.xlu0 %v3071, 64
    %v3074 = vpop.permute.xlu0 %3073
    %v3076 = vadd.f32 %v2998, %v3074
    %v3077 = vtanh.pop %v3076
    %v3078 = vsub.f32 1.0, %v3067
    %3080 = vrot.lane.b32.xlu0 %v3077, 96
    %v3081 = vpop.permute.xlu0 %3080
    %v3083 = vmul.f32 %v3078, %v3081
    %v3084 = vmul.f32 %v3067, %v2966
    %v3085 = vadd.f32 %v3083, %v3084
    %3087 = vrot.lane.b32.xlu0 %v3085, 96
    %v3088 = vpop.permute.xlu0 %3087
    %3090 = vst.msk [vmem:[#allocation3] sm:$0x3] %vm421, %v3088
    %v3091 = vadd.f32 %v3085, 0.0
    %v3092 = vsel %vm183, %v2972, 0
    %3094 = vmatpush.msra.mxu0 0.0
    %3095 = vmatpush.msra.mxu0 0.0
    %3096 = vmatpush.msra.mxu0 0.0
    %3097 = vmatpush.msra.mxu0 0.0
    %3098 = vmatpush.msra.mxu0 0.0
    %3099 = vmatpush.msra.mxu0 0.0
    %3100 = vmatpush.msra.mxu0 0.0
    %3101 = vmatpush.msra.mxu0 0.0
    %3102 = vmatpush.msra.mxu0 0.0
    %3103 = vmatpush.msra.mxu0 0.0
    %3104 = vmatpush.msra.mxu0 0.0
    %3105 = vmatpush.msra.mxu0 0.0
    %3106 = vmatpush.msra.mxu0 %v2848
    %3107 = vmatpush.msra.mxu0 %v2847
    %3108 = vmatpush.msra.mxu0 %v2846
    %3109 = vmatpush.msra.mxu0 %v2845
    %3110 = vmatmul.f32.gmra.mxu0 %v3092
    %v3111 = vpop.f32.mrf.mxu0
    %v3112 = vadd.f32 %v2903, %v3111
    %3113 = vdwg.mxu0
    %v3115 = vrot.slane %v3112, 6
    %v3117 = vadd.f32 %v2891, %v3115
    %v3118 = vxor.u32 %v3117, 2147483648
    %v3119 = vmul.f32 %v3118, 1.442695
    %v3120 = vpow.pop %v3119
    %v3121 = vadd.f32 %v3120, 1.0
    %v3122 = vrcp.pop %v3121
    %v3123 = vmul.f32 %v3121, %v3122
    %v3124 = vsub.f32 1.0, %v3123
    %v3125 = vmul.f32 %v3122, %v3124
    %v3126 = vadd.f32 %v3122, %v3125
    %vm3127 = vweird.f32 %v3121
    %vm3128 = vweird.f32 %v3122
    %vm3129 = vmor %vm3127, %vm3128
    %v3130 = vsel %vm3129, %v3122, %v3126
    %v3131 = vand.u32 2147483647, %v3121
    %vm3132 = vcmp.eq.f32.partialorder %v3131, 8.507059e+37
    %v3133 = vand.u32 %v3121, 2147483648
    %v3134 = vor.u32 1.1754944e-38, %v3133
    %v3135 = vsel %vm3132, %v3134, %v3130
    %v3136 = vmul.f32 1.0, %v3135
    %3137 = vrot.lane.b32.xlu0 %v3115, 64
    %v3138 = vpop.permute.xlu0 %3137
    %v3140 = vmul.f32 %v3136, %v3138
    %3142 = vrot.lane.b32.xlu0 %v3140, 64
    %v3143 = vpop.permute.xlu0 %3142
    %v3145 = vadd.f32 %v2891, %v3143
    %v3146 = vtanh.pop %v3145
    %v3147 = vsub.f32 1.0, %v3136
    %3149 = vrot.lane.b32.xlu0 %v3146, 96
    %v3150 = vpop.permute.xlu0 %3149
    %v3152 = vmul.f32 %v3147, %v3150
    %v3153 = vrot.slane %v2969, 6
    %v3155 = vmul.f32 %v3136, %v3153
    %v3156 = vadd.f32 %v3152, %v3155
    %3158 = vrot.lane.b32.xlu0 %v3156, 96
    %v3159 = vpop.permute.xlu0 %3158
    %v3161 = vrot.slane %v3085, 6
    %v3163 = vsel %vm183, %v3159, %v3161
    %v3165 = vrot.slane %v3163, 2
    %v3166 = vsel %vm127, %v3165, 0
    %3168 = vmatpush.msra.mxu0 0.0
    %3169 = vmatpush.msra.mxu0 0.0
    %3170 = vmatpush.msra.mxu0 0.0
    %3171 = vmatpush.msra.mxu0 0.0
    %3172 = vmatpush.msra.mxu0 0.0
    %3173 = vmatpush.msra.mxu0 0.0
    %3174 = vmatpush.msra.mxu0 0.0
    %3175 = vmatpush.msra.mxu0 0.0
    %3176 = vmatpush.msra.mxu0 %v2864
    %3177 = vmatpush.msra.mxu0 %v2862
    %3178 = vmatpush.msra.mxu0 %v2860
    %3179 = vmatpush.msra.mxu0 %v2858
    %3180 = vmatpush.msra.mxu0 %v2856
    %3181 = vmatpush.msra.mxu0 %v2854
    %3182 = vmatpush.msra.mxu0 %v2852
    %3183 = vmatpush.msra.mxu0 %v2850
    %3184 = vmatmul.f32.gmra.mxu0 %v3166
    %v3185 = vpop.f32.mrf.mxu0
    %v3186 = vadd.f32 %v2975, %v3185
    %3187 = vdwg.mxu0
    %3188 = vmatpush.msra.mxu0 0.0
    %3189 = vmatpush.msra.mxu0 0.0
    %3190 = vmatpush.msra.mxu0 0.0
    %3191 = vmatpush.msra.mxu0 0.0
    %3192 = vmatpush.msra.mxu0 0.0
    %3193 = vmatpush.msra.mxu0 0.0
    %3194 = vmatpush.msra.mxu0 0.0
    %3195 = vmatpush.msra.mxu0 0.0
    %3196 = vmatpush.msra.mxu0 %v2865
    %3197 = vmatpush.msra.mxu0 %v2863
    %3198 = vmatpush.msra.mxu0 %v2861
    %3199 = vmatpush.msra.mxu0 %v2859
    %3200 = vmatpush.msra.mxu0 %v2857
    %3201 = vmatpush.msra.mxu0 %v2855
    %3202 = vmatpush.msra.mxu0 %v2853
    %3203 = vmatpush.msra.mxu0 %v2851
    %3204 = vmatmul.f32.gmra.mxu0 %v3166
    %v3205 = vpop.f32.mrf.mxu0
    %v3206 = vadd.f32 %v2976, %v3205
    %3207 = vdwg.mxu0
    %3209 = vrot.lane.b32.xlu0 %v3186, 32
    %v3210 = vpop.permute.xlu0 %3209
    %v3212 = vadd.f32 %v3186, %v3210
    %v3213 = vxor.u32 %v3212, 2147483648
    %v3214 = vmul.f32 %v3213, 1.442695
    %v3215 = vpow.pop %v3214
    %v3216 = vadd.f32 %v3215, 1.0
    %v3217 = vrcp.pop %v3216
    %v3218 = vmul.f32 %v3216, %v3217
    %v3219 = vsub.f32 1.0, %v3218
    %v3220 = vmul.f32 %v3217, %v3219
    %v3221 = vadd.f32 %v3217, %v3220
    %vm3222 = vweird.f32 %v3216
    %vm3223 = vweird.f32 %v3217
    %vm3224 = vmor %vm3222, %vm3223
    %v3225 = vsel %vm3224, %v3217, %v3221
    %v3226 = vand.u32 2147483647, %v3216
    %vm3227 = vcmp.eq.f32.partialorder %v3226, 8.507059e+37
    %v3228 = vand.u32 %v3216, 2147483648
    %v3229 = vor.u32 1.1754944e-38, %v3228
    %v3230 = vsel %vm3227, %v3229, %v3225
    %v3231 = vmul.f32 1.0, %v3230
    %3233 = vrot.lane.b32.xlu0 %v3206, 32
    %v3234 = vpop.permute.xlu0 %3233
    %v3236 = vadd.f32 %v3186, %v3234
    %v3237 = vxor.u32 %v3236, 2147483648
    %v3238 = vmul.f32 %v3237, 1.442695
    %v3239 = vpow.pop %v3238
    %v3240 = vadd.f32 %v3239, 1.0
    %v3241 = vrcp.pop %v3240
    %v3242 = vmul.f32 %v3240, %v3241
    %v3243 = vsub.f32 1.0, %v3242
    %v3244 = vmul.f32 %v3241, %v3243
    %v3245 = vadd.f32 %v3241, %v3244
    %vm3246 = vweird.f32 %v3240
    %vm3247 = vweird.f32 %v3241
    %vm3248 = vmor %vm3246, %vm3247
    %v3249 = vsel %vm3248, %v3241, %v3245
    %v3250 = vand.u32 2147483647, %v3240
    %vm3251 = vcmp.eq.f32.partialorder %v3250, 8.507059e+37
    %v3252 = vand.u32 %v3240, 2147483648
    %v3253 = vor.u32 1.1754944e-38, %v3252
    %v3254 = vsel %vm3251, %v3253, %v3249
    %v3255 = vmul.f32 1.0, %v3254
    %3256 = vrot.lane.b32.xlu0 %v3206, 96
    %v3257 = vpop.permute.xlu0 %3256
    %v3259 = vmul.f32 %v3231, %v3257
    %3261 = vrot.lane.b32.xlu0 %v3259, 64
    %v3262 = vpop.permute.xlu0 %3261
    %v3264 = vadd.f32 %v3186, %v3262
    %v3265 = vtanh.pop %v3264
    %v3266 = vsub.f32 1.0, %v3255
    %3268 = vrot.lane.b32.xlu0 %v3265, 96
    %v3269 = vpop.permute.xlu0 %3268
    %v3271 = vmul.f32 %v3266, %v3269
    %v3272 = vmul.f32 %v3255, %v3085
    %v3273 = vadd.f32 %v3271, %v3272
    %3275 = vrot.lane.b32.xlu0 %v3273, 96
    %v3276 = vpop.permute.xlu0 %3275
    %3278 = vst.msk [vmem:[#allocation3 + $0x2] sm:$0x3] %vm421, %v3276
    %v3279 = vadd.f32 %v3091, %v3273
    %v3280 = vrot.slane %v3156, 2
    %3281 = vrot.lane.b32.xlu0 %v3280, 96
    %v3282 = vpop.permute.xlu0 %3281
    %v3283 = vsel %vm183, %v3282, 0
    %3285 = vmatpush.msra.mxu0 0.0
    %3286 = vmatpush.msra.mxu0 0.0
    %3287 = vmatpush.msra.mxu0 0.0
    %3288 = vmatpush.msra.mxu0 0.0
    %3289 = vmatpush.msra.mxu0 0.0
    %3290 = vmatpush.msra.mxu0 0.0
    %3291 = vmatpush.msra.mxu0 0.0
    %3292 = vmatpush.msra.mxu0 0.0
    %3293 = vmatpush.msra.mxu0 0.0
    %3294 = vmatpush.msra.mxu0 0.0
    %3295 = vmatpush.msra.mxu0 0.0
    %3296 = vmatpush.msra.mxu0 0.0
    %3297 = vmatpush.msra.mxu0 %v2848
    %3298 = vmatpush.msra.mxu0 %v2847
    %3299 = vmatpush.msra.mxu0 %v2846
    %3300 = vmatpush.msra.mxu0 %v2845
    %3301 = vmatmul.f32.gmra.mxu0 %v3283
    %v3302 = vpop.f32.mrf.mxu0
    %v3303 = vadd.f32 %v2903, %v3302
    %3304 = vdwg.mxu0
    %v3306 = vrot.slane %v3303, 4
    %v3308 = vadd.f32 %v2891, %v3306
    %v3309 = vxor.u32 %v3308, 2147483648
    %v3310 = vmul.f32 %v3309, 1.442695
    %v3311 = vpow.pop %v3310
    %v3312 = vadd.f32 %v3311, 1.0
    %v3313 = vrcp.pop %v3312
    %v3314 = vmul.f32 %v3312, %v3313
    %v3315 = vsub.f32 1.0, %v3314
    %v3316 = vmul.f32 %v3313, %v3315
    %v3317 = vadd.f32 %v3313, %v3316
    %vm3318 = vweird.f32 %v3312
    %vm3319 = vweird.f32 %v3313
    %vm3320 = vmor %vm3318, %vm3319
    %v3321 = vsel %vm3320, %v3313, %v3317
    %v3322 = vand.u32 2147483647, %v3312
    %vm3323 = vcmp.eq.f32.partialorder %v3322, 8.507059e+37
    %v3324 = vand.u32 %v3312, 2147483648
    %v3325 = vor.u32 1.1754944e-38, %v3324
    %v3326 = vsel %vm3323, %v3325, %v3321
    %v3327 = vmul.f32 1.0, %v3326
    %3328 = vrot.lane.b32.xlu0 %v3306, 64
    %v3329 = vpop.permute.xlu0 %3328
    %v3331 = vmul.f32 %v3327, %v3329
    %3333 = vrot.lane.b32.xlu0 %v3331, 64
    %v3334 = vpop.permute.xlu0 %3333
    %v3336 = vadd.f32 %v2891, %v3334
    %v3337 = vtanh.pop %v3336
    %v3338 = vsub.f32 1.0, %v3327
    %3340 = vrot.lane.b32.xlu0 %v3337, 96
    %v3341 = vpop.permute.xlu0 %3340
    %v3343 = vmul.f32 %v3338, %v3341
    %v3344 = vrot.slane %v3156, 6
    %v3346 = vmul.f32 %v3327, %v3344
    %v3347 = vadd.f32 %v3343, %v3346
    %3349 = vrot.lane.b32.xlu0 %v3347, 96
    %v3350 = vpop.permute.xlu0 %3349
    %v3352 = vrot.slane %v3273, 4
    %v3354 = vsel %vm183, %v3350, %v3352
    %v3356 = vrot.slane %v3354, 4
    %v3357 = vsel %vm127, %v3356, 0
    %3359 = vmatpush.msra.mxu0 0.0
    %3360 = vmatpush.msra.mxu0 0.0
    %3361 = vmatpush.msra.mxu0 0.0
    %3362 = vmatpush.msra.mxu0 0.0
    %3363 = vmatpush.msra.mxu0 0.0
    %3364 = vmatpush.msra.mxu0 0.0
    %3365 = vmatpush.msra.mxu0 0.0
    %3366 = vmatpush.msra.mxu0 0.0
    %3367 = vmatpush.msra.mxu0 %v2864
    %3368 = vmatpush.msra.mxu0 %v2862
    %3369 = vmatpush.msra.mxu0 %v2860
    %3370 = vmatpush.msra.mxu0 %v2858
    %3371 = vmatpush.msra.mxu0 %v2856
    %3372 = vmatpush.msra.mxu0 %v2854
    %3373 = vmatpush.msra.mxu0 %v2852
    %3374 = vmatpush.msra.mxu0 %v2850
    %3375 = vmatmul.f32.gmra.mxu0 %v3357
    %v3376 = vpop.f32.mrf.mxu0
    %v3377 = vadd.f32 %v2975, %v3376
    %3378 = vdwg.mxu0
    %3379 = vmatpush.msra.mxu0 0.0
    %3380 = vmatpush.msra.mxu0 0.0
    %3381 = vmatpush.msra.mxu0 0.0
    %3382 = vmatpush.msra.mxu0 0.0
    %3383 = vmatpush.msra.mxu0 0.0
    %3384 = vmatpush.msra.mxu0 0.0
    %3385 = vmatpush.msra.mxu0 0.0
    %3386 = vmatpush.msra.mxu0 0.0
    %3387 = vmatpush.msra.mxu0 %v2865
    %3388 = vmatpush.msra.mxu0 %v2863
    %3389 = vmatpush.msra.mxu0 %v2861
    %3390 = vmatpush.msra.mxu0 %v2859
    %3391 = vmatpush.msra.mxu0 %v2857
    %3392 = vmatpush.msra.mxu0 %v2855
    %3393 = vmatpush.msra.mxu0 %v2853
    %3394 = vmatpush.msra.mxu0 %v2851
    %3395 = vmatmul.f32.gmra.mxu0 %v3357
    %v3396 = vpop.f32.mrf.mxu0
    %v3397 = vadd.f32 %v2976, %v3396
    %3398 = vdwg.mxu0
    %3400 = vrot.lane.b32.xlu0 %v3377, 32
    %v3401 = vpop.permute.xlu0 %3400
    %v3403 = vadd.f32 %v3377, %v3401
    %v3404 = vxor.u32 %v3403, 2147483648
    %v3405 = vmul.f32 %v3404, 1.442695
    %v3406 = vpow.pop %v3405
    %v3407 = vadd.f32 %v3406, 1.0
    %v3408 = vrcp.pop %v3407
    %v3409 = vmul.f32 %v3407, %v3408
    %v3410 = vsub.f32 1.0, %v3409
    %v3411 = vmul.f32 %v3408, %v3410
    %v3412 = vadd.f32 %v3408, %v3411
    %vm3413 = vweird.f32 %v3407
    %vm3414 = vweird.f32 %v3408
    %vm3415 = vmor %vm3413, %vm3414
    %v3416 = vsel %vm3415, %v3408, %v3412
    %v3417 = vand.u32 2147483647, %v3407
    %vm3418 = vcmp.eq.f32.partialorder %v3417, 8.507059e+37
    %v3419 = vand.u32 %v3407, 2147483648
    %v3420 = vor.u32 1.1754944e-38, %v3419
    %v3421 = vsel %vm3418, %v3420, %v3416
    %v3422 = vmul.f32 1.0, %v3421
    %3424 = vrot.lane.b32.xlu0 %v3397, 32
    %v3425 = vpop.permute.xlu0 %3424
    %v3427 = vadd.f32 %v3377, %v3425
    %v3428 = vxor.u32 %v3427, 2147483648
    %v3429 = vmul.f32 %v3428, 1.442695
    %v3430 = vpow.pop %v3429
    %v3431 = vadd.f32 %v3430, 1.0
    %v3432 = vrcp.pop %v3431
    %v3433 = vmul.f32 %v3431, %v3432
    %v3434 = vsub.f32 1.0, %v3433
    %v3435 = vmul.f32 %v3432, %v3434
    %v3436 = vadd.f32 %v3432, %v3435
    %vm3437 = vweird.f32 %v3431
    %vm3438 = vweird.f32 %v3432
    %vm3439 = vmor %vm3437, %vm3438
    %v3440 = vsel %vm3439, %v3432, %v3436
    %v3441 = vand.u32 2147483647, %v3431
    %vm3442 = vcmp.eq.f32.partialorder %v3441, 8.507059e+37
    %v3443 = vand.u32 %v3431, 2147483648
    %v3444 = vor.u32 1.1754944e-38, %v3443
    %v3445 = vsel %vm3442, %v3444, %v3440
    %v3446 = vmul.f32 1.0, %v3445
    %3447 = vrot.lane.b32.xlu0 %v3397, 96
    %v3448 = vpop.permute.xlu0 %3447
    %v3450 = vmul.f32 %v3422, %v3448
    %3452 = vrot.lane.b32.xlu0 %v3450, 64
    %v3453 = vpop.permute.xlu0 %3452
    %v3455 = vadd.f32 %v3377, %v3453
    %v3456 = vtanh.pop %v3455
    %v3457 = vsub.f32 1.0, %v3446
    %3459 = vrot.lane.b32.xlu0 %v3456, 96
    %v3460 = vpop.permute.xlu0 %3459
    %v3462 = vmul.f32 %v3457, %v3460
    %v3463 = vmul.f32 %v3446, %v3273
    %v3464 = vadd.f32 %v3462, %v3463
    %3466 = vrot.lane.b32.xlu0 %v3464, 96
    %v3467 = vpop.permute.xlu0 %3466
    %3469 = vst.msk [vmem:[#allocation3 + $0x4] sm:$0x3] %vm421, %v3467
    %v3470 = vadd.f32 %v3279, %v3464
    %v3471 = vrot.slane %v3347, 4
    %3472 = vrot.lane.b32.xlu0 %v3471, 96
    %v3473 = vpop.permute.xlu0 %3472
    %v3474 = vsel %vm183, %v3473, 0
    %3476 = vmatpush.msra.mxu0 0.0
    %3477 = vmatpush.msra.mxu0 0.0
    %3478 = vmatpush.msra.mxu0 0.0
    %3479 = vmatpush.msra.mxu0 0.0
    %3480 = vmatpush.msra.mxu0 0.0
    %3481 = vmatpush.msra.mxu0 0.0
    %3482 = vmatpush.msra.mxu0 0.0
    %3483 = vmatpush.msra.mxu0 0.0
    %3484 = vmatpush.msra.mxu0 0.0
    %3485 = vmatpush.msra.mxu0 0.0
    %3486 = vmatpush.msra.mxu0 0.0
    %3487 = vmatpush.msra.mxu0 0.0
    %3488 = vmatpush.msra.mxu0 %v2848
    %3489 = vmatpush.msra.mxu0 %v2847
    %3490 = vmatpush.msra.mxu0 %v2846
    %3491 = vmatpush.msra.mxu0 %v2845
    %3492 = vmatmul.f32.gmra.mxu0 %v3474
    %v3493 = vpop.f32.mrf.mxu0
    %v3494 = vadd.f32 %v2903, %v3493
    %3495 = vdwg.mxu0
    %v3497 = vrot.slane %v3494, 2
    %v3499 = vadd.f32 %v2891, %v3497
    %v3500 = vxor.u32 %v3499, 2147483648
    %v3501 = vmul.f32 %v3500, 1.442695
    %v3502 = vpow.pop %v3501
    %v3503 = vadd.f32 %v3502, 1.0
    %v3504 = vrcp.pop %v3503
    %v3505 = vmul.f32 %v3503, %v3504
    %v3506 = vsub.f32 1.0, %v3505
    %v3507 = vmul.f32 %v3504, %v3506
    %v3508 = vadd.f32 %v3504, %v3507
    %vm3509 = vweird.f32 %v3503
    %vm3510 = vweird.f32 %v3504
    %vm3511 = vmor %vm3509, %vm3510
    %v3512 = vsel %vm3511, %v3504, %v3508
    %v3513 = vand.u32 2147483647, %v3503
    %vm3514 = vcmp.eq.f32.partialorder %v3513, 8.507059e+37
    %v3515 = vand.u32 %v3503, 2147483648
    %v3516 = vor.u32 1.1754944e-38, %v3515
    %v3517 = vsel %vm3514, %v3516, %v3512
    %v3518 = vmul.f32 1.0, %v3517
    %3519 = vrot.lane.b32.xlu0 %v3497, 64
    %v3520 = vpop.permute.xlu0 %3519
    %v3522 = vmul.f32 %v3518, %v3520
    %3524 = vrot.lane.b32.xlu0 %v3522, 64
    %v3525 = vpop.permute.xlu0 %3524
    %v3527 = vadd.f32 %v2891, %v3525
    %v3528 = vtanh.pop %v3527
    %v3529 = vsub.f32 1.0, %v3518
    %3531 = vrot.lane.b32.xlu0 %v3528, 96
    %v3532 = vpop.permute.xlu0 %3531
    %v3534 = vmul.f32 %v3529, %v3532
    %v3535 = vrot.slane %v3347, 6
    %v3537 = vmul.f32 %v3518, %v3535
    %v3538 = vadd.f32 %v3534, %v3537
    %3540 = vrot.lane.b32.xlu0 %v3538, 96
    %v3541 = vpop.permute.xlu0 %3540
    %v3543 = vrot.slane %v3464, 2
    %v3545 = vsel %vm183, %v3541, %v3543
    %v3547 = vrot.slane %v3545, 6
    %v3548 = vsel %vm127, %v3547, 0
    %3550 = vmatpush.msra.mxu0 0.0
    %3551 = vmatpush.msra.mxu0 0.0
    %3552 = vmatpush.msra.mxu0 0.0
    %3553 = vmatpush.msra.mxu0 0.0
    %3554 = vmatpush.msra.mxu0 0.0
    %3555 = vmatpush.msra.mxu0 0.0
    %3556 = vmatpush.msra.mxu0 0.0
    %3557 = vmatpush.msra.mxu0 0.0
    %3558 = vmatpush.msra.mxu0 %v2864
    %3559 = vmatpush.msra.mxu0 %v2862
    %3560 = vmatpush.msra.mxu0 %v2860
    %3561 = vmatpush.msra.mxu0 %v2858
    %3562 = vmatpush.msra.mxu0 %v2856
    %3563 = vmatpush.msra.mxu0 %v2854
    %3564 = vmatpush.msra.mxu0 %v2852
    %3565 = vmatpush.msra.mxu0 %v2850
    %3566 = vmatmul.f32.gmra.mxu0 %v3548
    %v3567 = vpop.f32.mrf.mxu0
    %v3568 = vadd.f32 %v2975, %v3567
    %3569 = vdwg.mxu0
    %3570 = vmatpush.msra.mxu0 0.0
    %3571 = vmatpush.msra.mxu0 0.0
    %3572 = vmatpush.msra.mxu0 0.0
    %3573 = vmatpush.msra.mxu0 0.0
    %3574 = vmatpush.msra.mxu0 0.0
    %3575 = vmatpush.msra.mxu0 0.0
    %3576 = vmatpush.msra.mxu0 0.0
    %3577 = vmatpush.msra.mxu0 0.0
    %3578 = vmatpush.msra.mxu0 %v2865
    %3579 = vmatpush.msra.mxu0 %v2863
    %3580 = vmatpush.msra.mxu0 %v2861
    %3581 = vmatpush.msra.mxu0 %v2859
    %3582 = vmatpush.msra.mxu0 %v2857
    %3583 = vmatpush.msra.mxu0 %v2855
    %3584 = vmatpush.msra.mxu0 %v2853
    %3585 = vmatpush.msra.mxu0 %v2851
    %3586 = vmatmul.f32.gmra.mxu0 %v3548
    %v3587 = vpop.f32.mrf.mxu0
    %v3588 = vadd.f32 %v2976, %v3587
    %3589 = vdwg.mxu0
    %3591 = vrot.lane.b32.xlu0 %v3568, 32
    %v3592 = vpop.permute.xlu0 %3591
    %v3594 = vadd.f32 %v3568, %v3592
    %v3595 = vxor.u32 %v3594, 2147483648
    %v3596 = vmul.f32 %v3595, 1.442695
    %v3597 = vpow.pop %v3596
    %v3598 = vadd.f32 %v3597, 1.0
    %v3599 = vrcp.pop %v3598
    %v3600 = vmul.f32 %v3598, %v3599
    %v3601 = vsub.f32 1.0, %v3600
    %v3602 = vmul.f32 %v3599, %v3601
    %v3603 = vadd.f32 %v3599, %v3602
    %vm3604 = vweird.f32 %v3598
    %vm3605 = vweird.f32 %v3599
    %vm3606 = vmor %vm3604, %vm3605
    %v3607 = vsel %vm3606, %v3599, %v3603
    %v3608 = vand.u32 2147483647, %v3598
    %vm3609 = vcmp.eq.f32.partialorder %v3608, 8.507059e+37
    %v3610 = vand.u32 %v3598, 2147483648
    %v3611 = vor.u32 1.1754944e-38, %v3610
    %v3612 = vsel %vm3609, %v3611, %v3607
    %v3613 = vmul.f32 1.0, %v3612
    %3615 = vrot.lane.b32.xlu0 %v3588, 32
    %v3616 = vpop.permute.xlu0 %3615
    %v3618 = vadd.f32 %v3568, %v3616
    %v3619 = vxor.u32 %v3618, 2147483648
    %v3620 = vmul.f32 %v3619, 1.442695
    %v3621 = vpow.pop %v3620
    %v3622 = vadd.f32 %v3621, 1.0
    %v3623 = vrcp.pop %v3622
    %v3624 = vmul.f32 %v3622, %v3623
    %v3625 = vsub.f32 1.0, %v3624
    %v3626 = vmul.f32 %v3623, %v3625
    %v3627 = vadd.f32 %v3623, %v3626
    %vm3628 = vweird.f32 %v3622
    %vm3629 = vweird.f32 %v3623
    %vm3630 = vmor %vm3628, %vm3629
    %v3631 = vsel %vm3630, %v3623, %v3627
    %v3632 = vand.u32 2147483647, %v3622
    %vm3633 = vcmp.eq.f32.partialorder %v3632, 8.507059e+37
    %v3634 = vand.u32 %v3622, 2147483648
    %v3635 = vor.u32 1.1754944e-38, %v3634
    %v3636 = vsel %vm3633, %v3635, %v3631
    %v3637 = vmul.f32 1.0, %v3636
    %3638 = vrot.lane.b32.xlu0 %v3588, 96
    %v3639 = vpop.permute.xlu0 %3638
    %v3641 = vmul.f32 %v3613, %v3639
    %3643 = vrot.lane.b32.xlu0 %v3641, 64
    %v3644 = vpop.permute.xlu0 %3643
    %v3646 = vadd.f32 %v3568, %v3644
    %v3647 = vtanh.pop %v3646
    %v3648 = vsub.f32 1.0, %v3637
    %3650 = vrot.lane.b32.xlu0 %v3647, 96
    %v3651 = vpop.permute.xlu0 %3650
    %v3653 = vmul.f32 %v3648, %v3651
    %v3654 = vmul.f32 %v3637, %v3464
    %v3655 = vadd.f32 %v3653, %v3654
    %3657 = vrot.lane.b32.xlu0 %v3655, 96
    %v3658 = vpop.permute.xlu0 %3657
    %3660 = vst.msk [vmem:[#allocation3 + $0x6] sm:$0x3] %vm421, %v3658
    %v3661 = vadd.f32 %v3470, %v3655
    %v3662 = vrot.slane %v3538, 6
    %3663 = vrot.lane.b32.xlu0 %v3662, 96
    %v3664 = vpop.permute.xlu0 %3663
    %v3665 = vsel %vm183, %v3664, 0
    %3667 = vmatpush.msra.mxu0 0.0
    %3668 = vmatpush.msra.mxu0 0.0
    %3669 = vmatpush.msra.mxu0 0.0
    %3670 = vmatpush.msra.mxu0 0.0
    %3671 = vmatpush.msra.mxu0 0.0
    %3672 = vmatpush.msra.mxu0 0.0
    %3673 = vmatpush.msra.mxu0 0.0
    %3674 = vmatpush.msra.mxu0 0.0
    %3675 = vmatpush.msra.mxu0 0.0
    %3676 = vmatpush.msra.mxu0 0.0
    %3677 = vmatpush.msra.mxu0 0.0
    %3678 = vmatpush.msra.mxu0 0.0
    %3679 = vmatpush.msra.mxu0 %v2848
    %3680 = vmatpush.msra.mxu0 %v2847
    %3681 = vmatpush.msra.mxu0 %v2846
    %3682 = vmatpush.msra.mxu0 %v2845
    %3683 = vmatmul.f32.gmra.mxu0 %v3665
    %v3684 = vpop.f32.mrf.mxu0
    %v3685 = vadd.f32 %v2903, %v3684
    %3686 = vdwg.mxu0
    %v3687 = vadd.f32 %v2894, %v3685
    %v3688 = vxor.u32 %v3687, 2147483648
    %v3689 = vmul.f32 %v3688, 1.442695
    %v3690 = vpow.pop %v3689
    %v3691 = vadd.f32 %v3690, 1.0
    %v3692 = vrcp.pop %v3691
    %v3693 = vmul.f32 %v3691, %v3692
    %v3694 = vsub.f32 1.0, %v3693
    %v3695 = vmul.f32 %v3692, %v3694
    %v3696 = vadd.f32 %v3692, %v3695
    %vm3697 = vweird.f32 %v3691
    %vm3698 = vweird.f32 %v3692
    %vm3699 = vmor %vm3697, %vm3698
    %v3700 = vsel %vm3699, %v3692, %v3696
    %v3701 = vand.u32 2147483647, %v3691
    %vm3702 = vcmp.eq.f32.partialorder %v3701, 8.507059e+37
    %v3703 = vand.u32 %v3691, 2147483648
    %v3704 = vor.u32 1.1754944e-38, %v3703
    %v3705 = vsel %vm3702, %v3704, %v3700
    %v3706 = vmul.f32 1.0, %v3705
    %3708 = vrot.lane.b32.xlu0 %v3685, 64
    %v3709 = vpop.permute.xlu0 %3708
    %v3711 = vmul.f32 %v3706, %v3709
    %3713 = vrot.lane.b32.xlu0 %v3711, 64
    %v3714 = vpop.permute.xlu0 %3713
    %v3716 = vadd.f32 %v2894, %v3714
    %v3717 = vtanh.pop %v3716
    %v3718 = vsub.f32 1.0, %v3706
    %3720 = vrot.lane.b32.xlu0 %v3717, 96
    %v3721 = vpop.permute.xlu0 %3720
    %v3723 = vmul.f32 %v3718, %v3721
    %v3725 = vmul.f32 %v3706, %v3662
    %v3726 = vadd.f32 %v3723, %v3725
    %3728 = vrot.lane.b32.xlu0 %v3726, 96
    %v3729 = vpop.permute.xlu0 %3728
    %v3731 = vsel %vm183, %v3729, %v3655
    %v3733 = vsel %vm127, %v3731, 0
    %3735 = vmatpush.msra.mxu0 0.0
    %3736 = vmatpush.msra.mxu0 0.0
    %3737 = vmatpush.msra.mxu0 0.0
    %3738 = vmatpush.msra.mxu0 0.0
    %3739 = vmatpush.msra.mxu0 0.0
    %3740 = vmatpush.msra.mxu0 0.0
    %3741 = vmatpush.msra.mxu0 0.0
    %3742 = vmatpush.msra.mxu0 0.0
    %3743 = vmatpush.msra.mxu0 %v2864
    %3744 = vmatpush.msra.mxu0 %v2862
    %3745 = vmatpush.msra.mxu0 %v2860
    %3746 = vmatpush.msra.mxu0 %v2858
    %3747 = vmatpush.msra.mxu0 %v2856
    %3748 = vmatpush.msra.mxu0 %v2854
    %3749 = vmatpush.msra.mxu0 %v2852
    %3750 = vmatpush.msra.mxu0 %v2850
    %3751 = vmatmul.f32.gmra.mxu0 %v3733
    %v3752 = vpop.f32.mrf.mxu0
    %v3753 = vadd.f32 %v2975, %v3752
    %3754 = vdwg.mxu0
    %3755 = vmatpush.msra.mxu0 0.0
    %3756 = vmatpush.msra.mxu0 0.0
    %3757 = vmatpush.msra.mxu0 0.0
    %3758 = vmatpush.msra.mxu0 0.0
    %3759 = vmatpush.msra.mxu0 0.0
    %3760 = vmatpush.msra.mxu0 0.0
    %3761 = vmatpush.msra.mxu0 0.0
    %3762 = vmatpush.msra.mxu0 0.0
    %3763 = vmatpush.msra.mxu0 %v2865
    %3764 = vmatpush.msra.mxu0 %v2863
    %3765 = vmatpush.msra.mxu0 %v2861
    %3766 = vmatpush.msra.mxu0 %v2859
    %3767 = vmatpush.msra.mxu0 %v2857
    %3768 = vmatpush.msra.mxu0 %v2855
    %3769 = vmatpush.msra.mxu0 %v2853
    %3770 = vmatpush.msra.mxu0 %v2851
    %3771 = vmatmul.f32.gmra.mxu0 %v3733
    %v3772 = vpop.f32.mrf.mxu0
    %v3773 = vadd.f32 %v2976, %v3772
    %3774 = vdwg.mxu0
    %3776 = vrot.lane.b32.xlu0 %v3753, 32
    %v3777 = vpop.permute.xlu0 %3776
    %v3779 = vadd.f32 %v3753, %v3777
    %v3780 = vxor.u32 %v3779, 2147483648
    %v3781 = vmul.f32 %v3780, 1.442695
    %v3782 = vpow.pop %v3781
    %v3783 = vadd.f32 %v3782, 1.0
    %v3784 = vrcp.pop %v3783
    %v3785 = vmul.f32 %v3783, %v3784
    %v3786 = vsub.f32 1.0, %v3785
    %v3787 = vmul.f32 %v3784, %v3786
    %v3788 = vadd.f32 %v3784, %v3787
    %vm3789 = vweird.f32 %v3783
    %vm3790 = vweird.f32 %v3784
    %vm3791 = vmor %vm3789, %vm3790
    %v3792 = vsel %vm3791, %v3784, %v3788
    %v3793 = vand.u32 2147483647, %v3783
    %vm3794 = vcmp.eq.f32.partialorder %v3793, 8.507059e+37
    %v3795 = vand.u32 %v3783, 2147483648
    %v3796 = vor.u32 1.1754944e-38, %v3795
    %v3797 = vsel %vm3794, %v3796, %v3792
    %v3798 = vmul.f32 1.0, %v3797
    %3800 = vrot.lane.b32.xlu0 %v3773, 32
    %v3801 = vpop.permute.xlu0 %3800
    %v3803 = vadd.f32 %v3753, %v3801
    %v3804 = vxor.u32 %v3803, 2147483648
    %v3805 = vmul.f32 %v3804, 1.442695
    %v3806 = vpow.pop %v3805
    %v3807 = vadd.f32 %v3806, 1.0
    %v3808 = vrcp.pop %v3807
    %v3809 = vmul.f32 %v3807, %v3808
    %v3810 = vsub.f32 1.0, %v3809
    %v3811 = vmul.f32 %v3808, %v3810
    %v3812 = vadd.f32 %v3808, %v3811
    %vm3813 = vweird.f32 %v3807
    %vm3814 = vweird.f32 %v3808
    %vm3815 = vmor %vm3813, %vm3814
    %v3816 = vsel %vm3815, %v3808, %v3812
    %v3817 = vand.u32 2147483647, %v3807
    %vm3818 = vcmp.eq.f32.partialorder %v3817, 8.507059e+37
    %v3819 = vand.u32 %v3807, 2147483648
    %v3820 = vor.u32 1.1754944e-38, %v3819
    %v3821 = vsel %vm3818, %v3820, %v3816
    %v3822 = vmul.f32 1.0, %v3821
    %3823 = vrot.lane.b32.xlu0 %v3773, 96
    %v3824 = vpop.permute.xlu0 %3823
    %v3826 = vmul.f32 %v3798, %v3824
    %3828 = vrot.lane.b32.xlu0 %v3826, 64
    %v3829 = vpop.permute.xlu0 %3828
    %v3831 = vadd.f32 %v3753, %v3829
    %v3832 = vtanh.pop %v3831
    %v3833 = vsub.f32 1.0, %v3822
    %3835 = vrot.lane.b32.xlu0 %v3832, 96
    %v3836 = vpop.permute.xlu0 %3835
    %v3838 = vmul.f32 %v3833, %v3836
    %v3839 = vmul.f32 %v3822, %v3655
    %v3840 = vadd.f32 %v3838, %v3839
    %3842 = vrot.lane.b32.xlu0 %v3840, 96
    %v3843 = vpop.permute.xlu0 %3842
    %3845 = vst.msk [vmem:[#allocation3 + $0x8] sm:$0x3] %vm421, %v3843
    %v3846 = vadd.f32 %v3661, %v3840
    %v3847 = vsel %vm183, %v3729, 0
    %3849 = vmatpush.msra.mxu0 0.0
    %3850 = vmatpush.msra.mxu0 0.0
    %3851 = vmatpush.msra.mxu0 0.0
    %3852 = vmatpush.msra.mxu0 0.0
    %3853 = vmatpush.msra.mxu0 0.0
    %3854 = vmatpush.msra.mxu0 0.0
    %3855 = vmatpush.msra.mxu0 0.0
    %3856 = vmatpush.msra.mxu0 0.0
    %3857 = vmatpush.msra.mxu0 0.0
    %3858 = vmatpush.msra.mxu0 0.0
    %3859 = vmatpush.msra.mxu0 0.0
    %3860 = vmatpush.msra.mxu0 0.0
    %3861 = vmatpush.msra.mxu0 %v2848
    %3862 = vmatpush.msra.mxu0 %v2847
    %3863 = vmatpush.msra.mxu0 %v2846
    %3864 = vmatpush.msra.mxu0 %v2845
    %3865 = vmatmul.f32.gmra.mxu0 %v3847
    %v3866 = vpop.f32.mrf.mxu0
    %v3867 = vadd.f32 %v2903, %v3866
    %3868 = vdwg.mxu0
    %v3870 = vrot.slane %v3867, 6
    %v3872 = vadd.f32 %v2894, %v3870
    %v3873 = vxor.u32 %v3872, 2147483648
    %v3874 = vmul.f32 %v3873, 1.442695
    %v3875 = vpow.pop %v3874
    %v3876 = vadd.f32 %v3875, 1.0
    %v3877 = vrcp.pop %v3876
    %v3878 = vmul.f32 %v3876, %v3877
    %v3879 = vsub.f32 1.0, %v3878
    %v3880 = vmul.f32 %v3877, %v3879
    %v3881 = vadd.f32 %v3877, %v3880
    %vm3882 = vweird.f32 %v3876
    %vm3883 = vweird.f32 %v3877
    %vm3884 = vmor %vm3882, %vm3883
    %v3885 = vsel %vm3884, %v3877, %v3881
    %v3886 = vand.u32 2147483647, %v3876
    %vm3887 = vcmp.eq.f32.partialorder %v3886, 8.507059e+37
    %v3888 = vand.u32 %v3876, 2147483648
    %v3889 = vor.u32 1.1754944e-38, %v3888
    %v3890 = vsel %vm3887, %v3889, %v3885
    %v3891 = vmul.f32 1.0, %v3890
    %3892 = vrot.lane.b32.xlu0 %v3870, 64
    %v3893 = vpop.permute.xlu0 %3892
    %v3895 = vmul.f32 %v3891, %v3893
    %3897 = vrot.lane.b32.xlu0 %v3895, 64
    %v3898 = vpop.permute.xlu0 %3897
    %v3900 = vadd.f32 %v2894, %v3898
    %v3901 = vtanh.pop %v3900
    %v3902 = vsub.f32 1.0, %v3891
    %3904 = vrot.lane.b32.xlu0 %v3901, 96
    %v3905 = vpop.permute.xlu0 %3904
    %v3907 = vmul.f32 %v3902, %v3905
    %v3908 = vrot.slane %v3726, 6
    %v3910 = vmul.f32 %v3891, %v3908
    %v3911 = vadd.f32 %v3907, %v3910
    %3913 = vrot.lane.b32.xlu0 %v3911, 96
    %v3914 = vpop.permute.xlu0 %3913
    %v3916 = vrot.slane %v3840, 6
    %v3918 = vsel %vm183, %v3914, %v3916
    %v3920 = vrot.slane %v3918, 2
    %v3921 = vsel %vm127, %v3920, 0
    %3923 = vmatpush.msra.mxu0 0.0
    %3924 = vmatpush.msra.mxu0 0.0
    %3925 = vmatpush.msra.mxu0 0.0
    %3926 = vmatpush.msra.mxu0 0.0
    %3927 = vmatpush.msra.mxu0 0.0
    %3928 = vmatpush.msra.mxu0 0.0
    %3929 = vmatpush.msra.mxu0 0.0
    %3930 = vmatpush.msra.mxu0 0.0
    %3931 = vmatpush.msra.mxu0 %v2864
    %3932 = vmatpush.msra.mxu0 %v2862
    %3933 = vmatpush.msra.mxu0 %v2860
    %3934 = vmatpush.msra.mxu0 %v2858
    %3935 = vmatpush.msra.mxu0 %v2856
    %3936 = vmatpush.msra.mxu0 %v2854
    %3937 = vmatpush.msra.mxu0 %v2852
    %3938 = vmatpush.msra.mxu0 %v2850
    %3939 = vmatmul.f32.gmra.mxu0 %v3921
    %v3940 = vpop.f32.mrf.mxu0
    %v3941 = vadd.f32 %v2975, %v3940
    %3942 = vdwg.mxu0
    %3943 = vmatpush.msra.mxu0 0.0
    %3944 = vmatpush.msra.mxu0 0.0
    %3945 = vmatpush.msra.mxu0 0.0
    %3946 = vmatpush.msra.mxu0 0.0
    %3947 = vmatpush.msra.mxu0 0.0
    %3948 = vmatpush.msra.mxu0 0.0
    %3949 = vmatpush.msra.mxu0 0.0
    %3950 = vmatpush.msra.mxu0 0.0
    %3951 = vmatpush.msra.mxu0 %v2865
    %3952 = vmatpush.msra.mxu0 %v2863
    %3953 = vmatpush.msra.mxu0 %v2861
    %3954 = vmatpush.msra.mxu0 %v2859
    %3955 = vmatpush.msra.mxu0 %v2857
    %3956 = vmatpush.msra.mxu0 %v2855
    %3957 = vmatpush.msra.mxu0 %v2853
    %3958 = vmatpush.msra.mxu0 %v2851
    %3959 = vmatmul.f32.gmra.mxu0 %v3921
    %v3960 = vpop.f32.mrf.mxu0
    %v3961 = vadd.f32 %v2976, %v3960
    %3962 = vdwg.mxu0
    %3964 = vrot.lane.b32.xlu0 %v3941, 32
    %v3965 = vpop.permute.xlu0 %3964
    %v3967 = vadd.f32 %v3941, %v3965
    %v3968 = vxor.u32 %v3967, 2147483648
    %v3969 = vmul.f32 %v3968, 1.442695
    %v3970 = vpow.pop %v3969
    %v3971 = vadd.f32 %v3970, 1.0
    %v3972 = vrcp.pop %v3971
    %v3973 = vmul.f32 %v3971, %v3972
    %v3974 = vsub.f32 1.0, %v3973
    %v3975 = vmul.f32 %v3972, %v3974
    %v3976 = vadd.f32 %v3972, %v3975
    %vm3977 = vweird.f32 %v3971
    %vm3978 = vweird.f32 %v3972
    %vm3979 = vmor %vm3977, %vm3978
    %v3980 = vsel %vm3979, %v3972, %v3976
    %v3981 = vand.u32 2147483647, %v3971
    %vm3982 = vcmp.eq.f32.partialorder %v3981, 8.507059e+37
    %v3983 = vand.u32 %v3971, 2147483648
    %v3984 = vor.u32 1.1754944e-38, %v3983
    %v3985 = vsel %vm3982, %v3984, %v3980
    %v3986 = vmul.f32 1.0, %v3985
    %3988 = vrot.lane.b32.xlu0 %v3961, 32
    %v3989 = vpop.permute.xlu0 %3988
    %v3991 = vadd.f32 %v3941, %v3989
    %v3992 = vxor.u32 %v3991, 2147483648
    %v3993 = vmul.f32 %v3992, 1.442695
    %v3994 = vpow.pop %v3993
    %v3995 = vadd.f32 %v3994, 1.0
    %v3996 = vrcp.pop %v3995
    %v3997 = vmul.f32 %v3995, %v3996
    %v3998 = vsub.f32 1.0, %v3997
    %v3999 = vmul.f32 %v3996, %v3998
    %v4000 = vadd.f32 %v3996, %v3999
    %vm4001 = vweird.f32 %v3995
    %vm4002 = vweird.f32 %v3996
    %vm4003 = vmor %vm4001, %vm4002
    %v4004 = vsel %vm4003, %v3996, %v4000
    %v4005 = vand.u32 2147483647, %v3995
    %vm4006 = vcmp.eq.f32.partialorder %v4005, 8.507059e+37
    %v4007 = vand.u32 %v3995, 2147483648
    %v4008 = vor.u32 1.1754944e-38, %v4007
    %v4009 = vsel %vm4006, %v4008, %v4004
    %v4010 = vmul.f32 1.0, %v4009
    %4011 = vrot.lane.b32.xlu0 %v3961, 96
    %v4012 = vpop.permute.xlu0 %4011
    %v4014 = vmul.f32 %v3986, %v4012
    %4016 = vrot.lane.b32.xlu0 %v4014, 64
    %v4017 = vpop.permute.xlu0 %4016
    %v4019 = vadd.f32 %v3941, %v4017
    %v4020 = vtanh.pop %v4019
    %v4021 = vsub.f32 1.0, %v4010
    %4023 = vrot.lane.b32.xlu0 %v4020, 96
    %v4024 = vpop.permute.xlu0 %4023
    %v4026 = vmul.f32 %v4021, %v4024
    %v4027 = vmul.f32 %v4010, %v3840
    %v4028 = vadd.f32 %v4026, %v4027
    %4030 = vrot.lane.b32.xlu0 %v4028, 96
    %v4031 = vpop.permute.xlu0 %4030
    %4033 = vst.msk [vmem:[#allocation3 + $0xa] sm:$0x3] %vm421, %v4031
    %v4034 = vadd.f32 %v3846, %v4028
    %v4035 = vrot.slane %v3911, 2
    %4036 = vrot.lane.b32.xlu0 %v4035, 96
    %v4037 = vpop.permute.xlu0 %4036
    %v4038 = vsel %vm183, %v4037, 0
    %4040 = vmatpush.msra.mxu0 0.0
    %4041 = vmatpush.msra.mxu0 0.0
    %4042 = vmatpush.msra.mxu0 0.0
    %4043 = vmatpush.msra.mxu0 0.0
    %4044 = vmatpush.msra.mxu0 0.0
    %4045 = vmatpush.msra.mxu0 0.0
    %4046 = vmatpush.msra.mxu0 0.0
    %4047 = vmatpush.msra.mxu0 0.0
    %4048 = vmatpush.msra.mxu0 0.0
    %4049 = vmatpush.msra.mxu0 0.0
    %4050 = vmatpush.msra.mxu0 0.0
    %4051 = vmatpush.msra.mxu0 0.0
    %4052 = vmatpush.msra.mxu0 %v2848
    %4053 = vmatpush.msra.mxu0 %v2847
    %4054 = vmatpush.msra.mxu0 %v2846
    %4055 = vmatpush.msra.mxu0 %v2845
    %4056 = vmatmul.f32.gmra.mxu0 %v4038
    %v4057 = vpop.f32.mrf.mxu0
    %v4058 = vadd.f32 %v2903, %v4057
    %4059 = vdwg.mxu0
    %v4061 = vrot.slane %v4058, 4
    %v4063 = vadd.f32 %v2894, %v4061
    %v4064 = vxor.u32 %v4063, 2147483648
    %v4065 = vmul.f32 %v4064, 1.442695
    %v4066 = vpow.pop %v4065
    %v4067 = vadd.f32 %v4066, 1.0
    %v4068 = vrcp.pop %v4067
    %v4069 = vmul.f32 %v4067, %v4068
    %v4070 = vsub.f32 1.0, %v4069
    %v4071 = vmul.f32 %v4068, %v4070
    %v4072 = vadd.f32 %v4068, %v4071
    %vm4073 = vweird.f32 %v4067
    %vm4074 = vweird.f32 %v4068
    %vm4075 = vmor %vm4073, %vm4074
    %v4076 = vsel %vm4075, %v4068, %v4072
    %v4077 = vand.u32 2147483647, %v4067
    %vm4078 = vcmp.eq.f32.partialorder %v4077, 8.507059e+37
    %v4079 = vand.u32 %v4067, 2147483648
    %v4080 = vor.u32 1.1754944e-38, %v4079
    %v4081 = vsel %vm4078, %v4080, %v4076
    %v4082 = vmul.f32 1.0, %v4081
    %4083 = vrot.lane.b32.xlu0 %v4061, 64
    %v4084 = vpop.permute.xlu0 %4083
    %v4086 = vmul.f32 %v4082, %v4084
    %4088 = vrot.lane.b32.xlu0 %v4086, 64
    %v4089 = vpop.permute.xlu0 %4088
    %v4091 = vadd.f32 %v2894, %v4089
    %v4092 = vtanh.pop %v4091
    %v4093 = vsub.f32 1.0, %v4082
    %4095 = vrot.lane.b32.xlu0 %v4092, 96
    %v4096 = vpop.permute.xlu0 %4095
    %v4098 = vmul.f32 %v4093, %v4096
    %v4099 = vrot.slane %v3911, 6
    %v4101 = vmul.f32 %v4082, %v4099
    %v4102 = vadd.f32 %v4098, %v4101
    %4104 = vrot.lane.b32.xlu0 %v4102, 96
    %v4105 = vpop.permute.xlu0 %4104
    %v4107 = vrot.slane %v4028, 4
    %v4109 = vsel %vm183, %v4105, %v4107
    %v4111 = vrot.slane %v4109, 4
    %v4112 = vsel %vm127, %v4111, 0
    %4114 = vmatpush.msra.mxu0 0.0
    %4115 = vmatpush.msra.mxu0 0.0
    %4116 = vmatpush.msra.mxu0 0.0
    %4117 = vmatpush.msra.mxu0 0.0
    %4118 = vmatpush.msra.mxu0 0.0
    %4119 = vmatpush.msra.mxu0 0.0
    %4120 = vmatpush.msra.mxu0 0.0
    %4121 = vmatpush.msra.mxu0 0.0
    %4122 = vmatpush.msra.mxu0 %v2864
    %4123 = vmatpush.msra.mxu0 %v2862
    %4124 = vmatpush.msra.mxu0 %v2860
    %4125 = vmatpush.msra.mxu0 %v2858
    %4126 = vmatpush.msra.mxu0 %v2856
    %4127 = vmatpush.msra.mxu0 %v2854
    %4128 = vmatpush.msra.mxu0 %v2852
    %4129 = vmatpush.msra.mxu0 %v2850
    %4130 = vmatmul.f32.gmra.mxu0 %v4112
    %v4131 = vpop.f32.mrf.mxu0
    %v4132 = vadd.f32 %v2975, %v4131
    %4133 = vdwg.mxu0
    %4134 = vmatpush.msra.mxu0 0.0
    %4135 = vmatpush.msra.mxu0 0.0
    %4136 = vmatpush.msra.mxu0 0.0
    %4137 = vmatpush.msra.mxu0 0.0
    %4138 = vmatpush.msra.mxu0 0.0
    %4139 = vmatpush.msra.mxu0 0.0
    %4140 = vmatpush.msra.mxu0 0.0
    %4141 = vmatpush.msra.mxu0 0.0
    %4142 = vmatpush.msra.mxu0 %v2865
    %4143 = vmatpush.msra.mxu0 %v2863
    %4144 = vmatpush.msra.mxu0 %v2861
    %4145 = vmatpush.msra.mxu0 %v2859
    %4146 = vmatpush.msra.mxu0 %v2857
    %4147 = vmatpush.msra.mxu0 %v2855
    %4148 = vmatpush.msra.mxu0 %v2853
    %4149 = vmatpush.msra.mxu0 %v2851
    %4150 = vmatmul.f32.gmra.mxu0 %v4112
    %v4151 = vpop.f32.mrf.mxu0
    %v4152 = vadd.f32 %v2976, %v4151
    %4153 = vdwg.mxu0
    %4155 = vrot.lane.b32.xlu0 %v4132, 32
    %v4156 = vpop.permute.xlu0 %4155
    %v4158 = vadd.f32 %v4132, %v4156
    %v4159 = vxor.u32 %v4158, 2147483648
    %v4160 = vmul.f32 %v4159, 1.442695
    %v4161 = vpow.pop %v4160
    %v4162 = vadd.f32 %v4161, 1.0
    %v4163 = vrcp.pop %v4162
    %v4164 = vmul.f32 %v4162, %v4163
    %v4165 = vsub.f32 1.0, %v4164
    %v4166 = vmul.f32 %v4163, %v4165
    %v4167 = vadd.f32 %v4163, %v4166
    %vm4168 = vweird.f32 %v4162
    %vm4169 = vweird.f32 %v4163
    %vm4170 = vmor %vm4168, %vm4169
    %v4171 = vsel %vm4170, %v4163, %v4167
    %v4172 = vand.u32 2147483647, %v4162
    %vm4173 = vcmp.eq.f32.partialorder %v4172, 8.507059e+37
    %v4174 = vand.u32 %v4162, 2147483648
    %v4175 = vor.u32 1.1754944e-38, %v4174
    %v4176 = vsel %vm4173, %v4175, %v4171
    %v4177 = vmul.f32 1.0, %v4176
    %4179 = vrot.lane.b32.xlu0 %v4152, 32
    %v4180 = vpop.permute.xlu0 %4179
    %v4182 = vadd.f32 %v4132, %v4180
    %v4183 = vxor.u32 %v4182, 2147483648
    %v4184 = vmul.f32 %v4183, 1.442695
    %v4185 = vpow.pop %v4184
    %v4186 = vadd.f32 %v4185, 1.0
    %v4187 = vrcp.pop %v4186
    %v4188 = vmul.f32 %v4186, %v4187
    %v4189 = vsub.f32 1.0, %v4188
    %v4190 = vmul.f32 %v4187, %v4189
    %v4191 = vadd.f32 %v4187, %v4190
    %vm4192 = vweird.f32 %v4186
    %vm4193 = vweird.f32 %v4187
    %vm4194 = vmor %vm4192, %vm4193
    %v4195 = vsel %vm4194, %v4187, %v4191
    %v4196 = vand.u32 2147483647, %v4186
    %vm4197 = vcmp.eq.f32.partialorder %v4196, 8.507059e+37
    %v4198 = vand.u32 %v4186, 2147483648
    %v4199 = vor.u32 1.1754944e-38, %v4198
    %v4200 = vsel %vm4197, %v4199, %v4195
    %v4201 = vmul.f32 1.0, %v4200
    %4202 = vrot.lane.b32.xlu0 %v4152, 96
    %v4203 = vpop.permute.xlu0 %4202
    %v4205 = vmul.f32 %v4177, %v4203
    %4207 = vrot.lane.b32.xlu0 %v4205, 64
    %v4208 = vpop.permute.xlu0 %4207
    %v4210 = vadd.f32 %v4132, %v4208
    %v4211 = vtanh.pop %v4210
    %v4212 = vsub.f32 1.0, %v4201
    %4214 = vrot.lane.b32.xlu0 %v4211, 96
    %v4215 = vpop.permute.xlu0 %4214
    %v4217 = vmul.f32 %v4212, %v4215
    %v4218 = vmul.f32 %v4201, %v4028
    %v4219 = vadd.f32 %v4217, %v4218
    %4221 = vrot.lane.b32.xlu0 %v4219, 96
    %v4222 = vpop.permute.xlu0 %4221
    %4224 = vst.msk [vmem:[#allocation3 + $0xc] sm:$0x3] %vm421, %v4222
    %v4225 = vadd.f32 %v4034, %v4219
    %v4226 = vld [vmem:[#allocation3] sm:$0xff]
    %v4227 = vld [vmem:[#allocation3 + $0x8] sm:$0x3f]
    %4229 = vrot.lane.b32.xlu0 %v2749, 64
    %v4230 = vpop.permute.xlu0 %4229
    %v4233 = vsel %vm183, %v4226, 0
    %v4236 = vsel %vm183, %v4227, 0
    %4238 = vmatpush.msra.mxu0 0.0
    %4239 = vmatpush.msra.mxu0 0.0
    %4240 = vmatpush.msra.mxu0 0.0
    %4241 = vmatpush.msra.mxu0 0.0
    %4242 = vmatpush.msra.mxu0 0.0
    %4243 = vmatpush.msra.mxu0 0.0
    %4244 = vmatpush.msra.mxu0 0.0
    %4245 = vmatpush.msra.mxu0 0.0
    %4246 = vmatpush.msra.mxu0 0.0
    %4247 = vmatpush.msra.mxu0 0.0
    %4248 = vmatpush.msra.mxu0 0.0
    %4249 = vmatpush.msra.mxu0 0.0
    %4250 = vmatpush.msra.mxu0 %v2740
    %4251 = vmatpush.msra.mxu0 %v2739
    %4252 = vmatpush.msra.mxu0 %v2738
    %4253 = vmatpush.msra.mxu0 %v2737
    %4254 = vmatmul.f32.gmra.mxu0 %v4233
    %v4255 = vpop.f32.mrf.mxu0
    %v4256 = vadd.f32 %v4230, %v4255
    %4257 = vmatmul.f32.gmra.mxu0 %v4236
    %v4258 = vpop.f32.mrf.mxu0
    %v4259 = vadd.f32 %v4230, %v4258
    %4260 = vdwg.mxu0
    %4261 = vst.msk [vmem:[%s7] sm:$0xff] %vm127, %v4256
    %vm4262 = vcmask 521216
    %4263 = vst.msk [vmem:[%s7 + $0x8] sm:$0x3f] %vm4262, %v4259
    %v4264 = vmul.f32 %v4225, 0.14285715
    %v4265 = vsel %vm183, %v2802, %v4264
    %v4266 = vperm.slane %v117, 7
    %v4268 = vsel %vm127, %v4265, 0
    %4270 = vmatpush.msra.mxu0 0.0
    %4271 = vmatpush.msra.mxu0 0.0
    %4272 = vmatpush.msra.mxu0 0.0
    %4273 = vmatpush.msra.mxu0 0.0
    %4274 = vmatpush.msra.mxu0 0.0
    %4275 = vmatpush.msra.mxu0 0.0
    %4276 = vmatpush.msra.mxu0 0.0
    %4277 = vmatpush.msra.mxu0 0.0
    %4278 = vmatpush.msra.mxu0 %v2748
    %4279 = vmatpush.msra.mxu0 %v2747
    %4280 = vmatpush.msra.mxu0 %v2746
    %4281 = vmatpush.msra.mxu0 %v2745
    %4282 = vmatpush.msra.mxu0 %v2744
    %4283 = vmatpush.msra.mxu0 %v2743
    %4284 = vmatpush.msra.mxu0 %v2742
    %4285 = vmatpush.msra.mxu0 %v2741
    %4286 = vmatmul.f32.gmra.mxu0 %v4268
    %v4287 = vpop.f32.mrf.mxu0
    %v4288 = vadd.f32 %v4266, %v4287
    %4289 = vdwg.mxu0
    %vm4290 = vcmask 25600
    %4291 = vst.msk [vmem:[#allocation15] sm:$0x3] %vm4290, %v4288
    // Predicated region
    $region46: #{textvae_forward.1} parent=1 // pred_check
      _
    $region47: #{textvae_forward.1} parent=1 // pred_check_branch
      %4293 = sbr.rel (0) target = $region49
    $region48: #{textvae_forward.1} parent=1 // pred_region
      _
    $region49: #{textvae_forward.1} parent=1 // pred_fallthru
      _
    // Predicated region
    $region50: #{textvae_forward.1} parent=1 // pred_check
      _
    $region51: #{textvae_forward.1} parent=1 // pred_check_branch
      %4295 = sbr.rel (0) target = $region53
    $region52: #{textvae_forward.1} parent=1 // pred_region
      %4297 = vsyncadd [#allocation6], 0
      %s4299 = sshll.u32 [#allocation12], 4
      %s4300 = int_to_ptr.vmem [resolvable:$true] %s4299
      %s4301 = sshll.u32 %s8, 4
      %s4302 = int_to_ptr.hbm [resolvable:$true] %s4301
      %4304 = dma.vmem_to_hbm [thread:$0]  %s4300, 32, %s4302, [#allocation6]
    $region53: #{textvae_forward.1} parent=1 // pred_fallthru
      _
    // Predicated region
    $region54: #{textvae_forward.1} parent=1 // pred_check
      _
    $region55: #{textvae_forward.1} parent=1 // pred_check_branch
      %4306 = sbr.rel (0) target = $region57
    $region56: #{textvae_forward.1} parent=1 // pred_region
      %4308 = vsyncadd [#allocation14], 0
      %s4310 = sshll.u32 [#allocation13], 4
      %s4311 = int_to_ptr.vmem [resolvable:$true] %s4310
      %s4312 = sshll.u32 %s9, 4
      %s4313 = int_to_ptr.hbm [resolvable:$true] %s4312
      %4315 = dma.vmem_to_hbm [thread:$0]  %s4311, 32, %s4313, [#allocation14]
    $region57: #{textvae_forward.1} parent=1 // pred_fallthru
      _
    // Predicated region
    $region58: #{textvae_forward.1} parent=1 // pred_check
      _
    $region59: #{textvae_forward.1} parent=1 // pred_check_branch
      %4317 = sbr.rel (0) target = $region61
    $region60: #{textvae_forward.1} parent=1 // pred_region
      %4319 = vsyncadd [#allocation14], 0
      %s4321 = sshll.u32 [#allocation15], 4
      %s4322 = int_to_ptr.vmem [resolvable:$true] %s4321
      %s4323 = sshll.u32 %s10, 4
      %s4324 = int_to_ptr.hbm [resolvable:$true] %s4323
      %4326 = dma.vmem_to_hbm [thread:$0]  %s4322, 32, %s4324, [#allocation14]
    $region61: #{textvae_forward.1} parent=1 // pred_fallthru
      _
    // Predicated region
    $region62: #{textvae_forward.1} parent=1 // pred_check
      _
    $region63: #{textvae_forward.1} parent=1 // pred_check_branch
      %4328 = sbr.rel (0) target = $region65
    $region64: #{textvae_forward.1} parent=1 // pred_region
      _
    $region65: #{textvae_forward.1} parent=1 // pred_fallthru
      _
    // Predicated region
    $region66: #{textvae_forward.1} parent=1 // pred_check
      _
    $region67: #{textvae_forward.1} parent=1 // pred_check_branch
      %4330 = sbr.rel (0) target = $region69
    $region68: #{textvae_forward.1} parent=1 // pred_region
      %4332 = dma.done [#allocation6], 32
    $region69: #{textvae_forward.1} parent=1 // pred_fallthru
      _
    // Predicated region
    $region70: #{textvae_forward.1} parent=1 // pred_check
      _
    $region71: #{textvae_forward.1} parent=1 // pred_check_branch
      %4334 = sbr.rel (0) target = $region73
    $region72: #{textvae_forward.1} parent=1 // pred_region
      %4336 = dma.done [#allocation14], 32
    $region73: #{textvae_forward.1} parent=1 // pred_fallthru
      _
    // Predicated region
    $region74: #{textvae_forward.1} parent=1 // pred_check
      _
    $region75: #{textvae_forward.1} parent=1 // pred_check_branch
      %4338 = sbr.rel (0) target = $region77
    $region76: #{textvae_forward.1} parent=1 // pred_region
      %4340 = dma.done [#allocation14], 32
    $region77: #{textvae_forward.1} parent=1 // pred_fallthru
      _
    %4341 = vsyncpa [#allocation5], 1
    %4342 = vsyncpa [#allocation8], 1
    %4343 = vsyncpa [#allocation11], 1
    %4344 = vsyncpa [#allocation6], 1
    %4345 = vsyncpa [#allocation14], 1

</llo_original>
